<compile_context>
chip_gen: v6e
topology: v6e:2x2x1
jax: 0.10.0
libtpu: 0.0.40
codegen_flags: <defaults>
</compile_context>

<pallas_src>
import math

import jax
import jax.numpy as jnp
from jax.experimental import pallas as pl
from jax.experimental.pallas import tpu as pltpu

# ---- module hyper-parameters (small, consistent with the PyTorch module) ----
INPUT_DIM = 16
NUM_LAYER = 6
NUM_MATERIAL = 5
T_LIM = (10.0, 200.0)
MIDDLE = 256
OUTPUT = 128
BATCH = 1        # Reshape(num_of_layer, num_of_material) requires batch == 1.
BATCH_PAD = 8    # pad rows to one sublane tile
LANE = 128       # pad tiny output layers (6, 30) to one lane tile
PREFETCH_AHEAD = 8  # max weight DMAs kept in flight


def _linear_shapes():
    """(in, out) of every nn.Linear in forward-traversal order."""
    shapes = []

    def add_residual(inp, mid, out, use_fc):
        shapes.append((inp, mid))          # fc1
        shapes.append((mid, out))          # fc2
        if use_fc:
            shapes.append((inp, out))      # fc3

    add_residual(INPUT_DIM, MIDDLE, OUTPUT, True)    # rs1
    add_residual(OUTPUT, MIDDLE, OUTPUT, False)      # rs2
    add_residual(OUTPUT, MIDDLE, OUTPUT, False)      # rs3
    add_residual(OUTPUT, MIDDLE, OUTPUT, False)      # rs4
    # t_net
    add_residual(OUTPUT, 256, 256, True)
    add_residual(256, 128, 512, True)
    shapes.append((512, 256))
    shapes.append((256, NUM_LAYER))
    # nk_net
    add_residual(OUTPUT, 256, 512, True)
    add_residual(512, 256, 512, True)
    add_residual(512, 128, 256, True)
    shapes.append((256, 512))
    shapes.append((512, 128))
    shapes.append((128, NUM_LAYER * NUM_MATERIAL))
    return shapes


NUM_LINEARS = len(_linear_shapes())  # 28


# ------------------------------- kernel -------------------------------------
def generator_kernel(*refs):
    """refs = (x, w_hbm*28, b_vmem*28, t_out, pm_out, w_vmem*28, dma_sem)."""
    n = NUM_LINEARS
    x_ref = refs[0]
    w_hbm = refs[1:1 + n]
    b_vmem = refs[1 + n:1 + 2 * n]
    t_ref = refs[1 + 2 * n]
    pm_ref = refs[2 + 2 * n]
    w_vmem = refs[3 + 2 * n:3 + 3 * n]
    sem = refs[3 + 3 * n]

    started = [0]

    def start_next():
        if started[0] < n:
            i = started[0]
            pltpu.make_async_copy(w_hbm[i], w_vmem[i], sem.at[i]).start()
            started[0] += 1

    # Prime the weight-prefetch pipeline (HBM -> VMEM), in usage order.
    for _ in range(min(PREFETCH_AHEAD, n)):
        start_next()

    counter = [0]

    def linear(act):
        i = counter[0]
        counter[0] += 1
        start_next()  # keep PREFETCH_AHEAD copies in flight
        pltpu.make_async_copy(w_hbm[i], w_vmem[i], sem.at[i]).wait()
        y = jnp.dot(act.astype(jnp.bfloat16), w_vmem[i][...],
                    preferred_element_type=jnp.float32)
        return y + b_vmem[i][...]

    relu = lambda v: jnp.maximum(v, 0.0)
    leaky_relu = lambda v: jnp.where(v > 0, v, 0.01 * v)  # F.leaky_relu default

    def residual(act, use_fc):
        # Y = relu(fc1(X)); Y = fc2(Y); X = fc3(X) if use_fc; return relu(Y + X)
        y = relu(linear(act))
        y = linear(y)
        if use_fc:
            act = linear(act)
        return relu(y + act)

    x = x_ref[...].astype(jnp.float32)

    # trunk
    out = leaky_relu(residual(x, True))     # rs1
    out = relu(residual(out, False))        # rs2
    out = relu(residual(out, False))        # rs3
    out = relu(residual(out, False))        # rs4

    # t_net: Residual(128,256,256,T), ReLU, Residual(256,128,512,T), ReLU,
    #        Linear(512,256), ReLU, Linear(256, num_of_layer) (lane-padded)
    h = relu(residual(out, True))
    h = relu(residual(h, True))
    h = relu(linear(h))
    h = linear(h)
    # Act_fun(t_min, t_max): (tanh(x) + 1) * (t_max - t_min)/2 + t_min
    scale = (T_LIM[1] - T_LIM[0]) / 2.0
    t_ref[...] = (jnp.tanh(h) + 1.0) * scale + T_LIM[0]

    # nk_net: Residual(128,256,512,T), ReLU, Residual(512,256,512,T), ReLU,
    #         Residual(512,128,256,T), ReLU, Linear(256,512), ReLU,
    #         Linear(512,128), ReLU, Linear(128, L*M) (lane-padded), Reshape(L,M)
    g = relu(residual(out, True))
    g = relu(residual(g, True))
    g = relu(residual(g, True))
    g = relu(linear(g))
    g = relu(linear(g))
    pm_ref[...] = linear(g)   # reshape to (L, M) done in the wrapper (pure glue)


# ------------------------------ parameters ----------------------------------
def init_params(key):
    """Deterministic synthetic weights (PyTorch-style uniform(-1/sqrt(in), 1/sqrt(in))).

    Weights are stored transposed as (in, out) and in bfloat16 (MXU inputs);
    biases stay float32.
    """
    params = []
    for i, (fi, fo) in enumerate(_linear_shapes()):
        kw, kb = jax.random.split(jax.random.fold_in(key, i))
        bound = 1.0 / math.sqrt(fi)
        w = jax.random.uniform(kw, (fi, fo), jnp.float32, -bound, bound)
        b = jax.random.uniform(kb, (1, fo), jnp.float32, -bound, bound)
        params.append((w.astype(jnp.bfloat16), b))
    return params


def pad_params(params):
    """Zero-pad output dims of the tiny final layers up to a full 128-lane tile."""
    padded = []
    for w, b in params:
        fo = w.shape[1]
        pad = (-fo) % LANE
        if pad:
            w = jnp.pad(w, ((0, 0), (0, pad)))
            b = jnp.pad(b, ((0, 0), (0, pad)))
        padded.append((w, b))
    return padded


# ------------------------------- wrapper -------------------------------------
def _generator_forward_impl(x, padded_params):
    weights = [w for w, _ in padded_params]
    biases = [b for _, b in padded_params]

    # Pad batch 1 -> 8 rows (one sublane tile); extra rows are ignored.
    xp = jnp.zeros((BATCH_PAD, INPUT_DIM), jnp.float32).at[: x.shape[0]].set(x)

    vmem = pl.BlockSpec(memory_space=pltpu.MemorySpace.VMEM)
    hbm = pl.BlockSpec(memory_space=pl.ANY)   # weights stay in HBM, DMA'd manually

    out_shapes = (
        jax.ShapeDtypeStruct((BATCH_PAD, LANE), jnp.float32),   # t (padded)
        jax.ShapeDtypeStruct((BATCH_PAD, LANE), jnp.float32),   # pm (padded)
    )
    scratch_shapes = [pltpu.VMEM(w.shape, jnp.bfloat16) for w in weights]
    scratch_shapes.append(pltpu.SemaphoreType.DMA((NUM_LINEARS,)))

    t_pad, pm_pad = pl.pallas_call(
        generator_kernel,
        out_shape=out_shapes,
        in_specs=[vmem] + [hbm] * NUM_LINEARS + [vmem] * NUM_LINEARS,
        out_specs=(vmem, vmem),
        scratch_shapes=scratch_shapes,
        compiler_params=pltpu.CompilerParams(vmem_limit_bytes=32 << 20),
    )(xp, *weights, *biases)

    t = t_pad[: x.shape[0], :NUM_LAYER]
    # torch Reshape(num_of_layer, num_of_material) == x.view(L, M); batch must be 1.
    probability_matrix = pm_pad[0, : NUM_LAYER * NUM_MATERIAL].reshape(
        NUM_LAYER, NUM_MATERIAL)
    return t, probability_matrix


generator_forward = jax.jit(_generator_forward_impl)


# ----------------------- pure-JAX reference (same precision) ----------------
def reference_forward(x, params):
    it = iter(params)

    def linear(v):
        w, b = next(it)
        return jnp.dot(v.astype(jnp.bfloat16), w,
                       preferred_element_type=jnp.float32) + b

    relu = lambda v: jnp.maximum(v, 0.0)
    leaky = lambda v: jnp.where(v > 0, v, 0.01 * v)

    def residual(v, use_fc):
        y = relu(linear(v))
        y = linear(y)
        if use_fc:
            v = linear(v)
        return relu(y + v)

    out = leaky(residual(x, True))
    out = relu(residual(out, False))
    out = relu(residual(out, False))
    out = relu(residual(out, False))

    h = relu(residual(out, True))
    h = relu(residual(h, True))
    h = relu(linear(h))
    h = linear(h)
    scale = (T_LIM[1] - T_LIM[0]) / 2.0
    t = (jnp.tanh(h) + 1.0) * scale + T_LIM[0]

    g = relu(residual(out, True))
    g = relu(residual(g, True))
    g = relu(residual(g, True))
    g = relu(linear(g))
    g = relu(linear(g))
    g = linear(g)
    return t, g.reshape(NUM_LAYER, NUM_MATERIAL)


if __name__ == "__main__":
    key = jax.random.PRNGKey(0)
    kx, kp = jax.random.split(key)

    x = jax.random.normal(kx, (BATCH, INPUT_DIM), dtype=jnp.float32)
    params = init_params(kp)          # bf16 weights, f32 biases (unpadded)
    padded_params = pad_params(params)  # lane-padded once; weights stay resident

    t, pm = generator_forward(x, padded_params)
    jax.block_until_ready((t, pm))

    assert t.shape == (BATCH, NUM_LAYER) and t.dtype == jnp.float32
    assert pm.shape == (NUM_LAYER, NUM_MATERIAL) and pm.dtype == jnp.float32
    # Act_fun output must lie in [t_min, t_max]
    assert bool(jnp.all(t >= T_LIM[0])) and bool(jnp.all(t <= T_LIM[1]))

    # Validate against a pure-JAX reference at the same (bf16-matmul) precision.
    t_ref, pm_ref = reference_forward(x, params)
    assert bool(jnp.allclose(t, t_ref, rtol=5e-2, atol=5e-2))
    assert bool(jnp.allclose(pm, pm_ref, rtol=5e-2, atol=5e-2))

    print("KERNEL_OK")
</pallas_src>

<mosaic_0001>
module attributes {stable_mosaic.version = 11 : i64} {
  func.func @generator_kernel(%arg0: memref<8x16xf32, #tpu.memory_space<vmem>>, %arg1: memref<16x256xbf16, #tpu.memory_space<any>>, %arg2: memref<256x128xbf16, #tpu.memory_space<any>>, %arg3: memref<16x128xbf16, #tpu.memory_space<any>>, %arg4: memref<128x256xbf16, #tpu.memory_space<any>>, %arg5: memref<256x128xbf16, #tpu.memory_space<any>>, %arg6: memref<128x256xbf16, #tpu.memory_space<any>>, %arg7: memref<256x128xbf16, #tpu.memory_space<any>>, %arg8: memref<128x256xbf16, #tpu.memory_space<any>>, %arg9: memref<256x128xbf16, #tpu.memory_space<any>>, %arg10: memref<128x256xbf16, #tpu.memory_space<any>>, %arg11: memref<256x256xbf16, #tpu.memory_space<any>>, %arg12: memref<128x256xbf16, #tpu.memory_space<any>>, %arg13: memref<256x128xbf16, #tpu.memory_space<any>>, %arg14: memref<128x512xbf16, #tpu.memory_space<any>>, %arg15: memref<256x512xbf16, #tpu.memory_space<any>>, %arg16: memref<512x256xbf16, #tpu.memory_space<any>>, %arg17: memref<256x128xbf16, #tpu.memory_space<any>>, %arg18: memref<128x256xbf16, #tpu.memory_space<any>>, %arg19: memref<256x512xbf16, #tpu.memory_space<any>>, %arg20: memref<128x512xbf16, #tpu.memory_space<any>>, %arg21: memref<512x256xbf16, #tpu.memory_space<any>>, %arg22: memref<256x512xbf16, #tpu.memory_space<any>>, %arg23: memref<512x512xbf16, #tpu.memory_space<any>>, %arg24: memref<512x128xbf16, #tpu.memory_space<any>>, %arg25: memref<128x256xbf16, #tpu.memory_space<any>>, %arg26: memref<512x256xbf16, #tpu.memory_space<any>>, %arg27: memref<256x512xbf16, #tpu.memory_space<any>>, %arg28: memref<512x128xbf16, #tpu.memory_space<any>>, %arg29: memref<128x128xbf16, #tpu.memory_space<any>>, %arg30: memref<1x256xf32, #tpu.memory_space<vmem>>, %arg31: memref<1x128xf32, #tpu.memory_space<vmem>>, %arg32: memref<1x128xf32, #tpu.memory_space<vmem>>, %arg33: memref<1x256xf32, #tpu.memory_space<vmem>>, %arg34: memref<1x128xf32, #tpu.memory_space<vmem>>, %arg35: memref<1x256xf32, #tpu.memory_space<vmem>>, %arg36: memref<1x128xf32, #tpu.memory_space<vmem>>, %arg37: memref<1x256xf32, #tpu.memory_space<vmem>>, %arg38: memref<1x128xf32, #tpu.memory_space<vmem>>, %arg39: memref<1x256xf32, #tpu.memory_space<vmem>>, %arg40: memref<1x256xf32, #tpu.memory_space<vmem>>, %arg41: memref<1x256xf32, #tpu.memory_space<vmem>>, %arg42: memref<1x128xf32, #tpu.memory_space<vmem>>, %arg43: memref<1x512xf32, #tpu.memory_space<vmem>>, %arg44: memref<1x512xf32, #tpu.memory_space<vmem>>, %arg45: memref<1x256xf32, #tpu.memory_space<vmem>>, %arg46: memref<1x128xf32, #tpu.memory_space<vmem>>, %arg47: memref<1x256xf32, #tpu.memory_space<vmem>>, %arg48: memref<1x512xf32, #tpu.memory_space<vmem>>, %arg49: memref<1x512xf32, #tpu.memory_space<vmem>>, %arg50: memref<1x256xf32, #tpu.memory_space<vmem>>, %arg51: memref<1x512xf32, #tpu.memory_space<vmem>>, %arg52: memref<1x512xf32, #tpu.memory_space<vmem>>, %arg53: memref<1x128xf32, #tpu.memory_space<vmem>>, %arg54: memref<1x256xf32, #tpu.memory_space<vmem>>, %arg55: memref<1x256xf32, #tpu.memory_space<vmem>>, %arg56: memref<1x512xf32, #tpu.memory_space<vmem>>, %arg57: memref<1x128xf32, #tpu.memory_space<vmem>>, %arg58: memref<1x128xf32, #tpu.memory_space<vmem>>, %arg59: memref<8x128xf32, #tpu.memory_space<vmem>>, %arg60: memref<8x128xf32, #tpu.memory_space<vmem>>, %arg61: memref<16x256xbf16, #tpu.memory_space<vmem>>, %arg62: memref<256x128xbf16, #tpu.memory_space<vmem>>, %arg63: memref<16x128xbf16, #tpu.memory_space<vmem>>, %arg64: memref<128x256xbf16, #tpu.memory_space<vmem>>, %arg65: memref<256x128xbf16, #tpu.memory_space<vmem>>, %arg66: memref<128x256xbf16, #tpu.memory_space<vmem>>, %arg67: memref<256x128xbf16, #tpu.memory_space<vmem>>, %arg68: memref<128x256xbf16, #tpu.memory_space<vmem>>, %arg69: memref<256x128xbf16, #tpu.memory_space<vmem>>, %arg70: memref<128x256xbf16, #tpu.memory_space<vmem>>, %arg71: memref<256x256xbf16, #tpu.memory_space<vmem>>, %arg72: memref<128x256xbf16, #tpu.memory_space<vmem>>, %arg73: memref<256x128xbf16, #tpu.memory_space<vmem>>, %arg74: memref<128x512xbf16, #tpu.memory_space<vmem>>, %arg75: memref<256x512xbf16, #tpu.memory_space<vmem>>, %arg76: memref<512x256xbf16, #tpu.memory_space<vmem>>, %arg77: memref<256x128xbf16, #tpu.memory_space<vmem>>, %arg78: memref<128x256xbf16, #tpu.memory_space<vmem>>, %arg79: memref<256x512xbf16, #tpu.memory_space<vmem>>, %arg80: memref<128x512xbf16, #tpu.memory_space<vmem>>, %arg81: memref<512x256xbf16, #tpu.memory_space<vmem>>, %arg82: memref<256x512xbf16, #tpu.memory_space<vmem>>, %arg83: memref<512x512xbf16, #tpu.memory_space<vmem>>, %arg84: memref<512x128xbf16, #tpu.memory_space<vmem>>, %arg85: memref<128x256xbf16, #tpu.memory_space<vmem>>, %arg86: memref<512x256xbf16, #tpu.memory_space<vmem>>, %arg87: memref<256x512xbf16, #tpu.memory_space<vmem>>, %arg88: memref<512x128xbf16, #tpu.memory_space<vmem>>, %arg89: memref<128x128xbf16, #tpu.memory_space<vmem>>, %arg90: memref<29x!tpu.dma_semaphore, #tpu.memory_space<semaphore_mem>>) attributes {dimension_semantics = [], scalar_prefetch = 0 : i64, scratch_operands = 30 : i64, tpu.core_type = #tpu.core_type<tc>} {
    %c0_i32 = arith.constant 0 : i32
    %0 = tpu.memref_slice %arg90[%c0_i32] : memref<29x!tpu.dma_semaphore, #tpu.memory_space<semaphore_mem>> -> memref<1x!tpu.dma_semaphore, #tpu.memory_space<semaphore_mem>>
    %1 = tpu.memref_squeeze %0 : memref<1x!tpu.dma_semaphore, #tpu.memory_space<semaphore_mem>> -> memref<!tpu.dma_semaphore, #tpu.memory_space<semaphore_mem>>
    tpu.enqueue_dma source(%arg1 : memref<16x256xbf16, #tpu.memory_space<any>>) target(%arg61 : memref<16x256xbf16, #tpu.memory_space<vmem>>) target_semaphore(%1 : memref<!tpu.dma_semaphore, #tpu.memory_space<semaphore_mem>>)
    %c1_i32 = arith.constant 1 : i32
    %2 = tpu.memref_slice %arg90[%c1_i32] : memref<29x!tpu.dma_semaphore, #tpu.memory_space<semaphore_mem>> -> memref<1x!tpu.dma_semaphore, #tpu.memory_space<semaphore_mem>>
    %3 = tpu.memref_squeeze %2 : memref<1x!tpu.dma_semaphore, #tpu.memory_space<semaphore_mem>> -> memref<!tpu.dma_semaphore, #tpu.memory_space<semaphore_mem>>
    tpu.enqueue_dma source(%arg2 : memref<256x128xbf16, #tpu.memory_space<any>>) target(%arg62 : memref<256x128xbf16, #tpu.memory_space<vmem>>) target_semaphore(%3 : memref<!tpu.dma_semaphore, #tpu.memory_space<semaphore_mem>>)
    %c2_i32 = arith.constant 2 : i32
    %4 = tpu.memref_slice %arg90[%c2_i32] : memref<29x!tpu.dma_semaphore, #tpu.memory_space<semaphore_mem>> -> memref<1x!tpu.dma_semaphore, #tpu.memory_space<semaphore_mem>>
    %5 = tpu.memref_squeeze %4 : memref<1x!tpu.dma_semaphore, #tpu.memory_space<semaphore_mem>> -> memref<!tpu.dma_semaphore, #tpu.memory_space<semaphore_mem>>
    tpu.enqueue_dma source(%arg3 : memref<16x128xbf16, #tpu.memory_space<any>>) target(%arg63 : memref<16x128xbf16, #tpu.memory_space<vmem>>) target_semaphore(%5 : memref<!tpu.dma_semaphore, #tpu.memory_space<semaphore_mem>>)
    %c3_i32 = arith.constant 3 : i32
    %6 = tpu.memref_slice %arg90[%c3_i32] : memref<29x!tpu.dma_semaphore, #tpu.memory_space<semaphore_mem>> -> memref<1x!tpu.dma_semaphore, #tpu.memory_space<semaphore_mem>>
    %7 = tpu.memref_squeeze %6 : memref<1x!tpu.dma_semaphore, #tpu.memory_space<semaphore_mem>> -> memref<!tpu.dma_semaphore, #tpu.memory_space<semaphore_mem>>
    tpu.enqueue_dma source(%arg4 : memref<128x256xbf16, #tpu.memory_space<any>>) target(%arg64 : memref<128x256xbf16, #tpu.memory_space<vmem>>) target_semaphore(%7 : memref<!tpu.dma_semaphore, #tpu.memory_space<semaphore_mem>>)
    %c4_i32 = arith.constant 4 : i32
    %8 = tpu.memref_slice %arg90[%c4_i32] : memref<29x!tpu.dma_semaphore, #tpu.memory_space<semaphore_mem>> -> memref<1x!tpu.dma_semaphore, #tpu.memory_space<semaphore_mem>>
    %9 = tpu.memref_squeeze %8 : memref<1x!tpu.dma_semaphore, #tpu.memory_space<semaphore_mem>> -> memref<!tpu.dma_semaphore, #tpu.memory_space<semaphore_mem>>
    tpu.enqueue_dma source(%arg5 : memref<256x128xbf16, #tpu.memory_space<any>>) target(%arg65 : memref<256x128xbf16, #tpu.memory_space<vmem>>) target_semaphore(%9 : memref<!tpu.dma_semaphore, #tpu.memory_space<semaphore_mem>>)
    %c5_i32 = arith.constant 5 : i32
    %10 = tpu.memref_slice %arg90[%c5_i32] : memref<29x!tpu.dma_semaphore, #tpu.memory_space<semaphore_mem>> -> memref<1x!tpu.dma_semaphore, #tpu.memory_space<semaphore_mem>>
    %11 = tpu.memref_squeeze %10 : memref<1x!tpu.dma_semaphore, #tpu.memory_space<semaphore_mem>> -> memref<!tpu.dma_semaphore, #tpu.memory_space<semaphore_mem>>
    tpu.enqueue_dma source(%arg6 : memref<128x256xbf16, #tpu.memory_space<any>>) target(%arg66 : memref<128x256xbf16, #tpu.memory_space<vmem>>) target_semaphore(%11 : memref<!tpu.dma_semaphore, #tpu.memory_space<semaphore_mem>>)
    %c6_i32 = arith.constant 6 : i32
    %12 = tpu.memref_slice %arg90[%c6_i32] : memref<29x!tpu.dma_semaphore, #tpu.memory_space<semaphore_mem>> -> memref<1x!tpu.dma_semaphore, #tpu.memory_space<semaphore_mem>>
    %13 = tpu.memref_squeeze %12 : memref<1x!tpu.dma_semaphore, #tpu.memory_space<semaphore_mem>> -> memref<!tpu.dma_semaphore, #tpu.memory_space<semaphore_mem>>
    tpu.enqueue_dma source(%arg7 : memref<256x128xbf16, #tpu.memory_space<any>>) target(%arg67 : memref<256x128xbf16, #tpu.memory_space<vmem>>) target_semaphore(%13 : memref<!tpu.dma_semaphore, #tpu.memory_space<semaphore_mem>>)
    %c7_i32 = arith.constant 7 : i32
    %14 = tpu.memref_slice %arg90[%c7_i32] : memref<29x!tpu.dma_semaphore, #tpu.memory_space<semaphore_mem>> -> memref<1x!tpu.dma_semaphore, #tpu.memory_space<semaphore_mem>>
    %15 = tpu.memref_squeeze %14 : memref<1x!tpu.dma_semaphore, #tpu.memory_space<semaphore_mem>> -> memref<!tpu.dma_semaphore, #tpu.memory_space<semaphore_mem>>
    tpu.enqueue_dma source(%arg8 : memref<128x256xbf16, #tpu.memory_space<any>>) target(%arg68 : memref<128x256xbf16, #tpu.memory_space<vmem>>) target_semaphore(%15 : memref<!tpu.dma_semaphore, #tpu.memory_space<semaphore_mem>>)
    %c0 = arith.constant 0 : index
    %c0_0 = arith.constant 0 : index
    %16 = vector.load %arg0[%c0, %c0_0] : memref<8x16xf32, #tpu.memory_space<vmem>>, vector<8x16xf32>
    %c8_i32 = arith.constant 8 : i32
    %17 = tpu.memref_slice %arg90[%c8_i32] : memref<29x!tpu.dma_semaphore, #tpu.memory_space<semaphore_mem>> -> memref<1x!tpu.dma_semaphore, #tpu.memory_space<semaphore_mem>>
    %18 = tpu.memref_squeeze %17 : memref<1x!tpu.dma_semaphore, #tpu.memory_space<semaphore_mem>> -> memref<!tpu.dma_semaphore, #tpu.memory_space<semaphore_mem>>
    tpu.enqueue_dma source(%arg9 : memref<256x128xbf16, #tpu.memory_space<any>>) target(%arg69 : memref<256x128xbf16, #tpu.memory_space<vmem>>) target_semaphore(%18 : memref<!tpu.dma_semaphore, #tpu.memory_space<semaphore_mem>>)
    %c0_i32_1 = arith.constant 0 : i32
    %19 = tpu.memref_slice %arg90[%c0_i32_1] : memref<29x!tpu.dma_semaphore, #tpu.memory_space<semaphore_mem>> -> memref<1x!tpu.dma_semaphore, #tpu.memory_space<semaphore_mem>>
    %20 = tpu.memref_squeeze %19 : memref<1x!tpu.dma_semaphore, #tpu.memory_space<semaphore_mem>> -> memref<!tpu.dma_semaphore, #tpu.memory_space<semaphore_mem>>
    tpu.wait_dma2 semaphore(%20 : memref<!tpu.dma_semaphore, #tpu.memory_space<semaphore_mem>>) src(%arg1 : memref<16x256xbf16, #tpu.memory_space<any>>) dst(%arg61 : memref<16x256xbf16, #tpu.memory_space<vmem>>)
    %21 = arith.truncf %16 : vector<8x16xf32> to vector<8x16xbf16>
    %c0_2 = arith.constant 0 : index
    %c0_3 = arith.constant 0 : index
    %22 = vector.load %arg61[%c0_2, %c0_3] : memref<16x256xbf16, #tpu.memory_space<vmem>>, vector<16x256xbf16>
    %cst = arith.constant dense<0.000000e+00> : vector<8x256xf32>
    %23 = tpu.matmul %21, %22, %cst {dimension_numbers = #tpu.dot_dimension_numbers<[1], [0], [0], [1], [0, 0, 1, 1], [], []>} : vector<8x16xbf16>, vector<16x256xbf16>, vector<8x256xf32> -> vector<8x256xf32>
    %c0_4 = arith.constant 0 : index
    %c0_5 = arith.constant 0 : index
    %24 = vector.load %arg30[%c0_4, %c0_5] : memref<1x256xf32, #tpu.memory_space<vmem>>, vector<1x256xf32>
    %25 = vector.broadcast %24 : vector<1x256xf32> to vector<8x256xf32>
    %26 = arith.addf %23, %25 : vector<8x256xf32>
    %cst_6 = arith.constant 0.000000e+00 : f32
    %27 = vector.broadcast %cst_6 : f32 to vector<8x256xf32>
    %28 = arith.maximumf %26, %27 : vector<8x256xf32>
    %c9_i32 = arith.constant 9 : i32
    %29 = tpu.memref_slice %arg90[%c9_i32] : memref<29x!tpu.dma_semaphore, #tpu.memory_space<semaphore_mem>> -> memref<1x!tpu.dma_semaphore, #tpu.memory_space<semaphore_mem>>
    %30 = tpu.memref_squeeze %29 : memref<1x!tpu.dma_semaphore, #tpu.memory_space<semaphore_mem>> -> memref<!tpu.dma_semaphore, #tpu.memory_space<semaphore_mem>>
    tpu.enqueue_dma source(%arg10 : memref<128x256xbf16, #tpu.memory_space<any>>) target(%arg70 : memref<128x256xbf16, #tpu.memory_space<vmem>>) target_semaphore(%30 : memref<!tpu.dma_semaphore, #tpu.memory_space<semaphore_mem>>)
    %c1_i32_7 = arith.constant 1 : i32
    %31 = tpu.memref_slice %arg90[%c1_i32_7] : memref<29x!tpu.dma_semaphore, #tpu.memory_space<semaphore_mem>> -> memref<1x!tpu.dma_semaphore, #tpu.memory_space<semaphore_mem>>
    %32 = tpu.memref_squeeze %31 : memref<1x!tpu.dma_semaphore, #tpu.memory_space<semaphore_mem>> -> memref<!tpu.dma_semaphore, #tpu.memory_space<semaphore_mem>>
    tpu.wait_dma2 semaphore(%32 : memref<!tpu.dma_semaphore, #tpu.memory_space<semaphore_mem>>) src(%arg2 : memref<256x128xbf16, #tpu.memory_space<any>>) dst(%arg62 : memref<256x128xbf16, #tpu.memory_space<vmem>>)
    %33 = arith.truncf %28 : vector<8x256xf32> to vector<8x256xbf16>
    %c0_8 = arith.constant 0 : index
    %c0_9 = arith.constant 0 : index
    %34 = vector.load %arg62[%c0_8, %c0_9] : memref<256x128xbf16, #tpu.memory_space<vmem>>, vector<256x128xbf16>
    %cst_10 = arith.constant dense<0.000000e+00> : vector<8x128xf32>
    %35 = tpu.matmul %33, %34, %cst_10 {dimension_numbers = #tpu.dot_dimension_numbers<[1], [0], [0], [1], [0, 0, 1, 1], [], []>} : vector<8x256xbf16>, vector<256x128xbf16>, vector<8x128xf32> -> vector<8x128xf32>
    %c0_11 = arith.constant 0 : index
    %c0_12 = arith.constant 0 : index
    %36 = vector.load %arg31[%c0_11, %c0_12] : memref<1x128xf32, #tpu.memory_space<vmem>>, vector<1x128xf32>
    %37 = vector.broadcast %36 : vector<1x128xf32> to vector<8x128xf32>
    %38 = arith.addf %35, %37 : vector<8x128xf32>
    %c10_i32 = arith.constant 10 : i32
    %39 = tpu.memref_slice %arg90[%c10_i32] : memref<29x!tpu.dma_semaphore, #tpu.memory_space<semaphore_mem>> -> memref<1x!tpu.dma_semaphore, #tpu.memory_space<semaphore_mem>>
    %40 = tpu.memref_squeeze %39 : memref<1x!tpu.dma_semaphore, #tpu.memory_space<semaphore_mem>> -> memref<!tpu.dma_semaphore, #tpu.memory_space<semaphore_mem>>
    tpu.enqueue_dma source(%arg11 : memref<256x256xbf16, #tpu.memory_space<any>>) target(%arg71 : memref<256x256xbf16, #tpu.memory_space<vmem>>) target_semaphore(%40 : memref<!tpu.dma_semaphore, #tpu.memory_space<semaphore_mem>>)
    %c2_i32_13 = arith.constant 2 : i32
    %41 = tpu.memref_slice %arg90[%c2_i32_13] : memref<29x!tpu.dma_semaphore, #tpu.memory_space<semaphore_mem>> -> memref<1x!tpu.dma_semaphore, #tpu.memory_space<semaphore_mem>>
    %42 = tpu.memref_squeeze %41 : memref<1x!tpu.dma_semaphore, #tpu.memory_space<semaphore_mem>> -> memref<!tpu.dma_semaphore, #tpu.memory_space<semaphore_mem>>
    tpu.wait_dma2 semaphore(%42 : memref<!tpu.dma_semaphore, #tpu.memory_space<semaphore_mem>>) src(%arg3 : memref<16x128xbf16, #tpu.memory_space<any>>) dst(%arg63 : memref<16x128xbf16, #tpu.memory_space<vmem>>)
    %43 = arith.truncf %16 : vector<8x16xf32> to vector<8x16xbf16>
    %c0_14 = arith.constant 0 : index
    %c0_15 = arith.constant 0 : index
    %44 = vector.load %arg63[%c0_14, %c0_15] : memref<16x128xbf16, #tpu.memory_space<vmem>>, vector<16x128xbf16>
    %cst_16 = arith.constant dense<0.000000e+00> : vector<8x128xf32>
    %45 = tpu.matmul %43, %44, %cst_16 {dimension_numbers = #tpu.dot_dimension_numbers<[1], [0], [0], [1], [0, 0, 1, 1], [], []>} : vector<8x16xbf16>, vector<16x128xbf16>, vector<8x128xf32> -> vector<8x128xf32>
    %c0_17 = arith.constant 0 : index
    %c0_18 = arith.constant 0 : index
    %46 = vector.load %arg32[%c0_17, %c0_18] : memref<1x128xf32, #tpu.memory_space<vmem>>, vector<1x128xf32>
    %47 = vector.broadcast %46 : vector<1x128xf32> to vector<8x128xf32>
    %48 = arith.addf %45, %47 : vector<8x128xf32>
    %49 = arith.addf %38, %48 : vector<8x128xf32>
    %cst_19 = arith.constant 0.000000e+00 : f32
    %50 = vector.broadcast %cst_19 : f32 to vector<8x128xf32>
    %51 = arith.maximumf %49, %50 : vector<8x128xf32>
    %cst_20 = arith.constant 0.000000e+00 : f32
    %52 = vector.broadcast %cst_20 : f32 to vector<8x128xf32>
    %53 = arith.cmpf ogt, %51, %52 : vector<8x128xf32>
    %cst_21 = arith.constant 0.00999999977 : f32
    %54 = vector.broadcast %cst_21 : f32 to vector<8x128xf32>
    %55 = arith.mulf %54, %51 : vector<8x128xf32>
    %56 = arith.select %53, %51, %55 : vector<8x128xi1>, vector<8x128xf32>
    %c11_i32 = arith.constant 11 : i32
    %57 = tpu.memref_slice %arg90[%c11_i32] : memref<29x!tpu.dma_semaphore, #tpu.memory_space<semaphore_mem>> -> memref<1x!tpu.dma_semaphore, #tpu.memory_space<semaphore_mem>>
    %58 = tpu.memref_squeeze %57 : memref<1x!tpu.dma_semaphore, #tpu.memory_space<semaphore_mem>> -> memref<!tpu.dma_semaphore, #tpu.memory_space<semaphore_mem>>
    tpu.enqueue_dma source(%arg12 : memref<128x256xbf16, #tpu.memory_space<any>>) target(%arg72 : memref<128x256xbf16, #tpu.memory_space<vmem>>) target_semaphore(%58 : memref<!tpu.dma_semaphore, #tpu.memory_space<semaphore_mem>>)
    %c3_i32_22 = arith.constant 3 : i32
    %59 = tpu.memref_slice %arg90[%c3_i32_22] : memref<29x!tpu.dma_semaphore, #tpu.memory_space<semaphore_mem>> -> memref<1x!tpu.dma_semaphore, #tpu.memory_space<semaphore_mem>>
    %60 = tpu.memref_squeeze %59 : memref<1x!tpu.dma_semaphore, #tpu.memory_space<semaphore_mem>> -> memref<!tpu.dma_semaphore, #tpu.memory_space<semaphore_mem>>
    tpu.wait_dma2 semaphore(%60 : memref<!tpu.dma_semaphore, #tpu.memory_space<semaphore_mem>>) src(%arg4 : memref<128x256xbf16, #tpu.memory_space<any>>) dst(%arg64 : memref<128x256xbf16, #tpu.memory_space<vmem>>)
    %61 = arith.truncf %56 : vector<8x128xf32> to vector<8x128xbf16>
    %c0_23 = arith.constant 0 : index
    %c0_24 = arith.constant 0 : index
    %62 = vector.load %arg64[%c0_23, %c0_24] : memref<128x256xbf16, #tpu.memory_space<vmem>>, vector<128x256xbf16>
    %cst_25 = arith.constant dense<0.000000e+00> : vector<8x256xf32>
    %63 = tpu.matmul %61, %62, %cst_25 {dimension_numbers = #tpu.dot_dimension_numbers<[1], [0], [0], [1], [0, 0, 1, 1], [], []>} : vector<8x128xbf16>, vector<128x256xbf16>, vector<8x256xf32> -> vector<8x256xf32>
    %c0_26 = arith.constant 0 : index
    %c0_27 = arith.constant 0 : index
    %64 = vector.load %arg33[%c0_26, %c0_27] : memref<1x256xf32, #tpu.memory_space<vmem>>, vector<1x256xf32>
    %65 = vector.broadcast %64 : vector<1x256xf32> to vector<8x256xf32>
    %66 = arith.addf %63, %65 : vector<8x256xf32>
    %cst_28 = arith.constant 0.000000e+00 : f32
    %67 = vector.broadcast %cst_28 : f32 to vector<8x256xf32>
    %68 = arith.maximumf %66, %67 : vector<8x256xf32>
    %c12_i32 = arith.constant 12 : i32
    %69 = tpu.memref_slice %arg90[%c12_i32] : memref<29x!tpu.dma_semaphore, #tpu.memory_space<semaphore_mem>> -> memref<1x!tpu.dma_semaphore, #tpu.memory_space<semaphore_mem>>
    %70 = tpu.memref_squeeze %69 : memref<1x!tpu.dma_semaphore, #tpu.memory_space<semaphore_mem>> -> memref<!tpu.dma_semaphore, #tpu.memory_space<semaphore_mem>>
    tpu.enqueue_dma source(%arg13 : memref<256x128xbf16, #tpu.memory_space<any>>) target(%arg73 : memref<256x128xbf16, #tpu.memory_space<vmem>>) target_semaphore(%70 : memref<!tpu.dma_semaphore, #tpu.memory_space<semaphore_mem>>)
    %c4_i32_29 = arith.constant 4 : i32
    %71 = tpu.memref_slice %arg90[%c4_i32_29] : memref<29x!tpu.dma_semaphore, #tpu.memory_space<semaphore_mem>> -> memref<1x!tpu.dma_semaphore, #tpu.memory_space<semaphore_mem>>
    %72 = tpu.memref_squeeze %71 : memref<1x!tpu.dma_semaphore, #tpu.memory_space<semaphore_mem>> -> memref<!tpu.dma_semaphore, #tpu.memory_space<semaphore_mem>>
    tpu.wait_dma2 semaphore(%72 : memref<!tpu.dma_semaphore, #tpu.memory_space<semaphore_mem>>) src(%arg5 : memref<256x128xbf16, #tpu.memory_space<any>>) dst(%arg65 : memref<256x128xbf16, #tpu.memory_space<vmem>>)
    %73 = arith.truncf %68 : vector<8x256xf32> to vector<8x256xbf16>
    %c0_30 = arith.constant 0 : index
    %c0_31 = arith.constant 0 : index
    %74 = vector.load %arg65[%c0_30, %c0_31] : memref<256x128xbf16, #tpu.memory_space<vmem>>, vector<256x128xbf16>
    %cst_32 = arith.constant dense<0.000000e+00> : vector<8x128xf32>
    %75 = tpu.matmul %73, %74, %cst_32 {dimension_numbers = #tpu.dot_dimension_numbers<[1], [0], [0], [1], [0, 0, 1, 1], [], []>} : vector<8x256xbf16>, vector<256x128xbf16>, vector<8x128xf32> -> vector<8x128xf32>
    %c0_33 = arith.constant 0 : index
    %c0_34 = arith.constant 0 : index
    %76 = vector.load %arg34[%c0_33, %c0_34] : memref<1x128xf32, #tpu.memory_space<vmem>>, vector<1x128xf32>
    %77 = vector.broadcast %76 : vector<1x128xf32> to vector<8x128xf32>
    %78 = arith.addf %75, %77 : vector<8x128xf32>
    %79 = arith.addf %78, %56 : vector<8x128xf32>
    %cst_35 = arith.constant 0.000000e+00 : f32
    %80 = vector.broadcast %cst_35 : f32 to vector<8x128xf32>
    %81 = arith.maximumf %79, %80 : vector<8x128xf32>
    %cst_36 = arith.constant 0.000000e+00 : f32
    %82 = vector.broadcast %cst_36 : f32 to vector<8x128xf32>
    %83 = arith.maximumf %81, %82 : vector<8x128xf32>
    %c13_i32 = arith.constant 13 : i32
    %84 = tpu.memref_slice %arg90[%c13_i32] : memref<29x!tpu.dma_semaphore, #tpu.memory_space<semaphore_mem>> -> memref<1x!tpu.dma_semaphore, #tpu.memory_space<semaphore_mem>>
    %85 = tpu.memref_squeeze %84 : memref<1x!tpu.dma_semaphore, #tpu.memory_space<semaphore_mem>> -> memref<!tpu.dma_semaphore, #tpu.memory_space<semaphore_mem>>
    tpu.enqueue_dma source(%arg14 : memref<128x512xbf16, #tpu.memory_space<any>>) target(%arg74 : memref<128x512xbf16, #tpu.memory_space<vmem>>) target_semaphore(%85 : memref<!tpu.dma_semaphore, #tpu.memory_space<semaphore_mem>>)
    %c5_i32_37 = arith.constant 5 : i32
    %86 = tpu.memref_slice %arg90[%c5_i32_37] : memref<29x!tpu.dma_semaphore, #tpu.memory_space<semaphore_mem>> -> memref<1x!tpu.dma_semaphore, #tpu.memory_space<semaphore_mem>>
    %87 = tpu.memref_squeeze %86 : memref<1x!tpu.dma_semaphore, #tpu.memory_space<semaphore_mem>> -> memref<!tpu.dma_semaphore, #tpu.memory_space<semaphore_mem>>
    tpu.wait_dma2 semaphore(%87 : memref<!tpu.dma_semaphore, #tpu.memory_space<semaphore_mem>>) src(%arg6 : memref<128x256xbf16, #tpu.memory_space<any>>) dst(%arg66 : memref<128x256xbf16, #tpu.memory_space<vmem>>)
    %88 = arith.truncf %83 : vector<8x128xf32> to vector<8x128xbf16>
    %c0_38 = arith.constant 0 : index
    %c0_39 = arith.constant 0 : index
    %89 = vector.load %arg66[%c0_38, %c0_39] : memref<128x256xbf16, #tpu.memory_space<vmem>>, vector<128x256xbf16>
    %cst_40 = arith.constant dense<0.000000e+00> : vector<8x256xf32>
    %90 = tpu.matmul %88, %89, %cst_40 {dimension_numbers = #tpu.dot_dimension_numbers<[1], [0], [0], [1], [0, 0, 1, 1], [], []>} : vector<8x128xbf16>, vector<128x256xbf16>, vector<8x256xf32> -> vector<8x256xf32>
    %c0_41 = arith.constant 0 : index
    %c0_42 = arith.constant 0 : index
    %91 = vector.load %arg35[%c0_41, %c0_42] : memref<1x256xf32, #tpu.memory_space<vmem>>, vector<1x256xf32>
    %92 = vector.broadcast %91 : vector<1x256xf32> to vector<8x256xf32>
    %93 = arith.addf %90, %92 : vector<8x256xf32>
    %cst_43 = arith.constant 0.000000e+00 : f32
    %94 = vector.broadcast %cst_43 : f32 to vector<8x256xf32>
    %95 = arith.maximumf %93, %94 : vector<8x256xf32>
    %c14_i32 = arith.constant 14 : i32
    %96 = tpu.memref_slice %arg90[%c14_i32] : memref<29x!tpu.dma_semaphore, #tpu.memory_space<semaphore_mem>> -> memref<1x!tpu.dma_semaphore, #tpu.memory_space<semaphore_mem>>
    %97 = tpu.memref_squeeze %96 : memref<1x!tpu.dma_semaphore, #tpu.memory_space<semaphore_mem>> -> memref<!tpu.dma_semaphore, #tpu.memory_space<semaphore_mem>>
    tpu.enqueue_dma source(%arg15 : memref<256x512xbf16, #tpu.memory_space<any>>) target(%arg75 : memref<256x512xbf16, #tpu.memory_space<vmem>>) target_semaphore(%97 : memref<!tpu.dma_semaphore, #tpu.memory_space<semaphore_mem>>)
    %c6_i32_44 = arith.constant 6 : i32
    %98 = tpu.memref_slice %arg90[%c6_i32_44] : memref<29x!tpu.dma_semaphore, #tpu.memory_space<semaphore_mem>> -> memref<1x!tpu.dma_semaphore, #tpu.memory_space<semaphore_mem>>
    %99 = tpu.memref_squeeze %98 : memref<1x!tpu.dma_semaphore, #tpu.memory_space<semaphore_mem>> -> memref<!tpu.dma_semaphore, #tpu.memory_space<semaphore_mem>>
    tpu.wait_dma2 semaphore(%99 : memref<!tpu.dma_semaphore, #tpu.memory_space<semaphore_mem>>) src(%arg7 : memref<256x128xbf16, #tpu.memory_space<any>>) dst(%arg67 : memref<256x128xbf16, #tpu.memory_space<vmem>>)
    %100 = arith.truncf %95 : vector<8x256xf32> to vector<8x256xbf16>
    %c0_45 = arith.constant 0 : index
    %c0_46 = arith.constant 0 : index
    %101 = vector.load %arg67[%c0_45, %c0_46] : memref<256x128xbf16, #tpu.memory_space<vmem>>, vector<256x128xbf16>
    %cst_47 = arith.constant dense<0.000000e+00> : vector<8x128xf32>
    %102 = tpu.matmul %100, %101, %cst_47 {dimension_numbers = #tpu.dot_dimension_numbers<[1], [0], [0], [1], [0, 0, 1, 1], [], []>} : vector<8x256xbf16>, vector<256x128xbf16>, vector<8x128xf32> -> vector<8x128xf32>
    %c0_48 = arith.constant 0 : index
    %c0_49 = arith.constant 0 : index
    %103 = vector.load %arg36[%c0_48, %c0_49] : memref<1x128xf32, #tpu.memory_space<vmem>>, vector<1x128xf32>
    %104 = vector.broadcast %103 : vector<1x128xf32> to vector<8x128xf32>
    %105 = arith.addf %102, %104 : vector<8x128xf32>
    %106 = arith.addf %105, %83 : vector<8x128xf32>
    %cst_50 = arith.constant 0.000000e+00 : f32
    %107 = vector.broadcast %cst_50 : f32 to vector<8x128xf32>
    %108 = arith.maximumf %106, %107 : vector<8x128xf32>
    %cst_51 = arith.constant 0.000000e+00 : f32
    %109 = vector.broadcast %cst_51 : f32 to vector<8x128xf32>
    %110 = arith.maximumf %108, %109 : vector<8x128xf32>
    %c15_i32 = arith.constant 15 : i32
    %111 = tpu.memref_slice %arg90[%c15_i32] : memref<29x!tpu.dma_semaphore, #tpu.memory_space<semaphore_mem>> -> memref<1x!tpu.dma_semaphore, #tpu.memory_space<semaphore_mem>>
    %112 = tpu.memref_squeeze %111 : memref<1x!tpu.dma_semaphore, #tpu.memory_space<semaphore_mem>> -> memref<!tpu.dma_semaphore, #tpu.memory_space<semaphore_mem>>
    tpu.enqueue_dma source(%arg16 : memref<512x256xbf16, #tpu.memory_space<any>>) target(%arg76 : memref<512x256xbf16, #tpu.memory_space<vmem>>) target_semaphore(%112 : memref<!tpu.dma_semaphore, #tpu.memory_space<semaphore_mem>>)
    %c7_i32_52 = arith.constant 7 : i32
    %113 = tpu.memref_slice %arg90[%c7_i32_52] : memref<29x!tpu.dma_semaphore, #tpu.memory_space<semaphore_mem>> -> memref<1x!tpu.dma_semaphore, #tpu.memory_space<semaphore_mem>>
    %114 = tpu.memref_squeeze %113 : memref<1x!tpu.dma_semaphore, #tpu.memory_space<semaphore_mem>> -> memref<!tpu.dma_semaphore, #tpu.memory_space<semaphore_mem>>
    tpu.wait_dma2 semaphore(%114 : memref<!tpu.dma_semaphore, #tpu.memory_space<semaphore_mem>>) src(%arg8 : memref<128x256xbf16, #tpu.memory_space<any>>) dst(%arg68 : memref<128x256xbf16, #tpu.memory_space<vmem>>)
    %115 = arith.truncf %110 : vector<8x128xf32> to vector<8x128xbf16>
    %c0_53 = arith.constant 0 : index
    %c0_54 = arith.constant 0 : index
    %116 = vector.load %arg68[%c0_53, %c0_54] : memref<128x256xbf16, #tpu.memory_space<vmem>>, vector<128x256xbf16>
    %cst_55 = arith.constant dense<0.000000e+00> : vector<8x256xf32>
    %117 = tpu.matmul %115, %116, %cst_55 {dimension_numbers = #tpu.dot_dimension_numbers<[1], [0], [0], [1], [0, 0, 1, 1], [], []>} : vector<8x128xbf16>, vector<128x256xbf16>, vector<8x256xf32> -> vector<8x256xf32>
    %c0_56 = arith.constant 0 : index
    %c0_57 = arith.constant 0 : index
    %118 = vector.load %arg37[%c0_56, %c0_57] : memref<1x256xf32, #tpu.memory_space<vmem>>, vector<1x256xf32>
    %119 = vector.broadcast %118 : vector<1x256xf32> to vector<8x256xf32>
    %120 = arith.addf %117, %119 : vector<8x256xf32>
    %cst_58 = arith.constant 0.000000e+00 : f32
    %121 = vector.broadcast %cst_58 : f32 to vector<8x256xf32>
    %122 = arith.maximumf %120, %121 : vector<8x256xf32>
    %c16_i32 = arith.constant 16 : i32
    %123 = tpu.memref_slice %arg90[%c16_i32] : memref<29x!tpu.dma_semaphore, #tpu.memory_space<semaphore_mem>> -> memref<1x!tpu.dma_semaphore, #tpu.memory_space<semaphore_mem>>
    %124 = tpu.memref_squeeze %123 : memref<1x!tpu.dma_semaphore, #tpu.memory_space<semaphore_mem>> -> memref<!tpu.dma_semaphore, #tpu.memory_space<semaphore_mem>>
    tpu.enqueue_dma source(%arg17 : memref<256x128xbf16, #tpu.memory_space<any>>) target(%arg77 : memref<256x128xbf16, #tpu.memory_space<vmem>>) target_semaphore(%124 : memref<!tpu.dma_semaphore, #tpu.memory_space<semaphore_mem>>)
    %c8_i32_59 = arith.constant 8 : i32
    %125 = tpu.memref_slice %arg90[%c8_i32_59] : memref<29x!tpu.dma_semaphore, #tpu.memory_space<semaphore_mem>> -> memref<1x!tpu.dma_semaphore, #tpu.memory_space<semaphore_mem>>
    %126 = tpu.memref_squeeze %125 : memref<1x!tpu.dma_semaphore, #tpu.memory_space<semaphore_mem>> -> memref<!tpu.dma_semaphore, #tpu.memory_space<semaphore_mem>>
    tpu.wait_dma2 semaphore(%126 : memref<!tpu.dma_semaphore, #tpu.memory_space<semaphore_mem>>) src(%arg9 : memref<256x128xbf16, #tpu.memory_space<any>>) dst(%arg69 : memref<256x128xbf16, #tpu.memory_space<vmem>>)
    %127 = arith.truncf %122 : vector<8x256xf32> to vector<8x256xbf16>
    %c0_60 = arith.constant 0 : index
    %c0_61 = arith.constant 0 : index
    %128 = vector.load %arg69[%c0_60, %c0_61] : memref<256x128xbf16, #tpu.memory_space<vmem>>, vector<256x128xbf16>
    %cst_62 = arith.constant dense<0.000000e+00> : vector<8x128xf32>
    %129 = tpu.matmul %127, %128, %cst_62 {dimension_numbers = #tpu.dot_dimension_numbers<[1], [0], [0], [1], [0, 0, 1, 1], [], []>} : vector<8x256xbf16>, vector<256x128xbf16>, vector<8x128xf32> -> vector<8x128xf32>
    %c0_63 = arith.constant 0 : index
    %c0_64 = arith.constant 0 : index
    %130 = vector.load %arg38[%c0_63, %c0_64] : memref<1x128xf32, #tpu.memory_space<vmem>>, vector<1x128xf32>
    %131 = vector.broadcast %130 : vector<1x128xf32> to vector<8x128xf32>
    %132 = arith.addf %129, %131 : vector<8x128xf32>
    %133 = arith.addf %132, %110 : vector<8x128xf32>
    %cst_65 = arith.constant 0.000000e+00 : f32
    %134 = vector.broadcast %cst_65 : f32 to vector<8x128xf32>
    %135 = arith.maximumf %133, %134 : vector<8x128xf32>
    %cst_66 = arith.constant 0.000000e+00 : f32
    %136 = vector.broadcast %cst_66 : f32 to vector<8x128xf32>
    %137 = arith.maximumf %135, %136 : vector<8x128xf32>
    %c17_i32 = arith.constant 17 : i32
    %138 = tpu.memref_slice %arg90[%c17_i32] : memref<29x!tpu.dma_semaphore, #tpu.memory_space<semaphore_mem>> -> memref<1x!tpu.dma_semaphore, #tpu.memory_space<semaphore_mem>>
    %139 = tpu.memref_squeeze %138 : memref<1x!tpu.dma_semaphore, #tpu.memory_space<semaphore_mem>> -> memref<!tpu.dma_semaphore, #tpu.memory_space<semaphore_mem>>
    tpu.enqueue_dma source(%arg18 : memref<128x256xbf16, #tpu.memory_space<any>>) target(%arg78 : memref<128x256xbf16, #tpu.memory_space<vmem>>) target_semaphore(%139 : memref<!tpu.dma_semaphore, #tpu.memory_space<semaphore_mem>>)
    %c9_i32_67 = arith.constant 9 : i32
    %140 = tpu.memref_slice %arg90[%c9_i32_67] : memref<29x!tpu.dma_semaphore, #tpu.memory_space<semaphore_mem>> -> memref<1x!tpu.dma_semaphore, #tpu.memory_space<semaphore_mem>>
    %141 = tpu.memref_squeeze %140 : memref<1x!tpu.dma_semaphore, #tpu.memory_space<semaphore_mem>> -> memref<!tpu.dma_semaphore, #tpu.memory_space<semaphore_mem>>
    tpu.wait_dma2 semaphore(%141 : memref<!tpu.dma_semaphore, #tpu.memory_space<semaphore_mem>>) src(%arg10 : memref<128x256xbf16, #tpu.memory_space<any>>) dst(%arg70 : memref<128x256xbf16, #tpu.memory_space<vmem>>)
    %142 = arith.truncf %137 : vector<8x128xf32> to vector<8x128xbf16>
    %c0_68 = arith.constant 0 : index
    %c0_69 = arith.constant 0 : index
    %143 = vector.load %arg70[%c0_68, %c0_69] : memref<128x256xbf16, #tpu.memory_space<vmem>>, vector<128x256xbf16>
    %cst_70 = arith.constant dense<0.000000e+00> : vector<8x256xf32>
    %144 = tpu.matmul %142, %143, %cst_70 {dimension_numbers = #tpu.dot_dimension_numbers<[1], [0], [0], [1], [0, 0, 1, 1], [], []>} : vector<8x128xbf16>, vector<128x256xbf16>, vector<8x256xf32> -> vector<8x256xf32>
    %c0_71 = arith.constant 0 : index
    %c0_72 = arith.constant 0 : index
    %145 = vector.load %arg39[%c0_71, %c0_72] : memref<1x256xf32, #tpu.memory_space<vmem>>, vector<1x256xf32>
    %146 = vector.broadcast %145 : vector<1x256xf32> to vector<8x256xf32>
    %147 = arith.addf %144, %146 : vector<8x256xf32>
    %cst_73 = arith.constant 0.000000e+00 : f32
    %148 = vector.broadcast %cst_73 : f32 to vector<8x256xf32>
    %149 = arith.maximumf %147, %148 : vector<8x256xf32>
    %c18_i32 = arith.constant 18 : i32
    %150 = tpu.memref_slice %arg90[%c18_i32] : memref<29x!tpu.dma_semaphore, #tpu.memory_space<semaphore_mem>> -> memref<1x!tpu.dma_semaphore, #tpu.memory_space<semaphore_mem>>
    %151 = tpu.memref_squeeze %150 : memref<1x!tpu.dma_semaphore, #tpu.memory_space<semaphore_mem>> -> memref<!tpu.dma_semaphore, #tpu.memory_space<semaphore_mem>>
    tpu.enqueue_dma source(%arg19 : memref<256x512xbf16, #tpu.memory_space<any>>) target(%arg79 : memref<256x512xbf16, #tpu.memory_space<vmem>>) target_semaphore(%151 : memref<!tpu.dma_semaphore, #tpu.memory_space<semaphore_mem>>)
    %c10_i32_74 = arith.constant 10 : i32
    %152 = tpu.memref_slice %arg90[%c10_i32_74] : memref<29x!tpu.dma_semaphore, #tpu.memory_space<semaphore_mem>> -> memref<1x!tpu.dma_semaphore, #tpu.memory_space<semaphore_mem>>
    %153 = tpu.memref_squeeze %152 : memref<1x!tpu.dma_semaphore, #tpu.memory_space<semaphore_mem>> -> memref<!tpu.dma_semaphore, #tpu.memory_space<semaphore_mem>>
    tpu.wait_dma2 semaphore(%153 : memref<!tpu.dma_semaphore, #tpu.memory_space<semaphore_mem>>) src(%arg11 : memref<256x256xbf16, #tpu.memory_space<any>>) dst(%arg71 : memref<256x256xbf16, #tpu.memory_space<vmem>>)
    %154 = arith.truncf %149 : vector<8x256xf32> to vector<8x256xbf16>
    %c0_75 = arith.constant 0 : index
    %c0_76 = arith.constant 0 : index
    %155 = vector.load %arg71[%c0_75, %c0_76] : memref<256x256xbf16, #tpu.memory_space<vmem>>, vector<256x256xbf16>
    %cst_77 = arith.constant dense<0.000000e+00> : vector<8x256xf32>
    %156 = tpu.matmul %154, %155, %cst_77 {dimension_numbers = #tpu.dot_dimension_numbers<[1], [0], [0], [1], [0, 0, 1, 1], [], []>} : vector<8x256xbf16>, vector<256x256xbf16>, vector<8x256xf32> -> vector<8x256xf32>
    %c0_78 = arith.constant 0 : index
    %c0_79 = arith.constant 0 : index
    %157 = vector.load %arg40[%c0_78, %c0_79] : memref<1x256xf32, #tpu.memory_space<vmem>>, vector<1x256xf32>
    %158 = vector.broadcast %157 : vector<1x256xf32> to vector<8x256xf32>
    %159 = arith.addf %156, %158 : vector<8x256xf32>
    %c19_i32 = arith.constant 19 : i32
    %160 = tpu.memref_slice %arg90[%c19_i32] : memref<29x!tpu.dma_semaphore, #tpu.memory_space<semaphore_mem>> -> memref<1x!tpu.dma_semaphore, #tpu.memory_space<semaphore_mem>>
    %161 = tpu.memref_squeeze %160 : memref<1x!tpu.dma_semaphore, #tpu.memory_space<semaphore_mem>> -> memref<!tpu.dma_semaphore, #tpu.memory_space<semaphore_mem>>
    tpu.enqueue_dma source(%arg20 : memref<128x512xbf16, #tpu.memory_space<any>>) target(%arg80 : memref<128x512xbf16, #tpu.memory_space<vmem>>) target_semaphore(%161 : memref<!tpu.dma_semaphore, #tpu.memory_space<semaphore_mem>>)
    %c11_i32_80 = arith.constant 11 : i32
    %162 = tpu.memref_slice %arg90[%c11_i32_80] : memref<29x!tpu.dma_semaphore, #tpu.memory_space<semaphore_mem>> -> memref<1x!tpu.dma_semaphore, #tpu.memory_space<semaphore_mem>>
    %163 = tpu.memref_squeeze %162 : memref<1x!tpu.dma_semaphore, #tpu.memory_space<semaphore_mem>> -> memref<!tpu.dma_semaphore, #tpu.memory_space<semaphore_mem>>
    tpu.wait_dma2 semaphore(%163 : memref<!tpu.dma_semaphore, #tpu.memory_space<semaphore_mem>>) src(%arg12 : memref<128x256xbf16, #tpu.memory_space<any>>) dst(%arg72 : memref<128x256xbf16, #tpu.memory_space<vmem>>)
    %164 = arith.truncf %137 : vector<8x128xf32> to vector<8x128xbf16>
    %c0_81 = arith.constant 0 : index
    %c0_82 = arith.constant 0 : index
    %165 = vector.load %arg72[%c0_81, %c0_82] : memref<128x256xbf16, #tpu.memory_space<vmem>>, vector<128x256xbf16>
    %cst_83 = arith.constant dense<0.000000e+00> : vector<8x256xf32>
    %166 = tpu.matmul %164, %165, %cst_83 {dimension_numbers = #tpu.dot_dimension_numbers<[1], [0], [0], [1], [0, 0, 1, 1], [], []>} : vector<8x128xbf16>, vector<128x256xbf16>, vector<8x256xf32> -> vector<8x256xf32>
    %c0_84 = arith.constant 0 : index
    %c0_85 = arith.constant 0 : index
    %167 = vector.load %arg41[%c0_84, %c0_85] : memref<1x256xf32, #tpu.memory_space<vmem>>, vector<1x256xf32>
    %168 = vector.broadcast %167 : vector<1x256xf32> to vector<8x256xf32>
    %169 = arith.addf %166, %168 : vector<8x256xf32>
    %170 = arith.addf %159, %169 : vector<8x256xf32>
    %cst_86 = arith.constant 0.000000e+00 : f32
    %171 = vector.broadcast %cst_86 : f32 to vector<8x256xf32>
    %172 = arith.maximumf %170, %171 : vector<8x256xf32>
    %cst_87 = arith.constant 0.000000e+00 : f32
    %173 = vector.broadcast %cst_87 : f32 to vector<8x256xf32>
    %174 = arith.maximumf %172, %173 : vector<8x256xf32>
    %c20_i32 = arith.constant 20 : i32
    %175 = tpu.memref_slice %arg90[%c20_i32] : memref<29x!tpu.dma_semaphore, #tpu.memory_space<semaphore_mem>> -> memref<1x!tpu.dma_semaphore, #tpu.memory_space<semaphore_mem>>
    %176 = tpu.memref_squeeze %175 : memref<1x!tpu.dma_semaphore, #tpu.memory_space<semaphore_mem>> -> memref<!tpu.dma_semaphore, #tpu.memory_space<semaphore_mem>>
    tpu.enqueue_dma source(%arg21 : memref<512x256xbf16, #tpu.memory_space<any>>) target(%arg81 : memref<512x256xbf16, #tpu.memory_space<vmem>>) target_semaphore(%176 : memref<!tpu.dma_semaphore, #tpu.memory_space<semaphore_mem>>)
    %c12_i32_88 = arith.constant 12 : i32
    %177 = tpu.memref_slice %arg90[%c12_i32_88] : memref<29x!tpu.dma_semaphore, #tpu.memory_space<semaphore_mem>> -> memref<1x!tpu.dma_semaphore, #tpu.memory_space<semaphore_mem>>
    %178 = tpu.memref_squeeze %177 : memref<1x!tpu.dma_semaphore, #tpu.memory_space<semaphore_mem>> -> memref<!tpu.dma_semaphore, #tpu.memory_space<semaphore_mem>>
    tpu.wait_dma2 semaphore(%178 : memref<!tpu.dma_semaphore, #tpu.memory_space<semaphore_mem>>) src(%arg13 : memref<256x128xbf16, #tpu.memory_space<any>>) dst(%arg73 : memref<256x128xbf16, #tpu.memory_space<vmem>>)
    %179 = arith.truncf %174 : vector<8x256xf32> to vector<8x256xbf16>
    %c0_89 = arith.constant 0 : index
    %c0_90 = arith.constant 0 : index
    %180 = vector.load %arg73[%c0_89, %c0_90] : memref<256x128xbf16, #tpu.memory_space<vmem>>, vector<256x128xbf16>
    %cst_91 = arith.constant dense<0.000000e+00> : vector<8x128xf32>
    %181 = tpu.matmul %179, %180, %cst_91 {dimension_numbers = #tpu.dot_dimension_numbers<[1], [0], [0], [1], [0, 0, 1, 1], [], []>} : vector<8x256xbf16>, vector<256x128xbf16>, vector<8x128xf32> -> vector<8x128xf32>
    %c0_92 = arith.constant 0 : index
    %c0_93 = arith.constant 0 : index
    %182 = vector.load %arg42[%c0_92, %c0_93] : memref<1x128xf32, #tpu.memory_space<vmem>>, vector<1x128xf32>
    %183 = vector.broadcast %182 : vector<1x128xf32> to vector<8x128xf32>
    %184 = arith.addf %181, %183 : vector<8x128xf32>
    %cst_94 = arith.constant 0.000000e+00 : f32
    %185 = vector.broadcast %cst_94 : f32 to vector<8x128xf32>
    %186 = arith.maximumf %184, %185 : vector<8x128xf32>
    %c21_i32 = arith.constant 21 : i32
    %187 = tpu.memref_slice %arg90[%c21_i32] : memref<29x!tpu.dma_semaphore, #tpu.memory_space<semaphore_mem>> -> memref<1x!tpu.dma_semaphore, #tpu.memory_space<semaphore_mem>>
    %188 = tpu.memref_squeeze %187 : memref<1x!tpu.dma_semaphore, #tpu.memory_space<semaphore_mem>> -> memref<!tpu.dma_semaphore, #tpu.memory_space<semaphore_mem>>
    tpu.enqueue_dma source(%arg22 : memref<256x512xbf16, #tpu.memory_space<any>>) target(%arg82 : memref<256x512xbf16, #tpu.memory_space<vmem>>) target_semaphore(%188 : memref<!tpu.dma_semaphore, #tpu.memory_space<semaphore_mem>>)
    %c13_i32_95 = arith.constant 13 : i32
    %189 = tpu.memref_slice %arg90[%c13_i32_95] : memref<29x!tpu.dma_semaphore, #tpu.memory_space<semaphore_mem>> -> memref<1x!tpu.dma_semaphore, #tpu.memory_space<semaphore_mem>>
    %190 = tpu.memref_squeeze %189 : memref<1x!tpu.dma_semaphore, #tpu.memory_space<semaphore_mem>> -> memref<!tpu.dma_semaphore, #tpu.memory_space<semaphore_mem>>
    tpu.wait_dma2 semaphore(%190 : memref<!tpu.dma_semaphore, #tpu.memory_space<semaphore_mem>>) src(%arg14 : memref<128x512xbf16, #tpu.memory_space<any>>) dst(%arg74 : memref<128x512xbf16, #tpu.memory_space<vmem>>)
    %191 = arith.truncf %186 : vector<8x128xf32> to vector<8x128xbf16>
    %c0_96 = arith.constant 0 : index
    %c0_97 = arith.constant 0 : index
    %192 = vector.load %arg74[%c0_96, %c0_97] : memref<128x512xbf16, #tpu.memory_space<vmem>>, vector<128x512xbf16>
    %cst_98 = arith.constant dense<0.000000e+00> : vector<8x512xf32>
    %193 = tpu.matmul %191, %192, %cst_98 {dimension_numbers = #tpu.dot_dimension_numbers<[1], [0], [0], [1], [0, 0, 1, 1], [], []>} : vector<8x128xbf16>, vector<128x512xbf16>, vector<8x512xf32> -> vector<8x512xf32>
    %c0_99 = arith.constant 0 : index
    %c0_100 = arith.constant 0 : index
    %194 = vector.load %arg43[%c0_99, %c0_100] : memref<1x512xf32, #tpu.memory_space<vmem>>, vector<1x512xf32>
    %195 = vector.broadcast %194 : vector<1x512xf32> to vector<8x512xf32>
    %196 = arith.addf %193, %195 : vector<8x512xf32>
    %c22_i32 = arith.constant 22 : i32
    %197 = tpu.memref_slice %arg90[%c22_i32] : memref<29x!tpu.dma_semaphore, #tpu.memory_space<semaphore_mem>> -> memref<1x!tpu.dma_semaphore, #tpu.memory_space<semaphore_mem>>
    %198 = tpu.memref_squeeze %197 : memref<1x!tpu.dma_semaphore, #tpu.memory_space<semaphore_mem>> -> memref<!tpu.dma_semaphore, #tpu.memory_space<semaphore_mem>>
    tpu.enqueue_dma source(%arg23 : memref<512x512xbf16, #tpu.memory_space<any>>) target(%arg83 : memref<512x512xbf16, #tpu.memory_space<vmem>>) target_semaphore(%198 : memref<!tpu.dma_semaphore, #tpu.memory_space<semaphore_mem>>)
    %c14_i32_101 = arith.constant 14 : i32
    %199 = tpu.memref_slice %arg90[%c14_i32_101] : memref<29x!tpu.dma_semaphore, #tpu.memory_space<semaphore_mem>> -> memref<1x!tpu.dma_semaphore, #tpu.memory_space<semaphore_mem>>
    %200 = tpu.memref_squeeze %199 : memref<1x!tpu.dma_semaphore, #tpu.memory_space<semaphore_mem>> -> memref<!tpu.dma_semaphore, #tpu.memory_space<semaphore_mem>>
    tpu.wait_dma2 semaphore(%200 : memref<!tpu.dma_semaphore, #tpu.memory_space<semaphore_mem>>) src(%arg15 : memref<256x512xbf16, #tpu.memory_space<any>>) dst(%arg75 : memref<256x512xbf16, #tpu.memory_space<vmem>>)
    %201 = arith.truncf %174 : vector<8x256xf32> to vector<8x256xbf16>
    %c0_102 = arith.constant 0 : index
    %c0_103 = arith.constant 0 : index
    %202 = vector.load %arg75[%c0_102, %c0_103] : memref<256x512xbf16, #tpu.memory_space<vmem>>, vector<256x512xbf16>
    %cst_104 = arith.constant dense<0.000000e+00> : vector<8x512xf32>
    %203 = tpu.matmul %201, %202, %cst_104 {dimension_numbers = #tpu.dot_dimension_numbers<[1], [0], [0], [1], [0, 0, 1, 1], [], []>} : vector<8x256xbf16>, vector<256x512xbf16>, vector<8x512xf32> -> vector<8x512xf32>
    %c0_105 = arith.constant 0 : index
    %c0_106 = arith.constant 0 : index
    %204 = vector.load %arg44[%c0_105, %c0_106] : memref<1x512xf32, #tpu.memory_space<vmem>>, vector<1x512xf32>
    %205 = vector.broadcast %204 : vector<1x512xf32> to vector<8x512xf32>
    %206 = arith.addf %203, %205 : vector<8x512xf32>
    %207 = arith.addf %196, %206 : vector<8x512xf32>
    %cst_107 = arith.constant 0.000000e+00 : f32
    %208 = vector.broadcast %cst_107 : f32 to vector<8x512xf32>
    %209 = arith.maximumf %207, %208 : vector<8x512xf32>
    %cst_108 = arith.constant 0.000000e+00 : f32
    %210 = vector.broadcast %cst_108 : f32 to vector<8x512xf32>
    %211 = arith.maximumf %209, %210 : vector<8x512xf32>
    %c23_i32 = arith.constant 23 : i32
    %212 = tpu.memref_slice %arg90[%c23_i32] : memref<29x!tpu.dma_semaphore, #tpu.memory_space<semaphore_mem>> -> memref<1x!tpu.dma_semaphore, #tpu.memory_space<semaphore_mem>>
    %213 = tpu.memref_squeeze %212 : memref<1x!tpu.dma_semaphore, #tpu.memory_space<semaphore_mem>> -> memref<!tpu.dma_semaphore, #tpu.memory_space<semaphore_mem>>
    tpu.enqueue_dma source(%arg24 : memref<512x128xbf16, #tpu.memory_space<any>>) target(%arg84 : memref<512x128xbf16, #tpu.memory_space<vmem>>) target_semaphore(%213 : memref<!tpu.dma_semaphore, #tpu.memory_space<semaphore_mem>>)
    %c15_i32_109 = arith.constant 15 : i32
    %214 = tpu.memref_slice %arg90[%c15_i32_109] : memref<29x!tpu.dma_semaphore, #tpu.memory_space<semaphore_mem>> -> memref<1x!tpu.dma_semaphore, #tpu.memory_space<semaphore_mem>>
    %215 = tpu.memref_squeeze %214 : memref<1x!tpu.dma_semaphore, #tpu.memory_space<semaphore_mem>> -> memref<!tpu.dma_semaphore, #tpu.memory_space<semaphore_mem>>
    tpu.wait_dma2 semaphore(%215 : memref<!tpu.dma_semaphore, #tpu.memory_space<semaphore_mem>>) src(%arg16 : memref<512x256xbf16, #tpu.memory_space<any>>) dst(%arg76 : memref<512x256xbf16, #tpu.memory_space<vmem>>)
    %216 = arith.truncf %211 : vector<8x512xf32> to vector<8x512xbf16>
    %c0_110 = arith.constant 0 : index
    %c0_111 = arith.constant 0 : index
    %217 = vector.load %arg76[%c0_110, %c0_111] : memref<512x256xbf16, #tpu.memory_space<vmem>>, vector<512x256xbf16>
    %cst_112 = arith.constant dense<0.000000e+00> : vector<8x256xf32>
    %218 = tpu.matmul %216, %217, %cst_112 {dimension_numbers = #tpu.dot_dimension_numbers<[1], [0], [0], [1], [0, 0, 1, 1], [], []>} : vector<8x512xbf16>, vector<512x256xbf16>, vector<8x256xf32> -> vector<8x256xf32>
    %c0_113 = arith.constant 0 : index
    %c0_114 = arith.constant 0 : index
    %219 = vector.load %arg45[%c0_113, %c0_114] : memref<1x256xf32, #tpu.memory_space<vmem>>, vector<1x256xf32>
    %220 = vector.broadcast %219 : vector<1x256xf32> to vector<8x256xf32>
    %221 = arith.addf %218, %220 : vector<8x256xf32>
    %cst_115 = arith.constant 0.000000e+00 : f32
    %222 = vector.broadcast %cst_115 : f32 to vector<8x256xf32>
    %223 = arith.maximumf %221, %222 : vector<8x256xf32>
    %c24_i32 = arith.constant 24 : i32
    %224 = tpu.memref_slice %arg90[%c24_i32] : memref<29x!tpu.dma_semaphore, #tpu.memory_space<semaphore_mem>> -> memref<1x!tpu.dma_semaphore, #tpu.memory_space<semaphore_mem>>
    %225 = tpu.memref_squeeze %224 : memref<1x!tpu.dma_semaphore, #tpu.memory_space<semaphore_mem>> -> memref<!tpu.dma_semaphore, #tpu.memory_space<semaphore_mem>>
    tpu.enqueue_dma source(%arg25 : memref<128x256xbf16, #tpu.memory_space<any>>) target(%arg85 : memref<128x256xbf16, #tpu.memory_space<vmem>>) target_semaphore(%225 : memref<!tpu.dma_semaphore, #tpu.memory_space<semaphore_mem>>)
    %c16_i32_116 = arith.constant 16 : i32
    %226 = tpu.memref_slice %arg90[%c16_i32_116] : memref<29x!tpu.dma_semaphore, #tpu.memory_space<semaphore_mem>> -> memref<1x!tpu.dma_semaphore, #tpu.memory_space<semaphore_mem>>
    %227 = tpu.memref_squeeze %226 : memref<1x!tpu.dma_semaphore, #tpu.memory_space<semaphore_mem>> -> memref<!tpu.dma_semaphore, #tpu.memory_space<semaphore_mem>>
    tpu.wait_dma2 semaphore(%227 : memref<!tpu.dma_semaphore, #tpu.memory_space<semaphore_mem>>) src(%arg17 : memref<256x128xbf16, #tpu.memory_space<any>>) dst(%arg77 : memref<256x128xbf16, #tpu.memory_space<vmem>>)
    %228 = arith.truncf %223 : vector<8x256xf32> to vector<8x256xbf16>
    %c0_117 = arith.constant 0 : index
    %c0_118 = arith.constant 0 : index
    %229 = vector.load %arg77[%c0_117, %c0_118] : memref<256x128xbf16, #tpu.memory_space<vmem>>, vector<256x128xbf16>
    %cst_119 = arith.constant dense<0.000000e+00> : vector<8x128xf32>
    %230 = tpu.matmul %228, %229, %cst_119 {dimension_numbers = #tpu.dot_dimension_numbers<[1], [0], [0], [1], [0, 0, 1, 1], [], []>} : vector<8x256xbf16>, vector<256x128xbf16>, vector<8x128xf32> -> vector<8x128xf32>
    %c0_120 = arith.constant 0 : index
    %c0_121 = arith.constant 0 : index
    %231 = vector.load %arg46[%c0_120, %c0_121] : memref<1x128xf32, #tpu.memory_space<vmem>>, vector<1x128xf32>
    %232 = vector.broadcast %231 : vector<1x128xf32> to vector<8x128xf32>
    %233 = arith.addf %230, %232 : vector<8x128xf32>
    %234 = math.tanh %233 : vector<8x128xf32>
    %cst_122 = arith.constant 1.000000e+00 : f32
    %235 = vector.broadcast %cst_122 : f32 to vector<8x128xf32>
    %236 = arith.addf %234, %235 : vector<8x128xf32>
    %cst_123 = arith.constant 9.500000e+01 : f32
    %237 = vector.broadcast %cst_123 : f32 to vector<8x128xf32>
    %238 = arith.mulf %236, %237 : vector<8x128xf32>
    %cst_124 = arith.constant 1.000000e+01 : f32
    %239 = vector.broadcast %cst_124 : f32 to vector<8x128xf32>
    %240 = arith.addf %238, %239 : vector<8x128xf32>
    %c0_125 = arith.constant 0 : index
    %c0_126 = arith.constant 0 : index
    %241 = vector.load %arg59[%c0_125, %c0_126] : memref<8x128xf32, #tpu.memory_space<vmem>>, vector<8x128xf32>
    tpu.vector_store %arg59[%c0_125, %c0_126], %240 {strides = array<i32>} : memref<8x128xf32, #tpu.memory_space<vmem>>, vector<8x128xf32>,
    %c25_i32 = arith.constant 25 : i32
    %242 = tpu.memref_slice %arg90[%c25_i32] : memref<29x!tpu.dma_semaphore, #tpu.memory_space<semaphore_mem>> -> memref<1x!tpu.dma_semaphore, #tpu.memory_space<semaphore_mem>>
    %243 = tpu.memref_squeeze %242 : memref<1x!tpu.dma_semaphore, #tpu.memory_space<semaphore_mem>> -> memref<!tpu.dma_semaphore, #tpu.memory_space<semaphore_mem>>
    tpu.enqueue_dma source(%arg26 : memref<512x256xbf16, #tpu.memory_space<any>>) target(%arg86 : memref<512x256xbf16, #tpu.memory_space<vmem>>) target_semaphore(%243 : memref<!tpu.dma_semaphore, #tpu.memory_space<semaphore_mem>>)
    %c17_i32_127 = arith.constant 17 : i32
    %244 = tpu.memref_slice %arg90[%c17_i32_127] : memref<29x!tpu.dma_semaphore, #tpu.memory_space<semaphore_mem>> -> memref<1x!tpu.dma_semaphore, #tpu.memory_space<semaphore_mem>>
    %245 = tpu.memref_squeeze %244 : memref<1x!tpu.dma_semaphore, #tpu.memory_space<semaphore_mem>> -> memref<!tpu.dma_semaphore, #tpu.memory_space<semaphore_mem>>
    tpu.wait_dma2 semaphore(%245 : memref<!tpu.dma_semaphore, #tpu.memory_space<semaphore_mem>>) src(%arg18 : memref<128x256xbf16, #tpu.memory_space<any>>) dst(%arg78 : memref<128x256xbf16, #tpu.memory_space<vmem>>)
    %246 = arith.truncf %137 : vector<8x128xf32> to vector<8x128xbf16>
    %c0_128 = arith.constant 0 : index
    %c0_129 = arith.constant 0 : index
    %247 = vector.load %arg78[%c0_128, %c0_129] : memref<128x256xbf16, #tpu.memory_space<vmem>>, vector<128x256xbf16>
    %cst_130 = arith.constant dense<0.000000e+00> : vector<8x256xf32>
    %248 = tpu.matmul %246, %247, %cst_130 {dimension_numbers = #tpu.dot_dimension_numbers<[1], [0], [0], [1], [0, 0, 1, 1], [], []>} : vector<8x128xbf16>, vector<128x256xbf16>, vector<8x256xf32> -> vector<8x256xf32>
    %c0_131 = arith.constant 0 : index
    %c0_132 = arith.constant 0 : index
    %249 = vector.load %arg47[%c0_131, %c0_132] : memref<1x256xf32, #tpu.memory_space<vmem>>, vector<1x256xf32>
    %250 = vector.broadcast %249 : vector<1x256xf32> to vector<8x256xf32>
    %251 = arith.addf %248, %250 : vector<8x256xf32>
    %cst_133 = arith.constant 0.000000e+00 : f32
    %252 = vector.broadcast %cst_133 : f32 to vector<8x256xf32>
    %253 = arith.maximumf %251, %252 : vector<8x256xf32>
    %c26_i32 = arith.constant 26 : i32
    %254 = tpu.memref_slice %arg90[%c26_i32] : memref<29x!tpu.dma_semaphore, #tpu.memory_space<semaphore_mem>> -> memref<1x!tpu.dma_semaphore, #tpu.memory_space<semaphore_mem>>
    %255 = tpu.memref_squeeze %254 : memref<1x!tpu.dma_semaphore, #tpu.memory_space<semaphore_mem>> -> memref<!tpu.dma_semaphore, #tpu.memory_space<semaphore_mem>>
    tpu.enqueue_dma source(%arg27 : memref<256x512xbf16, #tpu.memory_space<any>>) target(%arg87 : memref<256x512xbf16, #tpu.memory_space<vmem>>) target_semaphore(%255 : memref<!tpu.dma_semaphore, #tpu.memory_space<semaphore_mem>>)
    %c18_i32_134 = arith.constant 18 : i32
    %256 = tpu.memref_slice %arg90[%c18_i32_134] : memref<29x!tpu.dma_semaphore, #tpu.memory_space<semaphore_mem>> -> memref<1x!tpu.dma_semaphore, #tpu.memory_space<semaphore_mem>>
    %257 = tpu.memref_squeeze %256 : memref<1x!tpu.dma_semaphore, #tpu.memory_space<semaphore_mem>> -> memref<!tpu.dma_semaphore, #tpu.memory_space<semaphore_mem>>
    tpu.wait_dma2 semaphore(%257 : memref<!tpu.dma_semaphore, #tpu.memory_space<semaphore_mem>>) src(%arg19 : memref<256x512xbf16, #tpu.memory_space<any>>) dst(%arg79 : memref<256x512xbf16, #tpu.memory_space<vmem>>)
    %258 = arith.truncf %253 : vector<8x256xf32> to vector<8x256xbf16>
    %c0_135 = arith.constant 0 : index
    %c0_136 = arith.constant 0 : index
    %259 = vector.load %arg79[%c0_135, %c0_136] : memref<256x512xbf16, #tpu.memory_space<vmem>>, vector<256x512xbf16>
    %cst_137 = arith.constant dense<0.000000e+00> : vector<8x512xf32>
    %260 = tpu.matmul %258, %259, %cst_137 {dimension_numbers = #tpu.dot_dimension_numbers<[1], [0], [0], [1], [0, 0, 1, 1], [], []>} : vector<8x256xbf16>, vector<256x512xbf16>, vector<8x512xf32> -> vector<8x512xf32>
    %c0_138 = arith.constant 0 : index
    %c0_139 = arith.constant 0 : index
    %261 = vector.load %arg48[%c0_138, %c0_139] : memref<1x512xf32, #tpu.memory_space<vmem>>, vector<1x512xf32>
    %262 = vector.broadcast %261 : vector<1x512xf32> to vector<8x512xf32>
    %263 = arith.addf %260, %262 : vector<8x512xf32>
    %c27_i32 = arith.constant 27 : i32
    %264 = tpu.memref_slice %arg90[%c27_i32] : memref<29x!tpu.dma_semaphore, #tpu.memory_space<semaphore_mem>> -> memref<1x!tpu.dma_semaphore, #tpu.memory_space<semaphore_mem>>
    %265 = tpu.memref_squeeze %264 : memref<1x!tpu.dma_semaphore, #tpu.memory_space<semaphore_mem>> -> memref<!tpu.dma_semaphore, #tpu.memory_space<semaphore_mem>>
    tpu.enqueue_dma source(%arg28 : memref<512x128xbf16, #tpu.memory_space<any>>) target(%arg88 : memref<512x128xbf16, #tpu.memory_space<vmem>>) target_semaphore(%265 : memref<!tpu.dma_semaphore, #tpu.memory_space<semaphore_mem>>)
    %c19_i32_140 = arith.constant 19 : i32
    %266 = tpu.memref_slice %arg90[%c19_i32_140] : memref<29x!tpu.dma_semaphore, #tpu.memory_space<semaphore_mem>> -> memref<1x!tpu.dma_semaphore, #tpu.memory_space<semaphore_mem>>
    %267 = tpu.memref_squeeze %266 : memref<1x!tpu.dma_semaphore, #tpu.memory_space<semaphore_mem>> -> memref<!tpu.dma_semaphore, #tpu.memory_space<semaphore_mem>>
    tpu.wait_dma2 semaphore(%267 : memref<!tpu.dma_semaphore, #tpu.memory_space<semaphore_mem>>) src(%arg20 : memref<128x512xbf16, #tpu.memory_space<any>>) dst(%arg80 : memref<128x512xbf16, #tpu.memory_space<vmem>>)
    %268 = arith.truncf %137 : vector<8x128xf32> to vector<8x128xbf16>
    %c0_141 = arith.constant 0 : index
    %c0_142 = arith.constant 0 : index
    %269 = vector.load %arg80[%c0_141, %c0_142] : memref<128x512xbf16, #tpu.memory_space<vmem>>, vector<128x512xbf16>
    %cst_143 = arith.constant dense<0.000000e+00> : vector<8x512xf32>
    %270 = tpu.matmul %268, %269, %cst_143 {dimension_numbers = #tpu.dot_dimension_numbers<[1], [0], [0], [1], [0, 0, 1, 1], [], []>} : vector<8x128xbf16>, vector<128x512xbf16>, vector<8x512xf32> -> vector<8x512xf32>
    %c0_144 = arith.constant 0 : index
    %c0_145 = arith.constant 0 : index
    %271 = vector.load %arg49[%c0_144, %c0_145] : memref<1x512xf32, #tpu.memory_space<vmem>>, vector<1x512xf32>
    %272 = vector.broadcast %271 : vector<1x512xf32> to vector<8x512xf32>
    %273 = arith.addf %270, %272 : vector<8x512xf32>
    %274 = arith.addf %263, %273 : vector<8x512xf32>
    %cst_146 = arith.constant 0.000000e+00 : f32
    %275 = vector.broadcast %cst_146 : f32 to vector<8x512xf32>
    %276 = arith.maximumf %274, %275 : vector<8x512xf32>
    %cst_147 = arith.constant 0.000000e+00 : f32
    %277 = vector.broadcast %cst_147 : f32 to vector<8x512xf32>
    %278 = arith.maximumf %276, %277 : vector<8x512xf32>
    %c28_i32 = arith.constant 28 : i32
    %279 = tpu.memref_slice %arg90[%c28_i32] : memref<29x!tpu.dma_semaphore, #tpu.memory_space<semaphore_mem>> -> memref<1x!tpu.dma_semaphore, #tpu.memory_space<semaphore_mem>>
    %280 = tpu.memref_squeeze %279 : memref<1x!tpu.dma_semaphore, #tpu.memory_space<semaphore_mem>> -> memref<!tpu.dma_semaphore, #tpu.memory_space<semaphore_mem>>
    tpu.enqueue_dma source(%arg29 : memref<128x128xbf16, #tpu.memory_space<any>>) target(%arg89 : memref<128x128xbf16, #tpu.memory_space<vmem>>) target_semaphore(%280 : memref<!tpu.dma_semaphore, #tpu.memory_space<semaphore_mem>>)
    %c20_i32_148 = arith.constant 20 : i32
    %281 = tpu.memref_slice %arg90[%c20_i32_148] : memref<29x!tpu.dma_semaphore, #tpu.memory_space<semaphore_mem>> -> memref<1x!tpu.dma_semaphore, #tpu.memory_space<semaphore_mem>>
    %282 = tpu.memref_squeeze %281 : memref<1x!tpu.dma_semaphore, #tpu.memory_space<semaphore_mem>> -> memref<!tpu.dma_semaphore, #tpu.memory_space<semaphore_mem>>
    tpu.wait_dma2 semaphore(%282 : memref<!tpu.dma_semaphore, #tpu.memory_space<semaphore_mem>>) src(%arg21 : memref<512x256xbf16, #tpu.memory_space<any>>) dst(%arg81 : memref<512x256xbf16, #tpu.memory_space<vmem>>)
    %283 = arith.truncf %278 : vector<8x512xf32> to vector<8x512xbf16>
    %c0_149 = arith.constant 0 : index
    %c0_150 = arith.constant 0 : index
    %284 = vector.load %arg81[%c0_149, %c0_150] : memref<512x256xbf16, #tpu.memory_space<vmem>>, vector<512x256xbf16>
    %cst_151 = arith.constant dense<0.000000e+00> : vector<8x256xf32>
    %285 = tpu.matmul %283, %284, %cst_151 {dimension_numbers = #tpu.dot_dimension_numbers<[1], [0], [0], [1], [0, 0, 1, 1], [], []>} : vector<8x512xbf16>, vector<512x256xbf16>, vector<8x256xf32> -> vector<8x256xf32>
    %c0_152 = arith.constant 0 : index
    %c0_153 = arith.constant 0 : index
    %286 = vector.load %arg50[%c0_152, %c0_153] : memref<1x256xf32, #tpu.memory_space<vmem>>, vector<1x256xf32>
    %287 = vector.broadcast %286 : vector<1x256xf32> to vector<8x256xf32>
    %288 = arith.addf %285, %287 : vector<8x256xf32>
    %cst_154 = arith.constant 0.000000e+00 : f32
    %289 = vector.broadcast %cst_154 : f32 to vector<8x256xf32>
    %290 = arith.maximumf %288, %289 : vector<8x256xf32>
    %c21_i32_155 = arith.constant 21 : i32
    %291 = tpu.memref_slice %arg90[%c21_i32_155] : memref<29x!tpu.dma_semaphore, #tpu.memory_space<semaphore_mem>> -> memref<1x!tpu.dma_semaphore, #tpu.memory_space<semaphore_mem>>
    %292 = tpu.memref_squeeze %291 : memref<1x!tpu.dma_semaphore, #tpu.memory_space<semaphore_mem>> -> memref<!tpu.dma_semaphore, #tpu.memory_space<semaphore_mem>>
    tpu.wait_dma2 semaphore(%292 : memref<!tpu.dma_semaphore, #tpu.memory_space<semaphore_mem>>) src(%arg22 : memref<256x512xbf16, #tpu.memory_space<any>>) dst(%arg82 : memref<256x512xbf16, #tpu.memory_space<vmem>>)
    %293 = arith.truncf %290 : vector<8x256xf32> to vector<8x256xbf16>
    %c0_156 = arith.constant 0 : index
    %c0_157 = arith.constant 0 : index
    %294 = vector.load %arg82[%c0_156, %c0_157] : memref<256x512xbf16, #tpu.memory_space<vmem>>, vector<256x512xbf16>
    %cst_158 = arith.constant dense<0.000000e+00> : vector<8x512xf32>
    %295 = tpu.matmul %293, %294, %cst_158 {dimension_numbers = #tpu.dot_dimension_numbers<[1], [0], [0], [1], [0, 0, 1, 1], [], []>} : vector<8x256xbf16>, vector<256x512xbf16>, vector<8x512xf32> -> vector<8x512xf32>
    %c0_159 = arith.constant 0 : index
    %c0_160 = arith.constant 0 : index
    %296 = vector.load %arg51[%c0_159, %c0_160] : memref<1x512xf32, #tpu.memory_space<vmem>>, vector<1x512xf32>
    %297 = vector.broadcast %296 : vector<1x512xf32> to vector<8x512xf32>
    %298 = arith.addf %295, %297 : vector<8x512xf32>
    %c22_i32_161 = arith.constant 22 : i32
    %299 = tpu.memref_slice %arg90[%c22_i32_161] : memref<29x!tpu.dma_semaphore, #tpu.memory_space<semaphore_mem>> -> memref<1x!tpu.dma_semaphore, #tpu.memory_space<semaphore_mem>>
    %300 = tpu.memref_squeeze %299 : memref<1x!tpu.dma_semaphore, #tpu.memory_space<semaphore_mem>> -> memref<!tpu.dma_semaphore, #tpu.memory_space<semaphore_mem>>
    tpu.wait_dma2 semaphore(%300 : memref<!tpu.dma_semaphore, #tpu.memory_space<semaphore_mem>>) src(%arg23 : memref<512x512xbf16, #tpu.memory_space<any>>) dst(%arg83 : memref<512x512xbf16, #tpu.memory_space<vmem>>)
    %301 = arith.truncf %278 : vector<8x512xf32> to vector<8x512xbf16>
    %c0_162 = arith.constant 0 : index
    %c0_163 = arith.constant 0 : index
    %302 = vector.load %arg83[%c0_162, %c0_163] : memref<512x512xbf16, #tpu.memory_space<vmem>>, vector<512x512xbf16>
    %cst_164 = arith.constant dense<0.000000e+00> : vector<8x512xf32>
    %303 = tpu.matmul %301, %302, %cst_164 {dimension_numbers = #tpu.dot_dimension_numbers<[1], [0], [0], [1], [0, 0, 1, 1], [], []>} : vector<8x512xbf16>, vector<512x512xbf16>, vector<8x512xf32> -> vector<8x512xf32>
    %c0_165 = arith.constant 0 : index
    %c0_166 = arith.constant 0 : index
    %304 = vector.load %arg52[%c0_165, %c0_166] : memref<1x512xf32, #tpu.memory_space<vmem>>, vector<1x512xf32>
    %305 = vector.broadcast %304 : vector<1x512xf32> to vector<8x512xf32>
    %306 = arith.addf %303, %305 : vector<8x512xf32>
    %307 = arith.addf %298, %306 : vector<8x512xf32>
    %cst_167 = arith.constant 0.000000e+00 : f32
    %308 = vector.broadcast %cst_167 : f32 to vector<8x512xf32>
    %309 = arith.maximumf %307, %308 : vector<8x512xf32>
    %cst_168 = arith.constant 0.000000e+00 : f32
    %310 = vector.broadcast %cst_168 : f32 to vector<8x512xf32>
    %311 = arith.maximumf %309, %310 : vector<8x512xf32>
    %c23_i32_169 = arith.constant 23 : i32
    %312 = tpu.memref_slice %arg90[%c23_i32_169] : memref<29x!tpu.dma_semaphore, #tpu.memory_space<semaphore_mem>> -> memref<1x!tpu.dma_semaphore, #tpu.memory_space<semaphore_mem>>
    %313 = tpu.memref_squeeze %312 : memref<1x!tpu.dma_semaphore, #tpu.memory_space<semaphore_mem>> -> memref<!tpu.dma_semaphore, #tpu.memory_space<semaphore_mem>>
    tpu.wait_dma2 semaphore(%313 : memref<!tpu.dma_semaphore, #tpu.memory_space<semaphore_mem>>) src(%arg24 : memref<512x128xbf16, #tpu.memory_space<any>>) dst(%arg84 : memref<512x128xbf16, #tpu.memory_space<vmem>>)
    %314 = arith.truncf %311 : vector<8x512xf32> to vector<8x512xbf16>
    %c0_170 = arith.constant 0 : index
    %c0_171 = arith.constant 0 : index
    %315 = vector.load %arg84[%c0_170, %c0_171] : memref<512x128xbf16, #tpu.memory_space<vmem>>, vector<512x128xbf16>
    %cst_172 = arith.constant dense<0.000000e+00> : vector<8x128xf32>
    %316 = tpu.matmul %314, %315, %cst_172 {dimension_numbers = #tpu.dot_dimension_numbers<[1], [0], [0], [1], [0, 0, 1, 1], [], []>} : vector<8x512xbf16>, vector<512x128xbf16>, vector<8x128xf32> -> vector<8x128xf32>
    %c0_173 = arith.constant 0 : index
    %c0_174 = arith.constant 0 : index
    %317 = vector.load %arg53[%c0_173, %c0_174] : memref<1x128xf32, #tpu.memory_space<vmem>>, vector<1x128xf32>
    %318 = vector.broadcast %317 : vector<1x128xf32> to vector<8x128xf32>
    %319 = arith.addf %316, %318 : vector<8x128xf32>
    %cst_175 = arith.constant 0.000000e+00 : f32
    %320 = vector.broadcast %cst_175 : f32 to vector<8x128xf32>
    %321 = arith.maximumf %319, %320 : vector<8x128xf32>
    %c24_i32_176 = arith.constant 24 : i32
    %322 = tpu.memref_slice %arg90[%c24_i32_176] : memref<29x!tpu.dma_semaphore, #tpu.memory_space<semaphore_mem>> -> memref<1x!tpu.dma_semaphore, #tpu.memory_space<semaphore_mem>>
    %323 = tpu.memref_squeeze %322 : memref<1x!tpu.dma_semaphore, #tpu.memory_space<semaphore_mem>> -> memref<!tpu.dma_semaphore, #tpu.memory_space<semaphore_mem>>
    tpu.wait_dma2 semaphore(%323 : memref<!tpu.dma_semaphore, #tpu.memory_space<semaphore_mem>>) src(%arg25 : memref<128x256xbf16, #tpu.memory_space<any>>) dst(%arg85 : memref<128x256xbf16, #tpu.memory_space<vmem>>)
    %324 = arith.truncf %321 : vector<8x128xf32> to vector<8x128xbf16>
    %c0_177 = arith.constant 0 : index
    %c0_178 = arith.constant 0 : index
    %325 = vector.load %arg85[%c0_177, %c0_178] : memref<128x256xbf16, #tpu.memory_space<vmem>>, vector<128x256xbf16>
    %cst_179 = arith.constant dense<0.000000e+00> : vector<8x256xf32>
    %326 = tpu.matmul %324, %325, %cst_179 {dimension_numbers = #tpu.dot_dimension_numbers<[1], [0], [0], [1], [0, 0, 1, 1], [], []>} : vector<8x128xbf16>, vector<128x256xbf16>, vector<8x256xf32> -> vector<8x256xf32>
    %c0_180 = arith.constant 0 : index
    %c0_181 = arith.constant 0 : index
    %327 = vector.load %arg54[%c0_180, %c0_181] : memref<1x256xf32, #tpu.memory_space<vmem>>, vector<1x256xf32>
    %328 = vector.broadcast %327 : vector<1x256xf32> to vector<8x256xf32>
    %329 = arith.addf %326, %328 : vector<8x256xf32>
    %c25_i32_182 = arith.constant 25 : i32
    %330 = tpu.memref_slice %arg90[%c25_i32_182] : memref<29x!tpu.dma_semaphore, #tpu.memory_space<semaphore_mem>> -> memref<1x!tpu.dma_semaphore, #tpu.memory_space<semaphore_mem>>
    %331 = tpu.memref_squeeze %330 : memref<1x!tpu.dma_semaphore, #tpu.memory_space<semaphore_mem>> -> memref<!tpu.dma_semaphore, #tpu.memory_space<semaphore_mem>>
    tpu.wait_dma2 semaphore(%331 : memref<!tpu.dma_semaphore, #tpu.memory_space<semaphore_mem>>) src(%arg26 : memref<512x256xbf16, #tpu.memory_space<any>>) dst(%arg86 : memref<512x256xbf16, #tpu.memory_space<vmem>>)
    %332 = arith.truncf %311 : vector<8x512xf32> to vector<8x512xbf16>
    %c0_183 = arith.constant 0 : index
    %c0_184 = arith.constant 0 : index
    %333 = vector.load %arg86[%c0_183, %c0_184] : memref<512x256xbf16, #tpu.memory_space<vmem>>, vector<512x256xbf16>
    %cst_185 = arith.constant dense<0.000000e+00> : vector<8x256xf32>
    %334 = tpu.matmul %332, %333, %cst_185 {dimension_numbers = #tpu.dot_dimension_numbers<[1], [0], [0], [1], [0, 0, 1, 1], [], []>} : vector<8x512xbf16>, vector<512x256xbf16>, vector<8x256xf32> -> vector<8x256xf32>
    %c0_186 = arith.constant 0 : index
    %c0_187 = arith.constant 0 : index
    %335 = vector.load %arg55[%c0_186, %c0_187] : memref<1x256xf32, #tpu.memory_space<vmem>>, vector<1x256xf32>
    %336 = vector.broadcast %335 : vector<1x256xf32> to vector<8x256xf32>
    %337 = arith.addf %334, %336 : vector<8x256xf32>
    %338 = arith.addf %329, %337 : vector<8x256xf32>
    %cst_188 = arith.constant 0.000000e+00 : f32
    %339 = vector.broadcast %cst_188 : f32 to vector<8x256xf32>
    %340 = arith.maximumf %338, %339 : vector<8x256xf32>
    %cst_189 = arith.constant 0.000000e+00 : f32
    %341 = vector.broadcast %cst_189 : f32 to vector<8x256xf32>
    %342 = arith.maximumf %340, %341 : vector<8x256xf32>
    %c26_i32_190 = arith.constant 26 : i32
    %343 = tpu.memref_slice %arg90[%c26_i32_190] : memref<29x!tpu.dma_semaphore, #tpu.memory_space<semaphore_mem>> -> memref<1x!tpu.dma_semaphore, #tpu.memory_space<semaphore_mem>>
    %344 = tpu.memref_squeeze %343 : memref<1x!tpu.dma_semaphore, #tpu.memory_space<semaphore_mem>> -> memref<!tpu.dma_semaphore, #tpu.memory_space<semaphore_mem>>
    tpu.wait_dma2 semaphore(%344 : memref<!tpu.dma_semaphore, #tpu.memory_space<semaphore_mem>>) src(%arg27 : memref<256x512xbf16, #tpu.memory_space<any>>) dst(%arg87 : memref<256x512xbf16, #tpu.memory_space<vmem>>)
    %345 = arith.truncf %342 : vector<8x256xf32> to vector<8x256xbf16>
    %c0_191 = arith.constant 0 : index
    %c0_192 = arith.constant 0 : index
    %346 = vector.load %arg87[%c0_191, %c0_192] : memref<256x512xbf16, #tpu.memory_space<vmem>>, vector<256x512xbf16>
    %cst_193 = arith.constant dense<0.000000e+00> : vector<8x512xf32>
    %347 = tpu.matmul %345, %346, %cst_193 {dimension_numbers = #tpu.dot_dimension_numbers<[1], [0], [0], [1], [0, 0, 1, 1], [], []>} : vector<8x256xbf16>, vector<256x512xbf16>, vector<8x512xf32> -> vector<8x512xf32>
    %c0_194 = arith.constant 0 : index
    %c0_195 = arith.constant 0 : index
    %348 = vector.load %arg56[%c0_194, %c0_195] : memref<1x512xf32, #tpu.memory_space<vmem>>, vector<1x512xf32>
    %349 = vector.broadcast %348 : vector<1x512xf32> to vector<8x512xf32>
    %350 = arith.addf %347, %349 : vector<8x512xf32>
    %cst_196 = arith.constant 0.000000e+00 : f32
    %351 = vector.broadcast %cst_196 : f32 to vector<8x512xf32>
    %352 = arith.maximumf %350, %351 : vector<8x512xf32>
    %c27_i32_197 = arith.constant 27 : i32
    %353 = tpu.memref_slice %arg90[%c27_i32_197] : memref<29x!tpu.dma_semaphore, #tpu.memory_space<semaphore_mem>> -> memref<1x!tpu.dma_semaphore, #tpu.memory_space<semaphore_mem>>
    %354 = tpu.memref_squeeze %353 : memref<1x!tpu.dma_semaphore, #tpu.memory_space<semaphore_mem>> -> memref<!tpu.dma_semaphore, #tpu.memory_space<semaphore_mem>>
    tpu.wait_dma2 semaphore(%354 : memref<!tpu.dma_semaphore, #tpu.memory_space<semaphore_mem>>) src(%arg28 : memref<512x128xbf16, #tpu.memory_space<any>>) dst(%arg88 : memref<512x128xbf16, #tpu.memory_space<vmem>>)
    %355 = arith.truncf %352 : vector<8x512xf32> to vector<8x512xbf16>
    %c0_198 = arith.constant 0 : index
    %c0_199 = arith.constant 0 : index
    %356 = vector.load %arg88[%c0_198, %c0_199] : memref<512x128xbf16, #tpu.memory_space<vmem>>, vector<512x128xbf16>
    %cst_200 = arith.constant dense<0.000000e+00> : vector<8x128xf32>
    %357 = tpu.matmul %355, %356, %cst_200 {dimension_numbers = #tpu.dot_dimension_numbers<[1], [0], [0], [1], [0, 0, 1, 1], [], []>} : vector<8x512xbf16>, vector<512x128xbf16>, vector<8x128xf32> -> vector<8x128xf32>
    %c0_201 = arith.constant 0 : index
    %c0_202 = arith.constant 0 : index
    %358 = vector.load %arg57[%c0_201, %c0_202] : memref<1x128xf32, #tpu.memory_space<vmem>>, vector<1x128xf32>
    %359 = vector.broadcast %358 : vector<1x128xf32> to vector<8x128xf32>
    %360 = arith.addf %357, %359 : vector<8x128xf32>
    %cst_203 = arith.constant 0.000000e+00 : f32
    %361 = vector.broadcast %cst_203 : f32 to vector<8x128xf32>
    %362 = arith.maximumf %360, %361 : vector<8x128xf32>
    %c28_i32_204 = arith.constant 28 : i32
    %363 = tpu.memref_slice %arg90[%c28_i32_204] : memref<29x!tpu.dma_semaphore, #tpu.memory_space<semaphore_mem>> -> memref<1x!tpu.dma_semaphore, #tpu.memory_space<semaphore_mem>>
    %364 = tpu.memref_squeeze %363 : memref<1x!tpu.dma_semaphore, #tpu.memory_space<semaphore_mem>> -> memref<!tpu.dma_semaphore, #tpu.memory_space<semaphore_mem>>
    tpu.wait_dma2 semaphore(%364 : memref<!tpu.dma_semaphore, #tpu.memory_space<semaphore_mem>>) src(%arg29 : memref<128x128xbf16, #tpu.memory_space<any>>) dst(%arg89 : memref<128x128xbf16, #tpu.memory_space<vmem>>)
    %365 = arith.truncf %362 : vector<8x128xf32> to vector<8x128xbf16>
    %c0_205 = arith.constant 0 : index
    %c0_206 = arith.constant 0 : index
    %366 = vector.load %arg89[%c0_205, %c0_206] : memref<128x128xbf16, #tpu.memory_space<vmem>>, vector<128x128xbf16>
    %cst_207 = arith.constant dense<0.000000e+00> : vector<8x128xf32>
    %367 = tpu.matmul %365, %366, %cst_207 {dimension_numbers = #tpu.dot_dimension_numbers<[1], [0], [0], [1], [0, 0, 1, 1], [], []>} : vector<8x128xbf16>, vector<128x128xbf16>, vector<8x128xf32> -> vector<8x128xf32>
    %c0_208 = arith.constant 0 : index
    %c0_209 = arith.constant 0 : index
    %368 = vector.load %arg58[%c0_208, %c0_209] : memref<1x128xf32, #tpu.memory_space<vmem>>, vector<1x128xf32>
    %369 = vector.broadcast %368 : vector<1x128xf32> to vector<8x128xf32>
    %370 = arith.addf %367, %369 : vector<8x128xf32>
    %c0_210 = arith.constant 0 : index
    %c0_211 = arith.constant 0 : index
    %371 = vector.load %arg60[%c0_210, %c0_211] : memref<8x128xf32, #tpu.memory_space<vmem>>, vector<8x128xf32>
    tpu.vector_store %arg60[%c0_210, %c0_211], %370 {strides = array<i32>} : memref<8x128xf32, #tpu.memory_space<vmem>>, vector<8x128xf32>,
    return
  }
}

</mosaic_0001>

<llo_original>
// kernel: squeeze.1
$region0: #{squeeze.1}
  %s0 = inlined_call_operand.vmem [shape: f32[30], index: 0, kind: input, shape index: {}]
  %s1 = inlined_call_operand.hbm [shape: f32[6,5], index: 1, kind: output, shape index: {}]
  $region1: #{squeeze.1} parent=0
    #allocation0 [shape = 'u8[4096]{0}', space=vmem, size = 0x1000, scoped, tag = 'operand span for operand 1']
    #allocation1 [shape = 's32[1]{0}', space=sflag, size = 0x4, scoped, tag = 'scoped memory for squeeze.1']
    #allocation2 [shape = 'u8[4096]{0}', space=vmem, size = 0x1000, scoped, tag = 'scoped mem for input reshape']
    %2 = vsyncpa [#allocation1], 0
    %s4 = sshll.u32 1, 1
    %s5 = ssub.s32 %s4, 1
    %v6 = vld [vmem:[%s0] sm:%s5]
    %7 = vst [vmem:[#allocation2] sm:%s5] %v6
    %v8 = vld [vmem:[#allocation2] sm:$0x1]
    %vm9 = vcmask 39936
    %10 = vst.msk [vmem:[#allocation0] sm:$0x1] %vm9, %v8
    %v11 = vld [vmem:[#allocation2] sm:$0x1]
    %12 = vrot.lane.b32.xlu0 %v11, 123
    %v13 = vpop.permute.xlu0 %12
    %vm14 = vcmask 39936
    %s15 = scalar_lea.vmem [#allocation0], 1
    %16 = vst.msk [vmem:[%s15] sm:$0x1] %vm14, %v13
    %v17 = vld [vmem:[#allocation2] sm:$0x1]
    %18 = vrot.lane.b32.xlu0 %v17, 118
    %v19 = vpop.permute.xlu0 %18
    %vm20 = vcmask 39936
    %s21 = scalar_lea.vmem [#allocation0], 2
    %22 = vst.msk [vmem:[%s21] sm:$0x1] %vm20, %v19
    %v23 = vld [vmem:[#allocation2] sm:$0x1]
    %24 = vrot.lane.b32.xlu0 %v23, 113
    %v25 = vpop.permute.xlu0 %24
    %vm26 = vcmask 39936
    %s27 = scalar_lea.vmem [#allocation0], 3
    %28 = vst.msk [vmem:[%s27] sm:$0x1] %vm26, %v25
    %v29 = vld [vmem:[#allocation2] sm:$0x1]
    %30 = vrot.lane.b32.xlu0 %v29, 108
    %v31 = vpop.permute.xlu0 %30
    %vm32 = vcmask 39936
    %s33 = scalar_lea.vmem [#allocation0], 4
    %34 = vst.msk [vmem:[%s33] sm:$0x1] %vm32, %v31
    %v35 = vld [vmem:[#allocation2] sm:$0x1]
    %36 = vrot.lane.b32.xlu0 %v35, 103
    %v37 = vpop.permute.xlu0 %36
    %vm38 = vcmask 39936
    %s39 = scalar_lea.vmem [#allocation0], 5
    %40 = vst.msk [vmem:[%s39] sm:$0x1] %vm38, %v37
    %s42 = ssub.s32 128, 128
    %43 = vsyncadd [#allocation1], %s42
    %s45 = sshll.u32 [#allocation0], 4
    %s46 = int_to_ptr.vmem [resolvable:$true] %s45
    %48 = dma.vmem_to_hbm [thread:$0]  %s46, 128, %s1, [#allocation1]
    %49 = dma.done [#allocation1], 128
    %50 = vsyncpa [#allocation1], 1

// kernel: _generator_forward_impl.1
$region0: #{_generator_forward_impl.1}
  #allocation0 [shape = 'u32[]', space=smem, size = 0x4, offset = 0x4, fixed_abs, tag = 'smem constant byte address 0x4 - core index']
  #allocation1 [shape = 'u32[144,128]{1,0:T(1,128)}', space=vmem, size = 0x12000, scoped, tag = 'internal scratch']
  #allocation2 [shape = 'bf16[16,256]{1,0:T(8,128)(2,1)}', space=vmem, size = 0x2000, scoped, tag = 'scratch operand']
  #allocation3 [shape = 'bf16[256,128]{1,0:T(8,128)(2,1)}', space=vmem, size = 0x10000, scoped, tag = 'scratch operand']
  #allocation4 [shape = 'bf16[16,128]{1,0:T(8,128)(2,1)}', space=vmem, size = 0x1000, scoped, tag = 'scratch operand']
  #allocation5 [shape = 'bf16[128,256]{1,0:T(8,128)(2,1)}', space=vmem, size = 0x10000, scoped, tag = 'scratch operand']
  #allocation6 [shape = 'bf16[256,128]{1,0:T(8,128)(2,1)}', space=vmem, size = 0x10000, scoped, tag = 'scratch operand']
  #allocation7 [shape = 'bf16[128,256]{1,0:T(8,128)(2,1)}', space=vmem, size = 0x10000, scoped, tag = 'scratch operand']
  #allocation8 [shape = 'bf16[256,128]{1,0:T(8,128)(2,1)}', space=vmem, size = 0x10000, scoped, tag = 'scratch operand']
  #allocation9 [shape = 'bf16[128,256]{1,0:T(8,128)(2,1)}', space=vmem, size = 0x10000, scoped, tag = 'scratch operand']
  #allocation10 [shape = 'bf16[256,128]{1,0:T(8,128)(2,1)}', space=vmem, size = 0x10000, scoped, tag = 'scratch operand']
  #allocation11 [shape = 'bf16[128,256]{1,0:T(8,128)(2,1)}', space=vmem, size = 0x10000, scoped, tag = 'scratch operand']
  #allocation12 [shape = 'bf16[256,256]{1,0:T(8,128)(2,1)}', space=vmem, size = 0x20000, scoped, tag = 'scratch operand']
  #allocation13 [shape = 'bf16[128,256]{1,0:T(8,128)(2,1)}', space=vmem, size = 0x10000, scoped, tag = 'scratch operand']
  #allocation14 [shape = 'bf16[256,128]{1,0:T(8,128)(2,1)}', space=vmem, size = 0x10000, scoped, tag = 'scratch operand']
  #allocation15 [shape = 'bf16[128,512]{1,0:T(8,128)(2,1)}', space=vmem, size = 0x20000, scoped, tag = 'scratch operand']
  #allocation16 [shape = 'bf16[256,512]{1,0:T(8,128)(2,1)}', space=vmem, size = 0x40000, scoped, tag = 'scratch operand']
  #allocation17 [shape = 'bf16[512,256]{1,0:T(8,128)(2,1)}', space=vmem, size = 0x40000, scoped, tag = 'scratch operand']
  #allocation18 [shape = 'bf16[256,128]{1,0:T(8,128)(2,1)}', space=vmem, size = 0x10000, scoped, tag = 'scratch operand']
  #allocation19 [shape = 'bf16[128,256]{1,0:T(8,128)(2,1)}', space=vmem, size = 0x10000, scoped, tag = 'scratch operand']
  #allocation20 [shape = 'bf16[256,512]{1,0:T(8,128)(2,1)}', space=vmem, size = 0x40000, scoped, tag = 'scratch operand']
  #allocation21 [shape = 'bf16[128,512]{1,0:T(8,128)(2,1)}', space=vmem, size = 0x20000, scoped, tag = 'scratch operand']
  #allocation22 [shape = 'bf16[512,256]{1,0:T(8,128)(2,1)}', space=vmem, size = 0x40000, scoped, tag = 'scratch operand']
  #allocation23 [shape = 'bf16[256,512]{1,0:T(8,128)(2,1)}', space=vmem, size = 0x40000, scoped, tag = 'scratch operand']
  #allocation24 [shape = 'bf16[512,512]{1,0:T(8,128)(2,1)}', space=vmem, size = 0x80000, scoped, tag = 'scratch operand']
  #allocation25 [shape = 'bf16[512,128]{1,0:T(8,128)(2,1)}', space=vmem, size = 0x20000, scoped, tag = 'scratch operand']
  #allocation26 [shape = 'bf16[128,256]{1,0:T(8,128)(2,1)}', space=vmem, size = 0x10000, scoped, tag = 'scratch operand']
  #allocation27 [shape = 'bf16[512,256]{1,0:T(8,128)(2,1)}', space=vmem, size = 0x40000, scoped, tag = 'scratch operand']
  #allocation28 [shape = 'bf16[256,512]{1,0:T(8,128)(2,1)}', space=vmem, size = 0x40000, scoped, tag = 'scratch operand']
  #allocation29 [shape = 'bf16[512,128]{1,0:T(8,128)(2,1)}', space=vmem, size = 0x20000, scoped, tag = 'scratch operand']
  #allocation30 [shape = 'bf16[128,128]{1,0:T(8,128)(2,1)}', space=vmem, size = 0x8000, scoped, tag = 'scratch operand']
  #allocation31 [shape = 's32[29]{0}', space=sflag, size = 0x74, scoped, tag = 'scratch operand']
  #allocation54 [shape = 's32[]', space=sflag, size = 0x4, offset = 0, fixed_abs, tag = 'sflag constant byte address 0x0 - dummy sync flag']
  #allocation55 [shape = 's32[]', space=sflag, size = 0x4, offset = 0, fixed_abs, tag = 'sflag constant byte address 0x0 - dummy sync flag']
  #allocation56 [shape = 'u32[]', space=smem, size = 0x4, offset = 0x44, fixed_abs, tag = 'smem constant byte address 0x44 - assertion arg 0']
  #allocation57 [shape = 'u32[]', space=smem, size = 0x4, offset = 0x48, fixed_abs, tag = 'smem constant byte address 0x48 - assertion arg 1']
  #allocation58 [shape = 's32[]', space=sflag, size = 0x4, offset = 0, fixed_abs, tag = 'sflag constant byte address 0x0 - dummy sync flag']
  #allocation59 [shape = 's32[]', space=sflag, size = 0x4, offset = 0, fixed_abs, tag = 'sflag constant byte address 0x0 - dummy sync flag']
  #allocation60 [shape = 's32[]', space=sflag, size = 0x4, offset = 0, fixed_abs, tag = 'sflag constant byte address 0x0 - dummy sync flag']
  #allocation61 [shape = 's32[]', space=sflag, size = 0x4, offset = 0, fixed_abs, tag = 'sflag constant byte address 0x0 - dummy sync flag']
  #allocation62 [shape = 's32[]', space=sflag, size = 0x4, offset = 0, fixed_abs, tag = 'sflag constant byte address 0x0 - dummy sync flag']
  #allocation63 [shape = 's32[]', space=sflag, size = 0x4, offset = 0, fixed_abs, tag = 'sflag constant byte address 0x0 - dummy sync flag']
  #allocation64 [shape = 's32[]', space=sflag, size = 0x4, offset = 0, fixed_abs, tag = 'sflag constant byte address 0x0 - dummy sync flag']
  #allocation65 [shape = 's32[]', space=sflag, size = 0x4, offset = 0, fixed_abs, tag = 'sflag constant byte address 0x0 - dummy sync flag']
  #allocation66 [shape = 's32[]', space=sflag, size = 0x4, offset = 0, fixed_abs, tag = 'sflag constant byte address 0x0 - dummy sync flag']
  #allocation67 [shape = 's32[]', space=sflag, size = 0x4, offset = 0, fixed_abs, tag = 'sflag constant byte address 0x0 - dummy sync flag']
  #allocation68 [shape = 's32[]', space=sflag, size = 0x4, offset = 0, fixed_abs, tag = 'sflag constant byte address 0x0 - dummy sync flag']
  #allocation69 [shape = 's32[]', space=sflag, size = 0x4, offset = 0, fixed_abs, tag = 'sflag constant byte address 0x0 - dummy sync flag']
  #allocation70 [shape = 's32[]', space=sflag, size = 0x4, offset = 0, fixed_abs, tag = 'sflag constant byte address 0x0 - dummy sync flag']
  #allocation71 [shape = 's32[]', space=sflag, size = 0x4, offset = 0, fixed_abs, tag = 'sflag constant byte address 0x0 - dummy sync flag']
  #allocation72 [shape = 's32[]', space=sflag, size = 0x4, offset = 0, fixed_abs, tag = 'sflag constant byte address 0x0 - dummy sync flag']
  #allocation73 [shape = 's32[]', space=sflag, size = 0x4, offset = 0, fixed_abs, tag = 'sflag constant byte address 0x0 - dummy sync flag']
  #allocation74 [shape = 's32[]', space=sflag, size = 0x4, offset = 0, fixed_abs, tag = 'sflag constant byte address 0x0 - dummy sync flag']
  #allocation75 [shape = 's32[]', space=sflag, size = 0x4, offset = 0, fixed_abs, tag = 'sflag constant byte address 0x0 - dummy sync flag']
  #allocation76 [shape = 's32[]', space=sflag, size = 0x4, offset = 0, fixed_abs, tag = 'sflag constant byte address 0x0 - dummy sync flag']
  #allocation77 [shape = 's32[]', space=sflag, size = 0x4, offset = 0, fixed_abs, tag = 'sflag constant byte address 0x0 - dummy sync flag']
  #allocation78 [shape = 's32[]', space=sflag, size = 0x4, offset = 0, fixed_abs, tag = 'sflag constant byte address 0x0 - dummy sync flag']
  #allocation79 [shape = 's32[]', space=sflag, size = 0x4, offset = 0, fixed_abs, tag = 'sflag constant byte address 0x0 - dummy sync flag']
  #allocation80 [shape = 's32[]', space=sflag, size = 0x4, offset = 0, fixed_abs, tag = 'sflag constant byte address 0x0 - dummy sync flag']
  #allocation81 [shape = 's32[]', space=sflag, size = 0x4, offset = 0, fixed_abs, tag = 'sflag constant byte address 0x0 - dummy sync flag']
  #allocation82 [shape = 's32[]', space=sflag, size = 0x4, offset = 0, fixed_abs, tag = 'sflag constant byte address 0x0 - dummy sync flag']
  #allocation83 [shape = 's32[]', space=sflag, size = 0x4, offset = 0, fixed_abs, tag = 'sflag constant byte address 0x0 - dummy sync flag']
  #allocation84 [shape = 's32[]', space=sflag, size = 0x4, offset = 0, fixed_abs, tag = 'sflag constant byte address 0x0 - dummy sync flag']
  #allocation85 [shape = 's32[]', space=sflag, size = 0x4, offset = 0, fixed_abs, tag = 'sflag constant byte address 0x0 - dummy sync flag']
  #allocation86 [shape = 's32[]', space=sflag, size = 0x4, offset = 0, fixed_abs, tag = 'sflag constant byte address 0x0 - dummy sync flag']
  #allocation87 [shape = 's32[]', space=sflag, size = 0x4, offset = 0, fixed_abs, tag = 'sflag constant byte address 0x0 - dummy sync flag']
  #allocation88 [shape = 's32[]', space=sflag, size = 0x4, offset = 0, fixed_abs, tag = 'sflag constant byte address 0x0 - dummy sync flag']
  #allocation89 [shape = 's32[]', space=sflag, size = 0x4, offset = 0, fixed_abs, tag = 'sflag constant byte address 0x0 - dummy sync flag']
  #allocation90 [shape = 's32[]', space=sflag, size = 0x4, offset = 0, fixed_abs, tag = 'sflag constant byte address 0x0 - dummy sync flag']
  #allocation91 [shape = 's32[]', space=sflag, size = 0x4, offset = 0, fixed_abs, tag = 'sflag constant byte address 0x0 - dummy sync flag']
  #allocation92 [shape = 's32[]', space=sflag, size = 0x4, offset = 0, fixed_abs, tag = 'sflag constant byte address 0x0 - dummy sync flag']
  #allocation93 [shape = 's32[]', space=sflag, size = 0x4, offset = 0, fixed_abs, tag = 'sflag constant byte address 0x0 - dummy sync flag']
  #allocation94 [shape = 's32[]', space=sflag, size = 0x4, offset = 0, fixed_abs, tag = 'sflag constant byte address 0x0 - dummy sync flag']
  #allocation95 [shape = 's32[]', space=sflag, size = 0x4, offset = 0, fixed_abs, tag = 'sflag constant byte address 0x0 - dummy sync flag']
  #allocation96 [shape = 's32[]', space=sflag, size = 0x4, offset = 0, fixed_abs, tag = 'sflag constant byte address 0x0 - dummy sync flag']
  #allocation97 [shape = 's32[]', space=sflag, size = 0x4, offset = 0, fixed_abs, tag = 'sflag constant byte address 0x0 - dummy sync flag']
  #allocation98 [shape = 's32[]', space=sflag, size = 0x4, offset = 0, fixed_abs, tag = 'sflag constant byte address 0x0 - dummy sync flag']
  #allocation99 [shape = 's32[]', space=sflag, size = 0x4, offset = 0, fixed_abs, tag = 'sflag constant byte address 0x0 - dummy sync flag']
  #allocation100 [shape = 's32[]', space=sflag, size = 0x4, offset = 0, fixed_abs, tag = 'sflag constant byte address 0x0 - dummy sync flag']
  #allocation101 [shape = 's32[]', space=sflag, size = 0x4, offset = 0, fixed_abs, tag = 'sflag constant byte address 0x0 - dummy sync flag']
  #allocation102 [shape = 's32[]', space=sflag, size = 0x4, offset = 0, fixed_abs, tag = 'sflag constant byte address 0x0 - dummy sync flag']
  #allocation103 [shape = 's32[]', space=sflag, size = 0x4, offset = 0, fixed_abs, tag = 'sflag constant byte address 0x0 - dummy sync flag']
  #allocation104 [shape = 's32[]', space=sflag, size = 0x4, offset = 0, fixed_abs, tag = 'sflag constant byte address 0x0 - dummy sync flag']
  #allocation105 [shape = 's32[]', space=sflag, size = 0x4, offset = 0, fixed_abs, tag = 'sflag constant byte address 0x0 - dummy sync flag']
  #allocation106 [shape = 's32[]', space=sflag, size = 0x4, offset = 0, fixed_abs, tag = 'sflag constant byte address 0x0 - dummy sync flag']
  #allocation107 [shape = 's32[]', space=sflag, size = 0x4, offset = 0, fixed_abs, tag = 'sflag constant byte address 0x0 - dummy sync flag']
  #allocation108 [shape = 's32[]', space=sflag, size = 0x4, offset = 0, fixed_abs, tag = 'sflag constant byte address 0x0 - dummy sync flag']
  #allocation109 [shape = 's32[]', space=sflag, size = 0x4, offset = 0, fixed_abs, tag = 'sflag constant byte address 0x0 - dummy sync flag']
  #allocation110 [shape = 's32[]', space=sflag, size = 0x4, offset = 0, fixed_abs, tag = 'sflag constant byte address 0x0 - dummy sync flag']
  #allocation111 [shape = 's32[]', space=sflag, size = 0x4, offset = 0, fixed_abs, tag = 'sflag constant byte address 0x0 - dummy sync flag']
  %s0 = inlined_call_operand.smem [shape: u32[61], index: -1, kind: input, shape index: {}]
  %s1 = sld [smem:[%s0]]
  %s2 = scalar_lea.smem %s0, 1
  %s3 = sld [smem:[%s2]]
  %s4 = scalar_lea.smem %s0, 2
  %s5 = sld [smem:[%s4]]
  %s6 = scalar_lea.smem %s0, 3
  %s7 = sld [smem:[%s6]]
  %s8 = scalar_lea.smem %s0, 4
  %s9 = sld [smem:[%s8]]
  %s10 = scalar_lea.smem %s0, 5
  %s11 = sld [smem:[%s10]]
  %s12 = scalar_lea.smem %s0, 6
  %s13 = sld [smem:[%s12]]
  %s14 = scalar_lea.smem %s0, 7
  %s15 = sld [smem:[%s14]]
  %s16 = scalar_lea.smem %s0, 8
  %s17 = sld [smem:[%s16]]
  %s18 = scalar_lea.smem %s0, 9
  %s19 = sld [smem:[%s18]]
  %s20 = scalar_lea.smem %s0, 10
  %s21 = sld [smem:[%s20]]
  %s22 = scalar_lea.smem %s0, 11
  %s23 = sld [smem:[%s22]]
  %s24 = scalar_lea.smem %s0, 12
  %s25 = sld [smem:[%s24]]
  %s26 = scalar_lea.smem %s0, 13
  %s27 = sld [smem:[%s26]]
  %s28 = scalar_lea.smem %s0, 14
  %s29 = sld [smem:[%s28]]
  %s30 = scalar_lea.smem %s0, 15
  %s31 = sld [smem:[%s30]]
  %s32 = scalar_lea.smem %s0, 16
  %s33 = sld [smem:[%s32]]
  %s34 = scalar_lea.smem %s0, 17
  %s35 = sld [smem:[%s34]]
  %s36 = scalar_lea.smem %s0, 18
  %s37 = sld [smem:[%s36]]
  %s38 = scalar_lea.smem %s0, 19
  %s39 = sld [smem:[%s38]]
  %s40 = scalar_lea.smem %s0, 20
  %s41 = sld [smem:[%s40]]
  %s42 = scalar_lea.smem %s0, 21
  %s43 = sld [smem:[%s42]]
  %s44 = scalar_lea.smem %s0, 22
  %s45 = sld [smem:[%s44]]
  %s46 = scalar_lea.smem %s0, 23
  %s47 = sld [smem:[%s46]]
  %s48 = scalar_lea.smem %s0, 24
  %s49 = sld [smem:[%s48]]
  %s50 = scalar_lea.smem %s0, 25
  %s51 = sld [smem:[%s50]]
  %s52 = scalar_lea.smem %s0, 26
  %s53 = sld [smem:[%s52]]
  %s54 = scalar_lea.smem %s0, 27
  %s55 = sld [smem:[%s54]]
  %s56 = scalar_lea.smem %s0, 28
  %s57 = sld [smem:[%s56]]
  %s58 = scalar_lea.smem %s0, 29
  %s59 = sld [smem:[%s58]]
  %s60 = scalar_lea.smem %s0, 30
  %s61 = sld [smem:[%s60]]
  %s62 = scalar_lea.smem %s0, 31
  %s63 = sld [smem:[%s62]]
  %s64 = scalar_lea.smem %s0, 32
  %s65 = sld [smem:[%s64]]
  %s66 = scalar_lea.smem %s0, 33
  %s67 = sld [smem:[%s66]]
  %s68 = scalar_lea.smem %s0, 34
  %s69 = sld [smem:[%s68]]
  %s70 = scalar_lea.smem %s0, 35
  %s71 = sld [smem:[%s70]]
  %s72 = scalar_lea.smem %s0, 36
  %s73 = sld [smem:[%s72]]
  %s74 = scalar_lea.smem %s0, 37
  %s75 = sld [smem:[%s74]]
  %s76 = scalar_lea.smem %s0, 38
  %s77 = sld [smem:[%s76]]
  %s78 = scalar_lea.smem %s0, 39
  %s79 = sld [smem:[%s78]]
  %s80 = scalar_lea.smem %s0, 40
  %s81 = sld [smem:[%s80]]
  %s82 = scalar_lea.smem %s0, 41
  %s83 = sld [smem:[%s82]]
  %s84 = scalar_lea.smem %s0, 42
  %s85 = sld [smem:[%s84]]
  %s86 = scalar_lea.smem %s0, 43
  %s87 = sld [smem:[%s86]]
  %s88 = scalar_lea.smem %s0, 44
  %s89 = sld [smem:[%s88]]
  %s90 = scalar_lea.smem %s0, 45
  %s91 = sld [smem:[%s90]]
  %s92 = scalar_lea.smem %s0, 46
  %s93 = sld [smem:[%s92]]
  %s94 = scalar_lea.smem %s0, 47
  %s95 = sld [smem:[%s94]]
  %s96 = scalar_lea.smem %s0, 48
  %s97 = sld [smem:[%s96]]
  %s98 = scalar_lea.smem %s0, 49
  %s99 = sld [smem:[%s98]]
  %s100 = scalar_lea.smem %s0, 50
  %s101 = sld [smem:[%s100]]
  %s102 = scalar_lea.smem %s0, 51
  %s103 = sld [smem:[%s102]]
  %s104 = scalar_lea.smem %s0, 52
  %s105 = sld [smem:[%s104]]
  %s106 = scalar_lea.smem %s0, 53
  %s107 = sld [smem:[%s106]]
  %s108 = scalar_lea.smem %s0, 54
  %s109 = sld [smem:[%s108]]
  %s110 = scalar_lea.smem %s0, 55
  %s111 = sld [smem:[%s110]]
  %s112 = scalar_lea.smem %s0, 56
  %s113 = sld [smem:[%s112]]
  %s114 = scalar_lea.smem %s0, 57
  %s115 = sld [smem:[%s114]]
  %s116 = scalar_lea.smem %s0, 58
  %s117 = sld [smem:[%s116]]
  %s118 = scalar_lea.smem %s0, 59
  %s119 = sld [smem:[%s118]]
  %s120 = scalar_lea.smem %s0, 60
  %s121 = sld [smem:[%s120]]
  %122 = xla_tuple %s119, %s121
  %s123 = sld [smem:[#allocation0]]
  $region370: #{_generator_forward_impl.1} parent=0
    _
  %s125 = ssub.s32 1, %s123
  %s126 = scalar_select 0, %s125, %s123
  $region1: #{_generator_forward_impl.1} parent=0
    #allocation32 [shape = 'u8[1024]{0}', space=vmem, size = 0x400, scoped, tag = 'input window, operand 30, single buffered']
    #allocation33 [shape = 's32[1]{0}', space=sflag, size = 0x4, scoped, tag = 'scoped memory for _generator_forward_impl.1']
    #allocation34 [shape = 'u8[512]{0}', space=vmem, size = 0x400, scoped, tag = 'input window, operand 31, single buffered']
    #allocation35 [shape = 's32[1]{0}', space=sflag, size = 0x4, scoped, tag = 'scoped memory for _generator_forward_impl.1']
    #allocation36 [shape = 'u8[512]{0}', space=vmem, size = 0x400, scoped, tag = 'input window, operand 32, single buffered']
    #allocation37 [shape = 'u8[1024]{0}', space=vmem, size = 0x400, scoped, tag = 'input window, operand 33, single buffered']
    #allocation38 [shape = 's32[1]{0}', space=sflag, size = 0x4, scoped, tag = 'scoped memory for _generator_forward_impl.1']
    #allocation39 [shape = 'u8[512]{0}', space=vmem, size = 0x400, scoped, tag = 'input window, operand 34, single buffered']
    #allocation40 [shape = 'u8[1024]{0}', space=vmem, size = 0x400, scoped, tag = 'input window, operand 35, single buffered']
    #allocation41 [shape = 's32[1]{0}', space=sflag, size = 0x4, scoped, tag = 'scoped memory for _generator_forward_impl.1']
    #allocation42 [shape = 'u8[512]{0}', space=vmem, size = 0x400, scoped, tag = 'input window, operand 36, single buffered']
    #allocation43 [shape = 'u8[512]{0}', space=vmem, size = 0x400, scoped, tag = 'input window, operand 38, single buffered']
    #allocation44 [shape = 's32[1]{0}', space=sflag, size = 0x4, scoped, tag = 'scoped memory for _generator_forward_impl.1']
    #allocation45 [shape = 'u8[512]{0}', space=vmem, size = 0x400, scoped, tag = 'input window, operand 42, single buffered']
    #allocation46 [shape = 'u8[512]{0}', space=vmem, size = 0x400, scoped, tag = 'input window, operand 46, single buffered']
    #allocation47 [shape = 's32[1]{0}', space=sflag, size = 0x4, scoped, tag = 'scoped memory for _generator_forward_impl.1']
    #allocation48 [shape = 'u8[512]{0}', space=vmem, size = 0x400, scoped, tag = 'input window, operand 53, single buffered']
    #allocation49 [shape = 'u8[1024]{0}', space=vmem, size = 0x400, scoped, tag = 'input window, operand 54, single buffered']
    #allocation50 [shape = 's32[1]{0}', space=sflag, size = 0x4, scoped, tag = 'scoped memory for _generator_forward_impl.1']
    #allocation51 [shape = 'u8[1024]{0}', space=vmem, size = 0x400, scoped, tag = 'input window, operand 55, single buffered']
    #allocation52 [shape = 'u8[512]{0}', space=vmem, size = 0x400, scoped, tag = 'input window, operand 57, single buffered']
    #allocation53 [shape = 's32[1]{0}', space=sflag, size = 0x4, scoped, tag = 'scoped memory for _generator_forward_impl.1']
    %127 = vsyncpa [#allocation33], 0
    %128 = vsyncpa [#allocation35], 0
    %129 = vsyncpa [#allocation38], 0
    %130 = vsyncpa [#allocation41], 0
    %131 = vsyncpa [#allocation44], 0
    %132 = vsyncpa [#allocation47], 0
    %133 = vsyncpa [#allocation50], 0
    %134 = vsyncpa [#allocation53], 0
    // Predicated region
    $region2: #{_generator_forward_impl.1} parent=1 // pred_check
      _
    $region3: #{_generator_forward_impl.1} parent=1 // pred_check_branch
      %136 = sbr.rel (0) target = $region5
    $region4: #{_generator_forward_impl.1} parent=1 // pred_region
      _
    $region5: #{_generator_forward_impl.1} parent=1 // pred_fallthru
      _
    // Predicated region
    $region6: #{_generator_forward_impl.1} parent=1 // pred_check
      _
    $region7: #{_generator_forward_impl.1} parent=1 // pred_check_branch
      %138 = sbr.rel (0) target = $region9
    $region8: #{_generator_forward_impl.1} parent=1 // pred_region
      %s140 = ssub.s32 32, 32
      %141 = vsyncadd [#allocation33], %s140
      %s143 = sshll.u32 [#allocation32], 4
      %s144 = int_to_ptr.vmem [resolvable:$true] %s143
      %146 = dma.hbm_to_vmem [thread:$0]  %s61, 32, %s144, [#allocation33]
    $region9: #{_generator_forward_impl.1} parent=1 // pred_fallthru
      _
    // Predicated region
    $region10: #{_generator_forward_impl.1} parent=1 // pred_check
      _
    $region11: #{_generator_forward_impl.1} parent=1 // pred_check_branch
      %148 = sbr.rel (0) target = $region13
    $region12: #{_generator_forward_impl.1} parent=1 // pred_region
      %s150 = ssub.s32 16, 16
      %151 = vsyncadd [#allocation35], %s150
      %s153 = sshll.u32 [#allocation34], 4
      %s154 = int_to_ptr.vmem [resolvable:$true] %s153
      %156 = dma.hbm_to_vmem [thread:$0]  %s63, 16, %s154, [#allocation35]
    $region13: #{_generator_forward_impl.1} parent=1 // pred_fallthru
      _
    // Predicated region
    $region14: #{_generator_forward_impl.1} parent=1 // pred_check
      _
    $region15: #{_generator_forward_impl.1} parent=1 // pred_check_branch
      %158 = sbr.rel (0) target = $region17
    $region16: #{_generator_forward_impl.1} parent=1 // pred_region
      %s160 = ssub.s32 16, 16
      %161 = vsyncadd [#allocation35], %s160
      %s163 = sshll.u32 [#allocation36], 4
      %s164 = int_to_ptr.vmem [resolvable:$true] %s163
      %166 = dma.hbm_to_vmem [thread:$0]  %s65, 16, %s164, [#allocation35]
    $region17: #{_generator_forward_impl.1} parent=1 // pred_fallthru
      _
    // Predicated region
    $region18: #{_generator_forward_impl.1} parent=1 // pred_check
      _
    $region19: #{_generator_forward_impl.1} parent=1 // pred_check_branch
      %168 = sbr.rel (0) target = $region21
    $region20: #{_generator_forward_impl.1} parent=1 // pred_region
      %s170 = ssub.s32 32, 32
      %171 = vsyncadd [#allocation38], %s170
      %s173 = sshll.u32 [#allocation37], 4
      %s174 = int_to_ptr.vmem [resolvable:$true] %s173
      %176 = dma.hbm_to_vmem [thread:$0]  %s67, 32, %s174, [#allocation38]
    $region21: #{_generator_forward_impl.1} parent=1 // pred_fallthru
      _
    // Predicated region
    $region22: #{_generator_forward_impl.1} parent=1 // pred_check
      _
    $region23: #{_generator_forward_impl.1} parent=1 // pred_check_branch
      %178 = sbr.rel (0) target = $region25
    $region24: #{_generator_forward_impl.1} parent=1 // pred_region
      %s180 = ssub.s32 16, 16
      %181 = vsyncadd [#allocation38], %s180
      %s183 = sshll.u32 [#allocation39], 4
      %s184 = int_to_ptr.vmem [resolvable:$true] %s183
      %186 = dma.hbm_to_vmem [thread:$0]  %s69, 16, %s184, [#allocation38]
    $region25: #{_generator_forward_impl.1} parent=1 // pred_fallthru
      _
    // Predicated region
    $region26: #{_generator_forward_impl.1} parent=1 // pred_check
      _
    $region27: #{_generator_forward_impl.1} parent=1 // pred_check_branch
      %188 = sbr.rel (0) target = $region29
    $region28: #{_generator_forward_impl.1} parent=1 // pred_region
      %s190 = ssub.s32 32, 32
      %191 = vsyncadd [#allocation41], %s190
      %s193 = sshll.u32 [#allocation40], 4
      %s194 = int_to_ptr.vmem [resolvable:$true] %s193
      %196 = dma.hbm_to_vmem [thread:$0]  %s71, 32, %s194, [#allocation41]
    $region29: #{_generator_forward_impl.1} parent=1 // pred_fallthru
      _
    // Predicated region
    $region30: #{_generator_forward_impl.1} parent=1 // pred_check
      _
    $region31: #{_generator_forward_impl.1} parent=1 // pred_check_branch
      %198 = sbr.rel (0) target = $region33
    $region32: #{_generator_forward_impl.1} parent=1 // pred_region
      %s200 = ssub.s32 16, 16
      %201 = vsyncadd [#allocation41], %s200
      %s203 = sshll.u32 [#allocation42], 4
      %s204 = int_to_ptr.vmem [resolvable:$true] %s203
      %206 = dma.hbm_to_vmem [thread:$0]  %s73, 16, %s204, [#allocation41]
    $region33: #{_generator_forward_impl.1} parent=1 // pred_fallthru
      _
    // Predicated region
    $region34: #{_generator_forward_impl.1} parent=1 // pred_check
      _
    $region35: #{_generator_forward_impl.1} parent=1 // pred_check_branch
      %208 = sbr.rel (0) target = $region37
    $region36: #{_generator_forward_impl.1} parent=1 // pred_region
      _
    $region37: #{_generator_forward_impl.1} parent=1 // pred_fallthru
      _
    // Predicated region
    $region38: #{_generator_forward_impl.1} parent=1 // pred_check
      _
    $region39: #{_generator_forward_impl.1} parent=1 // pred_check_branch
      %210 = sbr.rel (0) target = $region41
    $region40: #{_generator_forward_impl.1} parent=1 // pred_region
      %s212 = ssub.s32 16, 16
      %213 = vsyncadd [#allocation44], %s212
      %s215 = sshll.u32 [#allocation43], 4
      %s216 = int_to_ptr.vmem [resolvable:$true] %s215
      %218 = dma.hbm_to_vmem [thread:$0]  %s77, 16, %s216, [#allocation44]
    $region41: #{_generator_forward_impl.1} parent=1 // pred_fallthru
      _
    // Predicated region
    $region42: #{_generator_forward_impl.1} parent=1 // pred_check
      _
    $region43: #{_generator_forward_impl.1} parent=1 // pred_check_branch
      %220 = sbr.rel (0) target = $region45
    $region44: #{_generator_forward_impl.1} parent=1 // pred_region
      _
    $region45: #{_generator_forward_impl.1} parent=1 // pred_fallthru
      _
    // Predicated region
    $region46: #{_generator_forward_impl.1} parent=1 // pred_check
      _
    $region47: #{_generator_forward_impl.1} parent=1 // pred_check_branch
      %222 = sbr.rel (0) target = $region49
    $region48: #{_generator_forward_impl.1} parent=1 // pred_region
      _
    $region49: #{_generator_forward_impl.1} parent=1 // pred_fallthru
      _
    // Predicated region
    $region50: #{_generator_forward_impl.1} parent=1 // pred_check
      _
    $region51: #{_generator_forward_impl.1} parent=1 // pred_check_branch
      %224 = sbr.rel (0) target = $region53
    $region52: #{_generator_forward_impl.1} parent=1 // pred_region
      _
    $region53: #{_generator_forward_impl.1} parent=1 // pred_fallthru
      _
    // Predicated region
    $region54: #{_generator_forward_impl.1} parent=1 // pred_check
      _
    $region55: #{_generator_forward_impl.1} parent=1 // pred_check_branch
      %226 = sbr.rel (0) target = $region57
    $region56: #{_generator_forward_impl.1} parent=1 // pred_region
      %s228 = ssub.s32 16, 16
      %229 = vsyncadd [#allocation44], %s228
      %s231 = sshll.u32 [#allocation45], 4
      %s232 = int_to_ptr.vmem [resolvable:$true] %s231
      %234 = dma.hbm_to_vmem [thread:$0]  %s85, 16, %s232, [#allocation44]
    $region57: #{_generator_forward_impl.1} parent=1 // pred_fallthru
      _
    // Predicated region
    $region58: #{_generator_forward_impl.1} parent=1 // pred_check
      _
    $region59: #{_generator_forward_impl.1} parent=1 // pred_check_branch
      %236 = sbr.rel (0) target = $region61
    $region60: #{_generator_forward_impl.1} parent=1 // pred_region
      _
    $region61: #{_generator_forward_impl.1} parent=1 // pred_fallthru
      _
    // Predicated region
    $region62: #{_generator_forward_impl.1} parent=1 // pred_check
      _
    $region63: #{_generator_forward_impl.1} parent=1 // pred_check_branch
      %238 = sbr.rel (0) target = $region65
    $region64: #{_generator_forward_impl.1} parent=1 // pred_region
      _
    $region65: #{_generator_forward_impl.1} parent=1 // pred_fallthru
      _
    // Predicated region
    $region66: #{_generator_forward_impl.1} parent=1 // pred_check
      _
    $region67: #{_generator_forward_impl.1} parent=1 // pred_check_branch
      %240 = sbr.rel (0) target = $region69
    $region68: #{_generator_forward_impl.1} parent=1 // pred_region
      _
    $region69: #{_generator_forward_impl.1} parent=1 // pred_fallthru
      _
    // Predicated region
    $region70: #{_generator_forward_impl.1} parent=1 // pred_check
      _
    $region71: #{_generator_forward_impl.1} parent=1 // pred_check_branch
      %242 = sbr.rel (0) target = $region73
    $region72: #{_generator_forward_impl.1} parent=1 // pred_region
      %s244 = ssub.s32 16, 16
      %245 = vsyncadd [#allocation47], %s244
      %s247 = sshll.u32 [#allocation46], 4
      %s248 = int_to_ptr.vmem [resolvable:$true] %s247
      %250 = dma.hbm_to_vmem [thread:$0]  %s93, 16, %s248, [#allocation47]
    $region73: #{_generator_forward_impl.1} parent=1 // pred_fallthru
      _
    // Predicated region
    $region74: #{_generator_forward_impl.1} parent=1 // pred_check
      _
    $region75: #{_generator_forward_impl.1} parent=1 // pred_check_branch
      %252 = sbr.rel (0) target = $region77
    $region76: #{_generator_forward_impl.1} parent=1 // pred_region
      _
    $region77: #{_generator_forward_impl.1} parent=1 // pred_fallthru
      _
    // Predicated region
    $region78: #{_generator_forward_impl.1} parent=1 // pred_check
      _
    $region79: #{_generator_forward_impl.1} parent=1 // pred_check_branch
      %254 = sbr.rel (0) target = $region81
    $region80: #{_generator_forward_impl.1} parent=1 // pred_region
      _
    $region81: #{_generator_forward_impl.1} parent=1 // pred_fallthru
      _
    // Predicated region
    $region82: #{_generator_forward_impl.1} parent=1 // pred_check
      _
    $region83: #{_generator_forward_impl.1} parent=1 // pred_check_branch
      %256 = sbr.rel (0) target = $region85
    $region84: #{_generator_forward_impl.1} parent=1 // pred_region
      _
    $region85: #{_generator_forward_impl.1} parent=1 // pred_fallthru
      _
    // Predicated region
    $region86: #{_generator_forward_impl.1} parent=1 // pred_check
      _
    $region87: #{_generator_forward_impl.1} parent=1 // pred_check_branch
      %258 = sbr.rel (0) target = $region89
    $region88: #{_generator_forward_impl.1} parent=1 // pred_region
      _
    $region89: #{_generator_forward_impl.1} parent=1 // pred_fallthru
      _
    // Predicated region
    $region90: #{_generator_forward_impl.1} parent=1 // pred_check
      _
    $region91: #{_generator_forward_impl.1} parent=1 // pred_check_branch
      %260 = sbr.rel (0) target = $region93
    $region92: #{_generator_forward_impl.1} parent=1 // pred_region
      _
    $region93: #{_generator_forward_impl.1} parent=1 // pred_fallthru
      _
    // Predicated region
    $region94: #{_generator_forward_impl.1} parent=1 // pred_check
      _
    $region95: #{_generator_forward_impl.1} parent=1 // pred_check_branch
      %262 = sbr.rel (0) target = $region97
    $region96: #{_generator_forward_impl.1} parent=1 // pred_region
      _
    $region97: #{_generator_forward_impl.1} parent=1 // pred_fallthru
      _
    // Predicated region
    $region98: #{_generator_forward_impl.1} parent=1 // pred_check
      _
    $region99: #{_generator_forward_impl.1} parent=1 // pred_check_branch
      %264 = sbr.rel (0) target = $region101
    $region100: #{_generator_forward_impl.1} parent=1 // pred_region
      %s266 = ssub.s32 16, 16
      %267 = vsyncadd [#allocation47], %s266
      %s269 = sshll.u32 [#allocation48], 4
      %s270 = int_to_ptr.vmem [resolvable:$true] %s269
      %272 = dma.hbm_to_vmem [thread:$0]  %s107, 16, %s270, [#allocation47]
    $region101: #{_generator_forward_impl.1} parent=1 // pred_fallthru
      _
    // Predicated region
    $region102: #{_generator_forward_impl.1} parent=1 // pred_check
      _
    $region103: #{_generator_forward_impl.1} parent=1 // pred_check_branch
      %274 = sbr.rel (0) target = $region105
    $region104: #{_generator_forward_impl.1} parent=1 // pred_region
      %s276 = ssub.s32 32, 32
      %277 = vsyncadd [#allocation50], %s276
      %s279 = sshll.u32 [#allocation49], 4
      %s280 = int_to_ptr.vmem [resolvable:$true] %s279
      %282 = dma.hbm_to_vmem [thread:$0]  %s109, 32, %s280, [#allocation50]
    $region105: #{_generator_forward_impl.1} parent=1 // pred_fallthru
      _
    // Predicated region
    $region106: #{_generator_forward_impl.1} parent=1 // pred_check
      _
    $region107: #{_generator_forward_impl.1} parent=1 // pred_check_branch
      %284 = sbr.rel (0) target = $region109
    $region108: #{_generator_forward_impl.1} parent=1 // pred_region
      %s286 = ssub.s32 32, 32
      %287 = vsyncadd [#allocation50], %s286
      %s289 = sshll.u32 [#allocation51], 4
      %s290 = int_to_ptr.vmem [resolvable:$true] %s289
      %292 = dma.hbm_to_vmem [thread:$0]  %s111, 32, %s290, [#allocation50]
    $region109: #{_generator_forward_impl.1} parent=1 // pred_fallthru
      _
    // Predicated region
    $region110: #{_generator_forward_impl.1} parent=1 // pred_check
      _
    $region111: #{_generator_forward_impl.1} parent=1 // pred_check_branch
      %294 = sbr.rel (0) target = $region113
    $region112: #{_generator_forward_impl.1} parent=1 // pred_region
      _
    $region113: #{_generator_forward_impl.1} parent=1 // pred_fallthru
      _
    // Predicated region
    $region114: #{_generator_forward_impl.1} parent=1 // pred_check
      _
    $region115: #{_generator_forward_impl.1} parent=1 // pred_check_branch
      %296 = sbr.rel (0) target = $region117
    $region116: #{_generator_forward_impl.1} parent=1 // pred_region
      %s298 = ssub.s32 16, 16
      %299 = vsyncadd [#allocation53], %s298
      %s301 = sshll.u32 [#allocation52], 4
      %s302 = int_to_ptr.vmem [resolvable:$true] %s301
      %304 = dma.hbm_to_vmem [thread:$0]  %s115, 16, %s302, [#allocation53]
    $region117: #{_generator_forward_impl.1} parent=1 // pred_fallthru
      _
    // Predicated region
    $region118: #{_generator_forward_impl.1} parent=1 // pred_check
      _
    $region119: #{_generator_forward_impl.1} parent=1 // pred_check_branch
      %306 = sbr.rel (0) target = $region121
    $region120: #{_generator_forward_impl.1} parent=1 // pred_region
      _
    $region121: #{_generator_forward_impl.1} parent=1 // pred_fallthru
      _
    // Predicated region
    $region122: #{_generator_forward_impl.1} parent=1 // pred_check
      _
    $region123: #{_generator_forward_impl.1} parent=1 // pred_check_branch
      %308 = sbr.rel (0) target = $region125
    $region124: #{_generator_forward_impl.1} parent=1 // pred_region
      %309 = dma.done [#allocation33], 32
    $region125: #{_generator_forward_impl.1} parent=1 // pred_fallthru
      _
    // Predicated region
    $region126: #{_generator_forward_impl.1} parent=1 // pred_check
      _
    $region127: #{_generator_forward_impl.1} parent=1 // pred_check_branch
      %311 = sbr.rel (0) target = $region129
    $region128: #{_generator_forward_impl.1} parent=1 // pred_region
      %312 = dma.done [#allocation35], 16
    $region129: #{_generator_forward_impl.1} parent=1 // pred_fallthru
      _
    // Predicated region
    $region130: #{_generator_forward_impl.1} parent=1 // pred_check
      _
    $region131: #{_generator_forward_impl.1} parent=1 // pred_check_branch
      %314 = sbr.rel (0) target = $region133
    $region132: #{_generator_forward_impl.1} parent=1 // pred_region
      %315 = dma.done [#allocation35], 16
    $region133: #{_generator_forward_impl.1} parent=1 // pred_fallthru
      _
    // Predicated region
    $region134: #{_generator_forward_impl.1} parent=1 // pred_check
      _
    $region135: #{_generator_forward_impl.1} parent=1 // pred_check_branch
      %317 = sbr.rel (0) target = $region137
    $region136: #{_generator_forward_impl.1} parent=1 // pred_region
      %318 = dma.done [#allocation38], 32
    $region137: #{_generator_forward_impl.1} parent=1 // pred_fallthru
      _
    // Predicated region
    $region138: #{_generator_forward_impl.1} parent=1 // pred_check
      _
    $region139: #{_generator_forward_impl.1} parent=1 // pred_check_branch
      %320 = sbr.rel (0) target = $region141
    $region140: #{_generator_forward_impl.1} parent=1 // pred_region
      %321 = dma.done [#allocation38], 16
    $region141: #{_generator_forward_impl.1} parent=1 // pred_fallthru
      _
    // Predicated region
    $region142: #{_generator_forward_impl.1} parent=1 // pred_check
      _
    $region143: #{_generator_forward_impl.1} parent=1 // pred_check_branch
      %323 = sbr.rel (0) target = $region145
    $region144: #{_generator_forward_impl.1} parent=1 // pred_region
      %324 = dma.done [#allocation41], 32
    $region145: #{_generator_forward_impl.1} parent=1 // pred_fallthru
      _
    // Predicated region
    $region146: #{_generator_forward_impl.1} parent=1 // pred_check
      _
    $region147: #{_generator_forward_impl.1} parent=1 // pred_check_branch
      %326 = sbr.rel (0) target = $region149
    $region148: #{_generator_forward_impl.1} parent=1 // pred_region
      %327 = dma.done [#allocation41], 16
    $region149: #{_generator_forward_impl.1} parent=1 // pred_fallthru
      _
    // Predicated region
    $region150: #{_generator_forward_impl.1} parent=1 // pred_check
      _
    $region151: #{_generator_forward_impl.1} parent=1 // pred_check_branch
      %329 = sbr.rel (0) target = $region153
    $region152: #{_generator_forward_impl.1} parent=1 // pred_region
      %330 = dma.done [#allocation44], 16
    $region153: #{_generator_forward_impl.1} parent=1 // pred_fallthru
      _
    // Predicated region
    $region154: #{_generator_forward_impl.1} parent=1 // pred_check
      _
    $region155: #{_generator_forward_impl.1} parent=1 // pred_check_branch
      %332 = sbr.rel (0) target = $region157
    $region156: #{_generator_forward_impl.1} parent=1 // pred_region
      %333 = dma.done [#allocation44], 16
    $region157: #{_generator_forward_impl.1} parent=1 // pred_fallthru
      _
    // Predicated region
    $region158: #{_generator_forward_impl.1} parent=1 // pred_check
      _
    $region159: #{_generator_forward_impl.1} parent=1 // pred_check_branch
      %335 = sbr.rel (0) target = $region161
    $region160: #{_generator_forward_impl.1} parent=1 // pred_region
      %336 = dma.done [#allocation47], 16
    $region161: #{_generator_forward_impl.1} parent=1 // pred_fallthru
      _
    // Predicated region
    $region162: #{_generator_forward_impl.1} parent=1 // pred_check
      _
    $region163: #{_generator_forward_impl.1} parent=1 // pred_check_branch
      %338 = sbr.rel (0) target = $region165
    $region164: #{_generator_forward_impl.1} parent=1 // pred_region
      %339 = dma.done [#allocation47], 16
    $region165: #{_generator_forward_impl.1} parent=1 // pred_fallthru
      _
    // Predicated region
    $region166: #{_generator_forward_impl.1} parent=1 // pred_check
      _
    $region167: #{_generator_forward_impl.1} parent=1 // pred_check_branch
      %341 = sbr.rel (0) target = $region169
    $region168: #{_generator_forward_impl.1} parent=1 // pred_region
      %342 = dma.done [#allocation50], 32
    $region169: #{_generator_forward_impl.1} parent=1 // pred_fallthru
      _
    // Predicated region
    $region170: #{_generator_forward_impl.1} parent=1 // pred_check
      _
    $region171: #{_generator_forward_impl.1} parent=1 // pred_check_branch
      %344 = sbr.rel (0) target = $region173
    $region172: #{_generator_forward_impl.1} parent=1 // pred_region
      %345 = dma.done [#allocation50], 32
    $region173: #{_generator_forward_impl.1} parent=1 // pred_fallthru
      _
    // Predicated region
    $region174: #{_generator_forward_impl.1} parent=1 // pred_check
      _
    $region175: #{_generator_forward_impl.1} parent=1 // pred_check_branch
      %347 = sbr.rel (0) target = $region177
    $region176: #{_generator_forward_impl.1} parent=1 // pred_region
      %348 = dma.done [#allocation53], 16
    $region177: #{_generator_forward_impl.1} parent=1 // pred_fallthru
      _
    // Predicated region
    $region178: #{_generator_forward_impl.1} parent=1 // pred_check
      _
    $region179: #{_generator_forward_impl.1} parent=1 // pred_check_branch
      %351 = sbr.rel target = $region181
    $region180: #{_generator_forward_impl.1} parent=1 // pred_region
      %352 = sst [smem:[#allocation56]] [#allocation55]
      %353 = sst [smem:[#allocation57]] [#allocation54]
    $region181: #{_generator_forward_impl.1} parent=1 // pred_fallthru
      _
    %355 = shalt.err (0)
    %s357 = sshll.u32 [#allocation2], 4
    %s358 = int_to_ptr.vmem [resolvable:$true] %s357
    %360 = dma.hbm_to_vmem [thread:$0]  %s3, 256, %s358, [#allocation31]
    %s361 = scalar_lea.sflag [#allocation31], 1
    // Predicated region
    $region182: #{_generator_forward_impl.1} parent=1 // pred_check
      _
    $region183: #{_generator_forward_impl.1} parent=1 // pred_check_branch
      %363 = sbr.rel target = $region185
    $region184: #{_generator_forward_impl.1} parent=1 // pred_region
      %364 = sst [smem:[#allocation56]] [#allocation59]
      %365 = sst [smem:[#allocation57]] [#allocation58]
    $region185: #{_generator_forward_impl.1} parent=1 // pred_fallthru
      _
    %367 = shalt.err (0)
    %s369 = sshll.u32 [#allocation3], 4
    %s370 = int_to_ptr.vmem [resolvable:$true] %s369
    %372 = dma.hbm_to_vmem [thread:$0]  %s5, 2048, %s370, %s361
    %s373 = scalar_lea.sflag [#allocation31], 2
    %p375 = scmp.lt.u32.totalorder 8, 8
    %p376 = pneg %p375
    // Predicated region
    $region186: #{_generator_forward_impl.1} parent=1 // pred_check
      _
    $region187: #{_generator_forward_impl.1} parent=1 // pred_check_branch
      %378 = sbr.rel (%p375) target = $region189
    $region188: #{_generator_forward_impl.1} parent=1 // pred_region
      %s394 = sand.u32 8, 7
      %p395 = scmp.eq.s32.totalorder %s394, 0
      // Predicated region
      $region201: #{_generator_forward_impl.1} parent=188 // pred_check
        %p396 = pneg %p395
      $region202: #{_generator_forward_impl.1} parent=188 // pred_check_branch
        %398 = sbr.rel (%p396) target = $region204
      $region203: #{_generator_forward_impl.1} parent=188 // pred_region
        loop: start=0, step=1, limit=1
        $region205: #{_generator_forward_impl.1} parent=203 // loop_pre_header
          _
        $region206: #{_generator_forward_impl.1} parent=203 // loop_header
          %s400 = sphi 0, %s404
          %p401 = scmp.ge.s32.totalorder %s400, 1
          %s405 = sphi %s7, %s7
          %s406 = sphi [#allocation4], [#allocation4]
        $region207: #{_generator_forward_impl.1} parent=203 // loop_header_branch
          %403 = sbr.rel (%p401) target = $region211
        $region208: #{_generator_forward_impl.1} parent=203 // loop_body
          %v407 = vld [vmem:[%s405] sm:$0xff]
          %408 = vst [vmem:[%s406] sm:$0xff] %v407
        $region209: #{_generator_forward_impl.1} parent=203 // loop_footer
          %s404 = sadd.s32 1, %s400
        $region210: #{_generator_forward_impl.1} parent=203 // loop_footer_branch
          %399 = sbr.rel target = $region206
        $region211: #{_generator_forward_impl.1} parent=203 // loop_exit
          _
      $region204: #{_generator_forward_impl.1} parent=188 // pred_fallthru
        _
      %p409 = pneg %p395
      // Predicated region
      $region212: #{_generator_forward_impl.1} parent=188 // pred_check
        _
      $region213: #{_generator_forward_impl.1} parent=188 // pred_check_branch
        %411 = sbr.rel (%p395) target = $region215
      $region214: #{_generator_forward_impl.1} parent=188 // pred_region
        %s412 = sand.u32 8, 7
      $region215: #{_generator_forward_impl.1} parent=188 // pred_fallthru
        _
    $region189: #{_generator_forward_impl.1} parent=1 // pred_fallthru
      _
    // Predicated region
    $region190: #{_generator_forward_impl.1} parent=1 // pred_check
      %p379 = pneg %p375
    $region191: #{_generator_forward_impl.1} parent=1 // pred_check_branch
      %381 = sbr.rel (%p379) target = $region193
    $region192: #{_generator_forward_impl.1} parent=1 // pred_region
      %s382 = sshll.u32 1, 8
      %s383 = ssub.s32 %s382, 1
      loop: start=0, step=1, limit=1
      $region194: #{_generator_forward_impl.1} parent=192 // loop_pre_header
        _
      $region195: #{_generator_forward_impl.1} parent=192 // loop_header
        %s385 = sphi 0, %s389
        %p386 = scmp.ge.s32.totalorder %s385, 1
        %s390 = sphi %s7, %s7
        %s391 = sphi [#allocation4], [#allocation4]
      $region196: #{_generator_forward_impl.1} parent=192 // loop_header_branch
        %388 = sbr.rel (%p386) target = $region200
      $region197: #{_generator_forward_impl.1} parent=192 // loop_body
        %v392 = vld [vmem:[%s390] sm:%s383]
        %393 = vst [vmem:[%s391] sm:%s383] %v392
      $region198: #{_generator_forward_impl.1} parent=192 // loop_footer
        %s389 = sadd.s32 1, %s385
      $region199: #{_generator_forward_impl.1} parent=192 // loop_footer_branch
        %384 = sbr.rel target = $region195
      $region200: #{_generator_forward_impl.1} parent=192 // loop_exit
        _
    $region193: #{_generator_forward_impl.1} parent=1 // pred_fallthru
      _
    // Predicated region
    $region216: #{_generator_forward_impl.1} parent=1 // pred_check
      _
    $region217: #{_generator_forward_impl.1} parent=1 // pred_check_branch
      %415 = sbr.rel (0) target = $region219
    $region218: #{_generator_forward_impl.1} parent=1 // pred_region
      %416 = vsyncadd %s373, 128
    $region219: #{_generator_forward_impl.1} parent=1 // pred_fallthru
      _
    %s417 = scalar_lea.sflag [#allocation31], 3
    // Predicated region
    $region220: #{_generator_forward_impl.1} parent=1 // pred_check
      _
    $region221: #{_generator_forward_impl.1} parent=1 // pred_check_branch
      %419 = sbr.rel target = $region223
    $region222: #{_generator_forward_impl.1} parent=1 // pred_region
      %420 = sst [smem:[#allocation56]] [#allocation62]
      %421 = sst [smem:[#allocation57]] [#allocation61]
    $region223: #{_generator_forward_impl.1} parent=1 // pred_fallthru
      _
    %423 = shalt.err (0)
    %s425 = sshll.u32 [#allocation5], 4
    %s426 = int_to_ptr.vmem [resolvable:$true] %s425
    %428 = dma.hbm_to_vmem [thread:$0]  %s9, 2048, %s426, %s417
    %s429 = scalar_lea.sflag [#allocation31], 4
    // Predicated region
    $region224: #{_generator_forward_impl.1} parent=1 // pred_check
      _
    $region225: #{_generator_forward_impl.1} parent=1 // pred_check_branch
      %431 = sbr.rel target = $region227
    $region226: #{_generator_forward_impl.1} parent=1 // pred_region
      %432 = sst [smem:[#allocation56]] [#allocation64]
      %433 = sst [smem:[#allocation57]] [#allocation63]
    $region227: #{_generator_forward_impl.1} parent=1 // pred_fallthru
      _
    %435 = shalt.err (0)
    %s437 = sshll.u32 [#allocation6], 4
    %s438 = int_to_ptr.vmem [resolvable:$true] %s437
    %440 = dma.hbm_to_vmem [thread:$0]  %s11, 2048, %s438, %s429
    %s441 = scalar_lea.sflag [#allocation31], 5
    // Predicated region
    $region228: #{_generator_forward_impl.1} parent=1 // pred_check
      _
    $region229: #{_generator_forward_impl.1} parent=1 // pred_check_branch
      %443 = sbr.rel target = $region231
    $region230: #{_generator_forward_impl.1} parent=1 // pred_region
      %444 = sst [smem:[#allocation56]] [#allocation66]
      %445 = sst [smem:[#allocation57]] [#allocation65]
    $region231: #{_generator_forward_impl.1} parent=1 // pred_fallthru
      _
    %447 = shalt.err (0)
    %s449 = sshll.u32 [#allocation7], 4
    %s450 = int_to_ptr.vmem [resolvable:$true] %s449
    %452 = dma.hbm_to_vmem [thread:$0]  %s13, 2048, %s450, %s441
    %s453 = scalar_lea.sflag [#allocation31], 6
    // Predicated region
    $region232: #{_generator_forward_impl.1} parent=1 // pred_check
      _
    $region233: #{_generator_forward_impl.1} parent=1 // pred_check_branch
      %455 = sbr.rel target = $region235
    $region234: #{_generator_forward_impl.1} parent=1 // pred_region
      %456 = sst [smem:[#allocation56]] [#allocation68]
      %457 = sst [smem:[#allocation57]] [#allocation67]
    $region235: #{_generator_forward_impl.1} parent=1 // pred_fallthru
      _
    %459 = shalt.err (0)
    %s461 = sshll.u32 [#allocation8], 4
    %s462 = int_to_ptr.vmem [resolvable:$true] %s461
    %464 = dma.hbm_to_vmem [thread:$0]  %s15, 2048, %s462, %s453
    %s465 = scalar_lea.sflag [#allocation31], 7
    // Predicated region
    $region236: #{_generator_forward_impl.1} parent=1 // pred_check
      _
    $region237: #{_generator_forward_impl.1} parent=1 // pred_check_branch
      %467 = sbr.rel target = $region239
    $region238: #{_generator_forward_impl.1} parent=1 // pred_region
      %468 = sst [smem:[#allocation56]] [#allocation70]
      %469 = sst [smem:[#allocation57]] [#allocation69]
    $region239: #{_generator_forward_impl.1} parent=1 // pred_fallthru
      _
    %471 = shalt.err (0)
    %s473 = sshll.u32 [#allocation9], 4
    %s474 = int_to_ptr.vmem [resolvable:$true] %s473
    %476 = dma.hbm_to_vmem [thread:$0]  %s17, 2048, %s474, %s465
    %v477 = vld [vmem:[%s1] sm:$0xff]
    %s478 = scalar_lea.sflag [#allocation31], 8
    // Predicated region
    $region240: #{_generator_forward_impl.1} parent=1 // pred_check
      _
    $region241: #{_generator_forward_impl.1} parent=1 // pred_check_branch
      %480 = sbr.rel target = $region243
    $region242: #{_generator_forward_impl.1} parent=1 // pred_region
      %481 = sst [smem:[#allocation56]] [#allocation72]
      %482 = sst [smem:[#allocation57]] [#allocation71]
    $region243: #{_generator_forward_impl.1} parent=1 // pred_fallthru
      _
    %484 = shalt.err (0)
    %s486 = sshll.u32 [#allocation10], 4
    %s487 = int_to_ptr.vmem [resolvable:$true] %s486
    %489 = dma.hbm_to_vmem [thread:$0]  %s19, 2048, %s487, %s478
    %s490 = smul.u32 4, 2
    %s491 = smul.u32 %s490, 2
    %s492 = sshll.u32 %s491, 4
    %493 = dma.done [#allocation31], %s492
    %v494 = vpack.c.bf16 %v477, %v477
    %v495 = vld [vmem:[#allocation2] sm:$0xff]
    %v496 = vld [vmem:[#allocation2 + $0x8] sm:$0xff]
    %v497 = vld [vmem:[#allocation32] sm:$0x3]
    %v499 = vlaneseq
    %v500 = vshrl.u32 %v499, 7
    %v501 = vsub.s32 0, %v500
    %v502 = vrot.slane %v497, %v501
    %v503 = vlaneseq
    %v504 = vshrl.u32 %v503, 7
    %v505 = vsub.s32 1, %v504
    %v506 = vrot.slane %v497, %v505
    %v511 = vunpack.c.l.b16 %v495
    %v512 = vunpack.c.h.b16 %v495
    %v513 = vunpack.c.l.b16 %v496
    %v514 = vunpack.c.h.b16 %v496
    %v515 = vpack.c.b16 %v513, %v511
    %v516 = vpack.c.b16 %v514, %v512
    %vm519 = vcmask 130048
    %v521 = vsel %vm519, %v494, 0
    %523 = vmatprep.subr.bf16.mxu0 0
    %524 = vmatpush1.bf16.msra.mxu0 0
    %525 = vmatprep.subr.bf16.mxu0 0
    %526 = vmatpush1.bf16.msra.mxu0 0
    %527 = vmatprep.subr.bf16.mxu0 0
    %528 = vmatpush1.bf16.msra.mxu0 0
    %529 = vmatprep.subr.bf16.mxu0 0
    %530 = vmatpush1.bf16.msra.mxu0 0
    %531 = vmatprep.subr.bf16.mxu0 0
    %532 = vmatpush1.bf16.msra.mxu0 0
    %533 = vmatprep.subr.bf16.mxu0 0
    %534 = vmatpush1.bf16.msra.mxu0 0
    %535 = vmatprep.subr.bf16.mxu0 0
    %536 = vmatpush1.bf16.msra.mxu0 0
    %537 = vmatprep.subr.bf16.mxu0 %v516
    %538 = vmatpush1.bf16.msra.mxu0 %v515
    %539 = vmatprep.subr.bf16.mxu0 0
    %540 = vmatpush2.bf16.msra.mxu0 0
    %541 = vmatprep.subr.bf16.mxu0 0
    %542 = vmatpush2.bf16.msra.mxu0 0
    %543 = vmatprep.subr.bf16.mxu0 0
    %544 = vmatpush2.bf16.msra.mxu0 0
    %545 = vmatprep.subr.bf16.mxu0 0
    %546 = vmatpush2.bf16.msra.mxu0 0
    %547 = vmatprep.subr.bf16.mxu0 0
    %548 = vmatpush2.bf16.msra.mxu0 0
    %549 = vmatprep.subr.bf16.mxu0 0
    %550 = vmatpush2.bf16.msra.mxu0 0
    %551 = vmatprep.subr.bf16.mxu0 0
    %552 = vmatpush2.bf16.msra.mxu0 0
    %553 = vmatprep.subr.bf16.mxu0 0
    %554 = vmatpush2.bf16.msra.mxu0 0
    %555 = vmatprep.mubr.bf16.mxu0 0
    %556 = vmatmul.mubr.bf16.gmra.mxu0 %v521
    %v557 = vpop.f32.mrf.mxu0
    %v558 = vadd.f32 %v502, %v557
    %v559 = vpop.f32.mrf.mxu0
    %v560 = vadd.f32 %v506, %v559
    %v561 = vpop.f32.mrf.mxu0
    %v562 = vpop.f32.mrf.mxu0
    %563 = vdwg.mxu0
    %v564 = vmax.f32 %v558, 0.0
    %v565 = vmax.f32 %v560, 0.0
    %s566 = scalar_lea.sflag [#allocation31], 9
    // Predicated region
    $region244: #{_generator_forward_impl.1} parent=1 // pred_check
      _
    $region245: #{_generator_forward_impl.1} parent=1 // pred_check_branch
      %568 = sbr.rel target = $region247
    $region246: #{_generator_forward_impl.1} parent=1 // pred_region
      %569 = sst [smem:[#allocation56]] [#allocation74]
      %570 = sst [smem:[#allocation57]] [#allocation73]
    $region247: #{_generator_forward_impl.1} parent=1 // pred_fallthru
      _
    %572 = shalt.err (0)
    %s574 = sshll.u32 [#allocation11], 4
    %s575 = int_to_ptr.vmem [resolvable:$true] %s574
    %577 = dma.hbm_to_vmem [thread:$0]  %s21, 2048, %s575, %s566
    %s578 = smul.u32 4, 32
    %s579 = smul.u32 %s578, 1
    %s580 = sshll.u32 %s579, 4
    %581 = dma.done %s361, %s580
    %v582 = vpack.c.bf16 %v564, %v564
    %v583 = vpack.c.bf16 %v565, %v565
    %v584 = vld [vmem:[#allocation3] sm:$0xf]
    %v585 = vld [vmem:[#allocation3 + $0x4] sm:$0xf]
    %v586 = vld [vmem:[#allocation3 + $0x8] sm:$0xf]
    %v587 = vld [vmem:[#allocation3 + $0xc] sm:$0xf]
    %v588 = vld [vmem:[#allocation3 + $0x10] sm:$0xf]
    %v589 = vld [vmem:[#allocation3 + $0x14] sm:$0xf]
    %v590 = vld [vmem:[#allocation3 + $0x18] sm:$0xf]
    %v591 = vld [vmem:[#allocation3 + $0x1c] sm:$0xf]
    %v592 = vld [vmem:[#allocation3 + $0x20] sm:$0xf]
    %v593 = vld [vmem:[#allocation3 + $0x24] sm:$0xf]
    %v594 = vld [vmem:[#allocation3 + $0x28] sm:$0xf]
    %v595 = vld [vmem:[#allocation3 + $0x2c] sm:$0xf]
    %v596 = vld [vmem:[#allocation3 + $0x30] sm:$0xf]
    %v597 = vld [vmem:[#allocation3 + $0x34] sm:$0xf]
    %v598 = vld [vmem:[#allocation3 + $0x38] sm:$0xf]
    %v599 = vld [vmem:[#allocation3 + $0x3c] sm:$0xf]
    %v600 = vld [vmem:[#allocation3 + $0x40] sm:$0xf]
    %v601 = vld [vmem:[#allocation3 + $0x44] sm:$0xf]
    %v602 = vld [vmem:[#allocation3 + $0x48] sm:$0xf]
    %v603 = vld [vmem:[#allocation3 + $0x4c] sm:$0xf]
    %v604 = vld [vmem:[#allocation3 + $0x50] sm:$0xf]
    %v605 = vld [vmem:[#allocation3 + $0x54] sm:$0xf]
    %v606 = vld [vmem:[#allocation3 + $0x58] sm:$0xf]
    %v607 = vld [vmem:[#allocation3 + $0x5c] sm:$0xf]
    %v608 = vld [vmem:[#allocation3 + $0x60] sm:$0xf]
    %v609 = vld [vmem:[#allocation3 + $0x64] sm:$0xf]
    %v610 = vld [vmem:[#allocation3 + $0x68] sm:$0xf]
    %v611 = vld [vmem:[#allocation3 + $0x6c] sm:$0xf]
    %v612 = vld [vmem:[#allocation3 + $0x70] sm:$0xf]
    %v613 = vld [vmem:[#allocation3 + $0x74] sm:$0xf]
    %v614 = vld [vmem:[#allocation3 + $0x78] sm:$0xf]
    %v615 = vld [vmem:[#allocation3 + $0x7c] sm:$0xf]
    %v616 = vld [vmem:[#allocation34] sm:$0x1]
    %v618 = vlaneseq
    %v619 = vshrl.u32 %v618, 7
    %v620 = vsub.s32 0, %v619
    %v621 = vrot.slane %v616, %v620
    %v655 = vunpack.c.l.b16 %v584
    %v656 = vunpack.c.l.b16 %v585
    %v657 = vunpack.c.l.b16 %v586
    %v658 = vunpack.c.l.b16 %v587
    %v659 = vunpack.c.l.b16 %v588
    %v660 = vunpack.c.l.b16 %v589
    %v661 = vunpack.c.l.b16 %v590
    %v662 = vunpack.c.l.b16 %v591
    %v663 = vunpack.c.l.b16 %v592
    %v664 = vunpack.c.l.b16 %v593
    %v665 = vunpack.c.l.b16 %v594
    %v666 = vunpack.c.l.b16 %v595
    %v667 = vunpack.c.l.b16 %v596
    %v668 = vunpack.c.l.b16 %v597
    %v669 = vunpack.c.l.b16 %v598
    %v670 = vunpack.c.l.b16 %v599
    %v671 = vunpack.c.l.b16 %v600
    %v672 = vunpack.c.l.b16 %v601
    %v673 = vunpack.c.l.b16 %v602
    %v674 = vunpack.c.l.b16 %v603
    %v675 = vunpack.c.l.b16 %v604
    %v676 = vunpack.c.l.b16 %v605
    %v677 = vunpack.c.l.b16 %v606
    %v678 = vunpack.c.l.b16 %v607
    %v679 = vunpack.c.l.b16 %v608
    %v680 = vunpack.c.l.b16 %v609
    %v681 = vunpack.c.l.b16 %v610
    %v682 = vunpack.c.l.b16 %v611
    %v683 = vunpack.c.l.b16 %v612
    %v684 = vunpack.c.l.b16 %v613
    %v685 = vunpack.c.l.b16 %v614
    %v686 = vunpack.c.l.b16 %v615
    %v687 = vpack.c.b16 %v656, %v655
    %v688 = vpack.c.b16 %v658, %v657
    %v689 = vpack.c.b16 %v660, %v659
    %v690 = vpack.c.b16 %v662, %v661
    %v691 = vpack.c.b16 %v664, %v663
    %v692 = vpack.c.b16 %v666, %v665
    %v693 = vpack.c.b16 %v668, %v667
    %v694 = vpack.c.b16 %v670, %v669
    %v695 = vpack.c.b16 %v672, %v671
    %v696 = vpack.c.b16 %v674, %v673
    %v697 = vpack.c.b16 %v676, %v675
    %v698 = vpack.c.b16 %v678, %v677
    %v699 = vpack.c.b16 %v680, %v679
    %v700 = vpack.c.b16 %v682, %v681
    %v701 = vpack.c.b16 %v684, %v683
    %v702 = vpack.c.b16 %v686, %v685
    %719 = vmatprep.subr.bf16.mxu0 0
    %720 = vmatpush1.bf16.msra.mxu0 %v694
    %721 = vmatprep.subr.bf16.mxu0 0
    %722 = vmatpush1.bf16.msra.mxu0 %v693
    %723 = vmatprep.subr.bf16.mxu0 0
    %724 = vmatpush1.bf16.msra.mxu0 %v692
    %725 = vmatprep.subr.bf16.mxu0 0
    %726 = vmatpush1.bf16.msra.mxu0 %v691
    %727 = vmatprep.subr.bf16.mxu0 0
    %728 = vmatpush1.bf16.msra.mxu0 %v690
    %729 = vmatprep.subr.bf16.mxu0 0
    %730 = vmatpush1.bf16.msra.mxu0 %v689
    %731 = vmatprep.subr.bf16.mxu0 0
    %732 = vmatpush1.bf16.msra.mxu0 %v688
    %733 = vmatprep.subr.bf16.mxu0 0
    %734 = vmatpush1.bf16.msra.mxu0 %v687
    %735 = vmatprep.subr.bf16.mxu0 0
    %736 = vmatpush2.bf16.msra.mxu0 %v702
    %737 = vmatprep.subr.bf16.mxu0 0
    %738 = vmatpush2.bf16.msra.mxu0 %v701
    %739 = vmatprep.subr.bf16.mxu0 0
    %740 = vmatpush2.bf16.msra.mxu0 %v700
    %741 = vmatprep.subr.bf16.mxu0 0
    %742 = vmatpush2.bf16.msra.mxu0 %v699
    %743 = vmatprep.subr.bf16.mxu0 0
    %744 = vmatpush2.bf16.msra.mxu0 %v698
    %745 = vmatprep.subr.bf16.mxu0 0
    %746 = vmatpush2.bf16.msra.mxu0 %v697
    %747 = vmatprep.subr.bf16.mxu0 0
    %748 = vmatpush2.bf16.msra.mxu0 %v696
    %749 = vmatprep.subr.bf16.mxu0 0
    %750 = vmatpush2.bf16.msra.mxu0 %v695
    %751 = vmatprep.mubr.bf16.mxu0 %v583
    %752 = vmatmul.mubr.bf16.gmra.mxu0 %v582
    %v753 = vpop.f32.mrf.mxu0
    %v754 = vadd.f32 %v621, %v753
    %v755 = vpop.f32.mrf.mxu0
    %v756 = vpop.f32.mrf.mxu0
    %v757 = vpop.f32.mrf.mxu0
    %758 = vdwg.mxu0
    %s759 = scalar_lea.sflag [#allocation31], 10
    // Predicated region
    $region248: #{_generator_forward_impl.1} parent=1 // pred_check
      _
    $region249: #{_generator_forward_impl.1} parent=1 // pred_check_branch
      %761 = sbr.rel target = $region251
    $region250: #{_generator_forward_impl.1} parent=1 // pred_region
      %762 = sst [smem:[#allocation56]] [#allocation76]
      %763 = sst [smem:[#allocation57]] [#allocation75]
    $region251: #{_generator_forward_impl.1} parent=1 // pred_fallthru
      _
    %765 = shalt.err (0)
    %s767 = sshll.u32 [#allocation12], 4
    %s768 = int_to_ptr.vmem [resolvable:$true] %s767
    %770 = dma.hbm_to_vmem [thread:$0]  %s23, 4096, %s768, %s759
    %s771 = smul.u32 %s490, 1
    %s772 = sshll.u32 %s771, 4
    %773 = dma.done %s373, %s772
    %v774 = vld [vmem:[#allocation4] sm:$0xf]
    %v775 = vld [vmem:[#allocation4 + $0x4] sm:$0xf]
    %v776 = vld [vmem:[#allocation36] sm:$0x1]
    %v778 = vlaneseq
    %v779 = vshrl.u32 %v778, 7
    %v780 = vsub.s32 0, %v779
    %v781 = vrot.slane %v776, %v780
    %v785 = vunpack.c.l.b16 %v774
    %v786 = vunpack.c.l.b16 %v775
    %v787 = vpack.c.b16 %v786, %v785
    %789 = vmatprep.subr.bf16.mxu0 0
    %790 = vmatpush1.bf16.msra.mxu0 0
    %791 = vmatprep.subr.bf16.mxu0 0
    %792 = vmatpush1.bf16.msra.mxu0 0
    %793 = vmatprep.subr.bf16.mxu0 0
    %794 = vmatpush1.bf16.msra.mxu0 0
    %795 = vmatprep.subr.bf16.mxu0 0
    %796 = vmatpush1.bf16.msra.mxu0 0
    %797 = vmatprep.subr.bf16.mxu0 0
    %798 = vmatpush1.bf16.msra.mxu0 0
    %799 = vmatprep.subr.bf16.mxu0 0
    %800 = vmatpush1.bf16.msra.mxu0 0
    %801 = vmatprep.subr.bf16.mxu0 0
    %802 = vmatpush1.bf16.msra.mxu0 0
    %803 = vmatprep.subr.bf16.mxu0 0
    %804 = vmatpush1.bf16.msra.mxu0 %v787
    %805 = vmatprep.subr.bf16.mxu0 0
    %806 = vmatpush2.bf16.msra.mxu0 0
    %807 = vmatprep.subr.bf16.mxu0 0
    %808 = vmatpush2.bf16.msra.mxu0 0
    %809 = vmatprep.subr.bf16.mxu0 0
    %810 = vmatpush2.bf16.msra.mxu0 0
    %811 = vmatprep.subr.bf16.mxu0 0
    %812 = vmatpush2.bf16.msra.mxu0 0
    %813 = vmatprep.subr.bf16.mxu0 0
    %814 = vmatpush2.bf16.msra.mxu0 0
    %815 = vmatprep.subr.bf16.mxu0 0
    %816 = vmatpush2.bf16.msra.mxu0 0
    %817 = vmatprep.subr.bf16.mxu0 0
    %818 = vmatpush2.bf16.msra.mxu0 0
    %819 = vmatprep.subr.bf16.mxu0 0
    %820 = vmatpush2.bf16.msra.mxu0 0
    %821 = vmatprep.mubr.bf16.mxu0 0
    %822 = vmatmul.mubr.bf16.gmra.mxu0 %v521
    %v823 = vpop.f32.mrf.mxu0
    %v824 = vadd.f32 %v781, %v823
    %v825 = vpop.f32.mrf.mxu0
    %v826 = vpop.f32.mrf.mxu0
    %v827 = vpop.f32.mrf.mxu0
    %828 = vdwg.mxu0
    %v829 = vadd.f32 %v754, %v824
    %v830 = vmax.f32 %v829, 0.0
    %vm831 = vcmp.gt.f32.partialorder %v830, 0.0
    %v832 = vmul.f32 %v830, 0.01
    %v833 = vsel %vm831, %v830, %v832
    %s834 = scalar_lea.sflag [#allocation31], 11
    // Predicated region
    $region252: #{_generator_forward_impl.1} parent=1 // pred_check
      _
    $region253: #{_generator_forward_impl.1} parent=1 // pred_check_branch
      %836 = sbr.rel target = $region255
    $region254: #{_generator_forward_impl.1} parent=1 // pred_region
      %837 = sst [smem:[#allocation56]] [#allocation78]
      %838 = sst [smem:[#allocation57]] [#allocation77]
    $region255: #{_generator_forward_impl.1} parent=1 // pred_fallthru
      _
    %840 = shalt.err (0)
    %s842 = sshll.u32 [#allocation13], 4
    %s843 = int_to_ptr.vmem [resolvable:$true] %s842
    %845 = dma.hbm_to_vmem [thread:$0]  %s25, 2048, %s843, %s834
    %s846 = smul.u32 4, 16
    %s847 = smul.u32 %s846, 2
    %s848 = sshll.u32 %s847, 4
    %849 = dma.done %s417, %s848
    %v850 = vpack.c.bf16 %v833, %v833
    %v851 = vld [vmem:[#allocation5] sm:$0xff]
    %v852 = vld [vmem:[#allocation5 + $0x8] sm:$0xff]
    %v853 = vld [vmem:[#allocation5 + $0x10] sm:$0xff]
    %v854 = vld [vmem:[#allocation5 + $0x18] sm:$0xff]
    %v855 = vld [vmem:[#allocation5 + $0x20] sm:$0xff]
    %v856 = vld [vmem:[#allocation5 + $0x28] sm:$0xff]
    %v857 = vld [vmem:[#allocation5 + $0x30] sm:$0xff]
    %v858 = vld [vmem:[#allocation5 + $0x38] sm:$0xff]
    %v859 = vld [vmem:[#allocation5 + $0x40] sm:$0xff]
    %v860 = vld [vmem:[#allocation5 + $0x48] sm:$0xff]
    %v861 = vld [vmem:[#allocation5 + $0x50] sm:$0xff]
    %v862 = vld [vmem:[#allocation5 + $0x58] sm:$0xff]
    %v863 = vld [vmem:[#allocation5 + $0x60] sm:$0xff]
    %v864 = vld [vmem:[#allocation5 + $0x68] sm:$0xff]
    %v865 = vld [vmem:[#allocation5 + $0x70] sm:$0xff]
    %v866 = vld [vmem:[#allocation5 + $0x78] sm:$0xff]
    %v867 = vld [vmem:[#allocation37] sm:$0x3]
    %v869 = vlaneseq
    %v870 = vshrl.u32 %v869, 7
    %v871 = vsub.s32 0, %v870
    %v872 = vrot.slane %v867, %v871
    %v873 = vlaneseq
    %v874 = vshrl.u32 %v873, 7
    %v875 = vsub.s32 1, %v874
    %v876 = vrot.slane %v867, %v875
    %v895 = vunpack.c.l.b16 %v851
    %v896 = vunpack.c.h.b16 %v851
    %v897 = vunpack.c.l.b16 %v852
    %v898 = vunpack.c.h.b16 %v852
    %v899 = vunpack.c.l.b16 %v853
    %v900 = vunpack.c.h.b16 %v853
    %v901 = vunpack.c.l.b16 %v854
    %v902 = vunpack.c.h.b16 %v854
    %v903 = vunpack.c.l.b16 %v855
    %v904 = vunpack.c.h.b16 %v855
    %v905 = vunpack.c.l.b16 %v856
    %v906 = vunpack.c.h.b16 %v856
    %v907 = vunpack.c.l.b16 %v857
    %v908 = vunpack.c.h.b16 %v857
    %v909 = vunpack.c.l.b16 %v858
    %v910 = vunpack.c.h.b16 %v858
    %v911 = vunpack.c.l.b16 %v859
    %v912 = vunpack.c.h.b16 %v859
    %v913 = vunpack.c.l.b16 %v860
    %v914 = vunpack.c.h.b16 %v860
    %v915 = vunpack.c.l.b16 %v861
    %v916 = vunpack.c.h.b16 %v861
    %v917 = vunpack.c.l.b16 %v862
    %v918 = vunpack.c.h.b16 %v862
    %v919 = vunpack.c.l.b16 %v863
    %v920 = vunpack.c.h.b16 %v863
    %v921 = vunpack.c.l.b16 %v864
    %v922 = vunpack.c.h.b16 %v864
    %v923 = vunpack.c.l.b16 %v865
    %v924 = vunpack.c.h.b16 %v865
    %v925 = vunpack.c.l.b16 %v866
    %v926 = vunpack.c.h.b16 %v866
    %v927 = vpack.c.b16 %v897, %v895
    %v928 = vpack.c.b16 %v898, %v896
    %v929 = vpack.c.b16 %v901, %v899
    %v930 = vpack.c.b16 %v902, %v900
    %v931 = vpack.c.b16 %v905, %v903
    %v932 = vpack.c.b16 %v906, %v904
    %v933 = vpack.c.b16 %v909, %v907
    %v934 = vpack.c.b16 %v910, %v908
    %v935 = vpack.c.b16 %v913, %v911
    %v936 = vpack.c.b16 %v914, %v912
    %v937 = vpack.c.b16 %v917, %v915
    %v938 = vpack.c.b16 %v918, %v916
    %v939 = vpack.c.b16 %v921, %v919
    %v940 = vpack.c.b16 %v922, %v920
    %v941 = vpack.c.b16 %v925, %v923
    %v942 = vpack.c.b16 %v926, %v924
    %959 = vmatprep.subr.bf16.mxu0 %v942
    %960 = vmatpush1.bf16.msra.mxu0 %v941
    %961 = vmatprep.subr.bf16.mxu0 %v940
    %962 = vmatpush1.bf16.msra.mxu0 %v939
    %963 = vmatprep.subr.bf16.mxu0 %v938
    %964 = vmatpush1.bf16.msra.mxu0 %v937
    %965 = vmatprep.subr.bf16.mxu0 %v936
    %966 = vmatpush1.bf16.msra.mxu0 %v935
    %967 = vmatprep.subr.bf16.mxu0 %v934
    %968 = vmatpush1.bf16.msra.mxu0 %v933
    %969 = vmatprep.subr.bf16.mxu0 %v932
    %970 = vmatpush1.bf16.msra.mxu0 %v931
    %971 = vmatprep.subr.bf16.mxu0 %v930
    %972 = vmatpush1.bf16.msra.mxu0 %v929
    %973 = vmatprep.subr.bf16.mxu0 %v928
    %974 = vmatpush1.bf16.msra.mxu0 %v927
    %975 = vmatprep.subr.bf16.mxu0 0
    %976 = vmatpush2.bf16.msra.mxu0 0
    %977 = vmatprep.subr.bf16.mxu0 0
    %978 = vmatpush2.bf16.msra.mxu0 0
    %979 = vmatprep.subr.bf16.mxu0 0
    %980 = vmatpush2.bf16.msra.mxu0 0
    %981 = vmatprep.subr.bf16.mxu0 0
    %982 = vmatpush2.bf16.msra.mxu0 0
    %983 = vmatprep.subr.bf16.mxu0 0
    %984 = vmatpush2.bf16.msra.mxu0 0
    %985 = vmatprep.subr.bf16.mxu0 0
    %986 = vmatpush2.bf16.msra.mxu0 0
    %987 = vmatprep.subr.bf16.mxu0 0
    %988 = vmatpush2.bf16.msra.mxu0 0
    %989 = vmatprep.subr.bf16.mxu0 0
    %990 = vmatpush2.bf16.msra.mxu0 0
    %991 = vmatprep.mubr.bf16.mxu0 0
    %992 = vmatmul.mubr.bf16.gmra.mxu0 %v850
    %v993 = vpop.f32.mrf.mxu0
    %v994 = vadd.f32 %v872, %v993
    %v995 = vpop.f32.mrf.mxu0
    %v996 = vadd.f32 %v876, %v995
    %v997 = vpop.f32.mrf.mxu0
    %v998 = vpop.f32.mrf.mxu0
    %999 = vdwg.mxu0
    %v1000 = vmax.f32 %v994, 0.0
    %v1001 = vmax.f32 %v996, 0.0
    %s1002 = scalar_lea.sflag [#allocation31], 12
    // Predicated region
    $region256: #{_generator_forward_impl.1} parent=1 // pred_check
      _
    $region257: #{_generator_forward_impl.1} parent=1 // pred_check_branch
      %1004 = sbr.rel target = $region259
    $region258: #{_generator_forward_impl.1} parent=1 // pred_region
      %1005 = sst [smem:[#allocation56]] [#allocation80]
      %1006 = sst [smem:[#allocation57]] [#allocation79]
    $region259: #{_generator_forward_impl.1} parent=1 // pred_fallthru
      _
    %1008 = shalt.err (0)
    %s1010 = sshll.u32 [#allocation14], 4
    %s1011 = int_to_ptr.vmem [resolvable:$true] %s1010
    %1013 = dma.hbm_to_vmem [thread:$0]  %s27, 2048, %s1011, %s1002
    %s1014 = sshll.u32 %s579, 4
    %1015 = dma.done %s429, %s1014
    %v1016 = vpack.c.bf16 %v1000, %v1000
    %v1017 = vpack.c.bf16 %v1001, %v1001
    %v1018 = vld [vmem:[#allocation6] sm:$0xf]
    %v1019 = vld [vmem:[#allocation6 + $0x4] sm:$0xf]
    %v1020 = vld [vmem:[#allocation6 + $0x8] sm:$0xf]
    %v1021 = vld [vmem:[#allocation6 + $0xc] sm:$0xf]
    %v1022 = vld [vmem:[#allocation6 + $0x10] sm:$0xf]
    %v1023 = vld [vmem:[#allocation6 + $0x14] sm:$0xf]
    %v1024 = vld [vmem:[#allocation6 + $0x18] sm:$0xf]
    %v1025 = vld [vmem:[#allocation6 + $0x1c] sm:$0xf]
    %v1026 = vld [vmem:[#allocation6 + $0x20] sm:$0xf]
    %v1027 = vld [vmem:[#allocation6 + $0x24] sm:$0xf]
    %v1028 = vld [vmem:[#allocation6 + $0x28] sm:$0xf]
    %v1029 = vld [vmem:[#allocation6 + $0x2c] sm:$0xf]
    %v1030 = vld [vmem:[#allocation6 + $0x30] sm:$0xf]
    %v1031 = vld [vmem:[#allocation6 + $0x34] sm:$0xf]
    %v1032 = vld [vmem:[#allocation6 + $0x38] sm:$0xf]
    %v1033 = vld [vmem:[#allocation6 + $0x3c] sm:$0xf]
    %v1034 = vld [vmem:[#allocation6 + $0x40] sm:$0xf]
    %v1035 = vld [vmem:[#allocation6 + $0x44] sm:$0xf]
    %v1036 = vld [vmem:[#allocation6 + $0x48] sm:$0xf]
    %v1037 = vld [vmem:[#allocation6 + $0x4c] sm:$0xf]
    %v1038 = vld [vmem:[#allocation6 + $0x50] sm:$0xf]
    %v1039 = vld [vmem:[#allocation6 + $0x54] sm:$0xf]
    %v1040 = vld [vmem:[#allocation6 + $0x58] sm:$0xf]
    %v1041 = vld [vmem:[#allocation6 + $0x5c] sm:$0xf]
    %v1042 = vld [vmem:[#allocation6 + $0x60] sm:$0xf]
    %v1043 = vld [vmem:[#allocation6 + $0x64] sm:$0xf]
    %v1044 = vld [vmem:[#allocation6 + $0x68] sm:$0xf]
    %v1045 = vld [vmem:[#allocation6 + $0x6c] sm:$0xf]
    %v1046 = vld [vmem:[#allocation6 + $0x70] sm:$0xf]
    %v1047 = vld [vmem:[#allocation6 + $0x74] sm:$0xf]
    %v1048 = vld [vmem:[#allocation6 + $0x78] sm:$0xf]
    %v1049 = vld [vmem:[#allocation6 + $0x7c] sm:$0xf]
    %v1050 = vld [vmem:[#allocation39] sm:$0x1]
    %v1052 = vlaneseq
    %v1053 = vshrl.u32 %v1052, 7
    %v1054 = vsub.s32 0, %v1053
    %v1055 = vrot.slane %v1050, %v1054
    %v1089 = vunpack.c.l.b16 %v1018
    %v1090 = vunpack.c.l.b16 %v1019
    %v1091 = vunpack.c.l.b16 %v1020
    %v1092 = vunpack.c.l.b16 %v1021
    %v1093 = vunpack.c.l.b16 %v1022
    %v1094 = vunpack.c.l.b16 %v1023
    %v1095 = vunpack.c.l.b16 %v1024
    %v1096 = vunpack.c.l.b16 %v1025
    %v1097 = vunpack.c.l.b16 %v1026
    %v1098 = vunpack.c.l.b16 %v1027
    %v1099 = vunpack.c.l.b16 %v1028
    %v1100 = vunpack.c.l.b16 %v1029
    %v1101 = vunpack.c.l.b16 %v1030
    %v1102 = vunpack.c.l.b16 %v1031
    %v1103 = vunpack.c.l.b16 %v1032
    %v1104 = vunpack.c.l.b16 %v1033
    %v1105 = vunpack.c.l.b16 %v1034
    %v1106 = vunpack.c.l.b16 %v1035
    %v1107 = vunpack.c.l.b16 %v1036
    %v1108 = vunpack.c.l.b16 %v1037
    %v1109 = vunpack.c.l.b16 %v1038
    %v1110 = vunpack.c.l.b16 %v1039
    %v1111 = vunpack.c.l.b16 %v1040
    %v1112 = vunpack.c.l.b16 %v1041
    %v1113 = vunpack.c.l.b16 %v1042
    %v1114 = vunpack.c.l.b16 %v1043
    %v1115 = vunpack.c.l.b16 %v1044
    %v1116 = vunpack.c.l.b16 %v1045
    %v1117 = vunpack.c.l.b16 %v1046
    %v1118 = vunpack.c.l.b16 %v1047
    %v1119 = vunpack.c.l.b16 %v1048
    %v1120 = vunpack.c.l.b16 %v1049
    %v1121 = vpack.c.b16 %v1090, %v1089
    %v1122 = vpack.c.b16 %v1092, %v1091
    %v1123 = vpack.c.b16 %v1094, %v1093
    %v1124 = vpack.c.b16 %v1096, %v1095
    %v1125 = vpack.c.b16 %v1098, %v1097
    %v1126 = vpack.c.b16 %v1100, %v1099
    %v1127 = vpack.c.b16 %v1102, %v1101
    %v1128 = vpack.c.b16 %v1104, %v1103
    %v1129 = vpack.c.b16 %v1106, %v1105
    %v1130 = vpack.c.b16 %v1108, %v1107
    %v1131 = vpack.c.b16 %v1110, %v1109
    %v1132 = vpack.c.b16 %v1112, %v1111
    %v1133 = vpack.c.b16 %v1114, %v1113
    %v1134 = vpack.c.b16 %v1116, %v1115
    %v1135 = vpack.c.b16 %v1118, %v1117
    %v1136 = vpack.c.b16 %v1120, %v1119
    %1153 = vmatprep.subr.bf16.mxu0 0
    %1154 = vmatpush1.bf16.msra.mxu0 %v1128
    %1155 = vmatprep.subr.bf16.mxu0 0
    %1156 = vmatpush1.bf16.msra.mxu0 %v1127
    %1157 = vmatprep.subr.bf16.mxu0 0
    %1158 = vmatpush1.bf16.msra.mxu0 %v1126
    %1159 = vmatprep.subr.bf16.mxu0 0
    %1160 = vmatpush1.bf16.msra.mxu0 %v1125
    %1161 = vmatprep.subr.bf16.mxu0 0
    %1162 = vmatpush1.bf16.msra.mxu0 %v1124
    %1163 = vmatprep.subr.bf16.mxu0 0
    %1164 = vmatpush1.bf16.msra.mxu0 %v1123
    %1165 = vmatprep.subr.bf16.mxu0 0
    %1166 = vmatpush1.bf16.msra.mxu0 %v1122
    %1167 = vmatprep.subr.bf16.mxu0 0
    %1168 = vmatpush1.bf16.msra.mxu0 %v1121
    %1169 = vmatprep.subr.bf16.mxu0 0
    %1170 = vmatpush2.bf16.msra.mxu0 %v1136
    %1171 = vmatprep.subr.bf16.mxu0 0
    %1172 = vmatpush2.bf16.msra.mxu0 %v1135
    %1173 = vmatprep.subr.bf16.mxu0 0
    %1174 = vmatpush2.bf16.msra.mxu0 %v1134
    %1175 = vmatprep.subr.bf16.mxu0 0
    %1176 = vmatpush2.bf16.msra.mxu0 %v1133
    %1177 = vmatprep.subr.bf16.mxu0 0
    %1178 = vmatpush2.bf16.msra.mxu0 %v1132
    %1179 = vmatprep.subr.bf16.mxu0 0
    %1180 = vmatpush2.bf16.msra.mxu0 %v1131
    %1181 = vmatprep.subr.bf16.mxu0 0
    %1182 = vmatpush2.bf16.msra.mxu0 %v1130
    %1183 = vmatprep.subr.bf16.mxu0 0
    %1184 = vmatpush2.bf16.msra.mxu0 %v1129
    %1185 = vmatprep.mubr.bf16.mxu0 %v1017
    %1186 = vmatmul.mubr.bf16.gmra.mxu0 %v1016
    %v1187 = vpop.f32.mrf.mxu0
    %v1188 = vadd.f32 %v1055, %v1187
    %v1189 = vpop.f32.mrf.mxu0
    %v1190 = vpop.f32.mrf.mxu0
    %v1191 = vpop.f32.mrf.mxu0
    %1192 = vdwg.mxu0
    %v1193 = vadd.f32 %v1188, %v833
    %v1194 = vmax.f32 %v1193, 0.0
    %v1195 = vmax.f32 %v1194, 0.0
    %s1196 = scalar_lea.sflag [#allocation31], 13
    // Predicated region
    $region260: #{_generator_forward_impl.1} parent=1 // pred_check
      _
    $region261: #{_generator_forward_impl.1} parent=1 // pred_check_branch
      %1198 = sbr.rel target = $region263
    $region262: #{_generator_forward_impl.1} parent=1 // pred_region
      %1199 = sst [smem:[#allocation56]] [#allocation82]
      %1200 = sst [smem:[#allocation57]] [#allocation81]
    $region263: #{_generator_forward_impl.1} parent=1 // pred_fallthru
      _
    %1202 = shalt.err (0)
    %s1204 = sshll.u32 [#allocation15], 4
    %s1205 = int_to_ptr.vmem [resolvable:$true] %s1204
    %1207 = dma.hbm_to_vmem [thread:$0]  %s29, 4096, %s1205, %s1196
    %s1208 = sshll.u32 %s847, 4
    %1209 = dma.done %s441, %s1208
    %v1210 = vpack.c.bf16 %v1195, %v1195
    %v1211 = vld [vmem:[#allocation7] sm:$0xff]
    %v1212 = vld [vmem:[#allocation7 + $0x8] sm:$0xff]
    %v1213 = vld [vmem:[#allocation7 + $0x10] sm:$0xff]
    %v1214 = vld [vmem:[#allocation7 + $0x18] sm:$0xff]
    %v1215 = vld [vmem:[#allocation7 + $0x20] sm:$0xff]
    %v1216 = vld [vmem:[#allocation7 + $0x28] sm:$0xff]
    %v1217 = vld [vmem:[#allocation7 + $0x30] sm:$0xff]
    %v1218 = vld [vmem:[#allocation7 + $0x38] sm:$0xff]
    %v1219 = vld [vmem:[#allocation7 + $0x40] sm:$0xff]
    %v1220 = vld [vmem:[#allocation7 + $0x48] sm:$0xff]
    %v1221 = vld [vmem:[#allocation7 + $0x50] sm:$0xff]
    %v1222 = vld [vmem:[#allocation7 + $0x58] sm:$0xff]
    %v1223 = vld [vmem:[#allocation7 + $0x60] sm:$0xff]
    %v1224 = vld [vmem:[#allocation7 + $0x68] sm:$0xff]
    %v1225 = vld [vmem:[#allocation7 + $0x70] sm:$0xff]
    %v1226 = vld [vmem:[#allocation7 + $0x78] sm:$0xff]
    %v1227 = vld [vmem:[#allocation40] sm:$0x3]
    %v1229 = vlaneseq
    %v1230 = vshrl.u32 %v1229, 7
    %v1231 = vsub.s32 0, %v1230
    %v1232 = vrot.slane %v1227, %v1231
    %v1233 = vlaneseq
    %v1234 = vshrl.u32 %v1233, 7
    %v1235 = vsub.s32 1, %v1234
    %v1236 = vrot.slane %v1227, %v1235
    %v1255 = vunpack.c.l.b16 %v1211
    %v1256 = vunpack.c.h.b16 %v1211
    %v1257 = vunpack.c.l.b16 %v1212
    %v1258 = vunpack.c.h.b16 %v1212
    %v1259 = vunpack.c.l.b16 %v1213
    %v1260 = vunpack.c.h.b16 %v1213
    %v1261 = vunpack.c.l.b16 %v1214
    %v1262 = vunpack.c.h.b16 %v1214
    %v1263 = vunpack.c.l.b16 %v1215
    %v1264 = vunpack.c.h.b16 %v1215
    %v1265 = vunpack.c.l.b16 %v1216
    %v1266 = vunpack.c.h.b16 %v1216
    %v1267 = vunpack.c.l.b16 %v1217
    %v1268 = vunpack.c.h.b16 %v1217
    %v1269 = vunpack.c.l.b16 %v1218
    %v1270 = vunpack.c.h.b16 %v1218
    %v1271 = vunpack.c.l.b16 %v1219
    %v1272 = vunpack.c.h.b16 %v1219
    %v1273 = vunpack.c.l.b16 %v1220
    %v1274 = vunpack.c.h.b16 %v1220
    %v1275 = vunpack.c.l.b16 %v1221
    %v1276 = vunpack.c.h.b16 %v1221
    %v1277 = vunpack.c.l.b16 %v1222
    %v1278 = vunpack.c.h.b16 %v1222
    %v1279 = vunpack.c.l.b16 %v1223
    %v1280 = vunpack.c.h.b16 %v1223
    %v1281 = vunpack.c.l.b16 %v1224
    %v1282 = vunpack.c.h.b16 %v1224
    %v1283 = vunpack.c.l.b16 %v1225
    %v1284 = vunpack.c.h.b16 %v1225
    %v1285 = vunpack.c.l.b16 %v1226
    %v1286 = vunpack.c.h.b16 %v1226
    %v1287 = vpack.c.b16 %v1257, %v1255
    %v1288 = vpack.c.b16 %v1258, %v1256
    %v1289 = vpack.c.b16 %v1261, %v1259
    %v1290 = vpack.c.b16 %v1262, %v1260
    %v1291 = vpack.c.b16 %v1265, %v1263
    %v1292 = vpack.c.b16 %v1266, %v1264
    %v1293 = vpack.c.b16 %v1269, %v1267
    %v1294 = vpack.c.b16 %v1270, %v1268
    %v1295 = vpack.c.b16 %v1273, %v1271
    %v1296 = vpack.c.b16 %v1274, %v1272
    %v1297 = vpack.c.b16 %v1277, %v1275
    %v1298 = vpack.c.b16 %v1278, %v1276
    %v1299 = vpack.c.b16 %v1281, %v1279
    %v1300 = vpack.c.b16 %v1282, %v1280
    %v1301 = vpack.c.b16 %v1285, %v1283
    %v1302 = vpack.c.b16 %v1286, %v1284
    %1319 = vmatprep.subr.bf16.mxu0 %v1302
    %1320 = vmatpush1.bf16.msra.mxu0 %v1301
    %1321 = vmatprep.subr.bf16.mxu0 %v1300
    %1322 = vmatpush1.bf16.msra.mxu0 %v1299
    %1323 = vmatprep.subr.bf16.mxu0 %v1298
    %1324 = vmatpush1.bf16.msra.mxu0 %v1297
    %1325 = vmatprep.subr.bf16.mxu0 %v1296
    %1326 = vmatpush1.bf16.msra.mxu0 %v1295
    %1327 = vmatprep.subr.bf16.mxu0 %v1294
    %1328 = vmatpush1.bf16.msra.mxu0 %v1293
    %1329 = vmatprep.subr.bf16.mxu0 %v1292
    %1330 = vmatpush1.bf16.msra.mxu0 %v1291
    %1331 = vmatprep.subr.bf16.mxu0 %v1290
    %1332 = vmatpush1.bf16.msra.mxu0 %v1289
    %1333 = vmatprep.subr.bf16.mxu0 %v1288
    %1334 = vmatpush1.bf16.msra.mxu0 %v1287
    %1335 = vmatprep.subr.bf16.mxu0 0
    %1336 = vmatpush2.bf16.msra.mxu0 0
    %1337 = vmatprep.subr.bf16.mxu0 0
    %1338 = vmatpush2.bf16.msra.mxu0 0
    %1339 = vmatprep.subr.bf16.mxu0 0
    %1340 = vmatpush2.bf16.msra.mxu0 0
    %1341 = vmatprep.subr.bf16.mxu0 0
    %1342 = vmatpush2.bf16.msra.mxu0 0
    %1343 = vmatprep.subr.bf16.mxu0 0
    %1344 = vmatpush2.bf16.msra.mxu0 0
    %1345 = vmatprep.subr.bf16.mxu0 0
    %1346 = vmatpush2.bf16.msra.mxu0 0
    %1347 = vmatprep.subr.bf16.mxu0 0
    %1348 = vmatpush2.bf16.msra.mxu0 0
    %1349 = vmatprep.subr.bf16.mxu0 0
    %1350 = vmatpush2.bf16.msra.mxu0 0
    %1351 = vmatprep.mubr.bf16.mxu0 0
    %1352 = vmatmul.mubr.bf16.gmra.mxu0 %v1210
    %v1353 = vpop.f32.mrf.mxu0
    %v1354 = vadd.f32 %v1232, %v1353
    %v1355 = vpop.f32.mrf.mxu0
    %v1356 = vadd.f32 %v1236, %v1355
    %v1357 = vpop.f32.mrf.mxu0
    %v1358 = vpop.f32.mrf.mxu0
    %1359 = vdwg.mxu0
    %v1360 = vmax.f32 %v1354, 0.0
    %v1361 = vmax.f32 %v1356, 0.0
    %s1362 = scalar_lea.sflag [#allocation31], 14
    // Predicated region
    $region264: #{_generator_forward_impl.1} parent=1 // pred_check
      _
    $region265: #{_generator_forward_impl.1} parent=1 // pred_check_branch
      %1364 = sbr.rel target = $region267
    $region266: #{_generator_forward_impl.1} parent=1 // pred_region
      %1365 = sst [smem:[#allocation56]] [#allocation84]
      %1366 = sst [smem:[#allocation57]] [#allocation83]
    $region267: #{_generator_forward_impl.1} parent=1 // pred_fallthru
      _
    %1368 = shalt.err (0)
    %s1370 = sshll.u32 [#allocation16], 4
    %s1371 = int_to_ptr.vmem [resolvable:$true] %s1370
    %1373 = dma.hbm_to_vmem [thread:$0]  %s31, 8192, %s1371, %s1362
    %s1374 = sshll.u32 %s579, 4
    %1375 = dma.done %s453, %s1374
    %v1376 = vpack.c.bf16 %v1360, %v1360
    %v1377 = vpack.c.bf16 %v1361, %v1361
    %v1378 = vld [vmem:[#allocation8] sm:$0xf]
    %v1379 = vld [vmem:[#allocation8 + $0x4] sm:$0xf]
    %v1380 = vld [vmem:[#allocation8 + $0x8] sm:$0xf]
    %v1381 = vld [vmem:[#allocation8 + $0xc] sm:$0xf]
    %v1382 = vld [vmem:[#allocation8 + $0x10] sm:$0xf]
    %v1383 = vld [vmem:[#allocation8 + $0x14] sm:$0xf]
    %v1384 = vld [vmem:[#allocation8 + $0x18] sm:$0xf]
    %v1385 = vld [vmem:[#allocation8 + $0x1c] sm:$0xf]
    %v1386 = vld [vmem:[#allocation8 + $0x20] sm:$0xf]
    %v1387 = vld [vmem:[#allocation8 + $0x24] sm:$0xf]
    %v1388 = vld [vmem:[#allocation8 + $0x28] sm:$0xf]
    %v1389 = vld [vmem:[#allocation8 + $0x2c] sm:$0xf]
    %v1390 = vld [vmem:[#allocation8 + $0x30] sm:$0xf]
    %v1391 = vld [vmem:[#allocation8 + $0x34] sm:$0xf]
    %v1392 = vld [vmem:[#allocation8 + $0x38] sm:$0xf]
    %v1393 = vld [vmem:[#allocation8 + $0x3c] sm:$0xf]
    %v1394 = vld [vmem:[#allocation8 + $0x40] sm:$0xf]
    %v1395 = vld [vmem:[#allocation8 + $0x44] sm:$0xf]
    %v1396 = vld [vmem:[#allocation8 + $0x48] sm:$0xf]
    %v1397 = vld [vmem:[#allocation8 + $0x4c] sm:$0xf]
    %v1398 = vld [vmem:[#allocation8 + $0x50] sm:$0xf]
    %v1399 = vld [vmem:[#allocation8 + $0x54] sm:$0xf]
    %v1400 = vld [vmem:[#allocation8 + $0x58] sm:$0xf]
    %v1401 = vld [vmem:[#allocation8 + $0x5c] sm:$0xf]
    %v1402 = vld [vmem:[#allocation8 + $0x60] sm:$0xf]
    %v1403 = vld [vmem:[#allocation8 + $0x64] sm:$0xf]
    %v1404 = vld [vmem:[#allocation8 + $0x68] sm:$0xf]
    %v1405 = vld [vmem:[#allocation8 + $0x6c] sm:$0xf]
    %v1406 = vld [vmem:[#allocation8 + $0x70] sm:$0xf]
    %v1407 = vld [vmem:[#allocation8 + $0x74] sm:$0xf]
    %v1408 = vld [vmem:[#allocation8 + $0x78] sm:$0xf]
    %v1409 = vld [vmem:[#allocation8 + $0x7c] sm:$0xf]
    %v1410 = vld [vmem:[#allocation42] sm:$0x1]
    %v1412 = vlaneseq
    %v1413 = vshrl.u32 %v1412, 7
    %v1414 = vsub.s32 0, %v1413
    %v1415 = vrot.slane %v1410, %v1414
    %v1449 = vunpack.c.l.b16 %v1378
    %v1450 = vunpack.c.l.b16 %v1379
    %v1451 = vunpack.c.l.b16 %v1380
    %v1452 = vunpack.c.l.b16 %v1381
    %v1453 = vunpack.c.l.b16 %v1382
    %v1454 = vunpack.c.l.b16 %v1383
    %v1455 = vunpack.c.l.b16 %v1384
    %v1456 = vunpack.c.l.b16 %v1385
    %v1457 = vunpack.c.l.b16 %v1386
    %v1458 = vunpack.c.l.b16 %v1387
    %v1459 = vunpack.c.l.b16 %v1388
    %v1460 = vunpack.c.l.b16 %v1389
    %v1461 = vunpack.c.l.b16 %v1390
    %v1462 = vunpack.c.l.b16 %v1391
    %v1463 = vunpack.c.l.b16 %v1392
    %v1464 = vunpack.c.l.b16 %v1393
    %v1465 = vunpack.c.l.b16 %v1394
    %v1466 = vunpack.c.l.b16 %v1395
    %v1467 = vunpack.c.l.b16 %v1396
    %v1468 = vunpack.c.l.b16 %v1397
    %v1469 = vunpack.c.l.b16 %v1398
    %v1470 = vunpack.c.l.b16 %v1399
    %v1471 = vunpack.c.l.b16 %v1400
    %v1472 = vunpack.c.l.b16 %v1401
    %v1473 = vunpack.c.l.b16 %v1402
    %v1474 = vunpack.c.l.b16 %v1403
    %v1475 = vunpack.c.l.b16 %v1404
    %v1476 = vunpack.c.l.b16 %v1405
    %v1477 = vunpack.c.l.b16 %v1406
    %v1478 = vunpack.c.l.b16 %v1407
    %v1479 = vunpack.c.l.b16 %v1408
    %v1480 = vunpack.c.l.b16 %v1409
    %v1481 = vpack.c.b16 %v1450, %v1449
    %v1482 = vpack.c.b16 %v1452, %v1451
    %v1483 = vpack.c.b16 %v1454, %v1453
    %v1484 = vpack.c.b16 %v1456, %v1455
    %v1485 = vpack.c.b16 %v1458, %v1457
    %v1486 = vpack.c.b16 %v1460, %v1459
    %v1487 = vpack.c.b16 %v1462, %v1461
    %v1488 = vpack.c.b16 %v1464, %v1463
    %v1489 = vpack.c.b16 %v1466, %v1465
    %v1490 = vpack.c.b16 %v1468, %v1467
    %v1491 = vpack.c.b16 %v1470, %v1469
    %v1492 = vpack.c.b16 %v1472, %v1471
    %v1493 = vpack.c.b16 %v1474, %v1473
    %v1494 = vpack.c.b16 %v1476, %v1475
    %v1495 = vpack.c.b16 %v1478, %v1477
    %v1496 = vpack.c.b16 %v1480, %v1479
    %1513 = vmatprep.subr.bf16.mxu0 0
    %1514 = vmatpush1.bf16.msra.mxu0 %v1488
    %1515 = vmatprep.subr.bf16.mxu0 0
    %1516 = vmatpush1.bf16.msra.mxu0 %v1487
    %1517 = vmatprep.subr.bf16.mxu0 0
    %1518 = vmatpush1.bf16.msra.mxu0 %v1486
    %1519 = vmatprep.subr.bf16.mxu0 0
    %1520 = vmatpush1.bf16.msra.mxu0 %v1485
    %1521 = vmatprep.subr.bf16.mxu0 0
    %1522 = vmatpush1.bf16.msra.mxu0 %v1484
    %1523 = vmatprep.subr.bf16.mxu0 0
    %1524 = vmatpush1.bf16.msra.mxu0 %v1483
    %1525 = vmatprep.subr.bf16.mxu0 0
    %1526 = vmatpush1.bf16.msra.mxu0 %v1482
    %1527 = vmatprep.subr.bf16.mxu0 0
    %1528 = vmatpush1.bf16.msra.mxu0 %v1481
    %1529 = vmatprep.subr.bf16.mxu0 0
    %1530 = vmatpush2.bf16.msra.mxu0 %v1496
    %1531 = vmatprep.subr.bf16.mxu0 0
    %1532 = vmatpush2.bf16.msra.mxu0 %v1495
    %1533 = vmatprep.subr.bf16.mxu0 0
    %1534 = vmatpush2.bf16.msra.mxu0 %v1494
    %1535 = vmatprep.subr.bf16.mxu0 0
    %1536 = vmatpush2.bf16.msra.mxu0 %v1493
    %1537 = vmatprep.subr.bf16.mxu0 0
    %1538 = vmatpush2.bf16.msra.mxu0 %v1492
    %1539 = vmatprep.subr.bf16.mxu0 0
    %1540 = vmatpush2.bf16.msra.mxu0 %v1491
    %1541 = vmatprep.subr.bf16.mxu0 0
    %1542 = vmatpush2.bf16.msra.mxu0 %v1490
    %1543 = vmatprep.subr.bf16.mxu0 0
    %1544 = vmatpush2.bf16.msra.mxu0 %v1489
    %1545 = vmatprep.mubr.bf16.mxu0 %v1377
    %1546 = vmatmul.mubr.bf16.gmra.mxu0 %v1376
    %v1547 = vpop.f32.mrf.mxu0
    %v1548 = vadd.f32 %v1415, %v1547
    %v1549 = vpop.f32.mrf.mxu0
    %v1550 = vpop.f32.mrf.mxu0
    %v1551 = vpop.f32.mrf.mxu0
    %1552 = vdwg.mxu0
    %v1553 = vadd.f32 %v1548, %v1195
    %v1554 = vmax.f32 %v1553, 0.0
    %v1555 = vmax.f32 %v1554, 0.0
    %s1556 = scalar_lea.sflag [#allocation31], 15
    // Predicated region
    $region268: #{_generator_forward_impl.1} parent=1 // pred_check
      _
    $region269: #{_generator_forward_impl.1} parent=1 // pred_check_branch
      %1558 = sbr.rel target = $region271
    $region270: #{_generator_forward_impl.1} parent=1 // pred_region
      %1559 = sst [smem:[#allocation56]] [#allocation86]
      %1560 = sst [smem:[#allocation57]] [#allocation85]
    $region271: #{_generator_forward_impl.1} parent=1 // pred_fallthru
      _
    %1562 = shalt.err (0)
    %s1564 = sshll.u32 [#allocation17], 4
    %s1565 = int_to_ptr.vmem [resolvable:$true] %s1564
    %1567 = dma.hbm_to_vmem [thread:$0]  %s33, 8192, %s1565, %s1556
    %s1568 = sshll.u32 %s847, 4
    %1569 = dma.done %s465, %s1568
    %v1570 = vpack.c.bf16 %v1555, %v1555
    %v1571 = vld [vmem:[#allocation9] sm:$0xff]
    %v1572 = vld [vmem:[#allocation9 + $0x8] sm:$0xff]
    %v1573 = vld [vmem:[#allocation9 + $0x10] sm:$0xff]
    %v1574 = vld [vmem:[#allocation9 + $0x18] sm:$0xff]
    %v1575 = vld [vmem:[#allocation9 + $0x20] sm:$0xff]
    %v1576 = vld [vmem:[#allocation9 + $0x28] sm:$0xff]
    %v1577 = vld [vmem:[#allocation9 + $0x30] sm:$0xff]
    %v1578 = vld [vmem:[#allocation9 + $0x38] sm:$0xff]
    %v1579 = vld [vmem:[#allocation9 + $0x40] sm:$0xff]
    %v1580 = vld [vmem:[#allocation9 + $0x48] sm:$0xff]
    %v1581 = vld [vmem:[#allocation9 + $0x50] sm:$0xff]
    %v1582 = vld [vmem:[#allocation9 + $0x58] sm:$0xff]
    %v1583 = vld [vmem:[#allocation9 + $0x60] sm:$0xff]
    %v1584 = vld [vmem:[#allocation9 + $0x68] sm:$0xff]
    %v1585 = vld [vmem:[#allocation9 + $0x70] sm:$0xff]
    %v1586 = vld [vmem:[#allocation9 + $0x78] sm:$0xff]
    %v1587 = vld [vmem:[%s75] sm:$0x3]
    %v1589 = vlaneseq
    %v1590 = vshrl.u32 %v1589, 7
    %v1591 = vsub.s32 0, %v1590
    %v1592 = vrot.slane %v1587, %v1591
    %v1593 = vlaneseq
    %v1594 = vshrl.u32 %v1593, 7
    %v1595 = vsub.s32 1, %v1594
    %v1596 = vrot.slane %v1587, %v1595
    %v1615 = vunpack.c.l.b16 %v1571
    %v1616 = vunpack.c.h.b16 %v1571
    %v1617 = vunpack.c.l.b16 %v1572
    %v1618 = vunpack.c.h.b16 %v1572
    %v1619 = vunpack.c.l.b16 %v1573
    %v1620 = vunpack.c.h.b16 %v1573
    %v1621 = vunpack.c.l.b16 %v1574
    %v1622 = vunpack.c.h.b16 %v1574
    %v1623 = vunpack.c.l.b16 %v1575
    %v1624 = vunpack.c.h.b16 %v1575
    %v1625 = vunpack.c.l.b16 %v1576
    %v1626 = vunpack.c.h.b16 %v1576
    %v1627 = vunpack.c.l.b16 %v1577
    %v1628 = vunpack.c.h.b16 %v1577
    %v1629 = vunpack.c.l.b16 %v1578
    %v1630 = vunpack.c.h.b16 %v1578
    %v1631 = vunpack.c.l.b16 %v1579
    %v1632 = vunpack.c.h.b16 %v1579
    %v1633 = vunpack.c.l.b16 %v1580
    %v1634 = vunpack.c.h.b16 %v1580
    %v1635 = vunpack.c.l.b16 %v1581
    %v1636 = vunpack.c.h.b16 %v1581
    %v1637 = vunpack.c.l.b16 %v1582
    %v1638 = vunpack.c.h.b16 %v1582
    %v1639 = vunpack.c.l.b16 %v1583
    %v1640 = vunpack.c.h.b16 %v1583
    %v1641 = vunpack.c.l.b16 %v1584
    %v1642 = vunpack.c.h.b16 %v1584
    %v1643 = vunpack.c.l.b16 %v1585
    %v1644 = vunpack.c.h.b16 %v1585
    %v1645 = vunpack.c.l.b16 %v1586
    %v1646 = vunpack.c.h.b16 %v1586
    %v1647 = vpack.c.b16 %v1617, %v1615
    %v1648 = vpack.c.b16 %v1618, %v1616
    %v1649 = vpack.c.b16 %v1621, %v1619
    %v1650 = vpack.c.b16 %v1622, %v1620
    %v1651 = vpack.c.b16 %v1625, %v1623
    %v1652 = vpack.c.b16 %v1626, %v1624
    %v1653 = vpack.c.b16 %v1629, %v1627
    %v1654 = vpack.c.b16 %v1630, %v1628
    %v1655 = vpack.c.b16 %v1633, %v1631
    %v1656 = vpack.c.b16 %v1634, %v1632
    %v1657 = vpack.c.b16 %v1637, %v1635
    %v1658 = vpack.c.b16 %v1638, %v1636
    %v1659 = vpack.c.b16 %v1641, %v1639
    %v1660 = vpack.c.b16 %v1642, %v1640
    %v1661 = vpack.c.b16 %v1645, %v1643
    %v1662 = vpack.c.b16 %v1646, %v1644
    %1679 = vmatprep.subr.bf16.mxu0 %v1662
    %1680 = vmatpush1.bf16.msra.mxu0 %v1661
    %1681 = vmatprep.subr.bf16.mxu0 %v1660
    %1682 = vmatpush1.bf16.msra.mxu0 %v1659
    %1683 = vmatprep.subr.bf16.mxu0 %v1658
    %1684 = vmatpush1.bf16.msra.mxu0 %v1657
    %1685 = vmatprep.subr.bf16.mxu0 %v1656
    %1686 = vmatpush1.bf16.msra.mxu0 %v1655
    %1687 = vmatprep.subr.bf16.mxu0 %v1654
    %1688 = vmatpush1.bf16.msra.mxu0 %v1653
    %1689 = vmatprep.subr.bf16.mxu0 %v1652
    %1690 = vmatpush1.bf16.msra.mxu0 %v1651
    %1691 = vmatprep.subr.bf16.mxu0 %v1650
    %1692 = vmatpush1.bf16.msra.mxu0 %v1649
    %1693 = vmatprep.subr.bf16.mxu0 %v1648
    %1694 = vmatpush1.bf16.msra.mxu0 %v1647
    %1695 = vmatprep.subr.bf16.mxu0 0
    %1696 = vmatpush2.bf16.msra.mxu0 0
    %1697 = vmatprep.subr.bf16.mxu0 0
    %1698 = vmatpush2.bf16.msra.mxu0 0
    %1699 = vmatprep.subr.bf16.mxu0 0
    %1700 = vmatpush2.bf16.msra.mxu0 0
    %1701 = vmatprep.subr.bf16.mxu0 0
    %1702 = vmatpush2.bf16.msra.mxu0 0
    %1703 = vmatprep.subr.bf16.mxu0 0
    %1704 = vmatpush2.bf16.msra.mxu0 0
    %1705 = vmatprep.subr.bf16.mxu0 0
    %1706 = vmatpush2.bf16.msra.mxu0 0
    %1707 = vmatprep.subr.bf16.mxu0 0
    %1708 = vmatpush2.bf16.msra.mxu0 0
    %1709 = vmatprep.subr.bf16.mxu0 0
    %1710 = vmatpush2.bf16.msra.mxu0 0
    %1711 = vmatprep.mubr.bf16.mxu0 0
    %1712 = vmatmul.mubr.bf16.gmra.mxu0 %v1570
    %v1713 = vpop.f32.mrf.mxu0
    %v1714 = vadd.f32 %v1592, %v1713
    %v1715 = vpop.f32.mrf.mxu0
    %v1716 = vadd.f32 %v1596, %v1715
    %v1717 = vpop.f32.mrf.mxu0
    %v1718 = vpop.f32.mrf.mxu0
    %1719 = vdwg.mxu0
    %v1720 = vmax.f32 %v1714, 0.0
    %v1721 = vmax.f32 %v1716, 0.0
    %s1722 = scalar_lea.sflag [#allocation31], 16
    // Predicated region
    $region272: #{_generator_forward_impl.1} parent=1 // pred_check
      _
    $region273: #{_generator_forward_impl.1} parent=1 // pred_check_branch
      %1724 = sbr.rel target = $region275
    $region274: #{_generator_forward_impl.1} parent=1 // pred_region
      %1725 = sst [smem:[#allocation56]] [#allocation88]
      %1726 = sst [smem:[#allocation57]] [#allocation87]
    $region275: #{_generator_forward_impl.1} parent=1 // pred_fallthru
      _
    %1728 = shalt.err (0)
    %s1730 = sshll.u32 [#allocation18], 4
    %s1731 = int_to_ptr.vmem [resolvable:$true] %s1730
    %1733 = dma.hbm_to_vmem [thread:$0]  %s35, 2048, %s1731, %s1722
    %s1734 = sshll.u32 %s579, 4
    %1735 = dma.done %s478, %s1734
    %v1736 = vpack.c.bf16 %v1720, %v1720
    %v1737 = vpack.c.bf16 %v1721, %v1721
    %v1738 = vld [vmem:[#allocation10] sm:$0xf]
    %v1739 = vld [vmem:[#allocation10 + $0x4] sm:$0xf]
    %v1740 = vld [vmem:[#allocation10 + $0x8] sm:$0xf]
    %v1741 = vld [vmem:[#allocation10 + $0xc] sm:$0xf]
    %v1742 = vld [vmem:[#allocation10 + $0x10] sm:$0xf]
    %v1743 = vld [vmem:[#allocation10 + $0x14] sm:$0xf]
    %v1744 = vld [vmem:[#allocation10 + $0x18] sm:$0xf]
    %v1745 = vld [vmem:[#allocation10 + $0x1c] sm:$0xf]
    %v1746 = vld [vmem:[#allocation10 + $0x20] sm:$0xf]
    %v1747 = vld [vmem:[#allocation10 + $0x24] sm:$0xf]
    %v1748 = vld [vmem:[#allocation10 + $0x28] sm:$0xf]
    %v1749 = vld [vmem:[#allocation10 + $0x2c] sm:$0xf]
    %v1750 = vld [vmem:[#allocation10 + $0x30] sm:$0xf]
    %v1751 = vld [vmem:[#allocation10 + $0x34] sm:$0xf]
    %v1752 = vld [vmem:[#allocation10 + $0x38] sm:$0xf]
    %v1753 = vld [vmem:[#allocation10 + $0x3c] sm:$0xf]
    %v1754 = vld [vmem:[#allocation10 + $0x40] sm:$0xf]
    %v1755 = vld [vmem:[#allocation10 + $0x44] sm:$0xf]
    %v1756 = vld [vmem:[#allocation10 + $0x48] sm:$0xf]
    %v1757 = vld [vmem:[#allocation10 + $0x4c] sm:$0xf]
    %v1758 = vld [vmem:[#allocation10 + $0x50] sm:$0xf]
    %v1759 = vld [vmem:[#allocation10 + $0x54] sm:$0xf]
    %v1760 = vld [vmem:[#allocation10 + $0x58] sm:$0xf]
    %v1761 = vld [vmem:[#allocation10 + $0x5c] sm:$0xf]
    %v1762 = vld [vmem:[#allocation10 + $0x60] sm:$0xf]
    %v1763 = vld [vmem:[#allocation10 + $0x64] sm:$0xf]
    %v1764 = vld [vmem:[#allocation10 + $0x68] sm:$0xf]
    %v1765 = vld [vmem:[#allocation10 + $0x6c] sm:$0xf]
    %v1766 = vld [vmem:[#allocation10 + $0x70] sm:$0xf]
    %v1767 = vld [vmem:[#allocation10 + $0x74] sm:$0xf]
    %v1768 = vld [vmem:[#allocation10 + $0x78] sm:$0xf]
    %v1769 = vld [vmem:[#allocation10 + $0x7c] sm:$0xf]
    %v1770 = vld [vmem:[#allocation43] sm:$0x1]
    %v1772 = vlaneseq
    %v1773 = vshrl.u32 %v1772, 7
    %v1774 = vsub.s32 0, %v1773
    %v1775 = vrot.slane %v1770, %v1774
    %v1809 = vunpack.c.l.b16 %v1738
    %v1810 = vunpack.c.l.b16 %v1739
    %v1811 = vunpack.c.l.b16 %v1740
    %v1812 = vunpack.c.l.b16 %v1741
    %v1813 = vunpack.c.l.b16 %v1742
    %v1814 = vunpack.c.l.b16 %v1743
    %v1815 = vunpack.c.l.b16 %v1744
    %v1816 = vunpack.c.l.b16 %v1745
    %v1817 = vunpack.c.l.b16 %v1746
    %v1818 = vunpack.c.l.b16 %v1747
    %v1819 = vunpack.c.l.b16 %v1748
    %v1820 = vunpack.c.l.b16 %v1749
    %v1821 = vunpack.c.l.b16 %v1750
    %v1822 = vunpack.c.l.b16 %v1751
    %v1823 = vunpack.c.l.b16 %v1752
    %v1824 = vunpack.c.l.b16 %v1753
    %v1825 = vunpack.c.l.b16 %v1754
    %v1826 = vunpack.c.l.b16 %v1755
    %v1827 = vunpack.c.l.b16 %v1756
    %v1828 = vunpack.c.l.b16 %v1757
    %v1829 = vunpack.c.l.b16 %v1758
    %v1830 = vunpack.c.l.b16 %v1759
    %v1831 = vunpack.c.l.b16 %v1760
    %v1832 = vunpack.c.l.b16 %v1761
    %v1833 = vunpack.c.l.b16 %v1762
    %v1834 = vunpack.c.l.b16 %v1763
    %v1835 = vunpack.c.l.b16 %v1764
    %v1836 = vunpack.c.l.b16 %v1765
    %v1837 = vunpack.c.l.b16 %v1766
    %v1838 = vunpack.c.l.b16 %v1767
    %v1839 = vunpack.c.l.b16 %v1768
    %v1840 = vunpack.c.l.b16 %v1769
    %v1841 = vpack.c.b16 %v1810, %v1809
    %v1842 = vpack.c.b16 %v1812, %v1811
    %v1843 = vpack.c.b16 %v1814, %v1813
    %v1844 = vpack.c.b16 %v1816, %v1815
    %v1845 = vpack.c.b16 %v1818, %v1817
    %v1846 = vpack.c.b16 %v1820, %v1819
    %v1847 = vpack.c.b16 %v1822, %v1821
    %v1848 = vpack.c.b16 %v1824, %v1823
    %v1849 = vpack.c.b16 %v1826, %v1825
    %v1850 = vpack.c.b16 %v1828, %v1827
    %v1851 = vpack.c.b16 %v1830, %v1829
    %v1852 = vpack.c.b16 %v1832, %v1831
    %v1853 = vpack.c.b16 %v1834, %v1833
    %v1854 = vpack.c.b16 %v1836, %v1835
    %v1855 = vpack.c.b16 %v1838, %v1837
    %v1856 = vpack.c.b16 %v1840, %v1839
    %1873 = vmatprep.subr.bf16.mxu0 0
    %1874 = vmatpush1.bf16.msra.mxu0 %v1848
    %1875 = vmatprep.subr.bf16.mxu0 0
    %1876 = vmatpush1.bf16.msra.mxu0 %v1847
    %1877 = vmatprep.subr.bf16.mxu0 0
    %1878 = vmatpush1.bf16.msra.mxu0 %v1846
    %1879 = vmatprep.subr.bf16.mxu0 0
    %1880 = vmatpush1.bf16.msra.mxu0 %v1845
    %1881 = vmatprep.subr.bf16.mxu0 0
    %1882 = vmatpush1.bf16.msra.mxu0 %v1844
    %1883 = vmatprep.subr.bf16.mxu0 0
    %1884 = vmatpush1.bf16.msra.mxu0 %v1843
    %1885 = vmatprep.subr.bf16.mxu0 0
    %1886 = vmatpush1.bf16.msra.mxu0 %v1842
    %1887 = vmatprep.subr.bf16.mxu0 0
    %1888 = vmatpush1.bf16.msra.mxu0 %v1841
    %1889 = vmatprep.subr.bf16.mxu0 0
    %1890 = vmatpush2.bf16.msra.mxu0 %v1856
    %1891 = vmatprep.subr.bf16.mxu0 0
    %1892 = vmatpush2.bf16.msra.mxu0 %v1855
    %1893 = vmatprep.subr.bf16.mxu0 0
    %1894 = vmatpush2.bf16.msra.mxu0 %v1854
    %1895 = vmatprep.subr.bf16.mxu0 0
    %1896 = vmatpush2.bf16.msra.mxu0 %v1853
    %1897 = vmatprep.subr.bf16.mxu0 0
    %1898 = vmatpush2.bf16.msra.mxu0 %v1852
    %1899 = vmatprep.subr.bf16.mxu0 0
    %1900 = vmatpush2.bf16.msra.mxu0 %v1851
    %1901 = vmatprep.subr.bf16.mxu0 0
    %1902 = vmatpush2.bf16.msra.mxu0 %v1850
    %1903 = vmatprep.subr.bf16.mxu0 0
    %1904 = vmatpush2.bf16.msra.mxu0 %v1849
    %1905 = vmatprep.mubr.bf16.mxu0 %v1737
    %1906 = vmatmul.mubr.bf16.gmra.mxu0 %v1736
    %v1907 = vpop.f32.mrf.mxu0
    %v1908 = vadd.f32 %v1775, %v1907
    %v1909 = vpop.f32.mrf.mxu0
    %v1910 = vpop.f32.mrf.mxu0
    %v1911 = vpop.f32.mrf.mxu0
    %1912 = vdwg.mxu0
    %v1913 = vadd.f32 %v1908, %v1555
    %v1914 = vmax.f32 %v1913, 0.0
    %v1915 = vmax.f32 %v1914, 0.0
    %s1916 = scalar_lea.sflag [#allocation31], 17
    // Predicated region
    $region276: #{_generator_forward_impl.1} parent=1 // pred_check
      _
    $region277: #{_generator_forward_impl.1} parent=1 // pred_check_branch
      %1918 = sbr.rel target = $region279
    $region278: #{_generator_forward_impl.1} parent=1 // pred_region
      %1919 = sst [smem:[#allocation56]] [#allocation90]
      %1920 = sst [smem:[#allocation57]] [#allocation89]
    $region279: #{_generator_forward_impl.1} parent=1 // pred_fallthru
      _
    %1922 = shalt.err (0)
    %s1924 = sshll.u32 [#allocation19], 4
    %s1925 = int_to_ptr.vmem [resolvable:$true] %s1924
    %1927 = dma.hbm_to_vmem [thread:$0]  %s37, 2048, %s1925, %s1916
    %s1928 = sshll.u32 %s847, 4
    %1929 = dma.done %s566, %s1928
    %v1930 = vpack.c.bf16 %v1915, %v1915
    %v1931 = vld [vmem:[#allocation11] sm:$0xff]
    %v1932 = vld [vmem:[#allocation11 + $0x8] sm:$0xff]
    %v1933 = vld [vmem:[#allocation11 + $0x10] sm:$0xff]
    %v1934 = vld [vmem:[#allocation11 + $0x18] sm:$0xff]
    %v1935 = vld [vmem:[#allocation11 + $0x20] sm:$0xff]
    %v1936 = vld [vmem:[#allocation11 + $0x28] sm:$0xff]
    %v1937 = vld [vmem:[#allocation11 + $0x30] sm:$0xff]
    %v1938 = vld [vmem:[#allocation11 + $0x38] sm:$0xff]
    %v1939 = vld [vmem:[#allocation11 + $0x40] sm:$0xff]
    %v1940 = vld [vmem:[#allocation11 + $0x48] sm:$0xff]
    %v1941 = vld [vmem:[#allocation11 + $0x50] sm:$0xff]
    %v1942 = vld [vmem:[#allocation11 + $0x58] sm:$0xff]
    %v1943 = vld [vmem:[#allocation11 + $0x60] sm:$0xff]
    %v1944 = vld [vmem:[#allocation11 + $0x68] sm:$0xff]
    %v1945 = vld [vmem:[#allocation11 + $0x70] sm:$0xff]
    %v1946 = vld [vmem:[#allocation11 + $0x78] sm:$0xff]
    %v1947 = vld [vmem:[%s79] sm:$0x3]
    %v1949 = vlaneseq
    %v1950 = vshrl.u32 %v1949, 7
    %v1951 = vsub.s32 0, %v1950
    %v1952 = vrot.slane %v1947, %v1951
    %v1953 = vlaneseq
    %v1954 = vshrl.u32 %v1953, 7
    %v1955 = vsub.s32 1, %v1954
    %v1956 = vrot.slane %v1947, %v1955
    %v1975 = vunpack.c.l.b16 %v1931
    %v1976 = vunpack.c.h.b16 %v1931
    %v1977 = vunpack.c.l.b16 %v1932
    %v1978 = vunpack.c.h.b16 %v1932
    %v1979 = vunpack.c.l.b16 %v1933
    %v1980 = vunpack.c.h.b16 %v1933
    %v1981 = vunpack.c.l.b16 %v1934
    %v1982 = vunpack.c.h.b16 %v1934
    %v1983 = vunpack.c.l.b16 %v1935
    %v1984 = vunpack.c.h.b16 %v1935
    %v1985 = vunpack.c.l.b16 %v1936
    %v1986 = vunpack.c.h.b16 %v1936
    %v1987 = vunpack.c.l.b16 %v1937
    %v1988 = vunpack.c.h.b16 %v1937
    %v1989 = vunpack.c.l.b16 %v1938
    %v1990 = vunpack.c.h.b16 %v1938
    %v1991 = vunpack.c.l.b16 %v1939
    %v1992 = vunpack.c.h.b16 %v1939
    %v1993 = vunpack.c.l.b16 %v1940
    %v1994 = vunpack.c.h.b16 %v1940
    %v1995 = vunpack.c.l.b16 %v1941
    %v1996 = vunpack.c.h.b16 %v1941
    %v1997 = vunpack.c.l.b16 %v1942
    %v1998 = vunpack.c.h.b16 %v1942
    %v1999 = vunpack.c.l.b16 %v1943
    %v2000 = vunpack.c.h.b16 %v1943
    %v2001 = vunpack.c.l.b16 %v1944
    %v2002 = vunpack.c.h.b16 %v1944
    %v2003 = vunpack.c.l.b16 %v1945
    %v2004 = vunpack.c.h.b16 %v1945
    %v2005 = vunpack.c.l.b16 %v1946
    %v2006 = vunpack.c.h.b16 %v1946
    %v2007 = vpack.c.b16 %v1977, %v1975
    %v2008 = vpack.c.b16 %v1978, %v1976
    %v2009 = vpack.c.b16 %v1981, %v1979
    %v2010 = vpack.c.b16 %v1982, %v1980
    %v2011 = vpack.c.b16 %v1985, %v1983
    %v2012 = vpack.c.b16 %v1986, %v1984
    %v2013 = vpack.c.b16 %v1989, %v1987
    %v2014 = vpack.c.b16 %v1990, %v1988
    %v2015 = vpack.c.b16 %v1993, %v1991
    %v2016 = vpack.c.b16 %v1994, %v1992
    %v2017 = vpack.c.b16 %v1997, %v1995
    %v2018 = vpack.c.b16 %v1998, %v1996
    %v2019 = vpack.c.b16 %v2001, %v1999
    %v2020 = vpack.c.b16 %v2002, %v2000
    %v2021 = vpack.c.b16 %v2005, %v2003
    %v2022 = vpack.c.b16 %v2006, %v2004
    %2039 = vmatprep.subr.bf16.mxu0 %v2022
    %2040 = vmatpush1.bf16.msra.mxu0 %v2021
    %2041 = vmatprep.subr.bf16.mxu0 %v2020
    %2042 = vmatpush1.bf16.msra.mxu0 %v2019
    %2043 = vmatprep.subr.bf16.mxu0 %v2018
    %2044 = vmatpush1.bf16.msra.mxu0 %v2017
    %2045 = vmatprep.subr.bf16.mxu0 %v2016
    %2046 = vmatpush1.bf16.msra.mxu0 %v2015
    %2047 = vmatprep.subr.bf16.mxu0 %v2014
    %2048 = vmatpush1.bf16.msra.mxu0 %v2013
    %2049 = vmatprep.subr.bf16.mxu0 %v2012
    %2050 = vmatpush1.bf16.msra.mxu0 %v2011
    %2051 = vmatprep.subr.bf16.mxu0 %v2010
    %2052 = vmatpush1.bf16.msra.mxu0 %v2009
    %2053 = vmatprep.subr.bf16.mxu0 %v2008
    %2054 = vmatpush1.bf16.msra.mxu0 %v2007
    %2055 = vmatprep.subr.bf16.mxu0 0
    %2056 = vmatpush2.bf16.msra.mxu0 0
    %2057 = vmatprep.subr.bf16.mxu0 0
    %2058 = vmatpush2.bf16.msra.mxu0 0
    %2059 = vmatprep.subr.bf16.mxu0 0
    %2060 = vmatpush2.bf16.msra.mxu0 0
    %2061 = vmatprep.subr.bf16.mxu0 0
    %2062 = vmatpush2.bf16.msra.mxu0 0
    %2063 = vmatprep.subr.bf16.mxu0 0
    %2064 = vmatpush2.bf16.msra.mxu0 0
    %2065 = vmatprep.subr.bf16.mxu0 0
    %2066 = vmatpush2.bf16.msra.mxu0 0
    %2067 = vmatprep.subr.bf16.mxu0 0
    %2068 = vmatpush2.bf16.msra.mxu0 0
    %2069 = vmatprep.subr.bf16.mxu0 0
    %2070 = vmatpush2.bf16.msra.mxu0 0
    %2071 = vmatprep.mubr.bf16.mxu0 0
    %2072 = vmatmul.mubr.bf16.gmra.mxu0 %v1930
    %v2073 = vpop.f32.mrf.mxu0
    %v2074 = vadd.f32 %v1952, %v2073
    %v2075 = vpop.f32.mrf.mxu0
    %v2076 = vadd.f32 %v1956, %v2075
    %v2077 = vpop.f32.mrf.mxu0
    %v2078 = vpop.f32.mrf.mxu0
    %2079 = vdwg.mxu0
    %v2080 = vmax.f32 %v2074, 0.0
    %v2081 = vmax.f32 %v2076, 0.0
    %s2082 = scalar_lea.sflag [#allocation31], 18
    // Predicated region
    $region280: #{_generator_forward_impl.1} parent=1 // pred_check
      _
    $region281: #{_generator_forward_impl.1} parent=1 // pred_check_branch
      %2084 = sbr.rel target = $region283
    $region282: #{_generator_forward_impl.1} parent=1 // pred_region
      %2085 = sst [smem:[#allocation56]] [#allocation92]
      %2086 = sst [smem:[#allocation57]] [#allocation91]
    $region283: #{_generator_forward_impl.1} parent=1 // pred_fallthru
      _
    %2088 = shalt.err (0)
    %s2090 = sshll.u32 [#allocation20], 4
    %s2091 = int_to_ptr.vmem [resolvable:$true] %s2090
    %2093 = dma.hbm_to_vmem [thread:$0]  %s39, 8192, %s2091, %s2082
    %s2094 = smul.u32 %s578, 2
    %s2095 = sshll.u32 %s2094, 4
    %2096 = dma.done %s759, %s2095
    %v2097 = vpack.c.bf16 %v2080, %v2080
    %v2098 = vpack.c.bf16 %v2081, %v2081
    %v2099 = vld [vmem:[#allocation12] sm:$0xff]
    %v2100 = vld [vmem:[#allocation12 + $0x8] sm:$0xff]
    %v2101 = vld [vmem:[#allocation12 + $0x10] sm:$0xff]
    %v2102 = vld [vmem:[#allocation12 + $0x18] sm:$0xff]
    %v2103 = vld [vmem:[#allocation12 + $0x20] sm:$0xff]
    %v2104 = vld [vmem:[#allocation12 + $0x28] sm:$0xff]
    %v2105 = vld [vmem:[#allocation12 + $0x30] sm:$0xff]
    %v2106 = vld [vmem:[#allocation12 + $0x38] sm:$0xff]
    %v2107 = vld [vmem:[#allocation12 + $0x40] sm:$0xff]
    %v2108 = vld [vmem:[#allocation12 + $0x48] sm:$0xff]
    %v2109 = vld [vmem:[#allocation12 + $0x50] sm:$0xff]
    %v2110 = vld [vmem:[#allocation12 + $0x58] sm:$0xff]
    %v2111 = vld [vmem:[#allocation12 + $0x60] sm:$0xff]
    %v2112 = vld [vmem:[#allocation12 + $0x68] sm:$0xff]
    %v2113 = vld [vmem:[#allocation12 + $0x70] sm:$0xff]
    %v2114 = vld [vmem:[#allocation12 + $0x78] sm:$0xff]
    %v2115 = vld [vmem:[#allocation12 + $0x80] sm:$0xff]
    %v2116 = vld [vmem:[#allocation12 + $0x88] sm:$0xff]
    %v2117 = vld [vmem:[#allocation12 + $0x90] sm:$0xff]
    %v2118 = vld [vmem:[#allocation12 + $0x98] sm:$0xff]
    %v2119 = vld [vmem:[#allocation12 + $0xa0] sm:$0xff]
    %v2120 = vld [vmem:[#allocation12 + $0xa8] sm:$0xff]
    %v2121 = vld [vmem:[#allocation12 + $0xb0] sm:$0xff]
    %v2122 = vld [vmem:[#allocation12 + $0xb8] sm:$0xff]
    %v2123 = vld [vmem:[#allocation12 + $0xc0] sm:$0xff]
    %v2124 = vld [vmem:[#allocation12 + $0xc8] sm:$0xff]
    %v2125 = vld [vmem:[#allocation12 + $0xd0] sm:$0xff]
    %v2126 = vld [vmem:[#allocation12 + $0xd8] sm:$0xff]
    %v2127 = vld [vmem:[#allocation12 + $0xe0] sm:$0xff]
    %v2128 = vld [vmem:[#allocation12 + $0xe8] sm:$0xff]
    %v2129 = vld [vmem:[#allocation12 + $0xf0] sm:$0xff]
    %v2130 = vld [vmem:[#allocation12 + $0xf8] sm:$0xff]
    %v2131 = vld [vmem:[%s81] sm:$0x3]
    %v2133 = vlaneseq
    %v2134 = vshrl.u32 %v2133, 7
    %v2135 = vsub.s32 0, %v2134
    %v2136 = vrot.slane %v2131, %v2135
    %v2137 = vlaneseq
    %v2138 = vshrl.u32 %v2137, 7
    %v2139 = vsub.s32 1, %v2138
    %v2140 = vrot.slane %v2131, %v2139
    %v2175 = vunpack.c.l.b16 %v2099
    %v2176 = vunpack.c.h.b16 %v2099
    %v2177 = vunpack.c.l.b16 %v2100
    %v2178 = vunpack.c.h.b16 %v2100
    %v2179 = vunpack.c.l.b16 %v2101
    %v2180 = vunpack.c.h.b16 %v2101
    %v2181 = vunpack.c.l.b16 %v2102
    %v2182 = vunpack.c.h.b16 %v2102
    %v2183 = vunpack.c.l.b16 %v2103
    %v2184 = vunpack.c.h.b16 %v2103
    %v2185 = vunpack.c.l.b16 %v2104
    %v2186 = vunpack.c.h.b16 %v2104
    %v2187 = vunpack.c.l.b16 %v2105
    %v2188 = vunpack.c.h.b16 %v2105
    %v2189 = vunpack.c.l.b16 %v2106
    %v2190 = vunpack.c.h.b16 %v2106
    %v2191 = vunpack.c.l.b16 %v2107
    %v2192 = vunpack.c.h.b16 %v2107
    %v2193 = vunpack.c.l.b16 %v2108
    %v2194 = vunpack.c.h.b16 %v2108
    %v2195 = vunpack.c.l.b16 %v2109
    %v2196 = vunpack.c.h.b16 %v2109
    %v2197 = vunpack.c.l.b16 %v2110
    %v2198 = vunpack.c.h.b16 %v2110
    %v2199 = vunpack.c.l.b16 %v2111
    %v2200 = vunpack.c.h.b16 %v2111
    %v2201 = vunpack.c.l.b16 %v2112
    %v2202 = vunpack.c.h.b16 %v2112
    %v2203 = vunpack.c.l.b16 %v2113
    %v2204 = vunpack.c.h.b16 %v2113
    %v2205 = vunpack.c.l.b16 %v2114
    %v2206 = vunpack.c.h.b16 %v2114
    %v2207 = vunpack.c.l.b16 %v2115
    %v2208 = vunpack.c.h.b16 %v2115
    %v2209 = vunpack.c.l.b16 %v2116
    %v2210 = vunpack.c.h.b16 %v2116
    %v2211 = vunpack.c.l.b16 %v2117
    %v2212 = vunpack.c.h.b16 %v2117
    %v2213 = vunpack.c.l.b16 %v2118
    %v2214 = vunpack.c.h.b16 %v2118
    %v2215 = vunpack.c.l.b16 %v2119
    %v2216 = vunpack.c.h.b16 %v2119
    %v2217 = vunpack.c.l.b16 %v2120
    %v2218 = vunpack.c.h.b16 %v2120
    %v2219 = vunpack.c.l.b16 %v2121
    %v2220 = vunpack.c.h.b16 %v2121
    %v2221 = vunpack.c.l.b16 %v2122
    %v2222 = vunpack.c.h.b16 %v2122
    %v2223 = vunpack.c.l.b16 %v2123
    %v2224 = vunpack.c.h.b16 %v2123
    %v2225 = vunpack.c.l.b16 %v2124
    %v2226 = vunpack.c.h.b16 %v2124
    %v2227 = vunpack.c.l.b16 %v2125
    %v2228 = vunpack.c.h.b16 %v2125
    %v2229 = vunpack.c.l.b16 %v2126
    %v2230 = vunpack.c.h.b16 %v2126
    %v2231 = vunpack.c.l.b16 %v2127
    %v2232 = vunpack.c.h.b16 %v2127
    %v2233 = vunpack.c.l.b16 %v2128
    %v2234 = vunpack.c.h.b16 %v2128
    %v2235 = vunpack.c.l.b16 %v2129
    %v2236 = vunpack.c.h.b16 %v2129
    %v2237 = vunpack.c.l.b16 %v2130
    %v2238 = vunpack.c.h.b16 %v2130
    %v2239 = vpack.c.b16 %v2177, %v2175
    %v2240 = vpack.c.b16 %v2178, %v2176
    %v2241 = vpack.c.b16 %v2181, %v2179
    %v2242 = vpack.c.b16 %v2182, %v2180
    %v2243 = vpack.c.b16 %v2185, %v2183
    %v2244 = vpack.c.b16 %v2186, %v2184
    %v2245 = vpack.c.b16 %v2189, %v2187
    %v2246 = vpack.c.b16 %v2190, %v2188
    %v2247 = vpack.c.b16 %v2193, %v2191
    %v2248 = vpack.c.b16 %v2194, %v2192
    %v2249 = vpack.c.b16 %v2197, %v2195
    %v2250 = vpack.c.b16 %v2198, %v2196
    %v2251 = vpack.c.b16 %v2201, %v2199
    %v2252 = vpack.c.b16 %v2202, %v2200
    %v2253 = vpack.c.b16 %v2205, %v2203
    %v2254 = vpack.c.b16 %v2206, %v2204
    %v2255 = vpack.c.b16 %v2209, %v2207
    %v2256 = vpack.c.b16 %v2210, %v2208
    %v2257 = vpack.c.b16 %v2213, %v2211
    %v2258 = vpack.c.b16 %v2214, %v2212
    %v2259 = vpack.c.b16 %v2217, %v2215
    %v2260 = vpack.c.b16 %v2218, %v2216
    %v2261 = vpack.c.b16 %v2221, %v2219
    %v2262 = vpack.c.b16 %v2222, %v2220
    %v2263 = vpack.c.b16 %v2225, %v2223
    %v2264 = vpack.c.b16 %v2226, %v2224
    %v2265 = vpack.c.b16 %v2229, %v2227
    %v2266 = vpack.c.b16 %v2230, %v2228
    %v2267 = vpack.c.b16 %v2233, %v2231
    %v2268 = vpack.c.b16 %v2234, %v2232
    %v2269 = vpack.c.b16 %v2237, %v2235
    %v2270 = vpack.c.b16 %v2238, %v2236
    %2303 = vmatprep.subr.bf16.mxu0 %v2254
    %2304 = vmatpush1.bf16.msra.mxu0 %v2253
    %2305 = vmatprep.subr.bf16.mxu0 %v2252
    %2306 = vmatpush1.bf16.msra.mxu0 %v2251
    %2307 = vmatprep.subr.bf16.mxu0 %v2250
    %2308 = vmatpush1.bf16.msra.mxu0 %v2249
    %2309 = vmatprep.subr.bf16.mxu0 %v2248
    %2310 = vmatpush1.bf16.msra.mxu0 %v2247
    %2311 = vmatprep.subr.bf16.mxu0 %v2246
    %2312 = vmatpush1.bf16.msra.mxu0 %v2245
    %2313 = vmatprep.subr.bf16.mxu0 %v2244
    %2314 = vmatpush1.bf16.msra.mxu0 %v2243
    %2315 = vmatprep.subr.bf16.mxu0 %v2242
    %2316 = vmatpush1.bf16.msra.mxu0 %v2241
    %2317 = vmatprep.subr.bf16.mxu0 %v2240
    %2318 = vmatpush1.bf16.msra.mxu0 %v2239
    %2319 = vmatprep.subr.bf16.mxu0 %v2270
    %2320 = vmatpush2.bf16.msra.mxu0 %v2269
    %2321 = vmatprep.subr.bf16.mxu0 %v2268
    %2322 = vmatpush2.bf16.msra.mxu0 %v2267
    %2323 = vmatprep.subr.bf16.mxu0 %v2266
    %2324 = vmatpush2.bf16.msra.mxu0 %v2265
    %2325 = vmatprep.subr.bf16.mxu0 %v2264
    %2326 = vmatpush2.bf16.msra.mxu0 %v2263
    %2327 = vmatprep.subr.bf16.mxu0 %v2262
    %2328 = vmatpush2.bf16.msra.mxu0 %v2261
    %2329 = vmatprep.subr.bf16.mxu0 %v2260
    %2330 = vmatpush2.bf16.msra.mxu0 %v2259
    %2331 = vmatprep.subr.bf16.mxu0 %v2258
    %2332 = vmatpush2.bf16.msra.mxu0 %v2257
    %2333 = vmatprep.subr.bf16.mxu0 %v2256
    %2334 = vmatpush2.bf16.msra.mxu0 %v2255
    %2335 = vmatprep.mubr.bf16.mxu0 %v2098
    %2336 = vmatmul.mubr.bf16.gmra.mxu0 %v2097
    %v2337 = vpop.f32.mrf.mxu0
    %v2338 = vadd.f32 %v2136, %v2337
    %v2339 = vpop.f32.mrf.mxu0
    %v2340 = vadd.f32 %v2140, %v2339
    %v2341 = vpop.f32.mrf.mxu0
    %v2342 = vpop.f32.mrf.mxu0
    %2343 = vdwg.mxu0
    %s2344 = scalar_lea.sflag [#allocation31], 19
    // Predicated region
    $region284: #{_generator_forward_impl.1} parent=1 // pred_check
      _
    $region285: #{_generator_forward_impl.1} parent=1 // pred_check_branch
      %2346 = sbr.rel target = $region287
    $region286: #{_generator_forward_impl.1} parent=1 // pred_region
      %2347 = sst [smem:[#allocation56]] [#allocation94]
      %2348 = sst [smem:[#allocation57]] [#allocation93]
    $region287: #{_generator_forward_impl.1} parent=1 // pred_fallthru
      _
    %2350 = shalt.err (0)
    %s2352 = sshll.u32 [#allocation21], 4
    %s2353 = int_to_ptr.vmem [resolvable:$true] %s2352
    %2355 = dma.hbm_to_vmem [thread:$0]  %s41, 4096, %s2353, %s2344
    %s2356 = sshll.u32 %s847, 4
    %2357 = dma.done %s834, %s2356
    %v2358 = vld [vmem:[#allocation13] sm:$0xff]
    %v2359 = vld [vmem:[#allocation13 + $0x8] sm:$0xff]
    %v2360 = vld [vmem:[#allocation13 + $0x10] sm:$0xff]
    %v2361 = vld [vmem:[#allocation13 + $0x18] sm:$0xff]
    %v2362 = vld [vmem:[#allocation13 + $0x20] sm:$0xff]
    %v2363 = vld [vmem:[#allocation13 + $0x28] sm:$0xff]
    %v2364 = vld [vmem:[#allocation13 + $0x30] sm:$0xff]
    %v2365 = vld [vmem:[#allocation13 + $0x38] sm:$0xff]
    %v2366 = vld [vmem:[#allocation13 + $0x40] sm:$0xff]
    %v2367 = vld [vmem:[#allocation13 + $0x48] sm:$0xff]
    %v2368 = vld [vmem:[#allocation13 + $0x50] sm:$0xff]
    %v2369 = vld [vmem:[#allocation13 + $0x58] sm:$0xff]
    %v2370 = vld [vmem:[#allocation13 + $0x60] sm:$0xff]
    %v2371 = vld [vmem:[#allocation13 + $0x68] sm:$0xff]
    %v2372 = vld [vmem:[#allocation13 + $0x70] sm:$0xff]
    %v2373 = vld [vmem:[#allocation13 + $0x78] sm:$0xff]
    %v2374 = vld [vmem:[%s83] sm:$0x3]
    %v2376 = vlaneseq
    %v2377 = vshrl.u32 %v2376, 7
    %v2378 = vsub.s32 0, %v2377
    %v2379 = vrot.slane %v2374, %v2378
    %v2380 = vlaneseq
    %v2381 = vshrl.u32 %v2380, 7
    %v2382 = vsub.s32 1, %v2381
    %v2383 = vrot.slane %v2374, %v2382
    %v2402 = vunpack.c.l.b16 %v2358
    %v2403 = vunpack.c.h.b16 %v2358
    %v2404 = vunpack.c.l.b16 %v2359
    %v2405 = vunpack.c.h.b16 %v2359
    %v2406 = vunpack.c.l.b16 %v2360
    %v2407 = vunpack.c.h.b16 %v2360
    %v2408 = vunpack.c.l.b16 %v2361
    %v2409 = vunpack.c.h.b16 %v2361
    %v2410 = vunpack.c.l.b16 %v2362
    %v2411 = vunpack.c.h.b16 %v2362
    %v2412 = vunpack.c.l.b16 %v2363
    %v2413 = vunpack.c.h.b16 %v2363
    %v2414 = vunpack.c.l.b16 %v2364
    %v2415 = vunpack.c.h.b16 %v2364
    %v2416 = vunpack.c.l.b16 %v2365
    %v2417 = vunpack.c.h.b16 %v2365
    %v2418 = vunpack.c.l.b16 %v2366
    %v2419 = vunpack.c.h.b16 %v2366
    %v2420 = vunpack.c.l.b16 %v2367
    %v2421 = vunpack.c.h.b16 %v2367
    %v2422 = vunpack.c.l.b16 %v2368
    %v2423 = vunpack.c.h.b16 %v2368
    %v2424 = vunpack.c.l.b16 %v2369
    %v2425 = vunpack.c.h.b16 %v2369
    %v2426 = vunpack.c.l.b16 %v2370
    %v2427 = vunpack.c.h.b16 %v2370
    %v2428 = vunpack.c.l.b16 %v2371
    %v2429 = vunpack.c.h.b16 %v2371
    %v2430 = vunpack.c.l.b16 %v2372
    %v2431 = vunpack.c.h.b16 %v2372
    %v2432 = vunpack.c.l.b16 %v2373
    %v2433 = vunpack.c.h.b16 %v2373
    %v2434 = vpack.c.b16 %v2404, %v2402
    %v2435 = vpack.c.b16 %v2405, %v2403
    %v2436 = vpack.c.b16 %v2408, %v2406
    %v2437 = vpack.c.b16 %v2409, %v2407
    %v2438 = vpack.c.b16 %v2412, %v2410
    %v2439 = vpack.c.b16 %v2413, %v2411
    %v2440 = vpack.c.b16 %v2416, %v2414
    %v2441 = vpack.c.b16 %v2417, %v2415
    %v2442 = vpack.c.b16 %v2420, %v2418
    %v2443 = vpack.c.b16 %v2421, %v2419
    %v2444 = vpack.c.b16 %v2424, %v2422
    %v2445 = vpack.c.b16 %v2425, %v2423
    %v2446 = vpack.c.b16 %v2428, %v2426
    %v2447 = vpack.c.b16 %v2429, %v2427
    %v2448 = vpack.c.b16 %v2432, %v2430
    %v2449 = vpack.c.b16 %v2433, %v2431
    %2466 = vmatprep.subr.bf16.mxu0 %v2449
    %2467 = vmatpush1.bf16.msra.mxu0 %v2448
    %2468 = vmatprep.subr.bf16.mxu0 %v2447
    %2469 = vmatpush1.bf16.msra.mxu0 %v2446
    %2470 = vmatprep.subr.bf16.mxu0 %v2445
    %2471 = vmatpush1.bf16.msra.mxu0 %v2444
    %2472 = vmatprep.subr.bf16.mxu0 %v2443
    %2473 = vmatpush1.bf16.msra.mxu0 %v2442
    %2474 = vmatprep.subr.bf16.mxu0 %v2441
    %2475 = vmatpush1.bf16.msra.mxu0 %v2440
    %2476 = vmatprep.subr.bf16.mxu0 %v2439
    %2477 = vmatpush1.bf16.msra.mxu0 %v2438
    %2478 = vmatprep.subr.bf16.mxu0 %v2437
    %2479 = vmatpush1.bf16.msra.mxu0 %v2436
    %2480 = vmatprep.subr.bf16.mxu0 %v2435
    %2481 = vmatpush1.bf16.msra.mxu0 %v2434
    %2482 = vmatprep.subr.bf16.mxu0 0
    %2483 = vmatpush2.bf16.msra.mxu0 0
    %2484 = vmatprep.subr.bf16.mxu0 0
    %2485 = vmatpush2.bf16.msra.mxu0 0
    %2486 = vmatprep.subr.bf16.mxu0 0
    %2487 = vmatpush2.bf16.msra.mxu0 0
    %2488 = vmatprep.subr.bf16.mxu0 0
    %2489 = vmatpush2.bf16.msra.mxu0 0
    %2490 = vmatprep.subr.bf16.mxu0 0
    %2491 = vmatpush2.bf16.msra.mxu0 0
    %2492 = vmatprep.subr.bf16.mxu0 0
    %2493 = vmatpush2.bf16.msra.mxu0 0
    %2494 = vmatprep.subr.bf16.mxu0 0
    %2495 = vmatpush2.bf16.msra.mxu0 0
    %2496 = vmatprep.subr.bf16.mxu0 0
    %2497 = vmatpush2.bf16.msra.mxu0 0
    %2498 = vmatprep.mubr.bf16.mxu0 0
    %2499 = vmatmul.mubr.bf16.gmra.mxu0 %v1930
    %v2500 = vpop.f32.mrf.mxu0
    %v2501 = vadd.f32 %v2379, %v2500
    %v2502 = vpop.f32.mrf.mxu0
    %v2503 = vadd.f32 %v2383, %v2502
    %v2504 = vpop.f32.mrf.mxu0
    %v2505 = vpop.f32.mrf.mxu0
    %2506 = vdwg.mxu0
    %v2507 = vadd.f32 %v2338, %v2501
    %v2508 = vadd.f32 %v2340, %v2503
    %v2509 = vmax.f32 %v2507, 0.0
    %v2510 = vmax.f32 %v2508, 0.0
    %v2511 = vmax.f32 %v2509, 0.0
    %v2512 = vmax.f32 %v2510, 0.0
    %s2513 = scalar_lea.sflag [#allocation31], 20
    // Predicated region
    $region288: #{_generator_forward_impl.1} parent=1 // pred_check
      _
    $region289: #{_generator_forward_impl.1} parent=1 // pred_check_branch
      %2515 = sbr.rel target = $region291
    $region290: #{_generator_forward_impl.1} parent=1 // pred_region
      %2516 = sst [smem:[#allocation56]] [#allocation96]
      %2517 = sst [smem:[#allocation57]] [#allocation95]
    $region291: #{_generator_forward_impl.1} parent=1 // pred_fallthru
      _
    %2519 = shalt.err (0)
    %s2521 = sshll.u32 [#allocation22], 4
    %s2522 = int_to_ptr.vmem [resolvable:$true] %s2521
    %2524 = dma.hbm_to_vmem [thread:$0]  %s43, 8192, %s2522, %s2513
    %s2525 = sshll.u32 %s579, 4
    %2526 = dma.done %s1002, %s2525
    %v2527 = vpack.c.bf16 %v2511, %v2511
    %v2528 = vpack.c.bf16 %v2512, %v2512
    %v2529 = vld [vmem:[#allocation14] sm:$0xf]
    %v2530 = vld [vmem:[#allocation14 + $0x4] sm:$0xf]
    %v2531 = vld [vmem:[#allocation14 + $0x8] sm:$0xf]
    %v2532 = vld [vmem:[#allocation14 + $0xc] sm:$0xf]
    %v2533 = vld [vmem:[#allocation14 + $0x10] sm:$0xf]
    %v2534 = vld [vmem:[#allocation14 + $0x14] sm:$0xf]
    %v2535 = vld [vmem:[#allocation14 + $0x18] sm:$0xf]
    %v2536 = vld [vmem:[#allocation14 + $0x1c] sm:$0xf]
    %v2537 = vld [vmem:[#allocation14 + $0x20] sm:$0xf]
    %v2538 = vld [vmem:[#allocation14 + $0x24] sm:$0xf]
    %v2539 = vld [vmem:[#allocation14 + $0x28] sm:$0xf]
    %v2540 = vld [vmem:[#allocation14 + $0x2c] sm:$0xf]
    %v2541 = vld [vmem:[#allocation14 + $0x30] sm:$0xf]
    %v2542 = vld [vmem:[#allocation14 + $0x34] sm:$0xf]
    %v2543 = vld [vmem:[#allocation14 + $0x38] sm:$0xf]
    %v2544 = vld [vmem:[#allocation14 + $0x3c] sm:$0xf]
    %v2545 = vld [vmem:[#allocation14 + $0x40] sm:$0xf]
    %v2546 = vld [vmem:[#allocation14 + $0x44] sm:$0xf]
    %v2547 = vld [vmem:[#allocation14 + $0x48] sm:$0xf]
    %v2548 = vld [vmem:[#allocation14 + $0x4c] sm:$0xf]
    %v2549 = vld [vmem:[#allocation14 + $0x50] sm:$0xf]
    %v2550 = vld [vmem:[#allocation14 + $0x54] sm:$0xf]
    %v2551 = vld [vmem:[#allocation14 + $0x58] sm:$0xf]
    %v2552 = vld [vmem:[#allocation14 + $0x5c] sm:$0xf]
    %v2553 = vld [vmem:[#allocation14 + $0x60] sm:$0xf]
    %v2554 = vld [vmem:[#allocation14 + $0x64] sm:$0xf]
    %v2555 = vld [vmem:[#allocation14 + $0x68] sm:$0xf]
    %v2556 = vld [vmem:[#allocation14 + $0x6c] sm:$0xf]
    %v2557 = vld [vmem:[#allocation14 + $0x70] sm:$0xf]
    %v2558 = vld [vmem:[#allocation14 + $0x74] sm:$0xf]
    %v2559 = vld [vmem:[#allocation14 + $0x78] sm:$0xf]
    %v2560 = vld [vmem:[#allocation14 + $0x7c] sm:$0xf]
    %v2561 = vld [vmem:[#allocation45] sm:$0x1]
    %v2563 = vlaneseq
    %v2564 = vshrl.u32 %v2563, 7
    %v2565 = vsub.s32 0, %v2564
    %v2566 = vrot.slane %v2561, %v2565
    %v2600 = vunpack.c.l.b16 %v2529
    %v2601 = vunpack.c.l.b16 %v2530
    %v2602 = vunpack.c.l.b16 %v2531
    %v2603 = vunpack.c.l.b16 %v2532
    %v2604 = vunpack.c.l.b16 %v2533
    %v2605 = vunpack.c.l.b16 %v2534
    %v2606 = vunpack.c.l.b16 %v2535
    %v2607 = vunpack.c.l.b16 %v2536
    %v2608 = vunpack.c.l.b16 %v2537
    %v2609 = vunpack.c.l.b16 %v2538
    %v2610 = vunpack.c.l.b16 %v2539
    %v2611 = vunpack.c.l.b16 %v2540
    %v2612 = vunpack.c.l.b16 %v2541
    %v2613 = vunpack.c.l.b16 %v2542
    %v2614 = vunpack.c.l.b16 %v2543
    %v2615 = vunpack.c.l.b16 %v2544
    %v2616 = vunpack.c.l.b16 %v2545
    %v2617 = vunpack.c.l.b16 %v2546
    %v2618 = vunpack.c.l.b16 %v2547
    %v2619 = vunpack.c.l.b16 %v2548
    %v2620 = vunpack.c.l.b16 %v2549
    %v2621 = vunpack.c.l.b16 %v2550
    %v2622 = vunpack.c.l.b16 %v2551
    %v2623 = vunpack.c.l.b16 %v2552
    %v2624 = vunpack.c.l.b16 %v2553
    %v2625 = vunpack.c.l.b16 %v2554
    %v2626 = vunpack.c.l.b16 %v2555
    %v2627 = vunpack.c.l.b16 %v2556
    %v2628 = vunpack.c.l.b16 %v2557
    %v2629 = vunpack.c.l.b16 %v2558
    %v2630 = vunpack.c.l.b16 %v2559
    %v2631 = vunpack.c.l.b16 %v2560
    %v2632 = vpack.c.b16 %v2601, %v2600
    %v2633 = vpack.c.b16 %v2603, %v2602
    %v2634 = vpack.c.b16 %v2605, %v2604
    %v2635 = vpack.c.b16 %v2607, %v2606
    %v2636 = vpack.c.b16 %v2609, %v2608
    %v2637 = vpack.c.b16 %v2611, %v2610
    %v2638 = vpack.c.b16 %v2613, %v2612
    %v2639 = vpack.c.b16 %v2615, %v2614
    %v2640 = vpack.c.b16 %v2617, %v2616
    %v2641 = vpack.c.b16 %v2619, %v2618
    %v2642 = vpack.c.b16 %v2621, %v2620
    %v2643 = vpack.c.b16 %v2623, %v2622
    %v2644 = vpack.c.b16 %v2625, %v2624
    %v2645 = vpack.c.b16 %v2627, %v2626
    %v2646 = vpack.c.b16 %v2629, %v2628
    %v2647 = vpack.c.b16 %v2631, %v2630
    %2664 = vmatprep.subr.bf16.mxu0 0
    %2665 = vmatpush1.bf16.msra.mxu0 %v2639
    %2666 = vmatprep.subr.bf16.mxu0 0
    %2667 = vmatpush1.bf16.msra.mxu0 %v2638
    %2668 = vmatprep.subr.bf16.mxu0 0
    %2669 = vmatpush1.bf16.msra.mxu0 %v2637
    %2670 = vmatprep.subr.bf16.mxu0 0
    %2671 = vmatpush1.bf16.msra.mxu0 %v2636
    %2672 = vmatprep.subr.bf16.mxu0 0
    %2673 = vmatpush1.bf16.msra.mxu0 %v2635
    %2674 = vmatprep.subr.bf16.mxu0 0
    %2675 = vmatpush1.bf16.msra.mxu0 %v2634
    %2676 = vmatprep.subr.bf16.mxu0 0
    %2677 = vmatpush1.bf16.msra.mxu0 %v2633
    %2678 = vmatprep.subr.bf16.mxu0 0
    %2679 = vmatpush1.bf16.msra.mxu0 %v2632
    %2680 = vmatprep.subr.bf16.mxu0 0
    %2681 = vmatpush2.bf16.msra.mxu0 %v2647
    %2682 = vmatprep.subr.bf16.mxu0 0
    %2683 = vmatpush2.bf16.msra.mxu0 %v2646
    %2684 = vmatprep.subr.bf16.mxu0 0
    %2685 = vmatpush2.bf16.msra.mxu0 %v2645
    %2686 = vmatprep.subr.bf16.mxu0 0
    %2687 = vmatpush2.bf16.msra.mxu0 %v2644
    %2688 = vmatprep.subr.bf16.mxu0 0
    %2689 = vmatpush2.bf16.msra.mxu0 %v2643
    %2690 = vmatprep.subr.bf16.mxu0 0
    %2691 = vmatpush2.bf16.msra.mxu0 %v2642
    %2692 = vmatprep.subr.bf16.mxu0 0
    %2693 = vmatpush2.bf16.msra.mxu0 %v2641
    %2694 = vmatprep.subr.bf16.mxu0 0
    %2695 = vmatpush2.bf16.msra.mxu0 %v2640
    %2696 = vmatprep.mubr.bf16.mxu0 %v2528
    %2697 = vmatmul.mubr.bf16.gmra.mxu0 %v2527
    %v2698 = vpop.f32.mrf.mxu0
    %v2699 = vadd.f32 %v2566, %v2698
    %v2700 = vpop.f32.mrf.mxu0
    %v2701 = vpop.f32.mrf.mxu0
    %v2702 = vpop.f32.mrf.mxu0
    %2703 = vdwg.mxu0
    %v2704 = vmax.f32 %v2699, 0.0
    %s2705 = scalar_lea.sflag [#allocation31], 21
    // Predicated region
    $region292: #{_generator_forward_impl.1} parent=1 // pred_check
      _
    $region293: #{_generator_forward_impl.1} parent=1 // pred_check_branch
      %2707 = sbr.rel target = $region295
    $region294: #{_generator_forward_impl.1} parent=1 // pred_region
      %2708 = sst [smem:[#allocation56]] [#allocation98]
      %2709 = sst [smem:[#allocation57]] [#allocation97]
    $region295: #{_generator_forward_impl.1} parent=1 // pred_fallthru
      _
    %2711 = shalt.err (0)
    %s2713 = sshll.u32 [#allocation23], 4
    %s2714 = int_to_ptr.vmem [resolvable:$true] %s2713
    %2716 = dma.hbm_to_vmem [thread:$0]  %s45, 8192, %s2714, %s2705
    %s2717 = smul.u32 %s846, 4
    %s2718 = sshll.u32 %s2717, 4
    %2719 = dma.done %s1196, %s2718
    %v2720 = vpack.c.bf16 %v2704, %v2704
    %v2721 = vld [vmem:[#allocation15] sm:$0xff]
    %v2722 = vld [vmem:[#allocation15 + $0x8] sm:$0xff]
    %v2723 = vld [vmem:[#allocation15 + $0x10] sm:$0xff]
    %v2724 = vld [vmem:[#allocation15 + $0x18] sm:$0xff]
    %v2725 = vld [vmem:[#allocation15 + $0x20] sm:$0xff]
    %v2726 = vld [vmem:[#allocation15 + $0x28] sm:$0xff]
    %v2727 = vld [vmem:[#allocation15 + $0x30] sm:$0xff]
    %v2728 = vld [vmem:[#allocation15 + $0x38] sm:$0xff]
    %v2729 = vld [vmem:[#allocation15 + $0x40] sm:$0xff]
    %v2730 = vld [vmem:[#allocation15 + $0x48] sm:$0xff]
    %v2731 = vld [vmem:[#allocation15 + $0x50] sm:$0xff]
    %v2732 = vld [vmem:[#allocation15 + $0x58] sm:$0xff]
    %v2733 = vld [vmem:[#allocation15 + $0x60] sm:$0xff]
    %v2734 = vld [vmem:[#allocation15 + $0x68] sm:$0xff]
    %v2735 = vld [vmem:[#allocation15 + $0x70] sm:$0xff]
    %v2736 = vld [vmem:[#allocation15 + $0x78] sm:$0xff]
    %v2737 = vld [vmem:[#allocation15 + $0x80] sm:$0xff]
    %v2738 = vld [vmem:[#allocation15 + $0x88] sm:$0xff]
    %v2739 = vld [vmem:[#allocation15 + $0x90] sm:$0xff]
    %v2740 = vld [vmem:[#allocation15 + $0x98] sm:$0xff]
    %v2741 = vld [vmem:[#allocation15 + $0xa0] sm:$0xff]
    %v2742 = vld [vmem:[#allocation15 + $0xa8] sm:$0xff]
    %v2743 = vld [vmem:[#allocation15 + $0xb0] sm:$0xff]
    %v2744 = vld [vmem:[#allocation15 + $0xb8] sm:$0xff]
    %v2745 = vld [vmem:[#allocation15 + $0xc0] sm:$0xff]
    %v2746 = vld [vmem:[#allocation15 + $0xc8] sm:$0xff]
    %v2747 = vld [vmem:[#allocation15 + $0xd0] sm:$0xff]
    %v2748 = vld [vmem:[#allocation15 + $0xd8] sm:$0xff]
    %v2749 = vld [vmem:[#allocation15 + $0xe0] sm:$0xff]
    %v2750 = vld [vmem:[#allocation15 + $0xe8] sm:$0xff]
    %v2751 = vld [vmem:[#allocation15 + $0xf0] sm:$0xff]
    %v2752 = vld [vmem:[#allocation15 + $0xf8] sm:$0xff]
    %v2753 = vld [vmem:[%s87] sm:$0xf]
    %v2755 = vlaneseq
    %v2756 = vshrl.u32 %v2755, 7
    %v2757 = vsub.s32 0, %v2756
    %v2758 = vrot.slane %v2753, %v2757
    %v2759 = vlaneseq
    %v2760 = vshrl.u32 %v2759, 7
    %v2761 = vsub.s32 1, %v2760
    %v2762 = vrot.slane %v2753, %v2761
    %v2763 = vlaneseq
    %v2764 = vshrl.u32 %v2763, 7
    %v2765 = vsub.s32 2, %v2764
    %v2766 = vrot.slane %v2753, %v2765
    %v2767 = vlaneseq
    %v2768 = vshrl.u32 %v2767, 7
    %v2769 = vsub.s32 3, %v2768
    %v2770 = vrot.slane %v2753, %v2769
    %v2807 = vunpack.c.l.b16 %v2721
    %v2808 = vunpack.c.h.b16 %v2721
    %v2809 = vunpack.c.l.b16 %v2722
    %v2810 = vunpack.c.h.b16 %v2722
    %v2811 = vunpack.c.l.b16 %v2723
    %v2812 = vunpack.c.h.b16 %v2723
    %v2813 = vunpack.c.l.b16 %v2724
    %v2814 = vunpack.c.h.b16 %v2724
    %v2815 = vunpack.c.l.b16 %v2725
    %v2816 = vunpack.c.h.b16 %v2725
    %v2817 = vunpack.c.l.b16 %v2726
    %v2818 = vunpack.c.h.b16 %v2726
    %v2819 = vunpack.c.l.b16 %v2727
    %v2820 = vunpack.c.h.b16 %v2727
    %v2821 = vunpack.c.l.b16 %v2728
    %v2822 = vunpack.c.h.b16 %v2728
    %v2823 = vunpack.c.l.b16 %v2729
    %v2824 = vunpack.c.h.b16 %v2729
    %v2825 = vunpack.c.l.b16 %v2730
    %v2826 = vunpack.c.h.b16 %v2730
    %v2827 = vunpack.c.l.b16 %v2731
    %v2828 = vunpack.c.h.b16 %v2731
    %v2829 = vunpack.c.l.b16 %v2732
    %v2830 = vunpack.c.h.b16 %v2732
    %v2831 = vunpack.c.l.b16 %v2733
    %v2832 = vunpack.c.h.b16 %v2733
    %v2833 = vunpack.c.l.b16 %v2734
    %v2834 = vunpack.c.h.b16 %v2734
    %v2835 = vunpack.c.l.b16 %v2735
    %v2836 = vunpack.c.h.b16 %v2735
    %v2837 = vunpack.c.l.b16 %v2736
    %v2838 = vunpack.c.h.b16 %v2736
    %v2839 = vunpack.c.l.b16 %v2737
    %v2840 = vunpack.c.h.b16 %v2737
    %v2841 = vunpack.c.l.b16 %v2738
    %v2842 = vunpack.c.h.b16 %v2738
    %v2843 = vunpack.c.l.b16 %v2739
    %v2844 = vunpack.c.h.b16 %v2739
    %v2845 = vunpack.c.l.b16 %v2740
    %v2846 = vunpack.c.h.b16 %v2740
    %v2847 = vunpack.c.l.b16 %v2741
    %v2848 = vunpack.c.h.b16 %v2741
    %v2849 = vunpack.c.l.b16 %v2742
    %v2850 = vunpack.c.h.b16 %v2742
    %v2851 = vunpack.c.l.b16 %v2743
    %v2852 = vunpack.c.h.b16 %v2743
    %v2853 = vunpack.c.l.b16 %v2744
    %v2854 = vunpack.c.h.b16 %v2744
    %v2855 = vunpack.c.l.b16 %v2745
    %v2856 = vunpack.c.h.b16 %v2745
    %v2857 = vunpack.c.l.b16 %v2746
    %v2858 = vunpack.c.h.b16 %v2746
    %v2859 = vunpack.c.l.b16 %v2747
    %v2860 = vunpack.c.h.b16 %v2747
    %v2861 = vunpack.c.l.b16 %v2748
    %v2862 = vunpack.c.h.b16 %v2748
    %v2863 = vunpack.c.l.b16 %v2749
    %v2864 = vunpack.c.h.b16 %v2749
    %v2865 = vunpack.c.l.b16 %v2750
    %v2866 = vunpack.c.h.b16 %v2750
    %v2867 = vunpack.c.l.b16 %v2751
    %v2868 = vunpack.c.h.b16 %v2751
    %v2869 = vunpack.c.l.b16 %v2752
    %v2870 = vunpack.c.h.b16 %v2752
    %v2871 = vpack.c.b16 %v2811, %v2807
    %v2872 = vpack.c.b16 %v2812, %v2808
    %v2873 = vpack.c.b16 %v2813, %v2809
    %v2874 = vpack.c.b16 %v2814, %v2810
    %v2875 = vpack.c.b16 %v2819, %v2815
    %v2876 = vpack.c.b16 %v2820, %v2816
    %v2877 = vpack.c.b16 %v2821, %v2817
    %v2878 = vpack.c.b16 %v2822, %v2818
    %v2879 = vpack.c.b16 %v2827, %v2823
    %v2880 = vpack.c.b16 %v2828, %v2824
    %v2881 = vpack.c.b16 %v2829, %v2825
    %v2882 = vpack.c.b16 %v2830, %v2826
    %v2883 = vpack.c.b16 %v2835, %v2831
    %v2884 = vpack.c.b16 %v2836, %v2832
    %v2885 = vpack.c.b16 %v2837, %v2833
    %v2886 = vpack.c.b16 %v2838, %v2834
    %v2887 = vpack.c.b16 %v2843, %v2839
    %v2888 = vpack.c.b16 %v2844, %v2840
    %v2889 = vpack.c.b16 %v2845, %v2841
    %v2890 = vpack.c.b16 %v2846, %v2842
    %v2891 = vpack.c.b16 %v2851, %v2847
    %v2892 = vpack.c.b16 %v2852, %v2848
    %v2893 = vpack.c.b16 %v2853, %v2849
    %v2894 = vpack.c.b16 %v2854, %v2850
    %v2895 = vpack.c.b16 %v2859, %v2855
    %v2896 = vpack.c.b16 %v2860, %v2856
    %v2897 = vpack.c.b16 %v2861, %v2857
    %v2898 = vpack.c.b16 %v2862, %v2858
    %v2899 = vpack.c.b16 %v2867, %v2863
    %v2900 = vpack.c.b16 %v2868, %v2864
    %v2901 = vpack.c.b16 %v2869, %v2865
    %v2902 = vpack.c.b16 %v2870, %v2866
    %2935 = vmatprep.subr.bf16.mxu0 %v2900
    %2936 = vmatpush1.bf16.msra.mxu0 %v2899
    %2937 = vmatprep.subr.bf16.mxu0 %v2896
    %2938 = vmatpush1.bf16.msra.mxu0 %v2895
    %2939 = vmatprep.subr.bf16.mxu0 %v2892
    %2940 = vmatpush1.bf16.msra.mxu0 %v2891
    %2941 = vmatprep.subr.bf16.mxu0 %v2888
    %2942 = vmatpush1.bf16.msra.mxu0 %v2887
    %2943 = vmatprep.subr.bf16.mxu0 %v2884
    %2944 = vmatpush1.bf16.msra.mxu0 %v2883
    %2945 = vmatprep.subr.bf16.mxu0 %v2880
    %2946 = vmatpush1.bf16.msra.mxu0 %v2879
    %2947 = vmatprep.subr.bf16.mxu0 %v2876
    %2948 = vmatpush1.bf16.msra.mxu0 %v2875
    %2949 = vmatprep.subr.bf16.mxu0 %v2872
    %2950 = vmatpush1.bf16.msra.mxu0 %v2871
    %2951 = vmatprep.subr.bf16.mxu0 0
    %2952 = vmatpush2.bf16.msra.mxu0 0
    %2953 = vmatprep.subr.bf16.mxu0 0
    %2954 = vmatpush2.bf16.msra.mxu0 0
    %2955 = vmatprep.subr.bf16.mxu0 0
    %2956 = vmatpush2.bf16.msra.mxu0 0
    %2957 = vmatprep.subr.bf16.mxu0 0
    %2958 = vmatpush2.bf16.msra.mxu0 0
    %2959 = vmatprep.subr.bf16.mxu0 0
    %2960 = vmatpush2.bf16.msra.mxu0 0
    %2961 = vmatprep.subr.bf16.mxu0 0
    %2962 = vmatpush2.bf16.msra.mxu0 0
    %2963 = vmatprep.subr.bf16.mxu0 0
    %2964 = vmatpush2.bf16.msra.mxu0 0
    %2965 = vmatprep.subr.bf16.mxu0 0
    %2966 = vmatpush2.bf16.msra.mxu0 0
    %2967 = vmatprep.mubr.bf16.mxu0 0
    %2968 = vmatmul.mubr.bf16.gmra.mxu0 %v2720
    %v2969 = vpop.f32.mrf.mxu0
    %v2970 = vadd.f32 %v2758, %v2969
    %v2971 = vpop.f32.mrf.mxu0
    %v2972 = vadd.f32 %v2762, %v2971
    %v2973 = vpop.f32.mrf.mxu0
    %v2974 = vpop.f32.mrf.mxu0
    %2975 = vdwg.mxu0
    %2976 = vmatprep.subr.bf16.mxu0 %v2902
    %2977 = vmatpush1.bf16.msra.mxu0 %v2901
    %2978 = vmatprep.subr.bf16.mxu0 %v2898
    %2979 = vmatpush1.bf16.msra.mxu0 %v2897
    %2980 = vmatprep.subr.bf16.mxu0 %v2894
    %2981 = vmatpush1.bf16.msra.mxu0 %v2893
    %2982 = vmatprep.subr.bf16.mxu0 %v2890
    %2983 = vmatpush1.bf16.msra.mxu0 %v2889
    %2984 = vmatprep.subr.bf16.mxu0 %v2886
    %2985 = vmatpush1.bf16.msra.mxu0 %v2885
    %2986 = vmatprep.subr.bf16.mxu0 %v2882
    %2987 = vmatpush1.bf16.msra.mxu0 %v2881
    %2988 = vmatprep.subr.bf16.mxu0 %v2878
    %2989 = vmatpush1.bf16.msra.mxu0 %v2877
    %2990 = vmatprep.subr.bf16.mxu0 %v2874
    %2991 = vmatpush1.bf16.msra.mxu0 %v2873
    %2992 = vmatprep.subr.bf16.mxu0 0
    %2993 = vmatpush2.bf16.msra.mxu0 0
    %2994 = vmatprep.subr.bf16.mxu0 0
    %2995 = vmatpush2.bf16.msra.mxu0 0
    %2996 = vmatprep.subr.bf16.mxu0 0
    %2997 = vmatpush2.bf16.msra.mxu0 0
    %2998 = vmatprep.subr.bf16.mxu0 0
    %2999 = vmatpush2.bf16.msra.mxu0 0
    %3000 = vmatprep.subr.bf16.mxu0 0
    %3001 = vmatpush2.bf16.msra.mxu0 0
    %3002 = vmatprep.subr.bf16.mxu0 0
    %3003 = vmatpush2.bf16.msra.mxu0 0
    %3004 = vmatprep.subr.bf16.mxu0 0
    %3005 = vmatpush2.bf16.msra.mxu0 0
    %3006 = vmatprep.subr.bf16.mxu0 0
    %3007 = vmatpush2.bf16.msra.mxu0 0
    %3008 = vmatprep.mubr.bf16.mxu0 0
    %3009 = vmatmul.mubr.bf16.gmra.mxu0 %v2720
    %v3010 = vpop.f32.mrf.mxu0
    %v3011 = vadd.f32 %v2766, %v3010
    %v3012 = vpop.f32.mrf.mxu0
    %v3013 = vadd.f32 %v2770, %v3012
    %v3014 = vpop.f32.mrf.mxu0
    %v3015 = vpop.f32.mrf.mxu0
    %3016 = vdwg.mxu0
    %s3017 = scalar_lea.sflag [#allocation31], 22
    // Predicated region
    $region296: #{_generator_forward_impl.1} parent=1 // pred_check
      _
    $region297: #{_generator_forward_impl.1} parent=1 // pred_check_branch
      %3019 = sbr.rel target = $region299
    $region298: #{_generator_forward_impl.1} parent=1 // pred_region
      %3020 = sst [smem:[#allocation56]] [#allocation100]
      %3021 = sst [smem:[#allocation57]] [#allocation99]
    $region299: #{_generator_forward_impl.1} parent=1 // pred_fallthru
      _
    %3023 = shalt.err (0)
    %s3025 = sshll.u32 [#allocation24], 4
    %s3026 = int_to_ptr.vmem [resolvable:$true] %s3025
    %3028 = dma.hbm_to_vmem [thread:$0]  %s47, 16384, %s3026, %s3017
    %s3029 = smul.u32 %s578, 4
    %s3030 = sshll.u32 %s3029, 4
    %3031 = dma.done %s1362, %s3030
    %v3032 = vld [vmem:[#allocation16] sm:$0xff]
    %v3033 = vld [vmem:[#allocation16 + $0x8] sm:$0xff]
    %v3034 = vld [vmem:[#allocation16 + $0x10] sm:$0xff]
    %v3035 = vld [vmem:[#allocation16 + $0x18] sm:$0xff]
    %v3036 = vld [vmem:[#allocation16 + $0x20] sm:$0xff]
    %v3037 = vld [vmem:[#allocation16 + $0x28] sm:$0xff]
    %v3038 = vld [vmem:[#allocation16 + $0x30] sm:$0xff]
    %v3039 = vld [vmem:[#allocation16 + $0x38] sm:$0xff]
    %v3040 = vld [vmem:[#allocation16 + $0x40] sm:$0xff]
    %v3041 = vld [vmem:[#allocation16 + $0x48] sm:$0xff]
    %v3042 = vld [vmem:[#allocation16 + $0x50] sm:$0xff]
    %v3043 = vld [vmem:[#allocation16 + $0x58] sm:$0xff]
    %v3044 = vld [vmem:[#allocation16 + $0x60] sm:$0xff]
    %v3045 = vld [vmem:[#allocation16 + $0x68] sm:$0xff]
    %v3046 = vld [vmem:[#allocation16 + $0x70] sm:$0xff]
    %v3047 = vld [vmem:[#allocation16 + $0x78] sm:$0xff]
    %v3048 = vld [vmem:[#allocation16 + $0x80] sm:$0xff]
    %v3049 = vld [vmem:[#allocation16 + $0x88] sm:$0xff]
    %v3050 = vld [vmem:[#allocation16 + $0x90] sm:$0xff]
    %v3051 = vld [vmem:[#allocation16 + $0x98] sm:$0xff]
    %v3052 = vld [vmem:[#allocation16 + $0xa0] sm:$0xff]
    %v3053 = vld [vmem:[#allocation16 + $0xa8] sm:$0xff]
    %v3054 = vld [vmem:[#allocation16 + $0xb0] sm:$0xff]
    %v3055 = vld [vmem:[#allocation16 + $0xb8] sm:$0xff]
    %v3056 = vld [vmem:[#allocation16 + $0xc0] sm:$0xff]
    %v3057 = vld [vmem:[#allocation16 + $0xc8] sm:$0xff]
    %v3058 = vld [vmem:[#allocation16 + $0xd0] sm:$0xff]
    %v3059 = vld [vmem:[#allocation16 + $0xd8] sm:$0xff]
    %v3060 = vld [vmem:[#allocation16 + $0xe0] sm:$0xff]
    %v3061 = vld [vmem:[#allocation16 + $0xe8] sm:$0xff]
    %v3062 = vld [vmem:[#allocation16 + $0xf0] sm:$0xff]
    %v3063 = vld [vmem:[#allocation16 + $0xf8] sm:$0xff]
    %v3064 = vld [vmem:[#allocation16 + $0x100] sm:$0xff]
    %v3065 = vld [vmem:[#allocation16 + $0x108] sm:$0xff]
    %v3066 = vld [vmem:[#allocation16 + $0x110] sm:$0xff]
    %v3067 = vld [vmem:[#allocation16 + $0x118] sm:$0xff]
    %v3068 = vld [vmem:[#allocation16 + $0x120] sm:$0xff]
    %v3069 = vld [vmem:[#allocation16 + $0x128] sm:$0xff]
    %v3070 = vld [vmem:[#allocation16 + $0x130] sm:$0xff]
    %v3071 = vld [vmem:[#allocation16 + $0x138] sm:$0xff]
    %v3072 = vld [vmem:[#allocation16 + $0x140] sm:$0xff]
    %v3073 = vld [vmem:[#allocation16 + $0x148] sm:$0xff]
    %v3074 = vld [vmem:[#allocation16 + $0x150] sm:$0xff]
    %v3075 = vld [vmem:[#allocation16 + $0x158] sm:$0xff]
    %v3076 = vld [vmem:[#allocation16 + $0x160] sm:$0xff]
    %v3077 = vld [vmem:[#allocation16 + $0x168] sm:$0xff]
    %v3078 = vld [vmem:[#allocation16 + $0x170] sm:$0xff]
    %v3079 = vld [vmem:[#allocation16 + $0x178] sm:$0xff]
    %v3080 = vld [vmem:[#allocation16 + $0x180] sm:$0xff]
    %v3081 = vld [vmem:[#allocation16 + $0x188] sm:$0xff]
    %v3082 = vld [vmem:[#allocation16 + $0x190] sm:$0xff]
    %v3083 = vld [vmem:[#allocation16 + $0x198] sm:$0xff]
    %v3084 = vld [vmem:[#allocation16 + $0x1a0] sm:$0xff]
    %v3085 = vld [vmem:[#allocation16 + $0x1a8] sm:$0xff]
    %v3086 = vld [vmem:[#allocation16 + $0x1b0] sm:$0xff]
    %v3087 = vld [vmem:[#allocation16 + $0x1b8] sm:$0xff]
    %v3088 = vld [vmem:[#allocation16 + $0x1c0] sm:$0xff]
    %v3089 = vld [vmem:[#allocation16 + $0x1c8] sm:$0xff]
    %v3090 = vld [vmem:[#allocation16 + $0x1d0] sm:$0xff]
    %v3091 = vld [vmem:[#allocation16 + $0x1d8] sm:$0xff]
    %v3092 = vld [vmem:[#allocation16 + $0x1e0] sm:$0xff]
    %v3093 = vld [vmem:[#allocation16 + $0x1e8] sm:$0xff]
    %v3094 = vld [vmem:[#allocation16 + $0x1f0] sm:$0xff]
    %v3095 = vld [vmem:[#allocation16 + $0x1f8] sm:$0xff]
    %v3096 = vld [vmem:[%s89] sm:$0xf]
    %v3098 = vlaneseq
    %v3099 = vshrl.u32 %v3098, 7
    %v3100 = vsub.s32 0, %v3099
    %v3101 = vrot.slane %v3096, %v3100
    %v3102 = vlaneseq
    %v3103 = vshrl.u32 %v3102, 7
    %v3104 = vsub.s32 1, %v3103
    %v3105 = vrot.slane %v3096, %v3104
    %v3106 = vlaneseq
    %v3107 = vshrl.u32 %v3106, 7
    %v3108 = vsub.s32 2, %v3107
    %v3109 = vrot.slane %v3096, %v3108
    %v3110 = vlaneseq
    %v3111 = vshrl.u32 %v3110, 7
    %v3112 = vsub.s32 3, %v3111
    %v3113 = vrot.slane %v3096, %v3112
    %v3182 = vunpack.c.l.b16 %v3032
    %v3183 = vunpack.c.h.b16 %v3032
    %v3184 = vunpack.c.l.b16 %v3033
    %v3185 = vunpack.c.h.b16 %v3033
    %v3186 = vunpack.c.l.b16 %v3034
    %v3187 = vunpack.c.h.b16 %v3034
    %v3188 = vunpack.c.l.b16 %v3035
    %v3189 = vunpack.c.h.b16 %v3035
    %v3190 = vunpack.c.l.b16 %v3036
    %v3191 = vunpack.c.h.b16 %v3036
    %v3192 = vunpack.c.l.b16 %v3037
    %v3193 = vunpack.c.h.b16 %v3037
    %v3194 = vunpack.c.l.b16 %v3038
    %v3195 = vunpack.c.h.b16 %v3038
    %v3196 = vunpack.c.l.b16 %v3039
    %v3197 = vunpack.c.h.b16 %v3039
    %v3198 = vunpack.c.l.b16 %v3040
    %v3199 = vunpack.c.h.b16 %v3040
    %v3200 = vunpack.c.l.b16 %v3041
    %v3201 = vunpack.c.h.b16 %v3041
    %v3202 = vunpack.c.l.b16 %v3042
    %v3203 = vunpack.c.h.b16 %v3042
    %v3204 = vunpack.c.l.b16 %v3043
    %v3205 = vunpack.c.h.b16 %v3043
    %v3206 = vunpack.c.l.b16 %v3044
    %v3207 = vunpack.c.h.b16 %v3044
    %v3208 = vunpack.c.l.b16 %v3045
    %v3209 = vunpack.c.h.b16 %v3045
    %v3210 = vunpack.c.l.b16 %v3046
    %v3211 = vunpack.c.h.b16 %v3046
    %v3212 = vunpack.c.l.b16 %v3047
    %v3213 = vunpack.c.h.b16 %v3047
    %v3214 = vunpack.c.l.b16 %v3048
    %v3215 = vunpack.c.h.b16 %v3048
    %v3216 = vunpack.c.l.b16 %v3049
    %v3217 = vunpack.c.h.b16 %v3049
    %v3218 = vunpack.c.l.b16 %v3050
    %v3219 = vunpack.c.h.b16 %v3050
    %v3220 = vunpack.c.l.b16 %v3051
    %v3221 = vunpack.c.h.b16 %v3051
    %v3222 = vunpack.c.l.b16 %v3052
    %v3223 = vunpack.c.h.b16 %v3052
    %v3224 = vunpack.c.l.b16 %v3053
    %v3225 = vunpack.c.h.b16 %v3053
    %v3226 = vunpack.c.l.b16 %v3054
    %v3227 = vunpack.c.h.b16 %v3054
    %v3228 = vunpack.c.l.b16 %v3055
    %v3229 = vunpack.c.h.b16 %v3055
    %v3230 = vunpack.c.l.b16 %v3056
    %v3231 = vunpack.c.h.b16 %v3056
    %v3232 = vunpack.c.l.b16 %v3057
    %v3233 = vunpack.c.h.b16 %v3057
    %v3234 = vunpack.c.l.b16 %v3058
    %v3235 = vunpack.c.h.b16 %v3058
    %v3236 = vunpack.c.l.b16 %v3059
    %v3237 = vunpack.c.h.b16 %v3059
    %v3238 = vunpack.c.l.b16 %v3060
    %v3239 = vunpack.c.h.b16 %v3060
    %v3240 = vunpack.c.l.b16 %v3061
    %v3241 = vunpack.c.h.b16 %v3061
    %v3242 = vunpack.c.l.b16 %v3062
    %v3243 = vunpack.c.h.b16 %v3062
    %v3244 = vunpack.c.l.b16 %v3063
    %v3245 = vunpack.c.h.b16 %v3063
    %v3246 = vunpack.c.l.b16 %v3064
    %v3247 = vunpack.c.h.b16 %v3064
    %v3248 = vunpack.c.l.b16 %v3065
    %v3249 = vunpack.c.h.b16 %v3065
    %v3250 = vunpack.c.l.b16 %v3066
    %v3251 = vunpack.c.h.b16 %v3066
    %v3252 = vunpack.c.l.b16 %v3067
    %v3253 = vunpack.c.h.b16 %v3067
    %v3254 = vunpack.c.l.b16 %v3068
    %v3255 = vunpack.c.h.b16 %v3068
    %v3256 = vunpack.c.l.b16 %v3069
    %v3257 = vunpack.c.h.b16 %v3069
    %v3258 = vunpack.c.l.b16 %v3070
    %v3259 = vunpack.c.h.b16 %v3070
    %v3260 = vunpack.c.l.b16 %v3071
    %v3261 = vunpack.c.h.b16 %v3071
    %v3262 = vunpack.c.l.b16 %v3072
    %v3263 = vunpack.c.h.b16 %v3072
    %v3264 = vunpack.c.l.b16 %v3073
    %v3265 = vunpack.c.h.b16 %v3073
    %v3266 = vunpack.c.l.b16 %v3074
    %v3267 = vunpack.c.h.b16 %v3074
    %v3268 = vunpack.c.l.b16 %v3075
    %v3269 = vunpack.c.h.b16 %v3075
    %v3270 = vunpack.c.l.b16 %v3076
    %v3271 = vunpack.c.h.b16 %v3076
    %v3272 = vunpack.c.l.b16 %v3077
    %v3273 = vunpack.c.h.b16 %v3077
    %v3274 = vunpack.c.l.b16 %v3078
    %v3275 = vunpack.c.h.b16 %v3078
    %v3276 = vunpack.c.l.b16 %v3079
    %v3277 = vunpack.c.h.b16 %v3079
    %v3278 = vunpack.c.l.b16 %v3080
    %v3279 = vunpack.c.h.b16 %v3080
    %v3280 = vunpack.c.l.b16 %v3081
    %v3281 = vunpack.c.h.b16 %v3081
    %v3282 = vunpack.c.l.b16 %v3082
    %v3283 = vunpack.c.h.b16 %v3082
    %v3284 = vunpack.c.l.b16 %v3083
    %v3285 = vunpack.c.h.b16 %v3083
    %v3286 = vunpack.c.l.b16 %v3084
    %v3287 = vunpack.c.h.b16 %v3084
    %v3288 = vunpack.c.l.b16 %v3085
    %v3289 = vunpack.c.h.b16 %v3085
    %v3290 = vunpack.c.l.b16 %v3086
    %v3291 = vunpack.c.h.b16 %v3086
    %v3292 = vunpack.c.l.b16 %v3087
    %v3293 = vunpack.c.h.b16 %v3087
    %v3294 = vunpack.c.l.b16 %v3088
    %v3295 = vunpack.c.h.b16 %v3088
    %v3296 = vunpack.c.l.b16 %v3089
    %v3297 = vunpack.c.h.b16 %v3089
    %v3298 = vunpack.c.l.b16 %v3090
    %v3299 = vunpack.c.h.b16 %v3090
    %v3300 = vunpack.c.l.b16 %v3091
    %v3301 = vunpack.c.h.b16 %v3091
    %v3302 = vunpack.c.l.b16 %v3092
    %v3303 = vunpack.c.h.b16 %v3092
    %v3304 = vunpack.c.l.b16 %v3093
    %v3305 = vunpack.c.h.b16 %v3093
    %v3306 = vunpack.c.l.b16 %v3094
    %v3307 = vunpack.c.h.b16 %v3094
    %v3308 = vunpack.c.l.b16 %v3095
    %v3309 = vunpack.c.h.b16 %v3095
    %v3310 = vpack.c.b16 %v3186, %v3182
    %v3311 = vpack.c.b16 %v3187, %v3183
    %v3312 = vpack.c.b16 %v3188, %v3184
    %v3313 = vpack.c.b16 %v3189, %v3185
    %v3314 = vpack.c.b16 %v3194, %v3190
    %v3315 = vpack.c.b16 %v3195, %v3191
    %v3316 = vpack.c.b16 %v3196, %v3192
    %v3317 = vpack.c.b16 %v3197, %v3193
    %v3318 = vpack.c.b16 %v3202, %v3198
    %v3319 = vpack.c.b16 %v3203, %v3199
    %v3320 = vpack.c.b16 %v3204, %v3200
    %v3321 = vpack.c.b16 %v3205, %v3201
    %v3322 = vpack.c.b16 %v3210, %v3206
    %v3323 = vpack.c.b16 %v3211, %v3207
    %v3324 = vpack.c.b16 %v3212, %v3208
    %v3325 = vpack.c.b16 %v3213, %v3209
    %v3326 = vpack.c.b16 %v3218, %v3214
    %v3327 = vpack.c.b16 %v3219, %v3215
    %v3328 = vpack.c.b16 %v3220, %v3216
    %v3329 = vpack.c.b16 %v3221, %v3217
    %v3330 = vpack.c.b16 %v3226, %v3222
    %v3331 = vpack.c.b16 %v3227, %v3223
    %v3332 = vpack.c.b16 %v3228, %v3224
    %v3333 = vpack.c.b16 %v3229, %v3225
    %v3334 = vpack.c.b16 %v3234, %v3230
    %v3335 = vpack.c.b16 %v3235, %v3231
    %v3336 = vpack.c.b16 %v3236, %v3232
    %v3337 = vpack.c.b16 %v3237, %v3233
    %v3338 = vpack.c.b16 %v3242, %v3238
    %v3339 = vpack.c.b16 %v3243, %v3239
    %v3340 = vpack.c.b16 %v3244, %v3240
    %v3341 = vpack.c.b16 %v3245, %v3241
    %v3342 = vpack.c.b16 %v3250, %v3246
    %v3343 = vpack.c.b16 %v3251, %v3247
    %v3344 = vpack.c.b16 %v3252, %v3248
    %v3345 = vpack.c.b16 %v3253, %v3249
    %v3346 = vpack.c.b16 %v3258, %v3254
    %v3347 = vpack.c.b16 %v3259, %v3255
    %v3348 = vpack.c.b16 %v3260, %v3256
    %v3349 = vpack.c.b16 %v3261, %v3257
    %v3350 = vpack.c.b16 %v3266, %v3262
    %v3351 = vpack.c.b16 %v3267, %v3263
    %v3352 = vpack.c.b16 %v3268, %v3264
    %v3353 = vpack.c.b16 %v3269, %v3265
    %v3354 = vpack.c.b16 %v3274, %v3270
    %v3355 = vpack.c.b16 %v3275, %v3271
    %v3356 = vpack.c.b16 %v3276, %v3272
    %v3357 = vpack.c.b16 %v3277, %v3273
    %v3358 = vpack.c.b16 %v3282, %v3278
    %v3359 = vpack.c.b16 %v3283, %v3279
    %v3360 = vpack.c.b16 %v3284, %v3280
    %v3361 = vpack.c.b16 %v3285, %v3281
    %v3362 = vpack.c.b16 %v3290, %v3286
    %v3363 = vpack.c.b16 %v3291, %v3287
    %v3364 = vpack.c.b16 %v3292, %v3288
    %v3365 = vpack.c.b16 %v3293, %v3289
    %v3366 = vpack.c.b16 %v3298, %v3294
    %v3367 = vpack.c.b16 %v3299, %v3295
    %v3368 = vpack.c.b16 %v3300, %v3296
    %v3369 = vpack.c.b16 %v3301, %v3297
    %v3370 = vpack.c.b16 %v3306, %v3302
    %v3371 = vpack.c.b16 %v3307, %v3303
    %v3372 = vpack.c.b16 %v3308, %v3304
    %v3373 = vpack.c.b16 %v3309, %v3305
    %3438 = vmatprep.subr.bf16.mxu0 %v3339
    %3439 = vmatpush1.bf16.msra.mxu0 %v3338
    %3440 = vmatprep.subr.bf16.mxu0 %v3335
    %3441 = vmatpush1.bf16.msra.mxu0 %v3334
    %3442 = vmatprep.subr.bf16.mxu0 %v3331
    %3443 = vmatpush1.bf16.msra.mxu0 %v3330
    %3444 = vmatprep.subr.bf16.mxu0 %v3327
    %3445 = vmatpush1.bf16.msra.mxu0 %v3326
    %3446 = vmatprep.subr.bf16.mxu0 %v3323
    %3447 = vmatpush1.bf16.msra.mxu0 %v3322
    %3448 = vmatprep.subr.bf16.mxu0 %v3319
    %3449 = vmatpush1.bf16.msra.mxu0 %v3318
    %3450 = vmatprep.subr.bf16.mxu0 %v3315
    %3451 = vmatpush1.bf16.msra.mxu0 %v3314
    %3452 = vmatprep.subr.bf16.mxu0 %v3311
    %3453 = vmatpush1.bf16.msra.mxu0 %v3310
    %3454 = vmatprep.subr.bf16.mxu0 %v3371
    %3455 = vmatpush2.bf16.msra.mxu0 %v3370
    %3456 = vmatprep.subr.bf16.mxu0 %v3367
    %3457 = vmatpush2.bf16.msra.mxu0 %v3366
    %3458 = vmatprep.subr.bf16.mxu0 %v3363
    %3459 = vmatpush2.bf16.msra.mxu0 %v3362
    %3460 = vmatprep.subr.bf16.mxu0 %v3359
    %3461 = vmatpush2.bf16.msra.mxu0 %v3358
    %3462 = vmatprep.subr.bf16.mxu0 %v3355
    %3463 = vmatpush2.bf16.msra.mxu0 %v3354
    %3464 = vmatprep.subr.bf16.mxu0 %v3351
    %3465 = vmatpush2.bf16.msra.mxu0 %v3350
    %3466 = vmatprep.subr.bf16.mxu0 %v3347
    %3467 = vmatpush2.bf16.msra.mxu0 %v3346
    %3468 = vmatprep.subr.bf16.mxu0 %v3343
    %3469 = vmatpush2.bf16.msra.mxu0 %v3342
    %3470 = vmatprep.mubr.bf16.mxu0 %v2528
    %3471 = vmatmul.mubr.bf16.gmra.mxu0 %v2527
    %v3472 = vpop.f32.mrf.mxu0
    %v3473 = vadd.f32 %v3101, %v3472
    %v3474 = vpop.f32.mrf.mxu0
    %v3475 = vadd.f32 %v3105, %v3474
    %v3476 = vpop.f32.mrf.mxu0
    %v3477 = vpop.f32.mrf.mxu0
    %3478 = vdwg.mxu0
    %3479 = vmatprep.subr.bf16.mxu0 %v3341
    %3480 = vmatpush1.bf16.msra.mxu0 %v3340
    %3481 = vmatprep.subr.bf16.mxu0 %v3337
    %3482 = vmatpush1.bf16.msra.mxu0 %v3336
    %3483 = vmatprep.subr.bf16.mxu0 %v3333
    %3484 = vmatpush1.bf16.msra.mxu0 %v3332
    %3485 = vmatprep.subr.bf16.mxu0 %v3329
    %3486 = vmatpush1.bf16.msra.mxu0 %v3328
    %3487 = vmatprep.subr.bf16.mxu0 %v3325
    %3488 = vmatpush1.bf16.msra.mxu0 %v3324
    %3489 = vmatprep.subr.bf16.mxu0 %v3321
    %3490 = vmatpush1.bf16.msra.mxu0 %v3320
    %3491 = vmatprep.subr.bf16.mxu0 %v3317
    %3492 = vmatpush1.bf16.msra.mxu0 %v3316
    %3493 = vmatprep.subr.bf16.mxu0 %v3313
    %3494 = vmatpush1.bf16.msra.mxu0 %v3312
    %3495 = vmatprep.subr.bf16.mxu0 %v3373
    %3496 = vmatpush2.bf16.msra.mxu0 %v3372
    %3497 = vmatprep.subr.bf16.mxu0 %v3369
    %3498 = vmatpush2.bf16.msra.mxu0 %v3368
    %3499 = vmatprep.subr.bf16.mxu0 %v3365
    %3500 = vmatpush2.bf16.msra.mxu0 %v3364
    %3501 = vmatprep.subr.bf16.mxu0 %v3361
    %3502 = vmatpush2.bf16.msra.mxu0 %v3360
    %3503 = vmatprep.subr.bf16.mxu0 %v3357
    %3504 = vmatpush2.bf16.msra.mxu0 %v3356
    %3505 = vmatprep.subr.bf16.mxu0 %v3353
    %3506 = vmatpush2.bf16.msra.mxu0 %v3352
    %3507 = vmatprep.subr.bf16.mxu0 %v3349
    %3508 = vmatpush2.bf16.msra.mxu0 %v3348
    %3509 = vmatprep.subr.bf16.mxu0 %v3345
    %3510 = vmatpush2.bf16.msra.mxu0 %v3344
    %3511 = vmatprep.mubr.bf16.mxu0 %v2528
    %3512 = vmatmul.mubr.bf16.gmra.mxu0 %v2527
    %v3513 = vpop.f32.mrf.mxu0
    %v3514 = vadd.f32 %v3109, %v3513
    %v3515 = vpop.f32.mrf.mxu0
    %v3516 = vadd.f32 %v3113, %v3515
    %v3517 = vpop.f32.mrf.mxu0
    %v3518 = vpop.f32.mrf.mxu0
    %3519 = vdwg.mxu0
    %v3520 = vadd.f32 %v2970, %v3473
    %v3521 = vadd.f32 %v2972, %v3475
    %v3522 = vadd.f32 %v3011, %v3514
    %v3523 = vadd.f32 %v3013, %v3516
    %v3524 = vmax.f32 %v3520, 0.0
    %v3525 = vmax.f32 %v3521, 0.0
    %v3526 = vmax.f32 %v3522, 0.0
    %v3527 = vmax.f32 %v3523, 0.0
    %v3528 = vmax.f32 %v3524, 0.0
    %v3529 = vmax.f32 %v3525, 0.0
    %v3530 = vmax.f32 %v3526, 0.0
    %v3531 = vmax.f32 %v3527, 0.0
    %s3532 = scalar_lea.sflag [#allocation31], 23
    // Predicated region
    $region300: #{_generator_forward_impl.1} parent=1 // pred_check
      _
    $region301: #{_generator_forward_impl.1} parent=1 // pred_check_branch
      %3534 = sbr.rel target = $region303
    $region302: #{_generator_forward_impl.1} parent=1 // pred_region
      %3535 = sst [smem:[#allocation56]] [#allocation102]
      %3536 = sst [smem:[#allocation57]] [#allocation101]
    $region303: #{_generator_forward_impl.1} parent=1 // pred_fallthru
      _
    %3538 = shalt.err (0)
    %s3540 = sshll.u32 [#allocation25], 4
    %s3541 = int_to_ptr.vmem [resolvable:$true] %s3540
    %3543 = dma.hbm_to_vmem [thread:$0]  %s49, 4096, %s3541, %s3532
    %s3544 = smul.u32 4, 64
    %s3545 = smul.u32 %s3544, 2
    %s3546 = sshll.u32 %s3545, 4
    %3547 = dma.done %s1556, %s3546
    %v3548 = vpack.c.bf16 %v3528, %v3528
    %v3549 = vpack.c.bf16 %v3529, %v3529
    %v3550 = vpack.c.bf16 %v3530, %v3530
    %v3551 = vpack.c.bf16 %v3531, %v3531
    %v3552 = vld [vmem:[#allocation17] sm:$0xff]
    %v3553 = vld [vmem:[#allocation17 + $0x8] sm:$0xff]
    %v3554 = vld [vmem:[#allocation17 + $0x10] sm:$0xff]
    %v3555 = vld [vmem:[#allocation17 + $0x18] sm:$0xff]
    %v3556 = vld [vmem:[#allocation17 + $0x20] sm:$0xff]
    %v3557 = vld [vmem:[#allocation17 + $0x28] sm:$0xff]
    %v3558 = vld [vmem:[#allocation17 + $0x30] sm:$0xff]
    %v3559 = vld [vmem:[#allocation17 + $0x38] sm:$0xff]
    %v3560 = vld [vmem:[#allocation17 + $0x40] sm:$0xff]
    %v3561 = vld [vmem:[#allocation17 + $0x48] sm:$0xff]
    %v3562 = vld [vmem:[#allocation17 + $0x50] sm:$0xff]
    %v3563 = vld [vmem:[#allocation17 + $0x58] sm:$0xff]
    %v3564 = vld [vmem:[#allocation17 + $0x60] sm:$0xff]
    %v3565 = vld [vmem:[#allocation17 + $0x68] sm:$0xff]
    %v3566 = vld [vmem:[#allocation17 + $0x70] sm:$0xff]
    %v3567 = vld [vmem:[#allocation17 + $0x78] sm:$0xff]
    %v3568 = vld [vmem:[#allocation17 + $0x80] sm:$0xff]
    %v3569 = vld [vmem:[#allocation17 + $0x88] sm:$0xff]
    %v3570 = vld [vmem:[#allocation17 + $0x90] sm:$0xff]
    %v3571 = vld [vmem:[#allocation17 + $0x98] sm:$0xff]
    %v3572 = vld [vmem:[#allocation17 + $0xa0] sm:$0xff]
    %v3573 = vld [vmem:[#allocation17 + $0xa8] sm:$0xff]
    %v3574 = vld [vmem:[#allocation17 + $0xb0] sm:$0xff]
    %v3575 = vld [vmem:[#allocation17 + $0xb8] sm:$0xff]
    %v3576 = vld [vmem:[#allocation17 + $0xc0] sm:$0xff]
    %v3577 = vld [vmem:[#allocation17 + $0xc8] sm:$0xff]
    %v3578 = vld [vmem:[#allocation17 + $0xd0] sm:$0xff]
    %v3579 = vld [vmem:[#allocation17 + $0xd8] sm:$0xff]
    %v3580 = vld [vmem:[#allocation17 + $0xe0] sm:$0xff]
    %v3581 = vld [vmem:[#allocation17 + $0xe8] sm:$0xff]
    %v3582 = vld [vmem:[#allocation17 + $0xf0] sm:$0xff]
    %v3583 = vld [vmem:[#allocation17 + $0xf8] sm:$0xff]
    %v3584 = vld [vmem:[#allocation17 + $0x100] sm:$0xff]
    %v3585 = vld [vmem:[#allocation17 + $0x108] sm:$0xff]
    %v3586 = vld [vmem:[#allocation17 + $0x110] sm:$0xff]
    %v3587 = vld [vmem:[#allocation17 + $0x118] sm:$0xff]
    %v3588 = vld [vmem:[#allocation17 + $0x120] sm:$0xff]
    %v3589 = vld [vmem:[#allocation17 + $0x128] sm:$0xff]
    %v3590 = vld [vmem:[#allocation17 + $0x130] sm:$0xff]
    %v3591 = vld [vmem:[#allocation17 + $0x138] sm:$0xff]
    %v3592 = vld [vmem:[#allocation17 + $0x140] sm:$0xff]
    %v3593 = vld [vmem:[#allocation17 + $0x148] sm:$0xff]
    %v3594 = vld [vmem:[#allocation17 + $0x150] sm:$0xff]
    %v3595 = vld [vmem:[#allocation17 + $0x158] sm:$0xff]
    %v3596 = vld [vmem:[#allocation17 + $0x160] sm:$0xff]
    %v3597 = vld [vmem:[#allocation17 + $0x168] sm:$0xff]
    %v3598 = vld [vmem:[#allocation17 + $0x170] sm:$0xff]
    %v3599 = vld [vmem:[#allocation17 + $0x178] sm:$0xff]
    %v3600 = vld [vmem:[#allocation17 + $0x180] sm:$0xff]
    %v3601 = vld [vmem:[#allocation17 + $0x188] sm:$0xff]
    %v3602 = vld [vmem:[#allocation17 + $0x190] sm:$0xff]
    %v3603 = vld [vmem:[#allocation17 + $0x198] sm:$0xff]
    %v3604 = vld [vmem:[#allocation17 + $0x1a0] sm:$0xff]
    %v3605 = vld [vmem:[#allocation17 + $0x1a8] sm:$0xff]
    %v3606 = vld [vmem:[#allocation17 + $0x1b0] sm:$0xff]
    %v3607 = vld [vmem:[#allocation17 + $0x1b8] sm:$0xff]
    %v3608 = vld [vmem:[#allocation17 + $0x1c0] sm:$0xff]
    %v3609 = vld [vmem:[#allocation17 + $0x1c8] sm:$0xff]
    %v3610 = vld [vmem:[#allocation17 + $0x1d0] sm:$0xff]
    %v3611 = vld [vmem:[#allocation17 + $0x1d8] sm:$0xff]
    %v3612 = vld [vmem:[#allocation17 + $0x1e0] sm:$0xff]
    %v3613 = vld [vmem:[#allocation17 + $0x1e8] sm:$0xff]
    %v3614 = vld [vmem:[#allocation17 + $0x1f0] sm:$0xff]
    %v3615 = vld [vmem:[#allocation17 + $0x1f8] sm:$0xff]
    %v3616 = vld [vmem:[%s91] sm:$0x3]
    %v3618 = vlaneseq
    %v3619 = vshrl.u32 %v3618, 7
    %v3620 = vsub.s32 0, %v3619
    %v3621 = vrot.slane %v3616, %v3620
    %v3622 = vlaneseq
    %v3623 = vshrl.u32 %v3622, 7
    %v3624 = vsub.s32 1, %v3623
    %v3625 = vrot.slane %v3616, %v3624
    %v3692 = vunpack.c.l.b16 %v3552
    %v3693 = vunpack.c.h.b16 %v3552
    %v3694 = vunpack.c.l.b16 %v3553
    %v3695 = vunpack.c.h.b16 %v3553
    %v3696 = vunpack.c.l.b16 %v3554
    %v3697 = vunpack.c.h.b16 %v3554
    %v3698 = vunpack.c.l.b16 %v3555
    %v3699 = vunpack.c.h.b16 %v3555
    %v3700 = vunpack.c.l.b16 %v3556
    %v3701 = vunpack.c.h.b16 %v3556
    %v3702 = vunpack.c.l.b16 %v3557
    %v3703 = vunpack.c.h.b16 %v3557
    %v3704 = vunpack.c.l.b16 %v3558
    %v3705 = vunpack.c.h.b16 %v3558
    %v3706 = vunpack.c.l.b16 %v3559
    %v3707 = vunpack.c.h.b16 %v3559
    %v3708 = vunpack.c.l.b16 %v3560
    %v3709 = vunpack.c.h.b16 %v3560
    %v3710 = vunpack.c.l.b16 %v3561
    %v3711 = vunpack.c.h.b16 %v3561
    %v3712 = vunpack.c.l.b16 %v3562
    %v3713 = vunpack.c.h.b16 %v3562
    %v3714 = vunpack.c.l.b16 %v3563
    %v3715 = vunpack.c.h.b16 %v3563
    %v3716 = vunpack.c.l.b16 %v3564
    %v3717 = vunpack.c.h.b16 %v3564
    %v3718 = vunpack.c.l.b16 %v3565
    %v3719 = vunpack.c.h.b16 %v3565
    %v3720 = vunpack.c.l.b16 %v3566
    %v3721 = vunpack.c.h.b16 %v3566
    %v3722 = vunpack.c.l.b16 %v3567
    %v3723 = vunpack.c.h.b16 %v3567
    %v3724 = vunpack.c.l.b16 %v3568
    %v3725 = vunpack.c.h.b16 %v3568
    %v3726 = vunpack.c.l.b16 %v3569
    %v3727 = vunpack.c.h.b16 %v3569
    %v3728 = vunpack.c.l.b16 %v3570
    %v3729 = vunpack.c.h.b16 %v3570
    %v3730 = vunpack.c.l.b16 %v3571
    %v3731 = vunpack.c.h.b16 %v3571
    %v3732 = vunpack.c.l.b16 %v3572
    %v3733 = vunpack.c.h.b16 %v3572
    %v3734 = vunpack.c.l.b16 %v3573
    %v3735 = vunpack.c.h.b16 %v3573
    %v3736 = vunpack.c.l.b16 %v3574
    %v3737 = vunpack.c.h.b16 %v3574
    %v3738 = vunpack.c.l.b16 %v3575
    %v3739 = vunpack.c.h.b16 %v3575
    %v3740 = vunpack.c.l.b16 %v3576
    %v3741 = vunpack.c.h.b16 %v3576
    %v3742 = vunpack.c.l.b16 %v3577
    %v3743 = vunpack.c.h.b16 %v3577
    %v3744 = vunpack.c.l.b16 %v3578
    %v3745 = vunpack.c.h.b16 %v3578
    %v3746 = vunpack.c.l.b16 %v3579
    %v3747 = vunpack.c.h.b16 %v3579
    %v3748 = vunpack.c.l.b16 %v3580
    %v3749 = vunpack.c.h.b16 %v3580
    %v3750 = vunpack.c.l.b16 %v3581
    %v3751 = vunpack.c.h.b16 %v3581
    %v3752 = vunpack.c.l.b16 %v3582
    %v3753 = vunpack.c.h.b16 %v3582
    %v3754 = vunpack.c.l.b16 %v3583
    %v3755 = vunpack.c.h.b16 %v3583
    %v3756 = vunpack.c.l.b16 %v3584
    %v3757 = vunpack.c.h.b16 %v3584
    %v3758 = vunpack.c.l.b16 %v3585
    %v3759 = vunpack.c.h.b16 %v3585
    %v3760 = vunpack.c.l.b16 %v3586
    %v3761 = vunpack.c.h.b16 %v3586
    %v3762 = vunpack.c.l.b16 %v3587
    %v3763 = vunpack.c.h.b16 %v3587
    %v3764 = vunpack.c.l.b16 %v3588
    %v3765 = vunpack.c.h.b16 %v3588
    %v3766 = vunpack.c.l.b16 %v3589
    %v3767 = vunpack.c.h.b16 %v3589
    %v3768 = vunpack.c.l.b16 %v3590
    %v3769 = vunpack.c.h.b16 %v3590
    %v3770 = vunpack.c.l.b16 %v3591
    %v3771 = vunpack.c.h.b16 %v3591
    %v3772 = vunpack.c.l.b16 %v3592
    %v3773 = vunpack.c.h.b16 %v3592
    %v3774 = vunpack.c.l.b16 %v3593
    %v3775 = vunpack.c.h.b16 %v3593
    %v3776 = vunpack.c.l.b16 %v3594
    %v3777 = vunpack.c.h.b16 %v3594
    %v3778 = vunpack.c.l.b16 %v3595
    %v3779 = vunpack.c.h.b16 %v3595
    %v3780 = vunpack.c.l.b16 %v3596
    %v3781 = vunpack.c.h.b16 %v3596
    %v3782 = vunpack.c.l.b16 %v3597
    %v3783 = vunpack.c.h.b16 %v3597
    %v3784 = vunpack.c.l.b16 %v3598
    %v3785 = vunpack.c.h.b16 %v3598
    %v3786 = vunpack.c.l.b16 %v3599
    %v3787 = vunpack.c.h.b16 %v3599
    %v3788 = vunpack.c.l.b16 %v3600
    %v3789 = vunpack.c.h.b16 %v3600
    %v3790 = vunpack.c.l.b16 %v3601
    %v3791 = vunpack.c.h.b16 %v3601
    %v3792 = vunpack.c.l.b16 %v3602
    %v3793 = vunpack.c.h.b16 %v3602
    %v3794 = vunpack.c.l.b16 %v3603
    %v3795 = vunpack.c.h.b16 %v3603
    %v3796 = vunpack.c.l.b16 %v3604
    %v3797 = vunpack.c.h.b16 %v3604
    %v3798 = vunpack.c.l.b16 %v3605
    %v3799 = vunpack.c.h.b16 %v3605
    %v3800 = vunpack.c.l.b16 %v3606
    %v3801 = vunpack.c.h.b16 %v3606
    %v3802 = vunpack.c.l.b16 %v3607
    %v3803 = vunpack.c.h.b16 %v3607
    %v3804 = vunpack.c.l.b16 %v3608
    %v3805 = vunpack.c.h.b16 %v3608
    %v3806 = vunpack.c.l.b16 %v3609
    %v3807 = vunpack.c.h.b16 %v3609
    %v3808 = vunpack.c.l.b16 %v3610
    %v3809 = vunpack.c.h.b16 %v3610
    %v3810 = vunpack.c.l.b16 %v3611
    %v3811 = vunpack.c.h.b16 %v3611
    %v3812 = vunpack.c.l.b16 %v3612
    %v3813 = vunpack.c.h.b16 %v3612
    %v3814 = vunpack.c.l.b16 %v3613
    %v3815 = vunpack.c.h.b16 %v3613
    %v3816 = vunpack.c.l.b16 %v3614
    %v3817 = vunpack.c.h.b16 %v3614
    %v3818 = vunpack.c.l.b16 %v3615
    %v3819 = vunpack.c.h.b16 %v3615
    %v3820 = vpack.c.b16 %v3694, %v3692
    %v3821 = vpack.c.b16 %v3695, %v3693
    %v3822 = vpack.c.b16 %v3698, %v3696
    %v3823 = vpack.c.b16 %v3699, %v3697
    %v3824 = vpack.c.b16 %v3702, %v3700
    %v3825 = vpack.c.b16 %v3703, %v3701
    %v3826 = vpack.c.b16 %v3706, %v3704
    %v3827 = vpack.c.b16 %v3707, %v3705
    %v3828 = vpack.c.b16 %v3710, %v3708
    %v3829 = vpack.c.b16 %v3711, %v3709
    %v3830 = vpack.c.b16 %v3714, %v3712
    %v3831 = vpack.c.b16 %v3715, %v3713
    %v3832 = vpack.c.b16 %v3718, %v3716
    %v3833 = vpack.c.b16 %v3719, %v3717
    %v3834 = vpack.c.b16 %v3722, %v3720
    %v3835 = vpack.c.b16 %v3723, %v3721
    %v3836 = vpack.c.b16 %v3726, %v3724
    %v3837 = vpack.c.b16 %v3727, %v3725
    %v3838 = vpack.c.b16 %v3730, %v3728
    %v3839 = vpack.c.b16 %v3731, %v3729
    %v3840 = vpack.c.b16 %v3734, %v3732
    %v3841 = vpack.c.b16 %v3735, %v3733
    %v3842 = vpack.c.b16 %v3738, %v3736
    %v3843 = vpack.c.b16 %v3739, %v3737
    %v3844 = vpack.c.b16 %v3742, %v3740
    %v3845 = vpack.c.b16 %v3743, %v3741
    %v3846 = vpack.c.b16 %v3746, %v3744
    %v3847 = vpack.c.b16 %v3747, %v3745
    %v3848 = vpack.c.b16 %v3750, %v3748
    %v3849 = vpack.c.b16 %v3751, %v3749
    %v3850 = vpack.c.b16 %v3754, %v3752
    %v3851 = vpack.c.b16 %v3755, %v3753
    %v3852 = vpack.c.b16 %v3758, %v3756
    %v3853 = vpack.c.b16 %v3759, %v3757
    %v3854 = vpack.c.b16 %v3762, %v3760
    %v3855 = vpack.c.b16 %v3763, %v3761
    %v3856 = vpack.c.b16 %v3766, %v3764
    %v3857 = vpack.c.b16 %v3767, %v3765
    %v3858 = vpack.c.b16 %v3770, %v3768
    %v3859 = vpack.c.b16 %v3771, %v3769
    %v3860 = vpack.c.b16 %v3774, %v3772
    %v3861 = vpack.c.b16 %v3775, %v3773
    %v3862 = vpack.c.b16 %v3778, %v3776
    %v3863 = vpack.c.b16 %v3779, %v3777
    %v3864 = vpack.c.b16 %v3782, %v3780
    %v3865 = vpack.c.b16 %v3783, %v3781
    %v3866 = vpack.c.b16 %v3786, %v3784
    %v3867 = vpack.c.b16 %v3787, %v3785
    %v3868 = vpack.c.b16 %v3790, %v3788
    %v3869 = vpack.c.b16 %v3791, %v3789
    %v3870 = vpack.c.b16 %v3794, %v3792
    %v3871 = vpack.c.b16 %v3795, %v3793
    %v3872 = vpack.c.b16 %v3798, %v3796
    %v3873 = vpack.c.b16 %v3799, %v3797
    %v3874 = vpack.c.b16 %v3802, %v3800
    %v3875 = vpack.c.b16 %v3803, %v3801
    %v3876 = vpack.c.b16 %v3806, %v3804
    %v3877 = vpack.c.b16 %v3807, %v3805
    %v3878 = vpack.c.b16 %v3810, %v3808
    %v3879 = vpack.c.b16 %v3811, %v3809
    %v3880 = vpack.c.b16 %v3814, %v3812
    %v3881 = vpack.c.b16 %v3815, %v3813
    %v3882 = vpack.c.b16 %v3818, %v3816
    %v3883 = vpack.c.b16 %v3819, %v3817
    %3948 = vmatprep.subr.bf16.mxu0 %v3835
    %3949 = vmatpush1.bf16.msra.mxu0 %v3834
    %3950 = vmatprep.subr.bf16.mxu0 %v3833
    %3951 = vmatpush1.bf16.msra.mxu0 %v3832
    %3952 = vmatprep.subr.bf16.mxu0 %v3831
    %3953 = vmatpush1.bf16.msra.mxu0 %v3830
    %3954 = vmatprep.subr.bf16.mxu0 %v3829
    %3955 = vmatpush1.bf16.msra.mxu0 %v3828
    %3956 = vmatprep.subr.bf16.mxu0 %v3827
    %3957 = vmatpush1.bf16.msra.mxu0 %v3826
    %3958 = vmatprep.subr.bf16.mxu0 %v3825
    %3959 = vmatpush1.bf16.msra.mxu0 %v3824
    %3960 = vmatprep.subr.bf16.mxu0 %v3823
    %3961 = vmatpush1.bf16.msra.mxu0 %v3822
    %3962 = vmatprep.subr.bf16.mxu0 %v3821
    %3963 = vmatpush1.bf16.msra.mxu0 %v3820
    %3964 = vmatprep.subr.bf16.mxu0 %v3851
    %3965 = vmatpush2.bf16.msra.mxu0 %v3850
    %3966 = vmatprep.subr.bf16.mxu0 %v3849
    %3967 = vmatpush2.bf16.msra.mxu0 %v3848
    %3968 = vmatprep.subr.bf16.mxu0 %v3847
    %3969 = vmatpush2.bf16.msra.mxu0 %v3846
    %3970 = vmatprep.subr.bf16.mxu0 %v3845
    %3971 = vmatpush2.bf16.msra.mxu0 %v3844
    %3972 = vmatprep.subr.bf16.mxu0 %v3843
    %3973 = vmatpush2.bf16.msra.mxu0 %v3842
    %3974 = vmatprep.subr.bf16.mxu0 %v3841
    %3975 = vmatpush2.bf16.msra.mxu0 %v3840
    %3976 = vmatprep.subr.bf16.mxu0 %v3839
    %3977 = vmatpush2.bf16.msra.mxu0 %v3838
    %3978 = vmatprep.subr.bf16.mxu0 %v3837
    %3979 = vmatpush2.bf16.msra.mxu0 %v3836
    %3980 = vmatprep.mubr.bf16.mxu0 %v3549
    %3981 = vmatmul.mubr.bf16.gmra.mxu0 %v3548
    %v3982 = vpop.f32.mrf.mxu0
    %v3983 = vadd.f32 %v3621, %v3982
    %v3984 = vpop.f32.mrf.mxu0
    %v3985 = vadd.f32 %v3625, %v3984
    %v3986 = vpop.f32.mrf.mxu0
    %v3987 = vpop.f32.mrf.mxu0
    %3988 = vdwg.mxu0
    %3989 = vmatprep.subr.bf16.mxu0 %v3867
    %3990 = vmatpush1.bf16.msra.mxu0 %v3866
    %3991 = vmatprep.subr.bf16.mxu0 %v3865
    %3992 = vmatpush1.bf16.msra.mxu0 %v3864
    %3993 = vmatprep.subr.bf16.mxu0 %v3863
    %3994 = vmatpush1.bf16.msra.mxu0 %v3862
    %3995 = vmatprep.subr.bf16.mxu0 %v3861
    %3996 = vmatpush1.bf16.msra.mxu0 %v3860
    %3997 = vmatprep.subr.bf16.mxu0 %v3859
    %3998 = vmatpush1.bf16.msra.mxu0 %v3858
    %3999 = vmatprep.subr.bf16.mxu0 %v3857
    %4000 = vmatpush1.bf16.msra.mxu0 %v3856
    %4001 = vmatprep.subr.bf16.mxu0 %v3855
    %4002 = vmatpush1.bf16.msra.mxu0 %v3854
    %4003 = vmatprep.subr.bf16.mxu0 %v3853
    %4004 = vmatpush1.bf16.msra.mxu0 %v3852
    %4005 = vmatprep.subr.bf16.mxu0 %v3883
    %4006 = vmatpush2.bf16.msra.mxu0 %v3882
    %4007 = vmatprep.subr.bf16.mxu0 %v3881
    %4008 = vmatpush2.bf16.msra.mxu0 %v3880
    %4009 = vmatprep.subr.bf16.mxu0 %v3879
    %4010 = vmatpush2.bf16.msra.mxu0 %v3878
    %4011 = vmatprep.subr.bf16.mxu0 %v3877
    %4012 = vmatpush2.bf16.msra.mxu0 %v3876
    %4013 = vmatprep.subr.bf16.mxu0 %v3875
    %4014 = vmatpush2.bf16.msra.mxu0 %v3874
    %4015 = vmatprep.subr.bf16.mxu0 %v3873
    %4016 = vmatpush2.bf16.msra.mxu0 %v3872
    %4017 = vmatprep.subr.bf16.mxu0 %v3871
    %4018 = vmatpush2.bf16.msra.mxu0 %v3870
    %4019 = vmatprep.subr.bf16.mxu0 %v3869
    %4020 = vmatpush2.bf16.msra.mxu0 %v3868
    %4021 = vmatprep.mubr.bf16.mxu0 %v3551
    %4022 = vmatmul.mubr.bf16.gmra.mxu0 %v3550
    %v4023 = vpop.f32.mrf.mxu0
    %v4024 = vadd.f32 %v3983, %v4023
    %v4025 = vpop.f32.mrf.mxu0
    %v4026 = vadd.f32 %v3985, %v4025
    %v4027 = vpop.f32.mrf.mxu0
    %v4028 = vpop.f32.mrf.mxu0
    %4029 = vdwg.mxu0
    %v4030 = vmax.f32 %v4024, 0.0
    %v4031 = vmax.f32 %v4026, 0.0
    %s4032 = scalar_lea.sflag [#allocation31], 24
    // Predicated region
    $region304: #{_generator_forward_impl.1} parent=1 // pred_check
      _
    $region305: #{_generator_forward_impl.1} parent=1 // pred_check_branch
      %4034 = sbr.rel target = $region307
    $region306: #{_generator_forward_impl.1} parent=1 // pred_region
      %4035 = sst [smem:[#allocation56]] [#allocation104]
      %4036 = sst [smem:[#allocation57]] [#allocation103]
    $region307: #{_generator_forward_impl.1} parent=1 // pred_fallthru
      _
    %4038 = shalt.err (0)
    %s4040 = sshll.u32 [#allocation26], 4
    %s4041 = int_to_ptr.vmem [resolvable:$true] %s4040
    %4043 = dma.hbm_to_vmem [thread:$0]  %s51, 2048, %s4041, %s4032
    %s4044 = sshll.u32 %s579, 4
    %4045 = dma.done %s1722, %s4044
    %v4046 = vpack.c.bf16 %v4030, %v4030
    %v4047 = vpack.c.bf16 %v4031, %v4031
    %v4048 = vld [vmem:[#allocation18] sm:$0xf]
    %v4049 = vld [vmem:[#allocation18 + $0x4] sm:$0xf]
    %v4050 = vld [vmem:[#allocation18 + $0x8] sm:$0xf]
    %v4051 = vld [vmem:[#allocation18 + $0xc] sm:$0xf]
    %v4052 = vld [vmem:[#allocation18 + $0x10] sm:$0xf]
    %v4053 = vld [vmem:[#allocation18 + $0x14] sm:$0xf]
    %v4054 = vld [vmem:[#allocation18 + $0x18] sm:$0xf]
    %v4055 = vld [vmem:[#allocation18 + $0x1c] sm:$0xf]
    %v4056 = vld [vmem:[#allocation18 + $0x20] sm:$0xf]
    %v4057 = vld [vmem:[#allocation18 + $0x24] sm:$0xf]
    %v4058 = vld [vmem:[#allocation18 + $0x28] sm:$0xf]
    %v4059 = vld [vmem:[#allocation18 + $0x2c] sm:$0xf]
    %v4060 = vld [vmem:[#allocation18 + $0x30] sm:$0xf]
    %v4061 = vld [vmem:[#allocation18 + $0x34] sm:$0xf]
    %v4062 = vld [vmem:[#allocation18 + $0x38] sm:$0xf]
    %v4063 = vld [vmem:[#allocation18 + $0x3c] sm:$0xf]
    %v4064 = vld [vmem:[#allocation18 + $0x40] sm:$0xf]
    %v4065 = vld [vmem:[#allocation18 + $0x44] sm:$0xf]
    %v4066 = vld [vmem:[#allocation18 + $0x48] sm:$0xf]
    %v4067 = vld [vmem:[#allocation18 + $0x4c] sm:$0xf]
    %v4068 = vld [vmem:[#allocation18 + $0x50] sm:$0xf]
    %v4069 = vld [vmem:[#allocation18 + $0x54] sm:$0xf]
    %v4070 = vld [vmem:[#allocation18 + $0x58] sm:$0xf]
    %v4071 = vld [vmem:[#allocation18 + $0x5c] sm:$0xf]
    %v4072 = vld [vmem:[#allocation18 + $0x60] sm:$0xf]
    %v4073 = vld [vmem:[#allocation18 + $0x64] sm:$0xf]
    %v4074 = vld [vmem:[#allocation18 + $0x68] sm:$0xf]
    %v4075 = vld [vmem:[#allocation18 + $0x6c] sm:$0xf]
    %v4076 = vld [vmem:[#allocation18 + $0x70] sm:$0xf]
    %v4077 = vld [vmem:[#allocation18 + $0x74] sm:$0xf]
    %v4078 = vld [vmem:[#allocation18 + $0x78] sm:$0xf]
    %v4079 = vld [vmem:[#allocation18 + $0x7c] sm:$0xf]
    %v4080 = vld [vmem:[#allocation46] sm:$0x1]
    %v4082 = vlaneseq
    %v4083 = vshrl.u32 %v4082, 7
    %v4084 = vsub.s32 0, %v4083
    %v4085 = vrot.slane %v4080, %v4084
    %v4119 = vunpack.c.l.b16 %v4048
    %v4120 = vunpack.c.l.b16 %v4049
    %v4121 = vunpack.c.l.b16 %v4050
    %v4122 = vunpack.c.l.b16 %v4051
    %v4123 = vunpack.c.l.b16 %v4052
    %v4124 = vunpack.c.l.b16 %v4053
    %v4125 = vunpack.c.l.b16 %v4054
    %v4126 = vunpack.c.l.b16 %v4055
    %v4127 = vunpack.c.l.b16 %v4056
    %v4128 = vunpack.c.l.b16 %v4057
    %v4129 = vunpack.c.l.b16 %v4058
    %v4130 = vunpack.c.l.b16 %v4059
    %v4131 = vunpack.c.l.b16 %v4060
    %v4132 = vunpack.c.l.b16 %v4061
    %v4133 = vunpack.c.l.b16 %v4062
    %v4134 = vunpack.c.l.b16 %v4063
    %v4135 = vunpack.c.l.b16 %v4064
    %v4136 = vunpack.c.l.b16 %v4065
    %v4137 = vunpack.c.l.b16 %v4066
    %v4138 = vunpack.c.l.b16 %v4067
    %v4139 = vunpack.c.l.b16 %v4068
    %v4140 = vunpack.c.l.b16 %v4069
    %v4141 = vunpack.c.l.b16 %v4070
    %v4142 = vunpack.c.l.b16 %v4071
    %v4143 = vunpack.c.l.b16 %v4072
    %v4144 = vunpack.c.l.b16 %v4073
    %v4145 = vunpack.c.l.b16 %v4074
    %v4146 = vunpack.c.l.b16 %v4075
    %v4147 = vunpack.c.l.b16 %v4076
    %v4148 = vunpack.c.l.b16 %v4077
    %v4149 = vunpack.c.l.b16 %v4078
    %v4150 = vunpack.c.l.b16 %v4079
    %v4151 = vpack.c.b16 %v4120, %v4119
    %v4152 = vpack.c.b16 %v4122, %v4121
    %v4153 = vpack.c.b16 %v4124, %v4123
    %v4154 = vpack.c.b16 %v4126, %v4125
    %v4155 = vpack.c.b16 %v4128, %v4127
    %v4156 = vpack.c.b16 %v4130, %v4129
    %v4157 = vpack.c.b16 %v4132, %v4131
    %v4158 = vpack.c.b16 %v4134, %v4133
    %v4159 = vpack.c.b16 %v4136, %v4135
    %v4160 = vpack.c.b16 %v4138, %v4137
    %v4161 = vpack.c.b16 %v4140, %v4139
    %v4162 = vpack.c.b16 %v4142, %v4141
    %v4163 = vpack.c.b16 %v4144, %v4143
    %v4164 = vpack.c.b16 %v4146, %v4145
    %v4165 = vpack.c.b16 %v4148, %v4147
    %v4166 = vpack.c.b16 %v4150, %v4149
    %4183 = vmatprep.subr.bf16.mxu0 0
    %4184 = vmatpush1.bf16.msra.mxu0 %v4158
    %4185 = vmatprep.subr.bf16.mxu0 0
    %4186 = vmatpush1.bf16.msra.mxu0 %v4157
    %4187 = vmatprep.subr.bf16.mxu0 0
    %4188 = vmatpush1.bf16.msra.mxu0 %v4156
    %4189 = vmatprep.subr.bf16.mxu0 0
    %4190 = vmatpush1.bf16.msra.mxu0 %v4155
    %4191 = vmatprep.subr.bf16.mxu0 0
    %4192 = vmatpush1.bf16.msra.mxu0 %v4154
    %4193 = vmatprep.subr.bf16.mxu0 0
    %4194 = vmatpush1.bf16.msra.mxu0 %v4153
    %4195 = vmatprep.subr.bf16.mxu0 0
    %4196 = vmatpush1.bf16.msra.mxu0 %v4152
    %4197 = vmatprep.subr.bf16.mxu0 0
    %4198 = vmatpush1.bf16.msra.mxu0 %v4151
    %4199 = vmatprep.subr.bf16.mxu0 0
    %4200 = vmatpush2.bf16.msra.mxu0 %v4166
    %4201 = vmatprep.subr.bf16.mxu0 0
    %4202 = vmatpush2.bf16.msra.mxu0 %v4165
    %4203 = vmatprep.subr.bf16.mxu0 0
    %4204 = vmatpush2.bf16.msra.mxu0 %v4164
    %4205 = vmatprep.subr.bf16.mxu0 0
    %4206 = vmatpush2.bf16.msra.mxu0 %v4163
    %4207 = vmatprep.subr.bf16.mxu0 0
    %4208 = vmatpush2.bf16.msra.mxu0 %v4162
    %4209 = vmatprep.subr.bf16.mxu0 0
    %4210 = vmatpush2.bf16.msra.mxu0 %v4161
    %4211 = vmatprep.subr.bf16.mxu0 0
    %4212 = vmatpush2.bf16.msra.mxu0 %v4160
    %4213 = vmatprep.subr.bf16.mxu0 0
    %4214 = vmatpush2.bf16.msra.mxu0 %v4159
    %4215 = vmatprep.mubr.bf16.mxu0 %v4047
    %4216 = vmatmul.mubr.bf16.gmra.mxu0 %v4046
    %v4217 = vpop.f32.mrf.mxu0
    %v4218 = vadd.f32 %v4085, %v4217
    %v4219 = vpop.f32.mrf.mxu0
    %v4220 = vpop.f32.mrf.mxu0
    %v4221 = vpop.f32.mrf.mxu0
    %4222 = vdwg.mxu0
    %v4223 = vtanh.pop %v4218
    %v4224 = vadd.f32 %v4223, 1.0
    %v4225 = vmul.f32 %v4224, 95.0
    %v4226 = vadd.f32 %v4225, 10.0
    %4227 = vst [vmem:[%s119] sm:$0xff] %v4226
    %s4228 = scalar_lea.sflag [#allocation31], 25
    // Predicated region
    $region308: #{_generator_forward_impl.1} parent=1 // pred_check
      _
    $region309: #{_generator_forward_impl.1} parent=1 // pred_check_branch
      %4230 = sbr.rel target = $region311
    $region310: #{_generator_forward_impl.1} parent=1 // pred_region
      %4231 = sst [smem:[#allocation56]] [#allocation106]
      %4232 = sst [smem:[#allocation57]] [#allocation105]
    $region311: #{_generator_forward_impl.1} parent=1 // pred_fallthru
      _
    %4234 = shalt.err (0)
    %s4236 = sshll.u32 [#allocation27], 4
    %s4237 = int_to_ptr.vmem [resolvable:$true] %s4236
    %4239 = dma.hbm_to_vmem [thread:$0]  %s53, 8192, %s4237, %s4228
    %s4240 = sshll.u32 %s847, 4
    %4241 = dma.done %s1916, %s4240
    %v4242 = vld [vmem:[#allocation19] sm:$0xff]
    %v4243 = vld [vmem:[#allocation19 + $0x8] sm:$0xff]
    %v4244 = vld [vmem:[#allocation19 + $0x10] sm:$0xff]
    %v4245 = vld [vmem:[#allocation19 + $0x18] sm:$0xff]
    %v4246 = vld [vmem:[#allocation19 + $0x20] sm:$0xff]
    %v4247 = vld [vmem:[#allocation19 + $0x28] sm:$0xff]
    %v4248 = vld [vmem:[#allocation19 + $0x30] sm:$0xff]
    %v4249 = vld [vmem:[#allocation19 + $0x38] sm:$0xff]
    %v4250 = vld [vmem:[#allocation19 + $0x40] sm:$0xff]
    %v4251 = vld [vmem:[#allocation19 + $0x48] sm:$0xff]
    %v4252 = vld [vmem:[#allocation19 + $0x50] sm:$0xff]
    %v4253 = vld [vmem:[#allocation19 + $0x58] sm:$0xff]
    %v4254 = vld [vmem:[#allocation19 + $0x60] sm:$0xff]
    %v4255 = vld [vmem:[#allocation19 + $0x68] sm:$0xff]
    %v4256 = vld [vmem:[#allocation19 + $0x70] sm:$0xff]
    %v4257 = vld [vmem:[#allocation19 + $0x78] sm:$0xff]
    %v4258 = vld [vmem:[%s95] sm:$0x3]
    %v4260 = vlaneseq
    %v4261 = vshrl.u32 %v4260, 7
    %v4262 = vsub.s32 0, %v4261
    %v4263 = vrot.slane %v4258, %v4262
    %v4264 = vlaneseq
    %v4265 = vshrl.u32 %v4264, 7
    %v4266 = vsub.s32 1, %v4265
    %v4267 = vrot.slane %v4258, %v4266
    %v4286 = vunpack.c.l.b16 %v4242
    %v4287 = vunpack.c.h.b16 %v4242
    %v4288 = vunpack.c.l.b16 %v4243
    %v4289 = vunpack.c.h.b16 %v4243
    %v4290 = vunpack.c.l.b16 %v4244
    %v4291 = vunpack.c.h.b16 %v4244
    %v4292 = vunpack.c.l.b16 %v4245
    %v4293 = vunpack.c.h.b16 %v4245
    %v4294 = vunpack.c.l.b16 %v4246
    %v4295 = vunpack.c.h.b16 %v4246
    %v4296 = vunpack.c.l.b16 %v4247
    %v4297 = vunpack.c.h.b16 %v4247
    %v4298 = vunpack.c.l.b16 %v4248
    %v4299 = vunpack.c.h.b16 %v4248
    %v4300 = vunpack.c.l.b16 %v4249
    %v4301 = vunpack.c.h.b16 %v4249
    %v4302 = vunpack.c.l.b16 %v4250
    %v4303 = vunpack.c.h.b16 %v4250
    %v4304 = vunpack.c.l.b16 %v4251
    %v4305 = vunpack.c.h.b16 %v4251
    %v4306 = vunpack.c.l.b16 %v4252
    %v4307 = vunpack.c.h.b16 %v4252
    %v4308 = vunpack.c.l.b16 %v4253
    %v4309 = vunpack.c.h.b16 %v4253
    %v4310 = vunpack.c.l.b16 %v4254
    %v4311 = vunpack.c.h.b16 %v4254
    %v4312 = vunpack.c.l.b16 %v4255
    %v4313 = vunpack.c.h.b16 %v4255
    %v4314 = vunpack.c.l.b16 %v4256
    %v4315 = vunpack.c.h.b16 %v4256
    %v4316 = vunpack.c.l.b16 %v4257
    %v4317 = vunpack.c.h.b16 %v4257
    %v4318 = vpack.c.b16 %v4288, %v4286
    %v4319 = vpack.c.b16 %v4289, %v4287
    %v4320 = vpack.c.b16 %v4292, %v4290
    %v4321 = vpack.c.b16 %v4293, %v4291
    %v4322 = vpack.c.b16 %v4296, %v4294
    %v4323 = vpack.c.b16 %v4297, %v4295
    %v4324 = vpack.c.b16 %v4300, %v4298
    %v4325 = vpack.c.b16 %v4301, %v4299
    %v4326 = vpack.c.b16 %v4304, %v4302
    %v4327 = vpack.c.b16 %v4305, %v4303
    %v4328 = vpack.c.b16 %v4308, %v4306
    %v4329 = vpack.c.b16 %v4309, %v4307
    %v4330 = vpack.c.b16 %v4312, %v4310
    %v4331 = vpack.c.b16 %v4313, %v4311
    %v4332 = vpack.c.b16 %v4316, %v4314
    %v4333 = vpack.c.b16 %v4317, %v4315
    %4350 = vmatprep.subr.bf16.mxu0 %v4333
    %4351 = vmatpush1.bf16.msra.mxu0 %v4332
    %4352 = vmatprep.subr.bf16.mxu0 %v4331
    %4353 = vmatpush1.bf16.msra.mxu0 %v4330
    %4354 = vmatprep.subr.bf16.mxu0 %v4329
    %4355 = vmatpush1.bf16.msra.mxu0 %v4328
    %4356 = vmatprep.subr.bf16.mxu0 %v4327
    %4357 = vmatpush1.bf16.msra.mxu0 %v4326
    %4358 = vmatprep.subr.bf16.mxu0 %v4325
    %4359 = vmatpush1.bf16.msra.mxu0 %v4324
    %4360 = vmatprep.subr.bf16.mxu0 %v4323
    %4361 = vmatpush1.bf16.msra.mxu0 %v4322
    %4362 = vmatprep.subr.bf16.mxu0 %v4321
    %4363 = vmatpush1.bf16.msra.mxu0 %v4320
    %4364 = vmatprep.subr.bf16.mxu0 %v4319
    %4365 = vmatpush1.bf16.msra.mxu0 %v4318
    %4366 = vmatprep.subr.bf16.mxu0 0
    %4367 = vmatpush2.bf16.msra.mxu0 0
    %4368 = vmatprep.subr.bf16.mxu0 0
    %4369 = vmatpush2.bf16.msra.mxu0 0
    %4370 = vmatprep.subr.bf16.mxu0 0
    %4371 = vmatpush2.bf16.msra.mxu0 0
    %4372 = vmatprep.subr.bf16.mxu0 0
    %4373 = vmatpush2.bf16.msra.mxu0 0
    %4374 = vmatprep.subr.bf16.mxu0 0
    %4375 = vmatpush2.bf16.msra.mxu0 0
    %4376 = vmatprep.subr.bf16.mxu0 0
    %4377 = vmatpush2.bf16.msra.mxu0 0
    %4378 = vmatprep.subr.bf16.mxu0 0
    %4379 = vmatpush2.bf16.msra.mxu0 0
    %4380 = vmatprep.subr.bf16.mxu0 0
    %4381 = vmatpush2.bf16.msra.mxu0 0
    %4382 = vmatprep.mubr.bf16.mxu0 0
    %4383 = vmatmul.mubr.bf16.gmra.mxu0 %v1930
    %v4384 = vpop.f32.mrf.mxu0
    %v4385 = vadd.f32 %v4263, %v4384
    %v4386 = vpop.f32.mrf.mxu0
    %v4387 = vadd.f32 %v4267, %v4386
    %v4388 = vpop.f32.mrf.mxu0
    %v4389 = vpop.f32.mrf.mxu0
    %4390 = vdwg.mxu0
    %v4391 = vmax.f32 %v4385, 0.0
    %v4392 = vmax.f32 %v4387, 0.0
    %s4393 = scalar_lea.sflag [#allocation31], 26
    // Predicated region
    $region312: #{_generator_forward_impl.1} parent=1 // pred_check
      _
    $region313: #{_generator_forward_impl.1} parent=1 // pred_check_branch
      %4395 = sbr.rel target = $region315
    $region314: #{_generator_forward_impl.1} parent=1 // pred_region
      %4396 = sst [smem:[#allocation56]] [#allocation108]
      %4397 = sst [smem:[#allocation57]] [#allocation107]
    $region315: #{_generator_forward_impl.1} parent=1 // pred_fallthru
      _
    %4399 = shalt.err (0)
    %s4401 = sshll.u32 [#allocation28], 4
    %s4402 = int_to_ptr.vmem [resolvable:$true] %s4401
    %4404 = dma.hbm_to_vmem [thread:$0]  %s55, 8192, %s4402, %s4393
    %s4405 = sshll.u32 %s3029, 4
    %4406 = dma.done %s2082, %s4405
    %v4407 = vpack.c.bf16 %v4391, %v4391
    %v4408 = vpack.c.bf16 %v4392, %v4392
    %v4409 = vld [vmem:[#allocation20] sm:$0xff]
    %v4410 = vld [vmem:[#allocation20 + $0x8] sm:$0xff]
    %v4411 = vld [vmem:[#allocation20 + $0x10] sm:$0xff]
    %v4412 = vld [vmem:[#allocation20 + $0x18] sm:$0xff]
    %v4413 = vld [vmem:[#allocation20 + $0x20] sm:$0xff]
    %v4414 = vld [vmem:[#allocation20 + $0x28] sm:$0xff]
    %v4415 = vld [vmem:[#allocation20 + $0x30] sm:$0xff]
    %v4416 = vld [vmem:[#allocation20 + $0x38] sm:$0xff]
    %v4417 = vld [vmem:[#allocation20 + $0x40] sm:$0xff]
    %v4418 = vld [vmem:[#allocation20 + $0x48] sm:$0xff]
    %v4419 = vld [vmem:[#allocation20 + $0x50] sm:$0xff]
    %v4420 = vld [vmem:[#allocation20 + $0x58] sm:$0xff]
    %v4421 = vld [vmem:[#allocation20 + $0x60] sm:$0xff]
    %v4422 = vld [vmem:[#allocation20 + $0x68] sm:$0xff]
    %v4423 = vld [vmem:[#allocation20 + $0x70] sm:$0xff]
    %v4424 = vld [vmem:[#allocation20 + $0x78] sm:$0xff]
    %v4425 = vld [vmem:[#allocation20 + $0x80] sm:$0xff]
    %v4426 = vld [vmem:[#allocation20 + $0x88] sm:$0xff]
    %v4427 = vld [vmem:[#allocation20 + $0x90] sm:$0xff]
    %v4428 = vld [vmem:[#allocation20 + $0x98] sm:$0xff]
    %v4429 = vld [vmem:[#allocation20 + $0xa0] sm:$0xff]
    %v4430 = vld [vmem:[#allocation20 + $0xa8] sm:$0xff]
    %v4431 = vld [vmem:[#allocation20 + $0xb0] sm:$0xff]
    %v4432 = vld [vmem:[#allocation20 + $0xb8] sm:$0xff]
    %v4433 = vld [vmem:[#allocation20 + $0xc0] sm:$0xff]
    %v4434 = vld [vmem:[#allocation20 + $0xc8] sm:$0xff]
    %v4435 = vld [vmem:[#allocation20 + $0xd0] sm:$0xff]
    %v4436 = vld [vmem:[#allocation20 + $0xd8] sm:$0xff]
    %v4437 = vld [vmem:[#allocation20 + $0xe0] sm:$0xff]
    %v4438 = vld [vmem:[#allocation20 + $0xe8] sm:$0xff]
    %v4439 = vld [vmem:[#allocation20 + $0xf0] sm:$0xff]
    %v4440 = vld [vmem:[#allocation20 + $0xf8] sm:$0xff]
    %v4441 = vld [vmem:[#allocation20 + $0x100] sm:$0xff]
    %v4442 = vld [vmem:[#allocation20 + $0x108] sm:$0xff]
    %v4443 = vld [vmem:[#allocation20 + $0x110] sm:$0xff]
    %v4444 = vld [vmem:[#allocation20 + $0x118] sm:$0xff]
    %v4445 = vld [vmem:[#allocation20 + $0x120] sm:$0xff]
    %v4446 = vld [vmem:[#allocation20 + $0x128] sm:$0xff]
    %v4447 = vld [vmem:[#allocation20 + $0x130] sm:$0xff]
    %v4448 = vld [vmem:[#allocation20 + $0x138] sm:$0xff]
    %v4449 = vld [vmem:[#allocation20 + $0x140] sm:$0xff]
    %v4450 = vld [vmem:[#allocation20 + $0x148] sm:$0xff]
    %v4451 = vld [vmem:[#allocation20 + $0x150] sm:$0xff]
    %v4452 = vld [vmem:[#allocation20 + $0x158] sm:$0xff]
    %v4453 = vld [vmem:[#allocation20 + $0x160] sm:$0xff]
    %v4454 = vld [vmem:[#allocation20 + $0x168] sm:$0xff]
    %v4455 = vld [vmem:[#allocation20 + $0x170] sm:$0xff]
    %v4456 = vld [vmem:[#allocation20 + $0x178] sm:$0xff]
    %v4457 = vld [vmem:[#allocation20 + $0x180] sm:$0xff]
    %v4458 = vld [vmem:[#allocation20 + $0x188] sm:$0xff]
    %v4459 = vld [vmem:[#allocation20 + $0x190] sm:$0xff]
    %v4460 = vld [vmem:[#allocation20 + $0x198] sm:$0xff]
    %v4461 = vld [vmem:[#allocation20 + $0x1a0] sm:$0xff]
    %v4462 = vld [vmem:[#allocation20 + $0x1a8] sm:$0xff]
    %v4463 = vld [vmem:[#allocation20 + $0x1b0] sm:$0xff]
    %v4464 = vld [vmem:[#allocation20 + $0x1b8] sm:$0xff]
    %v4465 = vld [vmem:[#allocation20 + $0x1c0] sm:$0xff]
    %v4466 = vld [vmem:[#allocation20 + $0x1c8] sm:$0xff]
    %v4467 = vld [vmem:[#allocation20 + $0x1d0] sm:$0xff]
    %v4468 = vld [vmem:[#allocation20 + $0x1d8] sm:$0xff]
    %v4469 = vld [vmem:[#allocation20 + $0x1e0] sm:$0xff]
    %v4470 = vld [vmem:[#allocation20 + $0x1e8] sm:$0xff]
    %v4471 = vld [vmem:[#allocation20 + $0x1f0] sm:$0xff]
    %v4472 = vld [vmem:[#allocation20 + $0x1f8] sm:$0xff]
    %v4473 = vld [vmem:[%s97] sm:$0xf]
    %v4475 = vlaneseq
    %v4476 = vshrl.u32 %v4475, 7
    %v4477 = vsub.s32 0, %v4476
    %v4478 = vrot.slane %v4473, %v4477
    %v4479 = vlaneseq
    %v4480 = vshrl.u32 %v4479, 7
    %v4481 = vsub.s32 1, %v4480
    %v4482 = vrot.slane %v4473, %v4481
    %v4483 = vlaneseq
    %v4484 = vshrl.u32 %v4483, 7
    %v4485 = vsub.s32 2, %v4484
    %v4486 = vrot.slane %v4473, %v4485
    %v4487 = vlaneseq
    %v4488 = vshrl.u32 %v4487, 7
    %v4489 = vsub.s32 3, %v4488
    %v4490 = vrot.slane %v4473, %v4489
    %v4559 = vunpack.c.l.b16 %v4409
    %v4560 = vunpack.c.h.b16 %v4409
    %v4561 = vunpack.c.l.b16 %v4410
    %v4562 = vunpack.c.h.b16 %v4410
    %v4563 = vunpack.c.l.b16 %v4411
    %v4564 = vunpack.c.h.b16 %v4411
    %v4565 = vunpack.c.l.b16 %v4412
    %v4566 = vunpack.c.h.b16 %v4412
    %v4567 = vunpack.c.l.b16 %v4413
    %v4568 = vunpack.c.h.b16 %v4413
    %v4569 = vunpack.c.l.b16 %v4414
    %v4570 = vunpack.c.h.b16 %v4414
    %v4571 = vunpack.c.l.b16 %v4415
    %v4572 = vunpack.c.h.b16 %v4415
    %v4573 = vunpack.c.l.b16 %v4416
    %v4574 = vunpack.c.h.b16 %v4416
    %v4575 = vunpack.c.l.b16 %v4417
    %v4576 = vunpack.c.h.b16 %v4417
    %v4577 = vunpack.c.l.b16 %v4418
    %v4578 = vunpack.c.h.b16 %v4418
    %v4579 = vunpack.c.l.b16 %v4419
    %v4580 = vunpack.c.h.b16 %v4419
    %v4581 = vunpack.c.l.b16 %v4420
    %v4582 = vunpack.c.h.b16 %v4420
    %v4583 = vunpack.c.l.b16 %v4421
    %v4584 = vunpack.c.h.b16 %v4421
    %v4585 = vunpack.c.l.b16 %v4422
    %v4586 = vunpack.c.h.b16 %v4422
    %v4587 = vunpack.c.l.b16 %v4423
    %v4588 = vunpack.c.h.b16 %v4423
    %v4589 = vunpack.c.l.b16 %v4424
    %v4590 = vunpack.c.h.b16 %v4424
    %v4591 = vunpack.c.l.b16 %v4425
    %v4592 = vunpack.c.h.b16 %v4425
    %v4593 = vunpack.c.l.b16 %v4426
    %v4594 = vunpack.c.h.b16 %v4426
    %v4595 = vunpack.c.l.b16 %v4427
    %v4596 = vunpack.c.h.b16 %v4427
    %v4597 = vunpack.c.l.b16 %v4428
    %v4598 = vunpack.c.h.b16 %v4428
    %v4599 = vunpack.c.l.b16 %v4429
    %v4600 = vunpack.c.h.b16 %v4429
    %v4601 = vunpack.c.l.b16 %v4430
    %v4602 = vunpack.c.h.b16 %v4430
    %v4603 = vunpack.c.l.b16 %v4431
    %v4604 = vunpack.c.h.b16 %v4431
    %v4605 = vunpack.c.l.b16 %v4432
    %v4606 = vunpack.c.h.b16 %v4432
    %v4607 = vunpack.c.l.b16 %v4433
    %v4608 = vunpack.c.h.b16 %v4433
    %v4609 = vunpack.c.l.b16 %v4434
    %v4610 = vunpack.c.h.b16 %v4434
    %v4611 = vunpack.c.l.b16 %v4435
    %v4612 = vunpack.c.h.b16 %v4435
    %v4613 = vunpack.c.l.b16 %v4436
    %v4614 = vunpack.c.h.b16 %v4436
    %v4615 = vunpack.c.l.b16 %v4437
    %v4616 = vunpack.c.h.b16 %v4437
    %v4617 = vunpack.c.l.b16 %v4438
    %v4618 = vunpack.c.h.b16 %v4438
    %v4619 = vunpack.c.l.b16 %v4439
    %v4620 = vunpack.c.h.b16 %v4439
    %v4621 = vunpack.c.l.b16 %v4440
    %v4622 = vunpack.c.h.b16 %v4440
    %v4623 = vunpack.c.l.b16 %v4441
    %v4624 = vunpack.c.h.b16 %v4441
    %v4625 = vunpack.c.l.b16 %v4442
    %v4626 = vunpack.c.h.b16 %v4442
    %v4627 = vunpack.c.l.b16 %v4443
    %v4628 = vunpack.c.h.b16 %v4443
    %v4629 = vunpack.c.l.b16 %v4444
    %v4630 = vunpack.c.h.b16 %v4444
    %v4631 = vunpack.c.l.b16 %v4445
    %v4632 = vunpack.c.h.b16 %v4445
    %v4633 = vunpack.c.l.b16 %v4446
    %v4634 = vunpack.c.h.b16 %v4446
    %v4635 = vunpack.c.l.b16 %v4447
    %v4636 = vunpack.c.h.b16 %v4447
    %v4637 = vunpack.c.l.b16 %v4448
    %v4638 = vunpack.c.h.b16 %v4448
    %v4639 = vunpack.c.l.b16 %v4449
    %v4640 = vunpack.c.h.b16 %v4449
    %v4641 = vunpack.c.l.b16 %v4450
    %v4642 = vunpack.c.h.b16 %v4450
    %v4643 = vunpack.c.l.b16 %v4451
    %v4644 = vunpack.c.h.b16 %v4451
    %v4645 = vunpack.c.l.b16 %v4452
    %v4646 = vunpack.c.h.b16 %v4452
    %v4647 = vunpack.c.l.b16 %v4453
    %v4648 = vunpack.c.h.b16 %v4453
    %v4649 = vunpack.c.l.b16 %v4454
    %v4650 = vunpack.c.h.b16 %v4454
    %v4651 = vunpack.c.l.b16 %v4455
    %v4652 = vunpack.c.h.b16 %v4455
    %v4653 = vunpack.c.l.b16 %v4456
    %v4654 = vunpack.c.h.b16 %v4456
    %v4655 = vunpack.c.l.b16 %v4457
    %v4656 = vunpack.c.h.b16 %v4457
    %v4657 = vunpack.c.l.b16 %v4458
    %v4658 = vunpack.c.h.b16 %v4458
    %v4659 = vunpack.c.l.b16 %v4459
    %v4660 = vunpack.c.h.b16 %v4459
    %v4661 = vunpack.c.l.b16 %v4460
    %v4662 = vunpack.c.h.b16 %v4460
    %v4663 = vunpack.c.l.b16 %v4461
    %v4664 = vunpack.c.h.b16 %v4461
    %v4665 = vunpack.c.l.b16 %v4462
    %v4666 = vunpack.c.h.b16 %v4462
    %v4667 = vunpack.c.l.b16 %v4463
    %v4668 = vunpack.c.h.b16 %v4463
    %v4669 = vunpack.c.l.b16 %v4464
    %v4670 = vunpack.c.h.b16 %v4464
    %v4671 = vunpack.c.l.b16 %v4465
    %v4672 = vunpack.c.h.b16 %v4465
    %v4673 = vunpack.c.l.b16 %v4466
    %v4674 = vunpack.c.h.b16 %v4466
    %v4675 = vunpack.c.l.b16 %v4467
    %v4676 = vunpack.c.h.b16 %v4467
    %v4677 = vunpack.c.l.b16 %v4468
    %v4678 = vunpack.c.h.b16 %v4468
    %v4679 = vunpack.c.l.b16 %v4469
    %v4680 = vunpack.c.h.b16 %v4469
    %v4681 = vunpack.c.l.b16 %v4470
    %v4682 = vunpack.c.h.b16 %v4470
    %v4683 = vunpack.c.l.b16 %v4471
    %v4684 = vunpack.c.h.b16 %v4471
    %v4685 = vunpack.c.l.b16 %v4472
    %v4686 = vunpack.c.h.b16 %v4472
    %v4687 = vpack.c.b16 %v4563, %v4559
    %v4688 = vpack.c.b16 %v4564, %v4560
    %v4689 = vpack.c.b16 %v4565, %v4561
    %v4690 = vpack.c.b16 %v4566, %v4562
    %v4691 = vpack.c.b16 %v4571, %v4567
    %v4692 = vpack.c.b16 %v4572, %v4568
    %v4693 = vpack.c.b16 %v4573, %v4569
    %v4694 = vpack.c.b16 %v4574, %v4570
    %v4695 = vpack.c.b16 %v4579, %v4575
    %v4696 = vpack.c.b16 %v4580, %v4576
    %v4697 = vpack.c.b16 %v4581, %v4577
    %v4698 = vpack.c.b16 %v4582, %v4578
    %v4699 = vpack.c.b16 %v4587, %v4583
    %v4700 = vpack.c.b16 %v4588, %v4584
    %v4701 = vpack.c.b16 %v4589, %v4585
    %v4702 = vpack.c.b16 %v4590, %v4586
    %v4703 = vpack.c.b16 %v4595, %v4591
    %v4704 = vpack.c.b16 %v4596, %v4592
    %v4705 = vpack.c.b16 %v4597, %v4593
    %v4706 = vpack.c.b16 %v4598, %v4594
    %v4707 = vpack.c.b16 %v4603, %v4599
    %v4708 = vpack.c.b16 %v4604, %v4600
    %v4709 = vpack.c.b16 %v4605, %v4601
    %v4710 = vpack.c.b16 %v4606, %v4602
    %v4711 = vpack.c.b16 %v4611, %v4607
    %v4712 = vpack.c.b16 %v4612, %v4608
    %v4713 = vpack.c.b16 %v4613, %v4609
    %v4714 = vpack.c.b16 %v4614, %v4610
    %v4715 = vpack.c.b16 %v4619, %v4615
    %v4716 = vpack.c.b16 %v4620, %v4616
    %v4717 = vpack.c.b16 %v4621, %v4617
    %v4718 = vpack.c.b16 %v4622, %v4618
    %v4719 = vpack.c.b16 %v4627, %v4623
    %v4720 = vpack.c.b16 %v4628, %v4624
    %v4721 = vpack.c.b16 %v4629, %v4625
    %v4722 = vpack.c.b16 %v4630, %v4626
    %v4723 = vpack.c.b16 %v4635, %v4631
    %v4724 = vpack.c.b16 %v4636, %v4632
    %v4725 = vpack.c.b16 %v4637, %v4633
    %v4726 = vpack.c.b16 %v4638, %v4634
    %v4727 = vpack.c.b16 %v4643, %v4639
    %v4728 = vpack.c.b16 %v4644, %v4640
    %v4729 = vpack.c.b16 %v4645, %v4641
    %v4730 = vpack.c.b16 %v4646, %v4642
    %v4731 = vpack.c.b16 %v4651, %v4647
    %v4732 = vpack.c.b16 %v4652, %v4648
    %v4733 = vpack.c.b16 %v4653, %v4649
    %v4734 = vpack.c.b16 %v4654, %v4650
    %v4735 = vpack.c.b16 %v4659, %v4655
    %v4736 = vpack.c.b16 %v4660, %v4656
    %v4737 = vpack.c.b16 %v4661, %v4657
    %v4738 = vpack.c.b16 %v4662, %v4658
    %v4739 = vpack.c.b16 %v4667, %v4663
    %v4740 = vpack.c.b16 %v4668, %v4664
    %v4741 = vpack.c.b16 %v4669, %v4665
    %v4742 = vpack.c.b16 %v4670, %v4666
    %v4743 = vpack.c.b16 %v4675, %v4671
    %v4744 = vpack.c.b16 %v4676, %v4672
    %v4745 = vpack.c.b16 %v4677, %v4673
    %v4746 = vpack.c.b16 %v4678, %v4674
    %v4747 = vpack.c.b16 %v4683, %v4679
    %v4748 = vpack.c.b16 %v4684, %v4680
    %v4749 = vpack.c.b16 %v4685, %v4681
    %v4750 = vpack.c.b16 %v4686, %v4682
    %4815 = vmatprep.subr.bf16.mxu0 %v4716
    %4816 = vmatpush1.bf16.msra.mxu0 %v4715
    %4817 = vmatprep.subr.bf16.mxu0 %v4712
    %4818 = vmatpush1.bf16.msra.mxu0 %v4711
    %4819 = vmatprep.subr.bf16.mxu0 %v4708
    %4820 = vmatpush1.bf16.msra.mxu0 %v4707
    %4821 = vmatprep.subr.bf16.mxu0 %v4704
    %4822 = vmatpush1.bf16.msra.mxu0 %v4703
    %4823 = vmatprep.subr.bf16.mxu0 %v4700
    %4824 = vmatpush1.bf16.msra.mxu0 %v4699
    %4825 = vmatprep.subr.bf16.mxu0 %v4696
    %4826 = vmatpush1.bf16.msra.mxu0 %v4695
    %4827 = vmatprep.subr.bf16.mxu0 %v4692
    %4828 = vmatpush1.bf16.msra.mxu0 %v4691
    %4829 = vmatprep.subr.bf16.mxu0 %v4688
    %4830 = vmatpush1.bf16.msra.mxu0 %v4687
    %4831 = vmatprep.subr.bf16.mxu0 %v4748
    %4832 = vmatpush2.bf16.msra.mxu0 %v4747
    %4833 = vmatprep.subr.bf16.mxu0 %v4744
    %4834 = vmatpush2.bf16.msra.mxu0 %v4743
    %4835 = vmatprep.subr.bf16.mxu0 %v4740
    %4836 = vmatpush2.bf16.msra.mxu0 %v4739
    %4837 = vmatprep.subr.bf16.mxu0 %v4736
    %4838 = vmatpush2.bf16.msra.mxu0 %v4735
    %4839 = vmatprep.subr.bf16.mxu0 %v4732
    %4840 = vmatpush2.bf16.msra.mxu0 %v4731
    %4841 = vmatprep.subr.bf16.mxu0 %v4728
    %4842 = vmatpush2.bf16.msra.mxu0 %v4727
    %4843 = vmatprep.subr.bf16.mxu0 %v4724
    %4844 = vmatpush2.bf16.msra.mxu0 %v4723
    %4845 = vmatprep.subr.bf16.mxu0 %v4720
    %4846 = vmatpush2.bf16.msra.mxu0 %v4719
    %4847 = vmatprep.mubr.bf16.mxu0 %v4408
    %4848 = vmatmul.mubr.bf16.gmra.mxu0 %v4407
    %v4849 = vpop.f32.mrf.mxu0
    %v4850 = vadd.f32 %v4478, %v4849
    %v4851 = vpop.f32.mrf.mxu0
    %v4852 = vadd.f32 %v4482, %v4851
    %v4853 = vpop.f32.mrf.mxu0
    %v4854 = vpop.f32.mrf.mxu0
    %4855 = vdwg.mxu0
    %4856 = vmatprep.subr.bf16.mxu0 %v4718
    %4857 = vmatpush1.bf16.msra.mxu0 %v4717
    %4858 = vmatprep.subr.bf16.mxu0 %v4714
    %4859 = vmatpush1.bf16.msra.mxu0 %v4713
    %4860 = vmatprep.subr.bf16.mxu0 %v4710
    %4861 = vmatpush1.bf16.msra.mxu0 %v4709
    %4862 = vmatprep.subr.bf16.mxu0 %v4706
    %4863 = vmatpush1.bf16.msra.mxu0 %v4705
    %4864 = vmatprep.subr.bf16.mxu0 %v4702
    %4865 = vmatpush1.bf16.msra.mxu0 %v4701
    %4866 = vmatprep.subr.bf16.mxu0 %v4698
    %4867 = vmatpush1.bf16.msra.mxu0 %v4697
    %4868 = vmatprep.subr.bf16.mxu0 %v4694
    %4869 = vmatpush1.bf16.msra.mxu0 %v4693
    %4870 = vmatprep.subr.bf16.mxu0 %v4690
    %4871 = vmatpush1.bf16.msra.mxu0 %v4689
    %4872 = vmatprep.subr.bf16.mxu0 %v4750
    %4873 = vmatpush2.bf16.msra.mxu0 %v4749
    %4874 = vmatprep.subr.bf16.mxu0 %v4746
    %4875 = vmatpush2.bf16.msra.mxu0 %v4745
    %4876 = vmatprep.subr.bf16.mxu0 %v4742
    %4877 = vmatpush2.bf16.msra.mxu0 %v4741
    %4878 = vmatprep.subr.bf16.mxu0 %v4738
    %4879 = vmatpush2.bf16.msra.mxu0 %v4737
    %4880 = vmatprep.subr.bf16.mxu0 %v4734
    %4881 = vmatpush2.bf16.msra.mxu0 %v4733
    %4882 = vmatprep.subr.bf16.mxu0 %v4730
    %4883 = vmatpush2.bf16.msra.mxu0 %v4729
    %4884 = vmatprep.subr.bf16.mxu0 %v4726
    %4885 = vmatpush2.bf16.msra.mxu0 %v4725
    %4886 = vmatprep.subr.bf16.mxu0 %v4722
    %4887 = vmatpush2.bf16.msra.mxu0 %v4721
    %4888 = vmatprep.mubr.bf16.mxu0 %v4408
    %4889 = vmatmul.mubr.bf16.gmra.mxu0 %v4407
    %v4890 = vpop.f32.mrf.mxu0
    %v4891 = vadd.f32 %v4486, %v4890
    %v4892 = vpop.f32.mrf.mxu0
    %v4893 = vadd.f32 %v4490, %v4892
    %v4894 = vpop.f32.mrf.mxu0
    %v4895 = vpop.f32.mrf.mxu0
    %4896 = vdwg.mxu0
    %s4897 = scalar_lea.sflag [#allocation31], 27
    // Predicated region
    $region316: #{_generator_forward_impl.1} parent=1 // pred_check
      _
    $region317: #{_generator_forward_impl.1} parent=1 // pred_check_branch
      %4899 = sbr.rel target = $region319
    $region318: #{_generator_forward_impl.1} parent=1 // pred_region
      %4900 = sst [smem:[#allocation56]] [#allocation110]
      %4901 = sst [smem:[#allocation57]] [#allocation109]
    $region319: #{_generator_forward_impl.1} parent=1 // pred_fallthru
      _
    %4903 = shalt.err (0)
    %s4905 = sshll.u32 [#allocation29], 4
    %s4906 = int_to_ptr.vmem [resolvable:$true] %s4905
    %4908 = dma.hbm_to_vmem [thread:$0]  %s57, 4096, %s4906, %s4897
    %s4909 = sshll.u32 %s2717, 4
    %4910 = dma.done %s2344, %s4909
    %v4911 = vld [vmem:[#allocation21] sm:$0xff]
    %v4912 = vld [vmem:[#allocation21 + $0x8] sm:$0xff]
    %v4913 = vld [vmem:[#allocation21 + $0x10] sm:$0xff]
    %v4914 = vld [vmem:[#allocation21 + $0x18] sm:$0xff]
    %v4915 = vld [vmem:[#allocation21 + $0x20] sm:$0xff]
    %v4916 = vld [vmem:[#allocation21 + $0x28] sm:$0xff]
    %v4917 = vld [vmem:[#allocation21 + $0x30] sm:$0xff]
    %v4918 = vld [vmem:[#allocation21 + $0x38] sm:$0xff]
    %v4919 = vld [vmem:[#allocation21 + $0x40] sm:$0xff]
    %v4920 = vld [vmem:[#allocation21 + $0x48] sm:$0xff]
    %v4921 = vld [vmem:[#allocation21 + $0x50] sm:$0xff]
    %v4922 = vld [vmem:[#allocation21 + $0x58] sm:$0xff]
    %v4923 = vld [vmem:[#allocation21 + $0x60] sm:$0xff]
    %v4924 = vld [vmem:[#allocation21 + $0x68] sm:$0xff]
    %v4925 = vld [vmem:[#allocation21 + $0x70] sm:$0xff]
    %v4926 = vld [vmem:[#allocation21 + $0x78] sm:$0xff]
    %v4927 = vld [vmem:[#allocation21 + $0x80] sm:$0xff]
    %v4928 = vld [vmem:[#allocation21 + $0x88] sm:$0xff]
    %v4929 = vld [vmem:[#allocation21 + $0x90] sm:$0xff]
    %v4930 = vld [vmem:[#allocation21 + $0x98] sm:$0xff]
    %v4931 = vld [vmem:[#allocation21 + $0xa0] sm:$0xff]
    %v4932 = vld [vmem:[#allocation21 + $0xa8] sm:$0xff]
    %v4933 = vld [vmem:[#allocation21 + $0xb0] sm:$0xff]
    %v4934 = vld [vmem:[#allocation21 + $0xb8] sm:$0xff]
    %v4935 = vld [vmem:[#allocation21 + $0xc0] sm:$0xff]
    %v4936 = vld [vmem:[#allocation21 + $0xc8] sm:$0xff]
    %v4937 = vld [vmem:[#allocation21 + $0xd0] sm:$0xff]
    %v4938 = vld [vmem:[#allocation21 + $0xd8] sm:$0xff]
    %v4939 = vld [vmem:[#allocation21 + $0xe0] sm:$0xff]
    %v4940 = vld [vmem:[#allocation21 + $0xe8] sm:$0xff]
    %v4941 = vld [vmem:[#allocation21 + $0xf0] sm:$0xff]
    %v4942 = vld [vmem:[#allocation21 + $0xf8] sm:$0xff]
    %v4943 = vld [vmem:[%s99] sm:$0xf]
    %v4945 = vlaneseq
    %v4946 = vshrl.u32 %v4945, 7
    %v4947 = vsub.s32 0, %v4946
    %v4948 = vrot.slane %v4943, %v4947
    %v4949 = vlaneseq
    %v4950 = vshrl.u32 %v4949, 7
    %v4951 = vsub.s32 1, %v4950
    %v4952 = vrot.slane %v4943, %v4951
    %v4953 = vlaneseq
    %v4954 = vshrl.u32 %v4953, 7
    %v4955 = vsub.s32 2, %v4954
    %v4956 = vrot.slane %v4943, %v4955
    %v4957 = vlaneseq
    %v4958 = vshrl.u32 %v4957, 7
    %v4959 = vsub.s32 3, %v4958
    %v4960 = vrot.slane %v4943, %v4959
    %v4997 = vunpack.c.l.b16 %v4911
    %v4998 = vunpack.c.h.b16 %v4911
    %v4999 = vunpack.c.l.b16 %v4912
    %v5000 = vunpack.c.h.b16 %v4912
    %v5001 = vunpack.c.l.b16 %v4913
    %v5002 = vunpack.c.h.b16 %v4913
    %v5003 = vunpack.c.l.b16 %v4914
    %v5004 = vunpack.c.h.b16 %v4914
    %v5005 = vunpack.c.l.b16 %v4915
    %v5006 = vunpack.c.h.b16 %v4915
    %v5007 = vunpack.c.l.b16 %v4916
    %v5008 = vunpack.c.h.b16 %v4916
    %v5009 = vunpack.c.l.b16 %v4917
    %v5010 = vunpack.c.h.b16 %v4917
    %v5011 = vunpack.c.l.b16 %v4918
    %v5012 = vunpack.c.h.b16 %v4918
    %v5013 = vunpack.c.l.b16 %v4919
    %v5014 = vunpack.c.h.b16 %v4919
    %v5015 = vunpack.c.l.b16 %v4920
    %v5016 = vunpack.c.h.b16 %v4920
    %v5017 = vunpack.c.l.b16 %v4921
    %v5018 = vunpack.c.h.b16 %v4921
    %v5019 = vunpack.c.l.b16 %v4922
    %v5020 = vunpack.c.h.b16 %v4922
    %v5021 = vunpack.c.l.b16 %v4923
    %v5022 = vunpack.c.h.b16 %v4923
    %v5023 = vunpack.c.l.b16 %v4924
    %v5024 = vunpack.c.h.b16 %v4924
    %v5025 = vunpack.c.l.b16 %v4925
    %v5026 = vunpack.c.h.b16 %v4925
    %v5027 = vunpack.c.l.b16 %v4926
    %v5028 = vunpack.c.h.b16 %v4926
    %v5029 = vunpack.c.l.b16 %v4927
    %v5030 = vunpack.c.h.b16 %v4927
    %v5031 = vunpack.c.l.b16 %v4928
    %v5032 = vunpack.c.h.b16 %v4928
    %v5033 = vunpack.c.l.b16 %v4929
    %v5034 = vunpack.c.h.b16 %v4929
    %v5035 = vunpack.c.l.b16 %v4930
    %v5036 = vunpack.c.h.b16 %v4930
    %v5037 = vunpack.c.l.b16 %v4931
    %v5038 = vunpack.c.h.b16 %v4931
    %v5039 = vunpack.c.l.b16 %v4932
    %v5040 = vunpack.c.h.b16 %v4932
    %v5041 = vunpack.c.l.b16 %v4933
    %v5042 = vunpack.c.h.b16 %v4933
    %v5043 = vunpack.c.l.b16 %v4934
    %v5044 = vunpack.c.h.b16 %v4934
    %v5045 = vunpack.c.l.b16 %v4935
    %v5046 = vunpack.c.h.b16 %v4935
    %v5047 = vunpack.c.l.b16 %v4936
    %v5048 = vunpack.c.h.b16 %v4936
    %v5049 = vunpack.c.l.b16 %v4937
    %v5050 = vunpack.c.h.b16 %v4937
    %v5051 = vunpack.c.l.b16 %v4938
    %v5052 = vunpack.c.h.b16 %v4938
    %v5053 = vunpack.c.l.b16 %v4939
    %v5054 = vunpack.c.h.b16 %v4939
    %v5055 = vunpack.c.l.b16 %v4940
    %v5056 = vunpack.c.h.b16 %v4940
    %v5057 = vunpack.c.l.b16 %v4941
    %v5058 = vunpack.c.h.b16 %v4941
    %v5059 = vunpack.c.l.b16 %v4942
    %v5060 = vunpack.c.h.b16 %v4942
    %v5061 = vpack.c.b16 %v5001, %v4997
    %v5062 = vpack.c.b16 %v5002, %v4998
    %v5063 = vpack.c.b16 %v5003, %v4999
    %v5064 = vpack.c.b16 %v5004, %v5000
    %v5065 = vpack.c.b16 %v5009, %v5005
    %v5066 = vpack.c.b16 %v5010, %v5006
    %v5067 = vpack.c.b16 %v5011, %v5007
    %v5068 = vpack.c.b16 %v5012, %v5008
    %v5069 = vpack.c.b16 %v5017, %v5013
    %v5070 = vpack.c.b16 %v5018, %v5014
    %v5071 = vpack.c.b16 %v5019, %v5015
    %v5072 = vpack.c.b16 %v5020, %v5016
    %v5073 = vpack.c.b16 %v5025, %v5021
    %v5074 = vpack.c.b16 %v5026, %v5022
    %v5075 = vpack.c.b16 %v5027, %v5023
    %v5076 = vpack.c.b16 %v5028, %v5024
    %v5077 = vpack.c.b16 %v5033, %v5029
    %v5078 = vpack.c.b16 %v5034, %v5030
    %v5079 = vpack.c.b16 %v5035, %v5031
    %v5080 = vpack.c.b16 %v5036, %v5032
    %v5081 = vpack.c.b16 %v5041, %v5037
    %v5082 = vpack.c.b16 %v5042, %v5038
    %v5083 = vpack.c.b16 %v5043, %v5039
    %v5084 = vpack.c.b16 %v5044, %v5040
    %v5085 = vpack.c.b16 %v5049, %v5045
    %v5086 = vpack.c.b16 %v5050, %v5046
    %v5087 = vpack.c.b16 %v5051, %v5047
    %v5088 = vpack.c.b16 %v5052, %v5048
    %v5089 = vpack.c.b16 %v5057, %v5053
    %v5090 = vpack.c.b16 %v5058, %v5054
    %v5091 = vpack.c.b16 %v5059, %v5055
    %v5092 = vpack.c.b16 %v5060, %v5056
    %5125 = vmatprep.subr.bf16.mxu0 %v5090
    %5126 = vmatpush1.bf16.msra.mxu0 %v5089
    %5127 = vmatprep.subr.bf16.mxu0 %v5086
    %5128 = vmatpush1.bf16.msra.mxu0 %v5085
    %5129 = vmatprep.subr.bf16.mxu0 %v5082
    %5130 = vmatpush1.bf16.msra.mxu0 %v5081
    %5131 = vmatprep.subr.bf16.mxu0 %v5078
    %5132 = vmatpush1.bf16.msra.mxu0 %v5077
    %5133 = vmatprep.subr.bf16.mxu0 %v5074
    %5134 = vmatpush1.bf16.msra.mxu0 %v5073
    %5135 = vmatprep.subr.bf16.mxu0 %v5070
    %5136 = vmatpush1.bf16.msra.mxu0 %v5069
    %5137 = vmatprep.subr.bf16.mxu0 %v5066
    %5138 = vmatpush1.bf16.msra.mxu0 %v5065
    %5139 = vmatprep.subr.bf16.mxu0 %v5062
    %5140 = vmatpush1.bf16.msra.mxu0 %v5061
    %5141 = vmatprep.subr.bf16.mxu0 0
    %5142 = vmatpush2.bf16.msra.mxu0 0
    %5143 = vmatprep.subr.bf16.mxu0 0
    %5144 = vmatpush2.bf16.msra.mxu0 0
    %5145 = vmatprep.subr.bf16.mxu0 0
    %5146 = vmatpush2.bf16.msra.mxu0 0
    %5147 = vmatprep.subr.bf16.mxu0 0
    %5148 = vmatpush2.bf16.msra.mxu0 0
    %5149 = vmatprep.subr.bf16.mxu0 0
    %5150 = vmatpush2.bf16.msra.mxu0 0
    %5151 = vmatprep.subr.bf16.mxu0 0
    %5152 = vmatpush2.bf16.msra.mxu0 0
    %5153 = vmatprep.subr.bf16.mxu0 0
    %5154 = vmatpush2.bf16.msra.mxu0 0
    %5155 = vmatprep.subr.bf16.mxu0 0
    %5156 = vmatpush2.bf16.msra.mxu0 0
    %5157 = vmatprep.mubr.bf16.mxu0 0
    %5158 = vmatmul.mubr.bf16.gmra.mxu0 %v1930
    %v5159 = vpop.f32.mrf.mxu0
    %v5160 = vadd.f32 %v4948, %v5159
    %v5161 = vpop.f32.mrf.mxu0
    %v5162 = vadd.f32 %v4952, %v5161
    %v5163 = vpop.f32.mrf.mxu0
    %v5164 = vpop.f32.mrf.mxu0
    %5165 = vdwg.mxu0
    %5166 = vmatprep.subr.bf16.mxu0 %v5092
    %5167 = vmatpush1.bf16.msra.mxu0 %v5091
    %5168 = vmatprep.subr.bf16.mxu0 %v5088
    %5169 = vmatpush1.bf16.msra.mxu0 %v5087
    %5170 = vmatprep.subr.bf16.mxu0 %v5084
    %5171 = vmatpush1.bf16.msra.mxu0 %v5083
    %5172 = vmatprep.subr.bf16.mxu0 %v5080
    %5173 = vmatpush1.bf16.msra.mxu0 %v5079
    %5174 = vmatprep.subr.bf16.mxu0 %v5076
    %5175 = vmatpush1.bf16.msra.mxu0 %v5075
    %5176 = vmatprep.subr.bf16.mxu0 %v5072
    %5177 = vmatpush1.bf16.msra.mxu0 %v5071
    %5178 = vmatprep.subr.bf16.mxu0 %v5068
    %5179 = vmatpush1.bf16.msra.mxu0 %v5067
    %5180 = vmatprep.subr.bf16.mxu0 %v5064
    %5181 = vmatpush1.bf16.msra.mxu0 %v5063
    %5182 = vmatprep.subr.bf16.mxu0 0
    %5183 = vmatpush2.bf16.msra.mxu0 0
    %5184 = vmatprep.subr.bf16.mxu0 0
    %5185 = vmatpush2.bf16.msra.mxu0 0
    %5186 = vmatprep.subr.bf16.mxu0 0
    %5187 = vmatpush2.bf16.msra.mxu0 0
    %5188 = vmatprep.subr.bf16.mxu0 0
    %5189 = vmatpush2.bf16.msra.mxu0 0
    %5190 = vmatprep.subr.bf16.mxu0 0
    %5191 = vmatpush2.bf16.msra.mxu0 0
    %5192 = vmatprep.subr.bf16.mxu0 0
    %5193 = vmatpush2.bf16.msra.mxu0 0
    %5194 = vmatprep.subr.bf16.mxu0 0
    %5195 = vmatpush2.bf16.msra.mxu0 0
    %5196 = vmatprep.subr.bf16.mxu0 0
    %5197 = vmatpush2.bf16.msra.mxu0 0
    %5198 = vmatprep.mubr.bf16.mxu0 0
    %5199 = vmatmul.mubr.bf16.gmra.mxu0 %v1930
    %v5200 = vpop.f32.mrf.mxu0
    %v5201 = vadd.f32 %v4956, %v5200
    %v5202 = vpop.f32.mrf.mxu0
    %v5203 = vadd.f32 %v4960, %v5202
    %v5204 = vpop.f32.mrf.mxu0
    %v5205 = vpop.f32.mrf.mxu0
    %5206 = vdwg.mxu0
    %v5207 = vadd.f32 %v4850, %v5160
    %v5208 = vadd.f32 %v4852, %v5162
    %v5209 = vadd.f32 %v4891, %v5201
    %v5210 = vadd.f32 %v4893, %v5203
    %v5211 = vmax.f32 %v5207, 0.0
    %v5212 = vmax.f32 %v5208, 0.0
    %v5213 = vmax.f32 %v5209, 0.0
    %v5214 = vmax.f32 %v5210, 0.0
    %v5215 = vmax.f32 %v5211, 0.0
    %v5216 = vmax.f32 %v5212, 0.0
    %v5217 = vmax.f32 %v5213, 0.0
    %v5218 = vmax.f32 %v5214, 0.0
    %s5219 = scalar_lea.sflag [#allocation31], 28
    %p5221 = scmp.lt.u32.totalorder 64, 8
    %p5222 = pneg %p5221
    // Predicated region
    $region320: #{_generator_forward_impl.1} parent=1 // pred_check
      _
    $region321: #{_generator_forward_impl.1} parent=1 // pred_check_branch
      %5224 = sbr.rel (%p5221) target = $region323
    $region322: #{_generator_forward_impl.1} parent=1 // pred_region
      %s5240 = sand.u32 64, 7
      %p5241 = scmp.eq.s32.totalorder %s5240, 0
      // Predicated region
      $region335: #{_generator_forward_impl.1} parent=322 // pred_check
        %p5242 = pneg %p5241
      $region336: #{_generator_forward_impl.1} parent=322 // pred_check_branch
        %5244 = sbr.rel (%p5242) target = $region338
      $region337: #{_generator_forward_impl.1} parent=322 // pred_region
        loop: start=0, step=1, limit=1
        $region339: #{_generator_forward_impl.1} parent=337 // loop_pre_header
          _
        $region340: #{_generator_forward_impl.1} parent=337 // loop_header
          %s5246 = sphi 0, %s5250
          %p5247 = scmp.ge.s32.totalorder %s5246, 1
          %s5251 = sphi %s59, %s59
          %s5252 = sphi [#allocation30], [#allocation30]
        $region341: #{_generator_forward_impl.1} parent=337 // loop_header_branch
          %5249 = sbr.rel (%p5247) target = $region345
        $region342: #{_generator_forward_impl.1} parent=337 // loop_body
          %v5253 = vld [vmem:[%s5251] sm:$0xff]
          %5254 = vst [vmem:[%s5252] sm:$0xff] %v5253
          %v5255 = vld [vmem:[%s5251 + $0x8] sm:$0xff]
          %5256 = vst [vmem:[%s5252 + $0x8] sm:$0xff] %v5255
          %v5257 = vld [vmem:[%s5251 + $0x10] sm:$0xff]
          %5258 = vst [vmem:[%s5252 + $0x10] sm:$0xff] %v5257
          %v5259 = vld [vmem:[%s5251 + $0x18] sm:$0xff]
          %5260 = vst [vmem:[%s5252 + $0x18] sm:$0xff] %v5259
          %v5261 = vld [vmem:[%s5251 + $0x20] sm:$0xff]
          %5262 = vst [vmem:[%s5252 + $0x20] sm:$0xff] %v5261
          %v5263 = vld [vmem:[%s5251 + $0x28] sm:$0xff]
          %5264 = vst [vmem:[%s5252 + $0x28] sm:$0xff] %v5263
          %v5265 = vld [vmem:[%s5251 + $0x30] sm:$0xff]
          %5266 = vst [vmem:[%s5252 + $0x30] sm:$0xff] %v5265
          %v5267 = vld [vmem:[%s5251 + $0x38] sm:$0xff]
          %5268 = vst [vmem:[%s5252 + $0x38] sm:$0xff] %v5267
        $region343: #{_generator_forward_impl.1} parent=337 // loop_footer
          %s5250 = sadd.s32 1, %s5246
        $region344: #{_generator_forward_impl.1} parent=337 // loop_footer_branch
          %5245 = sbr.rel target = $region340
        $region345: #{_generator_forward_impl.1} parent=337 // loop_exit
          _
      $region338: #{_generator_forward_impl.1} parent=322 // pred_fallthru
        _
      %p5269 = pneg %p5241
      // Predicated region
      $region346: #{_generator_forward_impl.1} parent=322 // pred_check
        _
      $region347: #{_generator_forward_impl.1} parent=322 // pred_check_branch
        %5271 = sbr.rel (%p5241) target = $region349
      $region348: #{_generator_forward_impl.1} parent=322 // pred_region
        %s5272 = sand.u32 64, 7
      $region349: #{_generator_forward_impl.1} parent=322 // pred_fallthru
        _
    $region323: #{_generator_forward_impl.1} parent=1 // pred_fallthru
      _
    // Predicated region
    $region324: #{_generator_forward_impl.1} parent=1 // pred_check
      %p5225 = pneg %p5221
    $region325: #{_generator_forward_impl.1} parent=1 // pred_check_branch
      %5227 = sbr.rel (%p5225) target = $region327
    $region326: #{_generator_forward_impl.1} parent=1 // pred_region
      %s5228 = sshll.u32 1, 64
      %s5229 = ssub.s32 %s5228, 1
      loop: start=0, step=1, limit=1
      $region328: #{_generator_forward_impl.1} parent=326 // loop_pre_header
        _
      $region329: #{_generator_forward_impl.1} parent=326 // loop_header
        %s5231 = sphi 0, %s5235
        %p5232 = scmp.ge.s32.totalorder %s5231, 1
        %s5236 = sphi %s59, %s59
        %s5237 = sphi [#allocation30], [#allocation30]
      $region330: #{_generator_forward_impl.1} parent=326 // loop_header_branch
        %5234 = sbr.rel (%p5232) target = $region334
      $region331: #{_generator_forward_impl.1} parent=326 // loop_body
        %v5238 = vld [vmem:[%s5236] sm:%s5229]
        %5239 = vst [vmem:[%s5237] sm:%s5229] %v5238
      $region332: #{_generator_forward_impl.1} parent=326 // loop_footer
        %s5235 = sadd.s32 1, %s5231
      $region333: #{_generator_forward_impl.1} parent=326 // loop_footer_branch
        %5230 = sbr.rel target = $region329
      $region334: #{_generator_forward_impl.1} parent=326 // loop_exit
        _
    $region327: #{_generator_forward_impl.1} parent=1 // pred_fallthru
      _
    // Predicated region
    $region350: #{_generator_forward_impl.1} parent=1 // pred_check
      _
    $region351: #{_generator_forward_impl.1} parent=1 // pred_check_branch
      %5275 = sbr.rel (0) target = $region353
    $region352: #{_generator_forward_impl.1} parent=1 // pred_region
      %5276 = vsyncadd %s5219, 1024
    $region353: #{_generator_forward_impl.1} parent=1 // pred_fallthru
      _
    %s5277 = sshll.u32 %s3545, 4
    %5278 = dma.done %s2513, %s5277
    %v5279 = vpack.c.bf16 %v5215, %v5215
    %v5280 = vpack.c.bf16 %v5216, %v5216
    %v5281 = vpack.c.bf16 %v5217, %v5217
    %v5282 = vpack.c.bf16 %v5218, %v5218
    %v5283 = vld [vmem:[#allocation22] sm:$0xff]
    %v5284 = vld [vmem:[#allocation22 + $0x8] sm:$0xff]
    %v5285 = vld [vmem:[#allocation22 + $0x10] sm:$0xff]
    %v5286 = vld [vmem:[#allocation22 + $0x18] sm:$0xff]
    %v5287 = vld [vmem:[#allocation22 + $0x20] sm:$0xff]
    %v5288 = vld [vmem:[#allocation22 + $0x28] sm:$0xff]
    %v5289 = vld [vmem:[#allocation22 + $0x30] sm:$0xff]
    %v5290 = vld [vmem:[#allocation22 + $0x38] sm:$0xff]
    %v5291 = vld [vmem:[#allocation22 + $0x40] sm:$0xff]
    %v5292 = vld [vmem:[#allocation22 + $0x48] sm:$0xff]
    %v5293 = vld [vmem:[#allocation22 + $0x50] sm:$0xff]
    %v5294 = vld [vmem:[#allocation22 + $0x58] sm:$0xff]
    %v5295 = vld [vmem:[#allocation22 + $0x60] sm:$0xff]
    %v5296 = vld [vmem:[#allocation22 + $0x68] sm:$0xff]
    %v5297 = vld [vmem:[#allocation22 + $0x70] sm:$0xff]
    %v5298 = vld [vmem:[#allocation22 + $0x78] sm:$0xff]
    %v5299 = vld [vmem:[#allocation22 + $0x80] sm:$0xff]
    %v5300 = vld [vmem:[#allocation22 + $0x88] sm:$0xff]
    %v5301 = vld [vmem:[#allocation22 + $0x90] sm:$0xff]
    %v5302 = vld [vmem:[#allocation22 + $0x98] sm:$0xff]
    %v5303 = vld [vmem:[#allocation22 + $0xa0] sm:$0xff]
    %v5304 = vld [vmem:[#allocation22 + $0xa8] sm:$0xff]
    %v5305 = vld [vmem:[#allocation22 + $0xb0] sm:$0xff]
    %v5306 = vld [vmem:[#allocation22 + $0xb8] sm:$0xff]
    %v5307 = vld [vmem:[#allocation22 + $0xc0] sm:$0xff]
    %v5308 = vld [vmem:[#allocation22 + $0xc8] sm:$0xff]
    %v5309 = vld [vmem:[#allocation22 + $0xd0] sm:$0xff]
    %v5310 = vld [vmem:[#allocation22 + $0xd8] sm:$0xff]
    %v5311 = vld [vmem:[#allocation22 + $0xe0] sm:$0xff]
    %v5312 = vld [vmem:[#allocation22 + $0xe8] sm:$0xff]
    %v5313 = vld [vmem:[#allocation22 + $0xf0] sm:$0xff]
    %v5314 = vld [vmem:[#allocation22 + $0xf8] sm:$0xff]
    %v5315 = vld [vmem:[#allocation22 + $0x100] sm:$0xff]
    %v5316 = vld [vmem:[#allocation22 + $0x108] sm:$0xff]
    %v5317 = vld [vmem:[#allocation22 + $0x110] sm:$0xff]
    %v5318 = vld [vmem:[#allocation22 + $0x118] sm:$0xff]
    %v5319 = vld [vmem:[#allocation22 + $0x120] sm:$0xff]
    %v5320 = vld [vmem:[#allocation22 + $0x128] sm:$0xff]
    %v5321 = vld [vmem:[#allocation22 + $0x130] sm:$0xff]
    %v5322 = vld [vmem:[#allocation22 + $0x138] sm:$0xff]
    %v5323 = vld [vmem:[#allocation22 + $0x140] sm:$0xff]
    %v5324 = vld [vmem:[#allocation22 + $0x148] sm:$0xff]
    %v5325 = vld [vmem:[#allocation22 + $0x150] sm:$0xff]
    %v5326 = vld [vmem:[#allocation22 + $0x158] sm:$0xff]
    %v5327 = vld [vmem:[#allocation22 + $0x160] sm:$0xff]
    %v5328 = vld [vmem:[#allocation22 + $0x168] sm:$0xff]
    %v5329 = vld [vmem:[#allocation22 + $0x170] sm:$0xff]
    %v5330 = vld [vmem:[#allocation22 + $0x178] sm:$0xff]
    %v5331 = vld [vmem:[#allocation22 + $0x180] sm:$0xff]
    %v5332 = vld [vmem:[#allocation22 + $0x188] sm:$0xff]
    %v5333 = vld [vmem:[#allocation22 + $0x190] sm:$0xff]
    %v5334 = vld [vmem:[#allocation22 + $0x198] sm:$0xff]
    %v5335 = vld [vmem:[#allocation22 + $0x1a0] sm:$0xff]
    %v5336 = vld [vmem:[#allocation22 + $0x1a8] sm:$0xff]
    %v5337 = vld [vmem:[#allocation22 + $0x1b0] sm:$0xff]
    %v5338 = vld [vmem:[#allocation22 + $0x1b8] sm:$0xff]
    %v5339 = vld [vmem:[#allocation22 + $0x1c0] sm:$0xff]
    %v5340 = vld [vmem:[#allocation22 + $0x1c8] sm:$0xff]
    %v5341 = vld [vmem:[#allocation22 + $0x1d0] sm:$0xff]
    %v5342 = vld [vmem:[#allocation22 + $0x1d8] sm:$0xff]
    %v5343 = vld [vmem:[#allocation22 + $0x1e0] sm:$0xff]
    %v5344 = vld [vmem:[#allocation22 + $0x1e8] sm:$0xff]
    %v5345 = vld [vmem:[#allocation22 + $0x1f0] sm:$0xff]
    %v5346 = vld [vmem:[#allocation22 + $0x1f8] sm:$0xff]
    %v5347 = vld [vmem:[%s101] sm:$0x3]
    %v5349 = vlaneseq
    %v5350 = vshrl.u32 %v5349, 7
    %v5351 = vsub.s32 0, %v5350
    %v5352 = vrot.slane %v5347, %v5351
    %v5353 = vlaneseq
    %v5354 = vshrl.u32 %v5353, 7
    %v5355 = vsub.s32 1, %v5354
    %v5356 = vrot.slane %v5347, %v5355
    %v5423 = vunpack.c.l.b16 %v5283
    %v5424 = vunpack.c.h.b16 %v5283
    %v5425 = vunpack.c.l.b16 %v5284
    %v5426 = vunpack.c.h.b16 %v5284
    %v5427 = vunpack.c.l.b16 %v5285
    %v5428 = vunpack.c.h.b16 %v5285
    %v5429 = vunpack.c.l.b16 %v5286
    %v5430 = vunpack.c.h.b16 %v5286
    %v5431 = vunpack.c.l.b16 %v5287
    %v5432 = vunpack.c.h.b16 %v5287
    %v5433 = vunpack.c.l.b16 %v5288
    %v5434 = vunpack.c.h.b16 %v5288
    %v5435 = vunpack.c.l.b16 %v5289
    %v5436 = vunpack.c.h.b16 %v5289
    %v5437 = vunpack.c.l.b16 %v5290
    %v5438 = vunpack.c.h.b16 %v5290
    %v5439 = vunpack.c.l.b16 %v5291
    %v5440 = vunpack.c.h.b16 %v5291
    %v5441 = vunpack.c.l.b16 %v5292
    %v5442 = vunpack.c.h.b16 %v5292
    %v5443 = vunpack.c.l.b16 %v5293
    %v5444 = vunpack.c.h.b16 %v5293
    %v5445 = vunpack.c.l.b16 %v5294
    %v5446 = vunpack.c.h.b16 %v5294
    %v5447 = vunpack.c.l.b16 %v5295
    %v5448 = vunpack.c.h.b16 %v5295
    %v5449 = vunpack.c.l.b16 %v5296
    %v5450 = vunpack.c.h.b16 %v5296
    %v5451 = vunpack.c.l.b16 %v5297
    %v5452 = vunpack.c.h.b16 %v5297
    %v5453 = vunpack.c.l.b16 %v5298
    %v5454 = vunpack.c.h.b16 %v5298
    %v5455 = vunpack.c.l.b16 %v5299
    %v5456 = vunpack.c.h.b16 %v5299
    %v5457 = vunpack.c.l.b16 %v5300
    %v5458 = vunpack.c.h.b16 %v5300
    %v5459 = vunpack.c.l.b16 %v5301
    %v5460 = vunpack.c.h.b16 %v5301
    %v5461 = vunpack.c.l.b16 %v5302
    %v5462 = vunpack.c.h.b16 %v5302
    %v5463 = vunpack.c.l.b16 %v5303
    %v5464 = vunpack.c.h.b16 %v5303
    %v5465 = vunpack.c.l.b16 %v5304
    %v5466 = vunpack.c.h.b16 %v5304
    %v5467 = vunpack.c.l.b16 %v5305
    %v5468 = vunpack.c.h.b16 %v5305
    %v5469 = vunpack.c.l.b16 %v5306
    %v5470 = vunpack.c.h.b16 %v5306
    %v5471 = vunpack.c.l.b16 %v5307
    %v5472 = vunpack.c.h.b16 %v5307
    %v5473 = vunpack.c.l.b16 %v5308
    %v5474 = vunpack.c.h.b16 %v5308
    %v5475 = vunpack.c.l.b16 %v5309
    %v5476 = vunpack.c.h.b16 %v5309
    %v5477 = vunpack.c.l.b16 %v5310
    %v5478 = vunpack.c.h.b16 %v5310
    %v5479 = vunpack.c.l.b16 %v5311
    %v5480 = vunpack.c.h.b16 %v5311
    %v5481 = vunpack.c.l.b16 %v5312
    %v5482 = vunpack.c.h.b16 %v5312
    %v5483 = vunpack.c.l.b16 %v5313
    %v5484 = vunpack.c.h.b16 %v5313
    %v5485 = vunpack.c.l.b16 %v5314
    %v5486 = vunpack.c.h.b16 %v5314
    %v5487 = vunpack.c.l.b16 %v5315
    %v5488 = vunpack.c.h.b16 %v5315
    %v5489 = vunpack.c.l.b16 %v5316
    %v5490 = vunpack.c.h.b16 %v5316
    %v5491 = vunpack.c.l.b16 %v5317
    %v5492 = vunpack.c.h.b16 %v5317
    %v5493 = vunpack.c.l.b16 %v5318
    %v5494 = vunpack.c.h.b16 %v5318
    %v5495 = vunpack.c.l.b16 %v5319
    %v5496 = vunpack.c.h.b16 %v5319
    %v5497 = vunpack.c.l.b16 %v5320
    %v5498 = vunpack.c.h.b16 %v5320
    %v5499 = vunpack.c.l.b16 %v5321
    %v5500 = vunpack.c.h.b16 %v5321
    %v5501 = vunpack.c.l.b16 %v5322
    %v5502 = vunpack.c.h.b16 %v5322
    %v5503 = vunpack.c.l.b16 %v5323
    %v5504 = vunpack.c.h.b16 %v5323
    %v5505 = vunpack.c.l.b16 %v5324
    %v5506 = vunpack.c.h.b16 %v5324
    %v5507 = vunpack.c.l.b16 %v5325
    %v5508 = vunpack.c.h.b16 %v5325
    %v5509 = vunpack.c.l.b16 %v5326
    %v5510 = vunpack.c.h.b16 %v5326
    %v5511 = vunpack.c.l.b16 %v5327
    %v5512 = vunpack.c.h.b16 %v5327
    %v5513 = vunpack.c.l.b16 %v5328
    %v5514 = vunpack.c.h.b16 %v5328
    %v5515 = vunpack.c.l.b16 %v5329
    %v5516 = vunpack.c.h.b16 %v5329
    %v5517 = vunpack.c.l.b16 %v5330
    %v5518 = vunpack.c.h.b16 %v5330
    %v5519 = vunpack.c.l.b16 %v5331
    %v5520 = vunpack.c.h.b16 %v5331
    %v5521 = vunpack.c.l.b16 %v5332
    %v5522 = vunpack.c.h.b16 %v5332
    %v5523 = vunpack.c.l.b16 %v5333
    %v5524 = vunpack.c.h.b16 %v5333
    %v5525 = vunpack.c.l.b16 %v5334
    %v5526 = vunpack.c.h.b16 %v5334
    %v5527 = vunpack.c.l.b16 %v5335
    %v5528 = vunpack.c.h.b16 %v5335
    %v5529 = vunpack.c.l.b16 %v5336
    %v5530 = vunpack.c.h.b16 %v5336
    %v5531 = vunpack.c.l.b16 %v5337
    %v5532 = vunpack.c.h.b16 %v5337
    %v5533 = vunpack.c.l.b16 %v5338
    %v5534 = vunpack.c.h.b16 %v5338
    %v5535 = vunpack.c.l.b16 %v5339
    %v5536 = vunpack.c.h.b16 %v5339
    %v5537 = vunpack.c.l.b16 %v5340
    %v5538 = vunpack.c.h.b16 %v5340
    %v5539 = vunpack.c.l.b16 %v5341
    %v5540 = vunpack.c.h.b16 %v5341
    %v5541 = vunpack.c.l.b16 %v5342
    %v5542 = vunpack.c.h.b16 %v5342
    %v5543 = vunpack.c.l.b16 %v5343
    %v5544 = vunpack.c.h.b16 %v5343
    %v5545 = vunpack.c.l.b16 %v5344
    %v5546 = vunpack.c.h.b16 %v5344
    %v5547 = vunpack.c.l.b16 %v5345
    %v5548 = vunpack.c.h.b16 %v5345
    %v5549 = vunpack.c.l.b16 %v5346
    %v5550 = vunpack.c.h.b16 %v5346
    %v5551 = vpack.c.b16 %v5425, %v5423
    %v5552 = vpack.c.b16 %v5426, %v5424
    %v5553 = vpack.c.b16 %v5429, %v5427
    %v5554 = vpack.c.b16 %v5430, %v5428
    %v5555 = vpack.c.b16 %v5433, %v5431
    %v5556 = vpack.c.b16 %v5434, %v5432
    %v5557 = vpack.c.b16 %v5437, %v5435
    %v5558 = vpack.c.b16 %v5438, %v5436
    %v5559 = vpack.c.b16 %v5441, %v5439
    %v5560 = vpack.c.b16 %v5442, %v5440
    %v5561 = vpack.c.b16 %v5445, %v5443
    %v5562 = vpack.c.b16 %v5446, %v5444
    %v5563 = vpack.c.b16 %v5449, %v5447
    %v5564 = vpack.c.b16 %v5450, %v5448
    %v5565 = vpack.c.b16 %v5453, %v5451
    %v5566 = vpack.c.b16 %v5454, %v5452
    %v5567 = vpack.c.b16 %v5457, %v5455
    %v5568 = vpack.c.b16 %v5458, %v5456
    %v5569 = vpack.c.b16 %v5461, %v5459
    %v5570 = vpack.c.b16 %v5462, %v5460
    %v5571 = vpack.c.b16 %v5465, %v5463
    %v5572 = vpack.c.b16 %v5466, %v5464
    %v5573 = vpack.c.b16 %v5469, %v5467
    %v5574 = vpack.c.b16 %v5470, %v5468
    %v5575 = vpack.c.b16 %v5473, %v5471
    %v5576 = vpack.c.b16 %v5474, %v5472
    %v5577 = vpack.c.b16 %v5477, %v5475
    %v5578 = vpack.c.b16 %v5478, %v5476
    %v5579 = vpack.c.b16 %v5481, %v5479
    %v5580 = vpack.c.b16 %v5482, %v5480
    %v5581 = vpack.c.b16 %v5485, %v5483
    %v5582 = vpack.c.b16 %v5486, %v5484
    %v5583 = vpack.c.b16 %v5489, %v5487
    %v5584 = vpack.c.b16 %v5490, %v5488
    %v5585 = vpack.c.b16 %v5493, %v5491
    %v5586 = vpack.c.b16 %v5494, %v5492
    %v5587 = vpack.c.b16 %v5497, %v5495
    %v5588 = vpack.c.b16 %v5498, %v5496
    %v5589 = vpack.c.b16 %v5501, %v5499
    %v5590 = vpack.c.b16 %v5502, %v5500
    %v5591 = vpack.c.b16 %v5505, %v5503
    %v5592 = vpack.c.b16 %v5506, %v5504
    %v5593 = vpack.c.b16 %v5509, %v5507
    %v5594 = vpack.c.b16 %v5510, %v5508
    %v5595 = vpack.c.b16 %v5513, %v5511
    %v5596 = vpack.c.b16 %v5514, %v5512
    %v5597 = vpack.c.b16 %v5517, %v5515
    %v5598 = vpack.c.b16 %v5518, %v5516
    %v5599 = vpack.c.b16 %v5521, %v5519
    %v5600 = vpack.c.b16 %v5522, %v5520
    %v5601 = vpack.c.b16 %v5525, %v5523
    %v5602 = vpack.c.b16 %v5526, %v5524
    %v5603 = vpack.c.b16 %v5529, %v5527
    %v5604 = vpack.c.b16 %v5530, %v5528
    %v5605 = vpack.c.b16 %v5533, %v5531
    %v5606 = vpack.c.b16 %v5534, %v5532
    %v5607 = vpack.c.b16 %v5537, %v5535
    %v5608 = vpack.c.b16 %v5538, %v5536
    %v5609 = vpack.c.b16 %v5541, %v5539
    %v5610 = vpack.c.b16 %v5542, %v5540
    %v5611 = vpack.c.b16 %v5545, %v5543
    %v5612 = vpack.c.b16 %v5546, %v5544
    %v5613 = vpack.c.b16 %v5549, %v5547
    %v5614 = vpack.c.b16 %v5550, %v5548
    %5679 = vmatprep.subr.bf16.mxu0 %v5566
    %5680 = vmatpush1.bf16.msra.mxu0 %v5565
    %5681 = vmatprep.subr.bf16.mxu0 %v5564
    %5682 = vmatpush1.bf16.msra.mxu0 %v5563
    %5683 = vmatprep.subr.bf16.mxu0 %v5562
    %5684 = vmatpush1.bf16.msra.mxu0 %v5561
    %5685 = vmatprep.subr.bf16.mxu0 %v5560
    %5686 = vmatpush1.bf16.msra.mxu0 %v5559
    %5687 = vmatprep.subr.bf16.mxu0 %v5558
    %5688 = vmatpush1.bf16.msra.mxu0 %v5557
    %5689 = vmatprep.subr.bf16.mxu0 %v5556
    %5690 = vmatpush1.bf16.msra.mxu0 %v5555
    %5691 = vmatprep.subr.bf16.mxu0 %v5554
    %5692 = vmatpush1.bf16.msra.mxu0 %v5553
    %5693 = vmatprep.subr.bf16.mxu0 %v5552
    %5694 = vmatpush1.bf16.msra.mxu0 %v5551
    %5695 = vmatprep.subr.bf16.mxu0 %v5582
    %5696 = vmatpush2.bf16.msra.mxu0 %v5581
    %5697 = vmatprep.subr.bf16.mxu0 %v5580
    %5698 = vmatpush2.bf16.msra.mxu0 %v5579
    %5699 = vmatprep.subr.bf16.mxu0 %v5578
    %5700 = vmatpush2.bf16.msra.mxu0 %v5577
    %5701 = vmatprep.subr.bf16.mxu0 %v5576
    %5702 = vmatpush2.bf16.msra.mxu0 %v5575
    %5703 = vmatprep.subr.bf16.mxu0 %v5574
    %5704 = vmatpush2.bf16.msra.mxu0 %v5573
    %5705 = vmatprep.subr.bf16.mxu0 %v5572
    %5706 = vmatpush2.bf16.msra.mxu0 %v5571
    %5707 = vmatprep.subr.bf16.mxu0 %v5570
    %5708 = vmatpush2.bf16.msra.mxu0 %v5569
    %5709 = vmatprep.subr.bf16.mxu0 %v5568
    %5710 = vmatpush2.bf16.msra.mxu0 %v5567
    %5711 = vmatprep.mubr.bf16.mxu0 %v5280
    %5712 = vmatmul.mubr.bf16.gmra.mxu0 %v5279
    %v5713 = vpop.f32.mrf.mxu0
    %v5714 = vadd.f32 %v5352, %v5713
    %v5715 = vpop.f32.mrf.mxu0
    %v5716 = vadd.f32 %v5356, %v5715
    %v5717 = vpop.f32.mrf.mxu0
    %v5718 = vpop.f32.mrf.mxu0
    %5719 = vdwg.mxu0
    %5720 = vmatprep.subr.bf16.mxu0 %v5598
    %5721 = vmatpush1.bf16.msra.mxu0 %v5597
    %5722 = vmatprep.subr.bf16.mxu0 %v5596
    %5723 = vmatpush1.bf16.msra.mxu0 %v5595
    %5724 = vmatprep.subr.bf16.mxu0 %v5594
    %5725 = vmatpush1.bf16.msra.mxu0 %v5593
    %5726 = vmatprep.subr.bf16.mxu0 %v5592
    %5727 = vmatpush1.bf16.msra.mxu0 %v5591
    %5728 = vmatprep.subr.bf16.mxu0 %v5590
    %5729 = vmatpush1.bf16.msra.mxu0 %v5589
    %5730 = vmatprep.subr.bf16.mxu0 %v5588
    %5731 = vmatpush1.bf16.msra.mxu0 %v5587
    %5732 = vmatprep.subr.bf16.mxu0 %v5586
    %5733 = vmatpush1.bf16.msra.mxu0 %v5585
    %5734 = vmatprep.subr.bf16.mxu0 %v5584
    %5735 = vmatpush1.bf16.msra.mxu0 %v5583
    %5736 = vmatprep.subr.bf16.mxu0 %v5614
    %5737 = vmatpush2.bf16.msra.mxu0 %v5613
    %5738 = vmatprep.subr.bf16.mxu0 %v5612
    %5739 = vmatpush2.bf16.msra.mxu0 %v5611
    %5740 = vmatprep.subr.bf16.mxu0 %v5610
    %5741 = vmatpush2.bf16.msra.mxu0 %v5609
    %5742 = vmatprep.subr.bf16.mxu0 %v5608
    %5743 = vmatpush2.bf16.msra.mxu0 %v5607
    %5744 = vmatprep.subr.bf16.mxu0 %v5606
    %5745 = vmatpush2.bf16.msra.mxu0 %v5605
    %5746 = vmatprep.subr.bf16.mxu0 %v5604
    %5747 = vmatpush2.bf16.msra.mxu0 %v5603
    %5748 = vmatprep.subr.bf16.mxu0 %v5602
    %5749 = vmatpush2.bf16.msra.mxu0 %v5601
    %5750 = vmatprep.subr.bf16.mxu0 %v5600
    %5751 = vmatpush2.bf16.msra.mxu0 %v5599
    %5752 = vmatprep.mubr.bf16.mxu0 %v5282
    %5753 = vmatmul.mubr.bf16.gmra.mxu0 %v5281
    %v5754 = vpop.f32.mrf.mxu0
    %v5755 = vadd.f32 %v5714, %v5754
    %v5756 = vpop.f32.mrf.mxu0
    %v5757 = vadd.f32 %v5716, %v5756
    %v5758 = vpop.f32.mrf.mxu0
    %v5759 = vpop.f32.mrf.mxu0
    %5760 = vdwg.mxu0
    %v5761 = vmax.f32 %v5755, 0.0
    %v5762 = vmax.f32 %v5757, 0.0
    %s5763 = sshll.u32 %s3029, 4
    %5764 = dma.done %s2705, %s5763
    %v5765 = vpack.c.bf16 %v5761, %v5761
    %v5766 = vpack.c.bf16 %v5762, %v5762
    %v5767 = vld [vmem:[#allocation23] sm:$0xff]
    %v5768 = vld [vmem:[#allocation23 + $0x8] sm:$0xff]
    %v5769 = vld [vmem:[#allocation23 + $0x10] sm:$0xff]
    %v5770 = vld [vmem:[#allocation23 + $0x18] sm:$0xff]
    %v5771 = vld [vmem:[#allocation23 + $0x20] sm:$0xff]
    %v5772 = vld [vmem:[#allocation23 + $0x28] sm:$0xff]
    %v5773 = vld [vmem:[#allocation23 + $0x30] sm:$0xff]
    %v5774 = vld [vmem:[#allocation23 + $0x38] sm:$0xff]
    %v5775 = vld [vmem:[#allocation23 + $0x40] sm:$0xff]
    %v5776 = vld [vmem:[#allocation23 + $0x48] sm:$0xff]
    %v5777 = vld [vmem:[#allocation23 + $0x50] sm:$0xff]
    %v5778 = vld [vmem:[#allocation23 + $0x58] sm:$0xff]
    %v5779 = vld [vmem:[#allocation23 + $0x60] sm:$0xff]
    %v5780 = vld [vmem:[#allocation23 + $0x68] sm:$0xff]
    %v5781 = vld [vmem:[#allocation23 + $0x70] sm:$0xff]
    %v5782 = vld [vmem:[#allocation23 + $0x78] sm:$0xff]
    %v5783 = vld [vmem:[#allocation23 + $0x80] sm:$0xff]
    %v5784 = vld [vmem:[#allocation23 + $0x88] sm:$0xff]
    %v5785 = vld [vmem:[#allocation23 + $0x90] sm:$0xff]
    %v5786 = vld [vmem:[#allocation23 + $0x98] sm:$0xff]
    %v5787 = vld [vmem:[#allocation23 + $0xa0] sm:$0xff]
    %v5788 = vld [vmem:[#allocation23 + $0xa8] sm:$0xff]
    %v5789 = vld [vmem:[#allocation23 + $0xb0] sm:$0xff]
    %v5790 = vld [vmem:[#allocation23 + $0xb8] sm:$0xff]
    %v5791 = vld [vmem:[#allocation23 + $0xc0] sm:$0xff]
    %v5792 = vld [vmem:[#allocation23 + $0xc8] sm:$0xff]
    %v5793 = vld [vmem:[#allocation23 + $0xd0] sm:$0xff]
    %v5794 = vld [vmem:[#allocation23 + $0xd8] sm:$0xff]
    %v5795 = vld [vmem:[#allocation23 + $0xe0] sm:$0xff]
    %v5796 = vld [vmem:[#allocation23 + $0xe8] sm:$0xff]
    %v5797 = vld [vmem:[#allocation23 + $0xf0] sm:$0xff]
    %v5798 = vld [vmem:[#allocation23 + $0xf8] sm:$0xff]
    %v5799 = vld [vmem:[#allocation23 + $0x100] sm:$0xff]
    %v5800 = vld [vmem:[#allocation23 + $0x108] sm:$0xff]
    %v5801 = vld [vmem:[#allocation23 + $0x110] sm:$0xff]
    %v5802 = vld [vmem:[#allocation23 + $0x118] sm:$0xff]
    %v5803 = vld [vmem:[#allocation23 + $0x120] sm:$0xff]
    %v5804 = vld [vmem:[#allocation23 + $0x128] sm:$0xff]
    %v5805 = vld [vmem:[#allocation23 + $0x130] sm:$0xff]
    %v5806 = vld [vmem:[#allocation23 + $0x138] sm:$0xff]
    %v5807 = vld [vmem:[#allocation23 + $0x140] sm:$0xff]
    %v5808 = vld [vmem:[#allocation23 + $0x148] sm:$0xff]
    %v5809 = vld [vmem:[#allocation23 + $0x150] sm:$0xff]
    %v5810 = vld [vmem:[#allocation23 + $0x158] sm:$0xff]
    %v5811 = vld [vmem:[#allocation23 + $0x160] sm:$0xff]
    %v5812 = vld [vmem:[#allocation23 + $0x168] sm:$0xff]
    %v5813 = vld [vmem:[#allocation23 + $0x170] sm:$0xff]
    %v5814 = vld [vmem:[#allocation23 + $0x178] sm:$0xff]
    %v5815 = vld [vmem:[#allocation23 + $0x180] sm:$0xff]
    %v5816 = vld [vmem:[#allocation23 + $0x188] sm:$0xff]
    %v5817 = vld [vmem:[#allocation23 + $0x190] sm:$0xff]
    %v5818 = vld [vmem:[#allocation23 + $0x198] sm:$0xff]
    %v5819 = vld [vmem:[#allocation23 + $0x1a0] sm:$0xff]
    %v5820 = vld [vmem:[#allocation23 + $0x1a8] sm:$0xff]
    %v5821 = vld [vmem:[#allocation23 + $0x1b0] sm:$0xff]
    %v5822 = vld [vmem:[#allocation23 + $0x1b8] sm:$0xff]
    %v5823 = vld [vmem:[#allocation23 + $0x1c0] sm:$0xff]
    %v5824 = vld [vmem:[#allocation23 + $0x1c8] sm:$0xff]
    %v5825 = vld [vmem:[#allocation23 + $0x1d0] sm:$0xff]
    %v5826 = vld [vmem:[#allocation23 + $0x1d8] sm:$0xff]
    %v5827 = vld [vmem:[#allocation23 + $0x1e0] sm:$0xff]
    %v5828 = vld [vmem:[#allocation23 + $0x1e8] sm:$0xff]
    %v5829 = vld [vmem:[#allocation23 + $0x1f0] sm:$0xff]
    %v5830 = vld [vmem:[#allocation23 + $0x1f8] sm:$0xff]
    %v5831 = vld [vmem:[%s103] sm:$0xf]
    %v5833 = vlaneseq
    %v5834 = vshrl.u32 %v5833, 7
    %v5835 = vsub.s32 0, %v5834
    %v5836 = vrot.slane %v5831, %v5835
    %v5837 = vlaneseq
    %v5838 = vshrl.u32 %v5837, 7
    %v5839 = vsub.s32 1, %v5838
    %v5840 = vrot.slane %v5831, %v5839
    %v5841 = vlaneseq
    %v5842 = vshrl.u32 %v5841, 7
    %v5843 = vsub.s32 2, %v5842
    %v5844 = vrot.slane %v5831, %v5843
    %v5845 = vlaneseq
    %v5846 = vshrl.u32 %v5845, 7
    %v5847 = vsub.s32 3, %v5846
    %v5848 = vrot.slane %v5831, %v5847
    %v5917 = vunpack.c.l.b16 %v5767
    %v5918 = vunpack.c.h.b16 %v5767
    %v5919 = vunpack.c.l.b16 %v5768
    %v5920 = vunpack.c.h.b16 %v5768
    %v5921 = vunpack.c.l.b16 %v5769
    %v5922 = vunpack.c.h.b16 %v5769
    %v5923 = vunpack.c.l.b16 %v5770
    %v5924 = vunpack.c.h.b16 %v5770
    %v5925 = vunpack.c.l.b16 %v5771
    %v5926 = vunpack.c.h.b16 %v5771
    %v5927 = vunpack.c.l.b16 %v5772
    %v5928 = vunpack.c.h.b16 %v5772
    %v5929 = vunpack.c.l.b16 %v5773
    %v5930 = vunpack.c.h.b16 %v5773
    %v5931 = vunpack.c.l.b16 %v5774
    %v5932 = vunpack.c.h.b16 %v5774
    %v5933 = vunpack.c.l.b16 %v5775
    %v5934 = vunpack.c.h.b16 %v5775
    %v5935 = vunpack.c.l.b16 %v5776
    %v5936 = vunpack.c.h.b16 %v5776
    %v5937 = vunpack.c.l.b16 %v5777
    %v5938 = vunpack.c.h.b16 %v5777
    %v5939 = vunpack.c.l.b16 %v5778
    %v5940 = vunpack.c.h.b16 %v5778
    %v5941 = vunpack.c.l.b16 %v5779
    %v5942 = vunpack.c.h.b16 %v5779
    %v5943 = vunpack.c.l.b16 %v5780
    %v5944 = vunpack.c.h.b16 %v5780
    %v5945 = vunpack.c.l.b16 %v5781
    %v5946 = vunpack.c.h.b16 %v5781
    %v5947 = vunpack.c.l.b16 %v5782
    %v5948 = vunpack.c.h.b16 %v5782
    %v5949 = vunpack.c.l.b16 %v5783
    %v5950 = vunpack.c.h.b16 %v5783
    %v5951 = vunpack.c.l.b16 %v5784
    %v5952 = vunpack.c.h.b16 %v5784
    %v5953 = vunpack.c.l.b16 %v5785
    %v5954 = vunpack.c.h.b16 %v5785
    %v5955 = vunpack.c.l.b16 %v5786
    %v5956 = vunpack.c.h.b16 %v5786
    %v5957 = vunpack.c.l.b16 %v5787
    %v5958 = vunpack.c.h.b16 %v5787
    %v5959 = vunpack.c.l.b16 %v5788
    %v5960 = vunpack.c.h.b16 %v5788
    %v5961 = vunpack.c.l.b16 %v5789
    %v5962 = vunpack.c.h.b16 %v5789
    %v5963 = vunpack.c.l.b16 %v5790
    %v5964 = vunpack.c.h.b16 %v5790
    %v5965 = vunpack.c.l.b16 %v5791
    %v5966 = vunpack.c.h.b16 %v5791
    %v5967 = vunpack.c.l.b16 %v5792
    %v5968 = vunpack.c.h.b16 %v5792
    %v5969 = vunpack.c.l.b16 %v5793
    %v5970 = vunpack.c.h.b16 %v5793
    %v5971 = vunpack.c.l.b16 %v5794
    %v5972 = vunpack.c.h.b16 %v5794
    %v5973 = vunpack.c.l.b16 %v5795
    %v5974 = vunpack.c.h.b16 %v5795
    %v5975 = vunpack.c.l.b16 %v5796
    %v5976 = vunpack.c.h.b16 %v5796
    %v5977 = vunpack.c.l.b16 %v5797
    %v5978 = vunpack.c.h.b16 %v5797
    %v5979 = vunpack.c.l.b16 %v5798
    %v5980 = vunpack.c.h.b16 %v5798
    %v5981 = vunpack.c.l.b16 %v5799
    %v5982 = vunpack.c.h.b16 %v5799
    %v5983 = vunpack.c.l.b16 %v5800
    %v5984 = vunpack.c.h.b16 %v5800
    %v5985 = vunpack.c.l.b16 %v5801
    %v5986 = vunpack.c.h.b16 %v5801
    %v5987 = vunpack.c.l.b16 %v5802
    %v5988 = vunpack.c.h.b16 %v5802
    %v5989 = vunpack.c.l.b16 %v5803
    %v5990 = vunpack.c.h.b16 %v5803
    %v5991 = vunpack.c.l.b16 %v5804
    %v5992 = vunpack.c.h.b16 %v5804
    %v5993 = vunpack.c.l.b16 %v5805
    %v5994 = vunpack.c.h.b16 %v5805
    %v5995 = vunpack.c.l.b16 %v5806
    %v5996 = vunpack.c.h.b16 %v5806
    %v5997 = vunpack.c.l.b16 %v5807
    %v5998 = vunpack.c.h.b16 %v5807
    %v5999 = vunpack.c.l.b16 %v5808
    %v6000 = vunpack.c.h.b16 %v5808
    %v6001 = vunpack.c.l.b16 %v5809
    %v6002 = vunpack.c.h.b16 %v5809
    %v6003 = vunpack.c.l.b16 %v5810
    %v6004 = vunpack.c.h.b16 %v5810
    %v6005 = vunpack.c.l.b16 %v5811
    %v6006 = vunpack.c.h.b16 %v5811
    %v6007 = vunpack.c.l.b16 %v5812
    %v6008 = vunpack.c.h.b16 %v5812
    %v6009 = vunpack.c.l.b16 %v5813
    %v6010 = vunpack.c.h.b16 %v5813
    %v6011 = vunpack.c.l.b16 %v5814
    %v6012 = vunpack.c.h.b16 %v5814
    %v6013 = vunpack.c.l.b16 %v5815
    %v6014 = vunpack.c.h.b16 %v5815
    %v6015 = vunpack.c.l.b16 %v5816
    %v6016 = vunpack.c.h.b16 %v5816
    %v6017 = vunpack.c.l.b16 %v5817
    %v6018 = vunpack.c.h.b16 %v5817
    %v6019 = vunpack.c.l.b16 %v5818
    %v6020 = vunpack.c.h.b16 %v5818
    %v6021 = vunpack.c.l.b16 %v5819
    %v6022 = vunpack.c.h.b16 %v5819
    %v6023 = vunpack.c.l.b16 %v5820
    %v6024 = vunpack.c.h.b16 %v5820
    %v6025 = vunpack.c.l.b16 %v5821
    %v6026 = vunpack.c.h.b16 %v5821
    %v6027 = vunpack.c.l.b16 %v5822
    %v6028 = vunpack.c.h.b16 %v5822
    %v6029 = vunpack.c.l.b16 %v5823
    %v6030 = vunpack.c.h.b16 %v5823
    %v6031 = vunpack.c.l.b16 %v5824
    %v6032 = vunpack.c.h.b16 %v5824
    %v6033 = vunpack.c.l.b16 %v5825
    %v6034 = vunpack.c.h.b16 %v5825
    %v6035 = vunpack.c.l.b16 %v5826
    %v6036 = vunpack.c.h.b16 %v5826
    %v6037 = vunpack.c.l.b16 %v5827
    %v6038 = vunpack.c.h.b16 %v5827
    %v6039 = vunpack.c.l.b16 %v5828
    %v6040 = vunpack.c.h.b16 %v5828
    %v6041 = vunpack.c.l.b16 %v5829
    %v6042 = vunpack.c.h.b16 %v5829
    %v6043 = vunpack.c.l.b16 %v5830
    %v6044 = vunpack.c.h.b16 %v5830
    %v6045 = vpack.c.b16 %v5921, %v5917
    %v6046 = vpack.c.b16 %v5922, %v5918
    %v6047 = vpack.c.b16 %v5923, %v5919
    %v6048 = vpack.c.b16 %v5924, %v5920
    %v6049 = vpack.c.b16 %v5929, %v5925
    %v6050 = vpack.c.b16 %v5930, %v5926
    %v6051 = vpack.c.b16 %v5931, %v5927
    %v6052 = vpack.c.b16 %v5932, %v5928
    %v6053 = vpack.c.b16 %v5937, %v5933
    %v6054 = vpack.c.b16 %v5938, %v5934
    %v6055 = vpack.c.b16 %v5939, %v5935
    %v6056 = vpack.c.b16 %v5940, %v5936
    %v6057 = vpack.c.b16 %v5945, %v5941
    %v6058 = vpack.c.b16 %v5946, %v5942
    %v6059 = vpack.c.b16 %v5947, %v5943
    %v6060 = vpack.c.b16 %v5948, %v5944
    %v6061 = vpack.c.b16 %v5953, %v5949
    %v6062 = vpack.c.b16 %v5954, %v5950
    %v6063 = vpack.c.b16 %v5955, %v5951
    %v6064 = vpack.c.b16 %v5956, %v5952
    %v6065 = vpack.c.b16 %v5961, %v5957
    %v6066 = vpack.c.b16 %v5962, %v5958
    %v6067 = vpack.c.b16 %v5963, %v5959
    %v6068 = vpack.c.b16 %v5964, %v5960
    %v6069 = vpack.c.b16 %v5969, %v5965
    %v6070 = vpack.c.b16 %v5970, %v5966
    %v6071 = vpack.c.b16 %v5971, %v5967
    %v6072 = vpack.c.b16 %v5972, %v5968
    %v6073 = vpack.c.b16 %v5977, %v5973
    %v6074 = vpack.c.b16 %v5978, %v5974
    %v6075 = vpack.c.b16 %v5979, %v5975
    %v6076 = vpack.c.b16 %v5980, %v5976
    %v6077 = vpack.c.b16 %v5985, %v5981
    %v6078 = vpack.c.b16 %v5986, %v5982
    %v6079 = vpack.c.b16 %v5987, %v5983
    %v6080 = vpack.c.b16 %v5988, %v5984
    %v6081 = vpack.c.b16 %v5993, %v5989
    %v6082 = vpack.c.b16 %v5994, %v5990
    %v6083 = vpack.c.b16 %v5995, %v5991
    %v6084 = vpack.c.b16 %v5996, %v5992
    %v6085 = vpack.c.b16 %v6001, %v5997
    %v6086 = vpack.c.b16 %v6002, %v5998
    %v6087 = vpack.c.b16 %v6003, %v5999
    %v6088 = vpack.c.b16 %v6004, %v6000
    %v6089 = vpack.c.b16 %v6009, %v6005
    %v6090 = vpack.c.b16 %v6010, %v6006
    %v6091 = vpack.c.b16 %v6011, %v6007
    %v6092 = vpack.c.b16 %v6012, %v6008
    %v6093 = vpack.c.b16 %v6017, %v6013
    %v6094 = vpack.c.b16 %v6018, %v6014
    %v6095 = vpack.c.b16 %v6019, %v6015
    %v6096 = vpack.c.b16 %v6020, %v6016
    %v6097 = vpack.c.b16 %v6025, %v6021
    %v6098 = vpack.c.b16 %v6026, %v6022
    %v6099 = vpack.c.b16 %v6027, %v6023
    %v6100 = vpack.c.b16 %v6028, %v6024
    %v6101 = vpack.c.b16 %v6033, %v6029
    %v6102 = vpack.c.b16 %v6034, %v6030
    %v6103 = vpack.c.b16 %v6035, %v6031
    %v6104 = vpack.c.b16 %v6036, %v6032
    %v6105 = vpack.c.b16 %v6041, %v6037
    %v6106 = vpack.c.b16 %v6042, %v6038
    %v6107 = vpack.c.b16 %v6043, %v6039
    %v6108 = vpack.c.b16 %v6044, %v6040
    %6173 = vmatprep.subr.bf16.mxu0 %v6074
    %6174 = vmatpush1.bf16.msra.mxu0 %v6073
    %6175 = vmatprep.subr.bf16.mxu0 %v6070
    %6176 = vmatpush1.bf16.msra.mxu0 %v6069
    %6177 = vmatprep.subr.bf16.mxu0 %v6066
    %6178 = vmatpush1.bf16.msra.mxu0 %v6065
    %6179 = vmatprep.subr.bf16.mxu0 %v6062
    %6180 = vmatpush1.bf16.msra.mxu0 %v6061
    %6181 = vmatprep.subr.bf16.mxu0 %v6058
    %6182 = vmatpush1.bf16.msra.mxu0 %v6057
    %6183 = vmatprep.subr.bf16.mxu0 %v6054
    %6184 = vmatpush1.bf16.msra.mxu0 %v6053
    %6185 = vmatprep.subr.bf16.mxu0 %v6050
    %6186 = vmatpush1.bf16.msra.mxu0 %v6049
    %6187 = vmatprep.subr.bf16.mxu0 %v6046
    %6188 = vmatpush1.bf16.msra.mxu0 %v6045
    %6189 = vmatprep.subr.bf16.mxu0 %v6106
    %6190 = vmatpush2.bf16.msra.mxu0 %v6105
    %6191 = vmatprep.subr.bf16.mxu0 %v6102
    %6192 = vmatpush2.bf16.msra.mxu0 %v6101
    %6193 = vmatprep.subr.bf16.mxu0 %v6098
    %6194 = vmatpush2.bf16.msra.mxu0 %v6097
    %6195 = vmatprep.subr.bf16.mxu0 %v6094
    %6196 = vmatpush2.bf16.msra.mxu0 %v6093
    %6197 = vmatprep.subr.bf16.mxu0 %v6090
    %6198 = vmatpush2.bf16.msra.mxu0 %v6089
    %6199 = vmatprep.subr.bf16.mxu0 %v6086
    %6200 = vmatpush2.bf16.msra.mxu0 %v6085
    %6201 = vmatprep.subr.bf16.mxu0 %v6082
    %6202 = vmatpush2.bf16.msra.mxu0 %v6081
    %6203 = vmatprep.subr.bf16.mxu0 %v6078
    %6204 = vmatpush2.bf16.msra.mxu0 %v6077
    %6205 = vmatprep.mubr.bf16.mxu0 %v5766
    %6206 = vmatmul.mubr.bf16.gmra.mxu0 %v5765
    %v6207 = vpop.f32.mrf.mxu0
    %v6208 = vadd.f32 %v5836, %v6207
    %v6209 = vpop.f32.mrf.mxu0
    %v6210 = vadd.f32 %v5840, %v6209
    %v6211 = vpop.f32.mrf.mxu0
    %v6212 = vpop.f32.mrf.mxu0
    %6213 = vdwg.mxu0
    %6214 = vmatprep.subr.bf16.mxu0 %v6076
    %6215 = vmatpush1.bf16.msra.mxu0 %v6075
    %6216 = vmatprep.subr.bf16.mxu0 %v6072
    %6217 = vmatpush1.bf16.msra.mxu0 %v6071
    %6218 = vmatprep.subr.bf16.mxu0 %v6068
    %6219 = vmatpush1.bf16.msra.mxu0 %v6067
    %6220 = vmatprep.subr.bf16.mxu0 %v6064
    %6221 = vmatpush1.bf16.msra.mxu0 %v6063
    %6222 = vmatprep.subr.bf16.mxu0 %v6060
    %6223 = vmatpush1.bf16.msra.mxu0 %v6059
    %6224 = vmatprep.subr.bf16.mxu0 %v6056
    %6225 = vmatpush1.bf16.msra.mxu0 %v6055
    %6226 = vmatprep.subr.bf16.mxu0 %v6052
    %6227 = vmatpush1.bf16.msra.mxu0 %v6051
    %6228 = vmatprep.subr.bf16.mxu0 %v6048
    %6229 = vmatpush1.bf16.msra.mxu0 %v6047
    %6230 = vmatprep.subr.bf16.mxu0 %v6108
    %6231 = vmatpush2.bf16.msra.mxu0 %v6107
    %6232 = vmatprep.subr.bf16.mxu0 %v6104
    %6233 = vmatpush2.bf16.msra.mxu0 %v6103
    %6234 = vmatprep.subr.bf16.mxu0 %v6100
    %6235 = vmatpush2.bf16.msra.mxu0 %v6099
    %6236 = vmatprep.subr.bf16.mxu0 %v6096
    %6237 = vmatpush2.bf16.msra.mxu0 %v6095
    %6238 = vmatprep.subr.bf16.mxu0 %v6092
    %6239 = vmatpush2.bf16.msra.mxu0 %v6091
    %6240 = vmatprep.subr.bf16.mxu0 %v6088
    %6241 = vmatpush2.bf16.msra.mxu0 %v6087
    %6242 = vmatprep.subr.bf16.mxu0 %v6084
    %6243 = vmatpush2.bf16.msra.mxu0 %v6083
    %6244 = vmatprep.subr.bf16.mxu0 %v6080
    %6245 = vmatpush2.bf16.msra.mxu0 %v6079
    %6246 = vmatprep.mubr.bf16.mxu0 %v5766
    %6247 = vmatmul.mubr.bf16.gmra.mxu0 %v5765
    %v6248 = vpop.f32.mrf.mxu0
    %v6249 = vadd.f32 %v5844, %v6248
    %v6250 = vpop.f32.mrf.mxu0
    %v6251 = vadd.f32 %v5848, %v6250
    %v6252 = vpop.f32.mrf.mxu0
    %v6253 = vpop.f32.mrf.mxu0
    %6254 = vdwg.mxu0
    %s6255 = smul.u32 %s3544, 4
    %s6256 = sshll.u32 %s6255, 4
    %6257 = dma.done %s3017, %s6256
    %v6258 = vld [vmem:[#allocation24] sm:$0xff]
    %v6259 = vld [vmem:[#allocation24 + $0x8] sm:$0xff]
    %v6260 = vld [vmem:[#allocation24 + $0x10] sm:$0xff]
    %v6261 = vld [vmem:[#allocation24 + $0x18] sm:$0xff]
    %v6262 = vld [vmem:[#allocation24 + $0x20] sm:$0xff]
    %v6263 = vld [vmem:[#allocation24 + $0x28] sm:$0xff]
    %v6264 = vld [vmem:[#allocation24 + $0x30] sm:$0xff]
    %v6265 = vld [vmem:[#allocation24 + $0x38] sm:$0xff]
    %v6266 = vld [vmem:[#allocation24 + $0x40] sm:$0xff]
    %v6267 = vld [vmem:[#allocation24 + $0x48] sm:$0xff]
    %v6268 = vld [vmem:[#allocation24 + $0x50] sm:$0xff]
    %v6269 = vld [vmem:[#allocation24 + $0x58] sm:$0xff]
    %v6270 = vld [vmem:[#allocation24 + $0x60] sm:$0xff]
    %v6271 = vld [vmem:[#allocation24 + $0x68] sm:$0xff]
    %v6272 = vld [vmem:[#allocation24 + $0x70] sm:$0xff]
    %v6273 = vld [vmem:[#allocation24 + $0x78] sm:$0xff]
    %v6274 = vld [vmem:[#allocation24 + $0x80] sm:$0xff]
    %v6275 = vld [vmem:[#allocation24 + $0x88] sm:$0xff]
    %v6276 = vld [vmem:[#allocation24 + $0x90] sm:$0xff]
    %v6277 = vld [vmem:[#allocation24 + $0x98] sm:$0xff]
    %v6278 = vld [vmem:[#allocation24 + $0xa0] sm:$0xff]
    %v6279 = vld [vmem:[#allocation24 + $0xa8] sm:$0xff]
    %v6280 = vld [vmem:[#allocation24 + $0xb0] sm:$0xff]
    %v6281 = vld [vmem:[#allocation24 + $0xb8] sm:$0xff]
    %v6282 = vld [vmem:[#allocation24 + $0xc0] sm:$0xff]
    %v6283 = vld [vmem:[#allocation24 + $0xc8] sm:$0xff]
    %v6284 = vld [vmem:[#allocation24 + $0xd0] sm:$0xff]
    %v6285 = vld [vmem:[#allocation24 + $0xd8] sm:$0xff]
    %v6286 = vld [vmem:[#allocation24 + $0xe0] sm:$0xff]
    %v6287 = vld [vmem:[#allocation24 + $0xe8] sm:$0xff]
    %v6288 = vld [vmem:[#allocation24 + $0xf0] sm:$0xff]
    %v6289 = vld [vmem:[#allocation24 + $0xf8] sm:$0xff]
    %v6290 = vld [vmem:[#allocation24 + $0x100] sm:$0xff]
    %v6291 = vld [vmem:[#allocation24 + $0x108] sm:$0xff]
    %v6292 = vld [vmem:[#allocation24 + $0x110] sm:$0xff]
    %v6293 = vld [vmem:[#allocation24 + $0x118] sm:$0xff]
    %v6294 = vld [vmem:[#allocation24 + $0x120] sm:$0xff]
    %v6295 = vld [vmem:[#allocation24 + $0x128] sm:$0xff]
    %v6296 = vld [vmem:[#allocation24 + $0x130] sm:$0xff]
    %v6297 = vld [vmem:[#allocation24 + $0x138] sm:$0xff]
    %v6298 = vld [vmem:[#allocation24 + $0x140] sm:$0xff]
    %v6299 = vld [vmem:[#allocation24 + $0x148] sm:$0xff]
    %v6300 = vld [vmem:[#allocation24 + $0x150] sm:$0xff]
    %v6301 = vld [vmem:[#allocation24 + $0x158] sm:$0xff]
    %v6302 = vld [vmem:[#allocation24 + $0x160] sm:$0xff]
    %v6303 = vld [vmem:[#allocation24 + $0x168] sm:$0xff]
    %v6304 = vld [vmem:[#allocation24 + $0x170] sm:$0xff]
    %v6305 = vld [vmem:[#allocation24 + $0x178] sm:$0xff]
    %v6306 = vld [vmem:[#allocation24 + $0x180] sm:$0xff]
    %v6307 = vld [vmem:[#allocation24 + $0x188] sm:$0xff]
    %v6308 = vld [vmem:[#allocation24 + $0x190] sm:$0xff]
    %v6309 = vld [vmem:[#allocation24 + $0x198] sm:$0xff]
    %v6310 = vld [vmem:[#allocation24 + $0x1a0] sm:$0xff]
    %v6311 = vld [vmem:[#allocation24 + $0x1a8] sm:$0xff]
    %v6312 = vld [vmem:[#allocation24 + $0x1b0] sm:$0xff]
    %v6313 = vld [vmem:[#allocation24 + $0x1b8] sm:$0xff]
    %v6314 = vld [vmem:[#allocation24 + $0x1c0] sm:$0xff]
    %v6315 = vld [vmem:[#allocation24 + $0x1c8] sm:$0xff]
    %v6316 = vld [vmem:[#allocation24 + $0x1d0] sm:$0xff]
    %v6317 = vld [vmem:[#allocation24 + $0x1d8] sm:$0xff]
    %v6318 = vld [vmem:[#allocation24 + $0x1e0] sm:$0xff]
    %v6319 = vld [vmem:[#allocation24 + $0x1e8] sm:$0xff]
    %v6320 = vld [vmem:[#allocation24 + $0x1f0] sm:$0xff]
    %v6321 = vld [vmem:[#allocation24 + $0x1f8] sm:$0xff]
    %v6322 = vld [vmem:[#allocation24 + $0x200] sm:$0xff]
    %v6323 = vld [vmem:[#allocation24 + $0x208] sm:$0xff]
    %v6324 = vld [vmem:[#allocation24 + $0x210] sm:$0xff]
    %v6325 = vld [vmem:[#allocation24 + $0x218] sm:$0xff]
    %v6326 = vld [vmem:[#allocation24 + $0x220] sm:$0xff]
    %v6327 = vld [vmem:[#allocation24 + $0x228] sm:$0xff]
    %v6328 = vld [vmem:[#allocation24 + $0x230] sm:$0xff]
    %v6329 = vld [vmem:[#allocation24 + $0x238] sm:$0xff]
    %v6330 = vld [vmem:[#allocation24 + $0x240] sm:$0xff]
    %v6331 = vld [vmem:[#allocation24 + $0x248] sm:$0xff]
    %v6332 = vld [vmem:[#allocation24 + $0x250] sm:$0xff]
    %v6333 = vld [vmem:[#allocation24 + $0x258] sm:$0xff]
    %v6334 = vld [vmem:[#allocation24 + $0x260] sm:$0xff]
    %v6335 = vld [vmem:[#allocation24 + $0x268] sm:$0xff]
    %v6336 = vld [vmem:[#allocation24 + $0x270] sm:$0xff]
    %v6337 = vld [vmem:[#allocation24 + $0x278] sm:$0xff]
    %v6338 = vld [vmem:[#allocation24 + $0x280] sm:$0xff]
    %v6339 = vld [vmem:[#allocation24 + $0x288] sm:$0xff]
    %v6340 = vld [vmem:[#allocation24 + $0x290] sm:$0xff]
    %v6341 = vld [vmem:[#allocation24 + $0x298] sm:$0xff]
    %v6342 = vld [vmem:[#allocation24 + $0x2a0] sm:$0xff]
    %v6343 = vld [vmem:[#allocation24 + $0x2a8] sm:$0xff]
    %v6344 = vld [vmem:[#allocation24 + $0x2b0] sm:$0xff]
    %v6345 = vld [vmem:[#allocation24 + $0x2b8] sm:$0xff]
    %v6346 = vld [vmem:[#allocation24 + $0x2c0] sm:$0xff]
    %v6347 = vld [vmem:[#allocation24 + $0x2c8] sm:$0xff]
    %v6348 = vld [vmem:[#allocation24 + $0x2d0] sm:$0xff]
    %v6349 = vld [vmem:[#allocation24 + $0x2d8] sm:$0xff]
    %v6350 = vld [vmem:[#allocation24 + $0x2e0] sm:$0xff]
    %v6351 = vld [vmem:[#allocation24 + $0x2e8] sm:$0xff]
    %v6352 = vld [vmem:[#allocation24 + $0x2f0] sm:$0xff]
    %v6353 = vld [vmem:[#allocation24 + $0x2f8] sm:$0xff]
    %v6354 = vld [vmem:[#allocation24 + $0x300] sm:$0xff]
    %v6355 = vld [vmem:[#allocation24 + $0x308] sm:$0xff]
    %v6356 = vld [vmem:[#allocation24 + $0x310] sm:$0xff]
    %v6357 = vld [vmem:[#allocation24 + $0x318] sm:$0xff]
    %v6358 = vld [vmem:[#allocation24 + $0x320] sm:$0xff]
    %v6359 = vld [vmem:[#allocation24 + $0x328] sm:$0xff]
    %v6360 = vld [vmem:[#allocation24 + $0x330] sm:$0xff]
    %v6361 = vld [vmem:[#allocation24 + $0x338] sm:$0xff]
    %v6362 = vld [vmem:[#allocation24 + $0x340] sm:$0xff]
    %v6363 = vld [vmem:[#allocation24 + $0x348] sm:$0xff]
    %v6364 = vld [vmem:[#allocation24 + $0x350] sm:$0xff]
    %v6365 = vld [vmem:[#allocation24 + $0x358] sm:$0xff]
    %v6366 = vld [vmem:[#allocation24 + $0x360] sm:$0xff]
    %v6367 = vld [vmem:[#allocation24 + $0x368] sm:$0xff]
    %v6368 = vld [vmem:[#allocation24 + $0x370] sm:$0xff]
    %v6369 = vld [vmem:[#allocation24 + $0x378] sm:$0xff]
    %v6370 = vld [vmem:[#allocation24 + $0x380] sm:$0xff]
    %v6371 = vld [vmem:[#allocation24 + $0x388] sm:$0xff]
    %v6372 = vld [vmem:[#allocation24 + $0x390] sm:$0xff]
    %v6373 = vld [vmem:[#allocation24 + $0x398] sm:$0xff]
    %v6374 = vld [vmem:[#allocation24 + $0x3a0] sm:$0xff]
    %v6375 = vld [vmem:[#allocation24 + $0x3a8] sm:$0xff]
    %v6376 = vld [vmem:[#allocation24 + $0x3b0] sm:$0xff]
    %v6377 = vld [vmem:[#allocation24 + $0x3b8] sm:$0xff]
    %v6378 = vld [vmem:[#allocation24 + $0x3c0] sm:$0xff]
    %v6379 = vld [vmem:[#allocation24 + $0x3c8] sm:$0xff]
    %v6380 = vld [vmem:[#allocation24 + $0x3d0] sm:$0xff]
    %v6381 = vld [vmem:[#allocation24 + $0x3d8] sm:$0xff]
    %v6382 = vld [vmem:[#allocation24 + $0x3e0] sm:$0xff]
    %v6383 = vld [vmem:[#allocation24 + $0x3e8] sm:$0xff]
    %v6384 = vld [vmem:[#allocation24 + $0x3f0] sm:$0xff]
    %v6385 = vld [vmem:[#allocation24 + $0x3f8] sm:$0xff]
    %v6386 = vld [vmem:[%s105] sm:$0xf]
    %v6388 = vlaneseq
    %v6389 = vshrl.u32 %v6388, 7
    %v6390 = vsub.s32 0, %v6389
    %v6391 = vrot.slane %v6386, %v6390
    %v6392 = vlaneseq
    %v6393 = vshrl.u32 %v6392, 7
    %v6394 = vsub.s32 1, %v6393
    %v6395 = vrot.slane %v6386, %v6394
    %v6396 = vlaneseq
    %v6397 = vshrl.u32 %v6396, 7
    %v6398 = vsub.s32 2, %v6397
    %v6399 = vrot.slane %v6386, %v6398
    %v6400 = vlaneseq
    %v6401 = vshrl.u32 %v6400, 7
    %v6402 = vsub.s32 3, %v6401
    %v6403 = vrot.slane %v6386, %v6402
    %v6536 = vunpack.c.l.b16 %v6258
    %v6537 = vunpack.c.h.b16 %v6258
    %v6538 = vunpack.c.l.b16 %v6259
    %v6539 = vunpack.c.h.b16 %v6259
    %v6540 = vunpack.c.l.b16 %v6260
    %v6541 = vunpack.c.h.b16 %v6260
    %v6542 = vunpack.c.l.b16 %v6261
    %v6543 = vunpack.c.h.b16 %v6261
    %v6544 = vunpack.c.l.b16 %v6262
    %v6545 = vunpack.c.h.b16 %v6262
    %v6546 = vunpack.c.l.b16 %v6263
    %v6547 = vunpack.c.h.b16 %v6263
    %v6548 = vunpack.c.l.b16 %v6264
    %v6549 = vunpack.c.h.b16 %v6264
    %v6550 = vunpack.c.l.b16 %v6265
    %v6551 = vunpack.c.h.b16 %v6265
    %v6552 = vunpack.c.l.b16 %v6266
    %v6553 = vunpack.c.h.b16 %v6266
    %v6554 = vunpack.c.l.b16 %v6267
    %v6555 = vunpack.c.h.b16 %v6267
    %v6556 = vunpack.c.l.b16 %v6268
    %v6557 = vunpack.c.h.b16 %v6268
    %v6558 = vunpack.c.l.b16 %v6269
    %v6559 = vunpack.c.h.b16 %v6269
    %v6560 = vunpack.c.l.b16 %v6270
    %v6561 = vunpack.c.h.b16 %v6270
    %v6562 = vunpack.c.l.b16 %v6271
    %v6563 = vunpack.c.h.b16 %v6271
    %v6564 = vunpack.c.l.b16 %v6272
    %v6565 = vunpack.c.h.b16 %v6272
    %v6566 = vunpack.c.l.b16 %v6273
    %v6567 = vunpack.c.h.b16 %v6273
    %v6568 = vunpack.c.l.b16 %v6274
    %v6569 = vunpack.c.h.b16 %v6274
    %v6570 = vunpack.c.l.b16 %v6275
    %v6571 = vunpack.c.h.b16 %v6275
    %v6572 = vunpack.c.l.b16 %v6276
    %v6573 = vunpack.c.h.b16 %v6276
    %v6574 = vunpack.c.l.b16 %v6277
    %v6575 = vunpack.c.h.b16 %v6277
    %v6576 = vunpack.c.l.b16 %v6278
    %v6577 = vunpack.c.h.b16 %v6278
    %v6578 = vunpack.c.l.b16 %v6279
    %v6579 = vunpack.c.h.b16 %v6279
    %v6580 = vunpack.c.l.b16 %v6280
    %v6581 = vunpack.c.h.b16 %v6280
    %v6582 = vunpack.c.l.b16 %v6281
    %v6583 = vunpack.c.h.b16 %v6281
    %v6584 = vunpack.c.l.b16 %v6282
    %v6585 = vunpack.c.h.b16 %v6282
    %v6586 = vunpack.c.l.b16 %v6283
    %v6587 = vunpack.c.h.b16 %v6283
    %v6588 = vunpack.c.l.b16 %v6284
    %v6589 = vunpack.c.h.b16 %v6284
    %v6590 = vunpack.c.l.b16 %v6285
    %v6591 = vunpack.c.h.b16 %v6285
    %v6592 = vunpack.c.l.b16 %v6286
    %v6593 = vunpack.c.h.b16 %v6286
    %v6594 = vunpack.c.l.b16 %v6287
    %v6595 = vunpack.c.h.b16 %v6287
    %v6596 = vunpack.c.l.b16 %v6288
    %v6597 = vunpack.c.h.b16 %v6288
    %v6598 = vunpack.c.l.b16 %v6289
    %v6599 = vunpack.c.h.b16 %v6289
    %v6600 = vunpack.c.l.b16 %v6290
    %v6601 = vunpack.c.h.b16 %v6290
    %v6602 = vunpack.c.l.b16 %v6291
    %v6603 = vunpack.c.h.b16 %v6291
    %v6604 = vunpack.c.l.b16 %v6292
    %v6605 = vunpack.c.h.b16 %v6292
    %v6606 = vunpack.c.l.b16 %v6293
    %v6607 = vunpack.c.h.b16 %v6293
    %v6608 = vunpack.c.l.b16 %v6294
    %v6609 = vunpack.c.h.b16 %v6294
    %v6610 = vunpack.c.l.b16 %v6295
    %v6611 = vunpack.c.h.b16 %v6295
    %v6612 = vunpack.c.l.b16 %v6296
    %v6613 = vunpack.c.h.b16 %v6296
    %v6614 = vunpack.c.l.b16 %v6297
    %v6615 = vunpack.c.h.b16 %v6297
    %v6616 = vunpack.c.l.b16 %v6298
    %v6617 = vunpack.c.h.b16 %v6298
    %v6618 = vunpack.c.l.b16 %v6299
    %v6619 = vunpack.c.h.b16 %v6299
    %v6620 = vunpack.c.l.b16 %v6300
    %v6621 = vunpack.c.h.b16 %v6300
    %v6622 = vunpack.c.l.b16 %v6301
    %v6623 = vunpack.c.h.b16 %v6301
    %v6624 = vunpack.c.l.b16 %v6302
    %v6625 = vunpack.c.h.b16 %v6302
    %v6626 = vunpack.c.l.b16 %v6303
    %v6627 = vunpack.c.h.b16 %v6303
    %v6628 = vunpack.c.l.b16 %v6304
    %v6629 = vunpack.c.h.b16 %v6304
    %v6630 = vunpack.c.l.b16 %v6305
    %v6631 = vunpack.c.h.b16 %v6305
    %v6632 = vunpack.c.l.b16 %v6306
    %v6633 = vunpack.c.h.b16 %v6306
    %v6634 = vunpack.c.l.b16 %v6307
    %v6635 = vunpack.c.h.b16 %v6307
    %v6636 = vunpack.c.l.b16 %v6308
    %v6637 = vunpack.c.h.b16 %v6308
    %v6638 = vunpack.c.l.b16 %v6309
    %v6639 = vunpack.c.h.b16 %v6309
    %v6640 = vunpack.c.l.b16 %v6310
    %v6641 = vunpack.c.h.b16 %v6310
    %v6642 = vunpack.c.l.b16 %v6311
    %v6643 = vunpack.c.h.b16 %v6311
    %v6644 = vunpack.c.l.b16 %v6312
    %v6645 = vunpack.c.h.b16 %v6312
    %v6646 = vunpack.c.l.b16 %v6313
    %v6647 = vunpack.c.h.b16 %v6313
    %v6648 = vunpack.c.l.b16 %v6314
    %v6649 = vunpack.c.h.b16 %v6314
    %v6650 = vunpack.c.l.b16 %v6315
    %v6651 = vunpack.c.h.b16 %v6315
    %v6652 = vunpack.c.l.b16 %v6316
    %v6653 = vunpack.c.h.b16 %v6316
    %v6654 = vunpack.c.l.b16 %v6317
    %v6655 = vunpack.c.h.b16 %v6317
    %v6656 = vunpack.c.l.b16 %v6318
    %v6657 = vunpack.c.h.b16 %v6318
    %v6658 = vunpack.c.l.b16 %v6319
    %v6659 = vunpack.c.h.b16 %v6319
    %v6660 = vunpack.c.l.b16 %v6320
    %v6661 = vunpack.c.h.b16 %v6320
    %v6662 = vunpack.c.l.b16 %v6321
    %v6663 = vunpack.c.h.b16 %v6321
    %v6664 = vunpack.c.l.b16 %v6322
    %v6665 = vunpack.c.h.b16 %v6322
    %v6666 = vunpack.c.l.b16 %v6323
    %v6667 = vunpack.c.h.b16 %v6323
    %v6668 = vunpack.c.l.b16 %v6324
    %v6669 = vunpack.c.h.b16 %v6324
    %v6670 = vunpack.c.l.b16 %v6325
    %v6671 = vunpack.c.h.b16 %v6325
    %v6672 = vunpack.c.l.b16 %v6326
    %v6673 = vunpack.c.h.b16 %v6326
    %v6674 = vunpack.c.l.b16 %v6327
    %v6675 = vunpack.c.h.b16 %v6327
    %v6676 = vunpack.c.l.b16 %v6328
    %v6677 = vunpack.c.h.b16 %v6328
    %v6678 = vunpack.c.l.b16 %v6329
    %v6679 = vunpack.c.h.b16 %v6329
    %v6680 = vunpack.c.l.b16 %v6330
    %v6681 = vunpack.c.h.b16 %v6330
    %v6682 = vunpack.c.l.b16 %v6331
    %v6683 = vunpack.c.h.b16 %v6331
    %v6684 = vunpack.c.l.b16 %v6332
    %v6685 = vunpack.c.h.b16 %v6332
    %v6686 = vunpack.c.l.b16 %v6333
    %v6687 = vunpack.c.h.b16 %v6333
    %v6688 = vunpack.c.l.b16 %v6334
    %v6689 = vunpack.c.h.b16 %v6334
    %v6690 = vunpack.c.l.b16 %v6335
    %v6691 = vunpack.c.h.b16 %v6335
    %v6692 = vunpack.c.l.b16 %v6336
    %v6693 = vunpack.c.h.b16 %v6336
    %v6694 = vunpack.c.l.b16 %v6337
    %v6695 = vunpack.c.h.b16 %v6337
    %v6696 = vunpack.c.l.b16 %v6338
    %v6697 = vunpack.c.h.b16 %v6338
    %v6698 = vunpack.c.l.b16 %v6339
    %v6699 = vunpack.c.h.b16 %v6339
    %v6700 = vunpack.c.l.b16 %v6340
    %v6701 = vunpack.c.h.b16 %v6340
    %v6702 = vunpack.c.l.b16 %v6341
    %v6703 = vunpack.c.h.b16 %v6341
    %v6704 = vunpack.c.l.b16 %v6342
    %v6705 = vunpack.c.h.b16 %v6342
    %v6706 = vunpack.c.l.b16 %v6343
    %v6707 = vunpack.c.h.b16 %v6343
    %v6708 = vunpack.c.l.b16 %v6344
    %v6709 = vunpack.c.h.b16 %v6344
    %v6710 = vunpack.c.l.b16 %v6345
    %v6711 = vunpack.c.h.b16 %v6345
    %v6712 = vunpack.c.l.b16 %v6346
    %v6713 = vunpack.c.h.b16 %v6346
    %v6714 = vunpack.c.l.b16 %v6347
    %v6715 = vunpack.c.h.b16 %v6347
    %v6716 = vunpack.c.l.b16 %v6348
    %v6717 = vunpack.c.h.b16 %v6348
    %v6718 = vunpack.c.l.b16 %v6349
    %v6719 = vunpack.c.h.b16 %v6349
    %v6720 = vunpack.c.l.b16 %v6350
    %v6721 = vunpack.c.h.b16 %v6350
    %v6722 = vunpack.c.l.b16 %v6351
    %v6723 = vunpack.c.h.b16 %v6351
    %v6724 = vunpack.c.l.b16 %v6352
    %v6725 = vunpack.c.h.b16 %v6352
    %v6726 = vunpack.c.l.b16 %v6353
    %v6727 = vunpack.c.h.b16 %v6353
    %v6728 = vunpack.c.l.b16 %v6354
    %v6729 = vunpack.c.h.b16 %v6354
    %v6730 = vunpack.c.l.b16 %v6355
    %v6731 = vunpack.c.h.b16 %v6355
    %v6732 = vunpack.c.l.b16 %v6356
    %v6733 = vunpack.c.h.b16 %v6356
    %v6734 = vunpack.c.l.b16 %v6357
    %v6735 = vunpack.c.h.b16 %v6357
    %v6736 = vunpack.c.l.b16 %v6358
    %v6737 = vunpack.c.h.b16 %v6358
    %v6738 = vunpack.c.l.b16 %v6359
    %v6739 = vunpack.c.h.b16 %v6359
    %v6740 = vunpack.c.l.b16 %v6360
    %v6741 = vunpack.c.h.b16 %v6360
    %v6742 = vunpack.c.l.b16 %v6361
    %v6743 = vunpack.c.h.b16 %v6361
    %v6744 = vunpack.c.l.b16 %v6362
    %v6745 = vunpack.c.h.b16 %v6362
    %v6746 = vunpack.c.l.b16 %v6363
    %v6747 = vunpack.c.h.b16 %v6363
    %v6748 = vunpack.c.l.b16 %v6364
    %v6749 = vunpack.c.h.b16 %v6364
    %v6750 = vunpack.c.l.b16 %v6365
    %v6751 = vunpack.c.h.b16 %v6365
    %v6752 = vunpack.c.l.b16 %v6366
    %v6753 = vunpack.c.h.b16 %v6366
    %v6754 = vunpack.c.l.b16 %v6367
    %v6755 = vunpack.c.h.b16 %v6367
    %v6756 = vunpack.c.l.b16 %v6368
    %v6757 = vunpack.c.h.b16 %v6368
    %v6758 = vunpack.c.l.b16 %v6369
    %v6759 = vunpack.c.h.b16 %v6369
    %v6760 = vunpack.c.l.b16 %v6370
    %v6761 = vunpack.c.h.b16 %v6370
    %v6762 = vunpack.c.l.b16 %v6371
    %v6763 = vunpack.c.h.b16 %v6371
    %v6764 = vunpack.c.l.b16 %v6372
    %v6765 = vunpack.c.h.b16 %v6372
    %v6766 = vunpack.c.l.b16 %v6373
    %v6767 = vunpack.c.h.b16 %v6373
    %v6768 = vunpack.c.l.b16 %v6374
    %v6769 = vunpack.c.h.b16 %v6374
    %v6770 = vunpack.c.l.b16 %v6375
    %v6771 = vunpack.c.h.b16 %v6375
    %v6772 = vunpack.c.l.b16 %v6376
    %v6773 = vunpack.c.h.b16 %v6376
    %v6774 = vunpack.c.l.b16 %v6377
    %v6775 = vunpack.c.h.b16 %v6377
    %v6776 = vunpack.c.l.b16 %v6378
    %v6777 = vunpack.c.h.b16 %v6378
    %v6778 = vunpack.c.l.b16 %v6379
    %v6779 = vunpack.c.h.b16 %v6379
    %v6780 = vunpack.c.l.b16 %v6380
    %v6781 = vunpack.c.h.b16 %v6380
    %v6782 = vunpack.c.l.b16 %v6381
    %v6783 = vunpack.c.h.b16 %v6381
    %v6784 = vunpack.c.l.b16 %v6382
    %v6785 = vunpack.c.h.b16 %v6382
    %v6786 = vunpack.c.l.b16 %v6383
    %v6787 = vunpack.c.h.b16 %v6383
    %v6788 = vunpack.c.l.b16 %v6384
    %v6789 = vunpack.c.h.b16 %v6384
    %v6790 = vunpack.c.l.b16 %v6385
    %v6791 = vunpack.c.h.b16 %v6385
    %v6792 = vpack.c.b16 %v6540, %v6536
    %v6793 = vpack.c.b16 %v6541, %v6537
    %v6794 = vpack.c.b16 %v6542, %v6538
    %v6795 = vpack.c.b16 %v6543, %v6539
    %v6796 = vpack.c.b16 %v6548, %v6544
    %v6797 = vpack.c.b16 %v6549, %v6545
    %v6798 = vpack.c.b16 %v6550, %v6546
    %v6799 = vpack.c.b16 %v6551, %v6547
    %v6800 = vpack.c.b16 %v6556, %v6552
    %v6801 = vpack.c.b16 %v6557, %v6553
    %v6802 = vpack.c.b16 %v6558, %v6554
    %v6803 = vpack.c.b16 %v6559, %v6555
    %v6804 = vpack.c.b16 %v6564, %v6560
    %v6805 = vpack.c.b16 %v6565, %v6561
    %v6806 = vpack.c.b16 %v6566, %v6562
    %v6807 = vpack.c.b16 %v6567, %v6563
    %v6808 = vpack.c.b16 %v6572, %v6568
    %v6809 = vpack.c.b16 %v6573, %v6569
    %v6810 = vpack.c.b16 %v6574, %v6570
    %v6811 = vpack.c.b16 %v6575, %v6571
    %v6812 = vpack.c.b16 %v6580, %v6576
    %v6813 = vpack.c.b16 %v6581, %v6577
    %v6814 = vpack.c.b16 %v6582, %v6578
    %v6815 = vpack.c.b16 %v6583, %v6579
    %v6816 = vpack.c.b16 %v6588, %v6584
    %v6817 = vpack.c.b16 %v6589, %v6585
    %v6818 = vpack.c.b16 %v6590, %v6586
    %v6819 = vpack.c.b16 %v6591, %v6587
    %v6820 = vpack.c.b16 %v6596, %v6592
    %v6821 = vpack.c.b16 %v6597, %v6593
    %v6822 = vpack.c.b16 %v6598, %v6594
    %v6823 = vpack.c.b16 %v6599, %v6595
    %v6824 = vpack.c.b16 %v6604, %v6600
    %v6825 = vpack.c.b16 %v6605, %v6601
    %v6826 = vpack.c.b16 %v6606, %v6602
    %v6827 = vpack.c.b16 %v6607, %v6603
    %v6828 = vpack.c.b16 %v6612, %v6608
    %v6829 = vpack.c.b16 %v6613, %v6609
    %v6830 = vpack.c.b16 %v6614, %v6610
    %v6831 = vpack.c.b16 %v6615, %v6611
    %v6832 = vpack.c.b16 %v6620, %v6616
    %v6833 = vpack.c.b16 %v6621, %v6617
    %v6834 = vpack.c.b16 %v6622, %v6618
    %v6835 = vpack.c.b16 %v6623, %v6619
    %v6836 = vpack.c.b16 %v6628, %v6624
    %v6837 = vpack.c.b16 %v6629, %v6625
    %v6838 = vpack.c.b16 %v6630, %v6626
    %v6839 = vpack.c.b16 %v6631, %v6627
    %v6840 = vpack.c.b16 %v6636, %v6632
    %v6841 = vpack.c.b16 %v6637, %v6633
    %v6842 = vpack.c.b16 %v6638, %v6634
    %v6843 = vpack.c.b16 %v6639, %v6635
    %v6844 = vpack.c.b16 %v6644, %v6640
    %v6845 = vpack.c.b16 %v6645, %v6641
    %v6846 = vpack.c.b16 %v6646, %v6642
    %v6847 = vpack.c.b16 %v6647, %v6643
    %v6848 = vpack.c.b16 %v6652, %v6648
    %v6849 = vpack.c.b16 %v6653, %v6649
    %v6850 = vpack.c.b16 %v6654, %v6650
    %v6851 = vpack.c.b16 %v6655, %v6651
    %v6852 = vpack.c.b16 %v6660, %v6656
    %v6853 = vpack.c.b16 %v6661, %v6657
    %v6854 = vpack.c.b16 %v6662, %v6658
    %v6855 = vpack.c.b16 %v6663, %v6659
    %v6856 = vpack.c.b16 %v6668, %v6664
    %v6857 = vpack.c.b16 %v6669, %v6665
    %v6858 = vpack.c.b16 %v6670, %v6666
    %v6859 = vpack.c.b16 %v6671, %v6667
    %v6860 = vpack.c.b16 %v6676, %v6672
    %v6861 = vpack.c.b16 %v6677, %v6673
    %v6862 = vpack.c.b16 %v6678, %v6674
    %v6863 = vpack.c.b16 %v6679, %v6675
    %v6864 = vpack.c.b16 %v6684, %v6680
    %v6865 = vpack.c.b16 %v6685, %v6681
    %v6866 = vpack.c.b16 %v6686, %v6682
    %v6867 = vpack.c.b16 %v6687, %v6683
    %v6868 = vpack.c.b16 %v6692, %v6688
    %v6869 = vpack.c.b16 %v6693, %v6689
    %v6870 = vpack.c.b16 %v6694, %v6690
    %v6871 = vpack.c.b16 %v6695, %v6691
    %v6872 = vpack.c.b16 %v6700, %v6696
    %v6873 = vpack.c.b16 %v6701, %v6697
    %v6874 = vpack.c.b16 %v6702, %v6698
    %v6875 = vpack.c.b16 %v6703, %v6699
    %v6876 = vpack.c.b16 %v6708, %v6704
    %v6877 = vpack.c.b16 %v6709, %v6705
    %v6878 = vpack.c.b16 %v6710, %v6706
    %v6879 = vpack.c.b16 %v6711, %v6707
    %v6880 = vpack.c.b16 %v6716, %v6712
    %v6881 = vpack.c.b16 %v6717, %v6713
    %v6882 = vpack.c.b16 %v6718, %v6714
    %v6883 = vpack.c.b16 %v6719, %v6715
    %v6884 = vpack.c.b16 %v6724, %v6720
    %v6885 = vpack.c.b16 %v6725, %v6721
    %v6886 = vpack.c.b16 %v6726, %v6722
    %v6887 = vpack.c.b16 %v6727, %v6723
    %v6888 = vpack.c.b16 %v6732, %v6728
    %v6889 = vpack.c.b16 %v6733, %v6729
    %v6890 = vpack.c.b16 %v6734, %v6730
    %v6891 = vpack.c.b16 %v6735, %v6731
    %v6892 = vpack.c.b16 %v6740, %v6736
    %v6893 = vpack.c.b16 %v6741, %v6737
    %v6894 = vpack.c.b16 %v6742, %v6738
    %v6895 = vpack.c.b16 %v6743, %v6739
    %v6896 = vpack.c.b16 %v6748, %v6744
    %v6897 = vpack.c.b16 %v6749, %v6745
    %v6898 = vpack.c.b16 %v6750, %v6746
    %v6899 = vpack.c.b16 %v6751, %v6747
    %v6900 = vpack.c.b16 %v6756, %v6752
    %v6901 = vpack.c.b16 %v6757, %v6753
    %v6902 = vpack.c.b16 %v6758, %v6754
    %v6903 = vpack.c.b16 %v6759, %v6755
    %v6904 = vpack.c.b16 %v6764, %v6760
    %v6905 = vpack.c.b16 %v6765, %v6761
    %v6906 = vpack.c.b16 %v6766, %v6762
    %v6907 = vpack.c.b16 %v6767, %v6763
    %v6908 = vpack.c.b16 %v6772, %v6768
    %v6909 = vpack.c.b16 %v6773, %v6769
    %v6910 = vpack.c.b16 %v6774, %v6770
    %v6911 = vpack.c.b16 %v6775, %v6771
    %v6912 = vpack.c.b16 %v6780, %v6776
    %v6913 = vpack.c.b16 %v6781, %v6777
    %v6914 = vpack.c.b16 %v6782, %v6778
    %v6915 = vpack.c.b16 %v6783, %v6779
    %v6916 = vpack.c.b16 %v6788, %v6784
    %v6917 = vpack.c.b16 %v6789, %v6785
    %v6918 = vpack.c.b16 %v6790, %v6786
    %v6919 = vpack.c.b16 %v6791, %v6787
    %7048 = vmatprep.subr.bf16.mxu0 %v6821
    %7049 = vmatpush1.bf16.msra.mxu0 %v6820
    %7050 = vmatprep.subr.bf16.mxu0 %v6817
    %7051 = vmatpush1.bf16.msra.mxu0 %v6816
    %7052 = vmatprep.subr.bf16.mxu0 %v6813
    %7053 = vmatpush1.bf16.msra.mxu0 %v6812
    %7054 = vmatprep.subr.bf16.mxu0 %v6809
    %7055 = vmatpush1.bf16.msra.mxu0 %v6808
    %7056 = vmatprep.subr.bf16.mxu0 %v6805
    %7057 = vmatpush1.bf16.msra.mxu0 %v6804
    %7058 = vmatprep.subr.bf16.mxu0 %v6801
    %7059 = vmatpush1.bf16.msra.mxu0 %v6800
    %7060 = vmatprep.subr.bf16.mxu0 %v6797
    %7061 = vmatpush1.bf16.msra.mxu0 %v6796
    %7062 = vmatprep.subr.bf16.mxu0 %v6793
    %7063 = vmatpush1.bf16.msra.mxu0 %v6792
    %7064 = vmatprep.subr.bf16.mxu0 %v6853
    %7065 = vmatpush2.bf16.msra.mxu0 %v6852
    %7066 = vmatprep.subr.bf16.mxu0 %v6849
    %7067 = vmatpush2.bf16.msra.mxu0 %v6848
    %7068 = vmatprep.subr.bf16.mxu0 %v6845
    %7069 = vmatpush2.bf16.msra.mxu0 %v6844
    %7070 = vmatprep.subr.bf16.mxu0 %v6841
    %7071 = vmatpush2.bf16.msra.mxu0 %v6840
    %7072 = vmatprep.subr.bf16.mxu0 %v6837
    %7073 = vmatpush2.bf16.msra.mxu0 %v6836
    %7074 = vmatprep.subr.bf16.mxu0 %v6833
    %7075 = vmatpush2.bf16.msra.mxu0 %v6832
    %7076 = vmatprep.subr.bf16.mxu0 %v6829
    %7077 = vmatpush2.bf16.msra.mxu0 %v6828
    %7078 = vmatprep.subr.bf16.mxu0 %v6825
    %7079 = vmatpush2.bf16.msra.mxu0 %v6824
    %7080 = vmatprep.mubr.bf16.mxu0 %v5280
    %7081 = vmatmul.mubr.bf16.gmra.mxu0 %v5279
    %v7082 = vpop.f32.mrf.mxu0
    %v7083 = vadd.f32 %v6391, %v7082
    %v7084 = vpop.f32.mrf.mxu0
    %v7085 = vadd.f32 %v6395, %v7084
    %v7086 = vpop.f32.mrf.mxu0
    %v7087 = vpop.f32.mrf.mxu0
    %7088 = vdwg.mxu0
    %7089 = vmatprep.subr.bf16.mxu0 %v6885
    %7090 = vmatpush1.bf16.msra.mxu0 %v6884
    %7091 = vmatprep.subr.bf16.mxu0 %v6881
    %7092 = vmatpush1.bf16.msra.mxu0 %v6880
    %7093 = vmatprep.subr.bf16.mxu0 %v6877
    %7094 = vmatpush1.bf16.msra.mxu0 %v6876
    %7095 = vmatprep.subr.bf16.mxu0 %v6873
    %7096 = vmatpush1.bf16.msra.mxu0 %v6872
    %7097 = vmatprep.subr.bf16.mxu0 %v6869
    %7098 = vmatpush1.bf16.msra.mxu0 %v6868
    %7099 = vmatprep.subr.bf16.mxu0 %v6865
    %7100 = vmatpush1.bf16.msra.mxu0 %v6864
    %7101 = vmatprep.subr.bf16.mxu0 %v6861
    %7102 = vmatpush1.bf16.msra.mxu0 %v6860
    %7103 = vmatprep.subr.bf16.mxu0 %v6857
    %7104 = vmatpush1.bf16.msra.mxu0 %v6856
    %7105 = vmatprep.subr.bf16.mxu0 %v6917
    %7106 = vmatpush2.bf16.msra.mxu0 %v6916
    %7107 = vmatprep.subr.bf16.mxu0 %v6913
    %7108 = vmatpush2.bf16.msra.mxu0 %v6912
    %7109 = vmatprep.subr.bf16.mxu0 %v6909
    %7110 = vmatpush2.bf16.msra.mxu0 %v6908
    %7111 = vmatprep.subr.bf16.mxu0 %v6905
    %7112 = vmatpush2.bf16.msra.mxu0 %v6904
    %7113 = vmatprep.subr.bf16.mxu0 %v6901
    %7114 = vmatpush2.bf16.msra.mxu0 %v6900
    %7115 = vmatprep.subr.bf16.mxu0 %v6897
    %7116 = vmatpush2.bf16.msra.mxu0 %v6896
    %7117 = vmatprep.subr.bf16.mxu0 %v6893
    %7118 = vmatpush2.bf16.msra.mxu0 %v6892
    %7119 = vmatprep.subr.bf16.mxu0 %v6889
    %7120 = vmatpush2.bf16.msra.mxu0 %v6888
    %7121 = vmatprep.mubr.bf16.mxu0 %v5282
    %7122 = vmatmul.mubr.bf16.gmra.mxu0 %v5281
    %v7123 = vpop.f32.mrf.mxu0
    %v7124 = vadd.f32 %v7083, %v7123
    %v7125 = vpop.f32.mrf.mxu0
    %v7126 = vadd.f32 %v7085, %v7125
    %v7127 = vpop.f32.mrf.mxu0
    %v7128 = vpop.f32.mrf.mxu0
    %7129 = vdwg.mxu0
    %7130 = vmatprep.subr.bf16.mxu0 %v6823
    %7131 = vmatpush1.bf16.msra.mxu0 %v6822
    %7132 = vmatprep.subr.bf16.mxu0 %v6819
    %7133 = vmatpush1.bf16.msra.mxu0 %v6818
    %7134 = vmatprep.subr.bf16.mxu0 %v6815
    %7135 = vmatpush1.bf16.msra.mxu0 %v6814
    %7136 = vmatprep.subr.bf16.mxu0 %v6811
    %7137 = vmatpush1.bf16.msra.mxu0 %v6810
    %7138 = vmatprep.subr.bf16.mxu0 %v6807
    %7139 = vmatpush1.bf16.msra.mxu0 %v6806
    %7140 = vmatprep.subr.bf16.mxu0 %v6803
    %7141 = vmatpush1.bf16.msra.mxu0 %v6802
    %7142 = vmatprep.subr.bf16.mxu0 %v6799
    %7143 = vmatpush1.bf16.msra.mxu0 %v6798
    %7144 = vmatprep.subr.bf16.mxu0 %v6795
    %7145 = vmatpush1.bf16.msra.mxu0 %v6794
    %7146 = vmatprep.subr.bf16.mxu0 %v6855
    %7147 = vmatpush2.bf16.msra.mxu0 %v6854
    %7148 = vmatprep.subr.bf16.mxu0 %v6851
    %7149 = vmatpush2.bf16.msra.mxu0 %v6850
    %7150 = vmatprep.subr.bf16.mxu0 %v6847
    %7151 = vmatpush2.bf16.msra.mxu0 %v6846
    %7152 = vmatprep.subr.bf16.mxu0 %v6843
    %7153 = vmatpush2.bf16.msra.mxu0 %v6842
    %7154 = vmatprep.subr.bf16.mxu0 %v6839
    %7155 = vmatpush2.bf16.msra.mxu0 %v6838
    %7156 = vmatprep.subr.bf16.mxu0 %v6835
    %7157 = vmatpush2.bf16.msra.mxu0 %v6834
    %7158 = vmatprep.subr.bf16.mxu0 %v6831
    %7159 = vmatpush2.bf16.msra.mxu0 %v6830
    %7160 = vmatprep.subr.bf16.mxu0 %v6827
    %7161 = vmatpush2.bf16.msra.mxu0 %v6826
    %7162 = vmatprep.mubr.bf16.mxu0 %v5280
    %7163 = vmatmul.mubr.bf16.gmra.mxu0 %v5279
    %v7164 = vpop.f32.mrf.mxu0
    %v7165 = vadd.f32 %v6399, %v7164
    %v7166 = vpop.f32.mrf.mxu0
    %v7167 = vadd.f32 %v6403, %v7166
    %v7168 = vpop.f32.mrf.mxu0
    %v7169 = vpop.f32.mrf.mxu0
    %7170 = vdwg.mxu0
    %7171 = vmatprep.subr.bf16.mxu0 %v6887
    %7172 = vmatpush1.bf16.msra.mxu0 %v6886
    %7173 = vmatprep.subr.bf16.mxu0 %v6883
    %7174 = vmatpush1.bf16.msra.mxu0 %v6882
    %7175 = vmatprep.subr.bf16.mxu0 %v6879
    %7176 = vmatpush1.bf16.msra.mxu0 %v6878
    %7177 = vmatprep.subr.bf16.mxu0 %v6875
    %7178 = vmatpush1.bf16.msra.mxu0 %v6874
    %7179 = vmatprep.subr.bf16.mxu0 %v6871
    %7180 = vmatpush1.bf16.msra.mxu0 %v6870
    %7181 = vmatprep.subr.bf16.mxu0 %v6867
    %7182 = vmatpush1.bf16.msra.mxu0 %v6866
    %7183 = vmatprep.subr.bf16.mxu0 %v6863
    %7184 = vmatpush1.bf16.msra.mxu0 %v6862
    %7185 = vmatprep.subr.bf16.mxu0 %v6859
    %7186 = vmatpush1.bf16.msra.mxu0 %v6858
    %7187 = vmatprep.subr.bf16.mxu0 %v6919
    %7188 = vmatpush2.bf16.msra.mxu0 %v6918
    %7189 = vmatprep.subr.bf16.mxu0 %v6915
    %7190 = vmatpush2.bf16.msra.mxu0 %v6914
    %7191 = vmatprep.subr.bf16.mxu0 %v6911
    %7192 = vmatpush2.bf16.msra.mxu0 %v6910
    %7193 = vmatprep.subr.bf16.mxu0 %v6907
    %7194 = vmatpush2.bf16.msra.mxu0 %v6906
    %7195 = vmatprep.subr.bf16.mxu0 %v6903
    %7196 = vmatpush2.bf16.msra.mxu0 %v6902
    %7197 = vmatprep.subr.bf16.mxu0 %v6899
    %7198 = vmatpush2.bf16.msra.mxu0 %v6898
    %7199 = vmatprep.subr.bf16.mxu0 %v6895
    %7200 = vmatpush2.bf16.msra.mxu0 %v6894
    %7201 = vmatprep.subr.bf16.mxu0 %v6891
    %7202 = vmatpush2.bf16.msra.mxu0 %v6890
    %7203 = vmatprep.mubr.bf16.mxu0 %v5282
    %7204 = vmatmul.mubr.bf16.gmra.mxu0 %v5281
    %v7205 = vpop.f32.mrf.mxu0
    %v7206 = vadd.f32 %v7165, %v7205
    %v7207 = vpop.f32.mrf.mxu0
    %v7208 = vadd.f32 %v7167, %v7207
    %v7209 = vpop.f32.mrf.mxu0
    %v7210 = vpop.f32.mrf.mxu0
    %7211 = vdwg.mxu0
    %v7212 = vadd.f32 %v6208, %v7124
    %v7213 = vadd.f32 %v6210, %v7126
    %v7214 = vadd.f32 %v6249, %v7206
    %v7215 = vadd.f32 %v6251, %v7208
    %v7216 = vmax.f32 %v7212, 0.0
    %v7217 = vmax.f32 %v7213, 0.0
    %v7218 = vmax.f32 %v7214, 0.0
    %v7219 = vmax.f32 %v7215, 0.0
    %v7220 = vmax.f32 %v7216, 0.0
    %v7221 = vmax.f32 %v7217, 0.0
    %v7222 = vmax.f32 %v7218, 0.0
    %v7223 = vmax.f32 %v7219, 0.0
    %s7224 = smul.u32 %s3544, 1
    %s7225 = sshll.u32 %s7224, 4
    %7226 = dma.done %s3532, %s7225
    %v7227 = vpack.c.bf16 %v7220, %v7220
    %v7228 = vpack.c.bf16 %v7221, %v7221
    %v7229 = vpack.c.bf16 %v7222, %v7222
    %v7230 = vpack.c.bf16 %v7223, %v7223
    %v7231 = vld [vmem:[#allocation25] sm:$0xf]
    %v7232 = vld [vmem:[#allocation25 + $0x4] sm:$0xf]
    %v7233 = vld [vmem:[#allocation25 + $0x8] sm:$0xf]
    %v7234 = vld [vmem:[#allocation25 + $0xc] sm:$0xf]
    %v7235 = vld [vmem:[#allocation25 + $0x10] sm:$0xf]
    %v7236 = vld [vmem:[#allocation25 + $0x14] sm:$0xf]
    %v7237 = vld [vmem:[#allocation25 + $0x18] sm:$0xf]
    %v7238 = vld [vmem:[#allocation25 + $0x1c] sm:$0xf]
    %v7239 = vld [vmem:[#allocation25 + $0x20] sm:$0xf]
    %v7240 = vld [vmem:[#allocation25 + $0x24] sm:$0xf]
    %v7241 = vld [vmem:[#allocation25 + $0x28] sm:$0xf]
    %v7242 = vld [vmem:[#allocation25 + $0x2c] sm:$0xf]
    %v7243 = vld [vmem:[#allocation25 + $0x30] sm:$0xf]
    %v7244 = vld [vmem:[#allocation25 + $0x34] sm:$0xf]
    %v7245 = vld [vmem:[#allocation25 + $0x38] sm:$0xf]
    %v7246 = vld [vmem:[#allocation25 + $0x3c] sm:$0xf]
    %v7247 = vld [vmem:[#allocation25 + $0x40] sm:$0xf]
    %v7248 = vld [vmem:[#allocation25 + $0x44] sm:$0xf]
    %v7249 = vld [vmem:[#allocation25 + $0x48] sm:$0xf]
    %v7250 = vld [vmem:[#allocation25 + $0x4c] sm:$0xf]
    %v7251 = vld [vmem:[#allocation25 + $0x50] sm:$0xf]
    %v7252 = vld [vmem:[#allocation25 + $0x54] sm:$0xf]
    %v7253 = vld [vmem:[#allocation25 + $0x58] sm:$0xf]
    %v7254 = vld [vmem:[#allocation25 + $0x5c] sm:$0xf]
    %v7255 = vld [vmem:[#allocation25 + $0x60] sm:$0xf]
    %v7256 = vld [vmem:[#allocation25 + $0x64] sm:$0xf]
    %v7257 = vld [vmem:[#allocation25 + $0x68] sm:$0xf]
    %v7258 = vld [vmem:[#allocation25 + $0x6c] sm:$0xf]
    %v7259 = vld [vmem:[#allocation25 + $0x70] sm:$0xf]
    %v7260 = vld [vmem:[#allocation25 + $0x74] sm:$0xf]
    %v7261 = vld [vmem:[#allocation25 + $0x78] sm:$0xf]
    %v7262 = vld [vmem:[#allocation25 + $0x7c] sm:$0xf]
    %v7263 = vld [vmem:[#allocation25 + $0x80] sm:$0xf]
    %v7264 = vld [vmem:[#allocation25 + $0x84] sm:$0xf]
    %v7265 = vld [vmem:[#allocation25 + $0x88] sm:$0xf]
    %v7266 = vld [vmem:[#allocation25 + $0x8c] sm:$0xf]
    %v7267 = vld [vmem:[#allocation25 + $0x90] sm:$0xf]
    %v7268 = vld [vmem:[#allocation25 + $0x94] sm:$0xf]
    %v7269 = vld [vmem:[#allocation25 + $0x98] sm:$0xf]
    %v7270 = vld [vmem:[#allocation25 + $0x9c] sm:$0xf]
    %v7271 = vld [vmem:[#allocation25 + $0xa0] sm:$0xf]
    %v7272 = vld [vmem:[#allocation25 + $0xa4] sm:$0xf]
    %v7273 = vld [vmem:[#allocation25 + $0xa8] sm:$0xf]
    %v7274 = vld [vmem:[#allocation25 + $0xac] sm:$0xf]
    %v7275 = vld [vmem:[#allocation25 + $0xb0] sm:$0xf]
    %v7276 = vld [vmem:[#allocation25 + $0xb4] sm:$0xf]
    %v7277 = vld [vmem:[#allocation25 + $0xb8] sm:$0xf]
    %v7278 = vld [vmem:[#allocation25 + $0xbc] sm:$0xf]
    %v7279 = vld [vmem:[#allocation25 + $0xc0] sm:$0xf]
    %v7280 = vld [vmem:[#allocation25 + $0xc4] sm:$0xf]
    %v7281 = vld [vmem:[#allocation25 + $0xc8] sm:$0xf]
    %v7282 = vld [vmem:[#allocation25 + $0xcc] sm:$0xf]
    %v7283 = vld [vmem:[#allocation25 + $0xd0] sm:$0xf]
    %v7284 = vld [vmem:[#allocation25 + $0xd4] sm:$0xf]
    %v7285 = vld [vmem:[#allocation25 + $0xd8] sm:$0xf]
    %v7286 = vld [vmem:[#allocation25 + $0xdc] sm:$0xf]
    %v7287 = vld [vmem:[#allocation25 + $0xe0] sm:$0xf]
    %v7288 = vld [vmem:[#allocation25 + $0xe4] sm:$0xf]
    %v7289 = vld [vmem:[#allocation25 + $0xe8] sm:$0xf]
    %v7290 = vld [vmem:[#allocation25 + $0xec] sm:$0xf]
    %v7291 = vld [vmem:[#allocation25 + $0xf0] sm:$0xf]
    %v7292 = vld [vmem:[#allocation25 + $0xf4] sm:$0xf]
    %v7293 = vld [vmem:[#allocation25 + $0xf8] sm:$0xf]
    %v7294 = vld [vmem:[#allocation25 + $0xfc] sm:$0xf]
    %v7295 = vld [vmem:[#allocation48] sm:$0x1]
    %v7297 = vlaneseq
    %v7298 = vshrl.u32 %v7297, 7
    %v7299 = vsub.s32 0, %v7298
    %v7300 = vrot.slane %v7295, %v7299
    %v7366 = vunpack.c.l.b16 %v7231
    %v7367 = vunpack.c.l.b16 %v7232
    %v7368 = vunpack.c.l.b16 %v7233
    %v7369 = vunpack.c.l.b16 %v7234
    %v7370 = vunpack.c.l.b16 %v7235
    %v7371 = vunpack.c.l.b16 %v7236
    %v7372 = vunpack.c.l.b16 %v7237
    %v7373 = vunpack.c.l.b16 %v7238
    %v7374 = vunpack.c.l.b16 %v7239
    %v7375 = vunpack.c.l.b16 %v7240
    %v7376 = vunpack.c.l.b16 %v7241
    %v7377 = vunpack.c.l.b16 %v7242
    %v7378 = vunpack.c.l.b16 %v7243
    %v7379 = vunpack.c.l.b16 %v7244
    %v7380 = vunpack.c.l.b16 %v7245
    %v7381 = vunpack.c.l.b16 %v7246
    %v7382 = vunpack.c.l.b16 %v7247
    %v7383 = vunpack.c.l.b16 %v7248
    %v7384 = vunpack.c.l.b16 %v7249
    %v7385 = vunpack.c.l.b16 %v7250
    %v7386 = vunpack.c.l.b16 %v7251
    %v7387 = vunpack.c.l.b16 %v7252
    %v7388 = vunpack.c.l.b16 %v7253
    %v7389 = vunpack.c.l.b16 %v7254
    %v7390 = vunpack.c.l.b16 %v7255
    %v7391 = vunpack.c.l.b16 %v7256
    %v7392 = vunpack.c.l.b16 %v7257
    %v7393 = vunpack.c.l.b16 %v7258
    %v7394 = vunpack.c.l.b16 %v7259
    %v7395 = vunpack.c.l.b16 %v7260
    %v7396 = vunpack.c.l.b16 %v7261
    %v7397 = vunpack.c.l.b16 %v7262
    %v7398 = vunpack.c.l.b16 %v7263
    %v7399 = vunpack.c.l.b16 %v7264
    %v7400 = vunpack.c.l.b16 %v7265
    %v7401 = vunpack.c.l.b16 %v7266
    %v7402 = vunpack.c.l.b16 %v7267
    %v7403 = vunpack.c.l.b16 %v7268
    %v7404 = vunpack.c.l.b16 %v7269
    %v7405 = vunpack.c.l.b16 %v7270
    %v7406 = vunpack.c.l.b16 %v7271
    %v7407 = vunpack.c.l.b16 %v7272
    %v7408 = vunpack.c.l.b16 %v7273
    %v7409 = vunpack.c.l.b16 %v7274
    %v7410 = vunpack.c.l.b16 %v7275
    %v7411 = vunpack.c.l.b16 %v7276
    %v7412 = vunpack.c.l.b16 %v7277
    %v7413 = vunpack.c.l.b16 %v7278
    %v7414 = vunpack.c.l.b16 %v7279
    %v7415 = vunpack.c.l.b16 %v7280
    %v7416 = vunpack.c.l.b16 %v7281
    %v7417 = vunpack.c.l.b16 %v7282
    %v7418 = vunpack.c.l.b16 %v7283
    %v7419 = vunpack.c.l.b16 %v7284
    %v7420 = vunpack.c.l.b16 %v7285
    %v7421 = vunpack.c.l.b16 %v7286
    %v7422 = vunpack.c.l.b16 %v7287
    %v7423 = vunpack.c.l.b16 %v7288
    %v7424 = vunpack.c.l.b16 %v7289
    %v7425 = vunpack.c.l.b16 %v7290
    %v7426 = vunpack.c.l.b16 %v7291
    %v7427 = vunpack.c.l.b16 %v7292
    %v7428 = vunpack.c.l.b16 %v7293
    %v7429 = vunpack.c.l.b16 %v7294
    %v7430 = vpack.c.b16 %v7367, %v7366
    %v7431 = vpack.c.b16 %v7369, %v7368
    %v7432 = vpack.c.b16 %v7371, %v7370
    %v7433 = vpack.c.b16 %v7373, %v7372
    %v7434 = vpack.c.b16 %v7375, %v7374
    %v7435 = vpack.c.b16 %v7377, %v7376
    %v7436 = vpack.c.b16 %v7379, %v7378
    %v7437 = vpack.c.b16 %v7381, %v7380
    %v7438 = vpack.c.b16 %v7383, %v7382
    %v7439 = vpack.c.b16 %v7385, %v7384
    %v7440 = vpack.c.b16 %v7387, %v7386
    %v7441 = vpack.c.b16 %v7389, %v7388
    %v7442 = vpack.c.b16 %v7391, %v7390
    %v7443 = vpack.c.b16 %v7393, %v7392
    %v7444 = vpack.c.b16 %v7395, %v7394
    %v7445 = vpack.c.b16 %v7397, %v7396
    %v7446 = vpack.c.b16 %v7399, %v7398
    %v7447 = vpack.c.b16 %v7401, %v7400
    %v7448 = vpack.c.b16 %v7403, %v7402
    %v7449 = vpack.c.b16 %v7405, %v7404
    %v7450 = vpack.c.b16 %v7407, %v7406
    %v7451 = vpack.c.b16 %v7409, %v7408
    %v7452 = vpack.c.b16 %v7411, %v7410
    %v7453 = vpack.c.b16 %v7413, %v7412
    %v7454 = vpack.c.b16 %v7415, %v7414
    %v7455 = vpack.c.b16 %v7417, %v7416
    %v7456 = vpack.c.b16 %v7419, %v7418
    %v7457 = vpack.c.b16 %v7421, %v7420
    %v7458 = vpack.c.b16 %v7423, %v7422
    %v7459 = vpack.c.b16 %v7425, %v7424
    %v7460 = vpack.c.b16 %v7427, %v7426
    %v7461 = vpack.c.b16 %v7429, %v7428
    %7494 = vmatprep.subr.bf16.mxu0 0
    %7495 = vmatpush1.bf16.msra.mxu0 %v7437
    %7496 = vmatprep.subr.bf16.mxu0 0
    %7497 = vmatpush1.bf16.msra.mxu0 %v7436
    %7498 = vmatprep.subr.bf16.mxu0 0
    %7499 = vmatpush1.bf16.msra.mxu0 %v7435
    %7500 = vmatprep.subr.bf16.mxu0 0
    %7501 = vmatpush1.bf16.msra.mxu0 %v7434
    %7502 = vmatprep.subr.bf16.mxu0 0
    %7503 = vmatpush1.bf16.msra.mxu0 %v7433
    %7504 = vmatprep.subr.bf16.mxu0 0
    %7505 = vmatpush1.bf16.msra.mxu0 %v7432
    %7506 = vmatprep.subr.bf16.mxu0 0
    %7507 = vmatpush1.bf16.msra.mxu0 %v7431
    %7508 = vmatprep.subr.bf16.mxu0 0
    %7509 = vmatpush1.bf16.msra.mxu0 %v7430
    %7510 = vmatprep.subr.bf16.mxu0 0
    %7511 = vmatpush2.bf16.msra.mxu0 %v7445
    %7512 = vmatprep.subr.bf16.mxu0 0
    %7513 = vmatpush2.bf16.msra.mxu0 %v7444
    %7514 = vmatprep.subr.bf16.mxu0 0
    %7515 = vmatpush2.bf16.msra.mxu0 %v7443
    %7516 = vmatprep.subr.bf16.mxu0 0
    %7517 = vmatpush2.bf16.msra.mxu0 %v7442
    %7518 = vmatprep.subr.bf16.mxu0 0
    %7519 = vmatpush2.bf16.msra.mxu0 %v7441
    %7520 = vmatprep.subr.bf16.mxu0 0
    %7521 = vmatpush2.bf16.msra.mxu0 %v7440
    %7522 = vmatprep.subr.bf16.mxu0 0
    %7523 = vmatpush2.bf16.msra.mxu0 %v7439
    %7524 = vmatprep.subr.bf16.mxu0 0
    %7525 = vmatpush2.bf16.msra.mxu0 %v7438
    %7526 = vmatprep.mubr.bf16.mxu0 %v7228
    %7527 = vmatmul.mubr.bf16.gmra.mxu0 %v7227
    %v7528 = vpop.f32.mrf.mxu0
    %v7529 = vadd.f32 %v7300, %v7528
    %v7530 = vpop.f32.mrf.mxu0
    %v7531 = vpop.f32.mrf.mxu0
    %v7532 = vpop.f32.mrf.mxu0
    %7533 = vdwg.mxu0
    %7534 = vmatprep.subr.bf16.mxu0 0
    %7535 = vmatpush1.bf16.msra.mxu0 %v7453
    %7536 = vmatprep.subr.bf16.mxu0 0
    %7537 = vmatpush1.bf16.msra.mxu0 %v7452
    %7538 = vmatprep.subr.bf16.mxu0 0
    %7539 = vmatpush1.bf16.msra.mxu0 %v7451
    %7540 = vmatprep.subr.bf16.mxu0 0
    %7541 = vmatpush1.bf16.msra.mxu0 %v7450
    %7542 = vmatprep.subr.bf16.mxu0 0
    %7543 = vmatpush1.bf16.msra.mxu0 %v7449
    %7544 = vmatprep.subr.bf16.mxu0 0
    %7545 = vmatpush1.bf16.msra.mxu0 %v7448
    %7546 = vmatprep.subr.bf16.mxu0 0
    %7547 = vmatpush1.bf16.msra.mxu0 %v7447
    %7548 = vmatprep.subr.bf16.mxu0 0
    %7549 = vmatpush1.bf16.msra.mxu0 %v7446
    %7550 = vmatprep.subr.bf16.mxu0 0
    %7551 = vmatpush2.bf16.msra.mxu0 %v7461
    %7552 = vmatprep.subr.bf16.mxu0 0
    %7553 = vmatpush2.bf16.msra.mxu0 %v7460
    %7554 = vmatprep.subr.bf16.mxu0 0
    %7555 = vmatpush2.bf16.msra.mxu0 %v7459
    %7556 = vmatprep.subr.bf16.mxu0 0
    %7557 = vmatpush2.bf16.msra.mxu0 %v7458
    %7558 = vmatprep.subr.bf16.mxu0 0
    %7559 = vmatpush2.bf16.msra.mxu0 %v7457
    %7560 = vmatprep.subr.bf16.mxu0 0
    %7561 = vmatpush2.bf16.msra.mxu0 %v7456
    %7562 = vmatprep.subr.bf16.mxu0 0
    %7563 = vmatpush2.bf16.msra.mxu0 %v7455
    %7564 = vmatprep.subr.bf16.mxu0 0
    %7565 = vmatpush2.bf16.msra.mxu0 %v7454
    %7566 = vmatprep.mubr.bf16.mxu0 %v7230
    %7567 = vmatmul.mubr.bf16.gmra.mxu0 %v7229
    %v7568 = vpop.f32.mrf.mxu0
    %v7569 = vadd.f32 %v7529, %v7568
    %v7570 = vpop.f32.mrf.mxu0
    %v7571 = vpop.f32.mrf.mxu0
    %v7572 = vpop.f32.mrf.mxu0
    %7573 = vdwg.mxu0
    %v7574 = vmax.f32 %v7569, 0.0
    %s7575 = sshll.u32 %s847, 4
    %7576 = dma.done %s4032, %s7575
    %v7577 = vpack.c.bf16 %v7574, %v7574
    %v7578 = vld [vmem:[#allocation26] sm:$0xff]
    %v7579 = vld [vmem:[#allocation26 + $0x8] sm:$0xff]
    %v7580 = vld [vmem:[#allocation26 + $0x10] sm:$0xff]
    %v7581 = vld [vmem:[#allocation26 + $0x18] sm:$0xff]
    %v7582 = vld [vmem:[#allocation26 + $0x20] sm:$0xff]
    %v7583 = vld [vmem:[#allocation26 + $0x28] sm:$0xff]
    %v7584 = vld [vmem:[#allocation26 + $0x30] sm:$0xff]
    %v7585 = vld [vmem:[#allocation26 + $0x38] sm:$0xff]
    %v7586 = vld [vmem:[#allocation26 + $0x40] sm:$0xff]
    %v7587 = vld [vmem:[#allocation26 + $0x48] sm:$0xff]
    %v7588 = vld [vmem:[#allocation26 + $0x50] sm:$0xff]
    %v7589 = vld [vmem:[#allocation26 + $0x58] sm:$0xff]
    %v7590 = vld [vmem:[#allocation26 + $0x60] sm:$0xff]
    %v7591 = vld [vmem:[#allocation26 + $0x68] sm:$0xff]
    %v7592 = vld [vmem:[#allocation26 + $0x70] sm:$0xff]
    %v7593 = vld [vmem:[#allocation26 + $0x78] sm:$0xff]
    %v7594 = vld [vmem:[#allocation49] sm:$0x3]
    %v7596 = vlaneseq
    %v7597 = vshrl.u32 %v7596, 7
    %v7598 = vsub.s32 0, %v7597
    %v7599 = vrot.slane %v7594, %v7598
    %v7600 = vlaneseq
    %v7601 = vshrl.u32 %v7600, 7
    %v7602 = vsub.s32 1, %v7601
    %v7603 = vrot.slane %v7594, %v7602
    %v7622 = vunpack.c.l.b16 %v7578
    %v7623 = vunpack.c.h.b16 %v7578
    %v7624 = vunpack.c.l.b16 %v7579
    %v7625 = vunpack.c.h.b16 %v7579
    %v7626 = vunpack.c.l.b16 %v7580
    %v7627 = vunpack.c.h.b16 %v7580
    %v7628 = vunpack.c.l.b16 %v7581
    %v7629 = vunpack.c.h.b16 %v7581
    %v7630 = vunpack.c.l.b16 %v7582
    %v7631 = vunpack.c.h.b16 %v7582
    %v7632 = vunpack.c.l.b16 %v7583
    %v7633 = vunpack.c.h.b16 %v7583
    %v7634 = vunpack.c.l.b16 %v7584
    %v7635 = vunpack.c.h.b16 %v7584
    %v7636 = vunpack.c.l.b16 %v7585
    %v7637 = vunpack.c.h.b16 %v7585
    %v7638 = vunpack.c.l.b16 %v7586
    %v7639 = vunpack.c.h.b16 %v7586
    %v7640 = vunpack.c.l.b16 %v7587
    %v7641 = vunpack.c.h.b16 %v7587
    %v7642 = vunpack.c.l.b16 %v7588
    %v7643 = vunpack.c.h.b16 %v7588
    %v7644 = vunpack.c.l.b16 %v7589
    %v7645 = vunpack.c.h.b16 %v7589
    %v7646 = vunpack.c.l.b16 %v7590
    %v7647 = vunpack.c.h.b16 %v7590
    %v7648 = vunpack.c.l.b16 %v7591
    %v7649 = vunpack.c.h.b16 %v7591
    %v7650 = vunpack.c.l.b16 %v7592
    %v7651 = vunpack.c.h.b16 %v7592
    %v7652 = vunpack.c.l.b16 %v7593
    %v7653 = vunpack.c.h.b16 %v7593
    %v7654 = vpack.c.b16 %v7624, %v7622
    %v7655 = vpack.c.b16 %v7625, %v7623
    %v7656 = vpack.c.b16 %v7628, %v7626
    %v7657 = vpack.c.b16 %v7629, %v7627
    %v7658 = vpack.c.b16 %v7632, %v7630
    %v7659 = vpack.c.b16 %v7633, %v7631
    %v7660 = vpack.c.b16 %v7636, %v7634
    %v7661 = vpack.c.b16 %v7637, %v7635
    %v7662 = vpack.c.b16 %v7640, %v7638
    %v7663 = vpack.c.b16 %v7641, %v7639
    %v7664 = vpack.c.b16 %v7644, %v7642
    %v7665 = vpack.c.b16 %v7645, %v7643
    %v7666 = vpack.c.b16 %v7648, %v7646
    %v7667 = vpack.c.b16 %v7649, %v7647
    %v7668 = vpack.c.b16 %v7652, %v7650
    %v7669 = vpack.c.b16 %v7653, %v7651
    %7686 = vmatprep.subr.bf16.mxu0 %v7669
    %7687 = vmatpush1.bf16.msra.mxu0 %v7668
    %7688 = vmatprep.subr.bf16.mxu0 %v7667
    %7689 = vmatpush1.bf16.msra.mxu0 %v7666
    %7690 = vmatprep.subr.bf16.mxu0 %v7665
    %7691 = vmatpush1.bf16.msra.mxu0 %v7664
    %7692 = vmatprep.subr.bf16.mxu0 %v7663
    %7693 = vmatpush1.bf16.msra.mxu0 %v7662
    %7694 = vmatprep.subr.bf16.mxu0 %v7661
    %7695 = vmatpush1.bf16.msra.mxu0 %v7660
    %7696 = vmatprep.subr.bf16.mxu0 %v7659
    %7697 = vmatpush1.bf16.msra.mxu0 %v7658
    %7698 = vmatprep.subr.bf16.mxu0 %v7657
    %7699 = vmatpush1.bf16.msra.mxu0 %v7656
    %7700 = vmatprep.subr.bf16.mxu0 %v7655
    %7701 = vmatpush1.bf16.msra.mxu0 %v7654
    %7702 = vmatprep.subr.bf16.mxu0 0
    %7703 = vmatpush2.bf16.msra.mxu0 0
    %7704 = vmatprep.subr.bf16.mxu0 0
    %7705 = vmatpush2.bf16.msra.mxu0 0
    %7706 = vmatprep.subr.bf16.mxu0 0
    %7707 = vmatpush2.bf16.msra.mxu0 0
    %7708 = vmatprep.subr.bf16.mxu0 0
    %7709 = vmatpush2.bf16.msra.mxu0 0
    %7710 = vmatprep.subr.bf16.mxu0 0
    %7711 = vmatpush2.bf16.msra.mxu0 0
    %7712 = vmatprep.subr.bf16.mxu0 0
    %7713 = vmatpush2.bf16.msra.mxu0 0
    %7714 = vmatprep.subr.bf16.mxu0 0
    %7715 = vmatpush2.bf16.msra.mxu0 0
    %7716 = vmatprep.subr.bf16.mxu0 0
    %7717 = vmatpush2.bf16.msra.mxu0 0
    %7718 = vmatprep.mubr.bf16.mxu0 0
    %7719 = vmatmul.mubr.bf16.gmra.mxu0 %v7577
    %v7720 = vpop.f32.mrf.mxu0
    %v7721 = vadd.f32 %v7599, %v7720
    %v7722 = vpop.f32.mrf.mxu0
    %v7723 = vadd.f32 %v7603, %v7722
    %v7724 = vpop.f32.mrf.mxu0
    %v7725 = vpop.f32.mrf.mxu0
    %7726 = vdwg.mxu0
    %s7727 = sshll.u32 %s3545, 4
    %7728 = dma.done %s4228, %s7727
    %v7729 = vld [vmem:[#allocation27] sm:$0xff]
    %v7730 = vld [vmem:[#allocation27 + $0x8] sm:$0xff]
    %v7731 = vld [vmem:[#allocation27 + $0x10] sm:$0xff]
    %v7732 = vld [vmem:[#allocation27 + $0x18] sm:$0xff]
    %v7733 = vld [vmem:[#allocation27 + $0x20] sm:$0xff]
    %v7734 = vld [vmem:[#allocation27 + $0x28] sm:$0xff]
    %v7735 = vld [vmem:[#allocation27 + $0x30] sm:$0xff]
    %v7736 = vld [vmem:[#allocation27 + $0x38] sm:$0xff]
    %v7737 = vld [vmem:[#allocation27 + $0x40] sm:$0xff]
    %v7738 = vld [vmem:[#allocation27 + $0x48] sm:$0xff]
    %v7739 = vld [vmem:[#allocation27 + $0x50] sm:$0xff]
    %v7740 = vld [vmem:[#allocation27 + $0x58] sm:$0xff]
    %v7741 = vld [vmem:[#allocation27 + $0x60] sm:$0xff]
    %v7742 = vld [vmem:[#allocation27 + $0x68] sm:$0xff]
    %v7743 = vld [vmem:[#allocation27 + $0x70] sm:$0xff]
    %v7744 = vld [vmem:[#allocation27 + $0x78] sm:$0xff]
    %v7745 = vld [vmem:[#allocation27 + $0x80] sm:$0xff]
    %v7746 = vld [vmem:[#allocation27 + $0x88] sm:$0xff]
    %v7747 = vld [vmem:[#allocation27 + $0x90] sm:$0xff]
    %v7748 = vld [vmem:[#allocation27 + $0x98] sm:$0xff]
    %v7749 = vld [vmem:[#allocation27 + $0xa0] sm:$0xff]
    %v7750 = vld [vmem:[#allocation27 + $0xa8] sm:$0xff]
    %v7751 = vld [vmem:[#allocation27 + $0xb0] sm:$0xff]
    %v7752 = vld [vmem:[#allocation27 + $0xb8] sm:$0xff]
    %v7753 = vld [vmem:[#allocation27 + $0xc0] sm:$0xff]
    %v7754 = vld [vmem:[#allocation27 + $0xc8] sm:$0xff]
    %v7755 = vld [vmem:[#allocation27 + $0xd0] sm:$0xff]
    %v7756 = vld [vmem:[#allocation27 + $0xd8] sm:$0xff]
    %v7757 = vld [vmem:[#allocation27 + $0xe0] sm:$0xff]
    %v7758 = vld [vmem:[#allocation27 + $0xe8] sm:$0xff]
    %v7759 = vld [vmem:[#allocation27 + $0xf0] sm:$0xff]
    %v7760 = vld [vmem:[#allocation27 + $0xf8] sm:$0xff]
    %v7761 = vld [vmem:[#allocation27 + $0x100] sm:$0xff]
    %v7762 = vld [vmem:[#allocation27 + $0x108] sm:$0xff]
    %v7763 = vld [vmem:[#allocation27 + $0x110] sm:$0xff]
    %v7764 = vld [vmem:[#allocation27 + $0x118] sm:$0xff]
    %v7765 = vld [vmem:[#allocation27 + $0x120] sm:$0xff]
    %v7766 = vld [vmem:[#allocation27 + $0x128] sm:$0xff]
    %v7767 = vld [vmem:[#allocation27 + $0x130] sm:$0xff]
    %v7768 = vld [vmem:[#allocation27 + $0x138] sm:$0xff]
    %v7769 = vld [vmem:[#allocation27 + $0x140] sm:$0xff]
    %v7770 = vld [vmem:[#allocation27 + $0x148] sm:$0xff]
    %v7771 = vld [vmem:[#allocation27 + $0x150] sm:$0xff]
    %v7772 = vld [vmem:[#allocation27 + $0x158] sm:$0xff]
    %v7773 = vld [vmem:[#allocation27 + $0x160] sm:$0xff]
    %v7774 = vld [vmem:[#allocation27 + $0x168] sm:$0xff]
    %v7775 = vld [vmem:[#allocation27 + $0x170] sm:$0xff]
    %v7776 = vld [vmem:[#allocation27 + $0x178] sm:$0xff]
    %v7777 = vld [vmem:[#allocation27 + $0x180] sm:$0xff]
    %v7778 = vld [vmem:[#allocation27 + $0x188] sm:$0xff]
    %v7779 = vld [vmem:[#allocation27 + $0x190] sm:$0xff]
    %v7780 = vld [vmem:[#allocation27 + $0x198] sm:$0xff]
    %v7781 = vld [vmem:[#allocation27 + $0x1a0] sm:$0xff]
    %v7782 = vld [vmem:[#allocation27 + $0x1a8] sm:$0xff]
    %v7783 = vld [vmem:[#allocation27 + $0x1b0] sm:$0xff]
    %v7784 = vld [vmem:[#allocation27 + $0x1b8] sm:$0xff]
    %v7785 = vld [vmem:[#allocation27 + $0x1c0] sm:$0xff]
    %v7786 = vld [vmem:[#allocation27 + $0x1c8] sm:$0xff]
    %v7787 = vld [vmem:[#allocation27 + $0x1d0] sm:$0xff]
    %v7788 = vld [vmem:[#allocation27 + $0x1d8] sm:$0xff]
    %v7789 = vld [vmem:[#allocation27 + $0x1e0] sm:$0xff]
    %v7790 = vld [vmem:[#allocation27 + $0x1e8] sm:$0xff]
    %v7791 = vld [vmem:[#allocation27 + $0x1f0] sm:$0xff]
    %v7792 = vld [vmem:[#allocation27 + $0x1f8] sm:$0xff]
    %v7793 = vld [vmem:[#allocation51] sm:$0x3]
    %v7795 = vlaneseq
    %v7796 = vshrl.u32 %v7795, 7
    %v7797 = vsub.s32 0, %v7796
    %v7798 = vrot.slane %v7793, %v7797
    %v7799 = vlaneseq
    %v7800 = vshrl.u32 %v7799, 7
    %v7801 = vsub.s32 1, %v7800
    %v7802 = vrot.slane %v7793, %v7801
    %v7869 = vunpack.c.l.b16 %v7729
    %v7870 = vunpack.c.h.b16 %v7729
    %v7871 = vunpack.c.l.b16 %v7730
    %v7872 = vunpack.c.h.b16 %v7730
    %v7873 = vunpack.c.l.b16 %v7731
    %v7874 = vunpack.c.h.b16 %v7731
    %v7875 = vunpack.c.l.b16 %v7732
    %v7876 = vunpack.c.h.b16 %v7732
    %v7877 = vunpack.c.l.b16 %v7733
    %v7878 = vunpack.c.h.b16 %v7733
    %v7879 = vunpack.c.l.b16 %v7734
    %v7880 = vunpack.c.h.b16 %v7734
    %v7881 = vunpack.c.l.b16 %v7735
    %v7882 = vunpack.c.h.b16 %v7735
    %v7883 = vunpack.c.l.b16 %v7736
    %v7884 = vunpack.c.h.b16 %v7736
    %v7885 = vunpack.c.l.b16 %v7737
    %v7886 = vunpack.c.h.b16 %v7737
    %v7887 = vunpack.c.l.b16 %v7738
    %v7888 = vunpack.c.h.b16 %v7738
    %v7889 = vunpack.c.l.b16 %v7739
    %v7890 = vunpack.c.h.b16 %v7739
    %v7891 = vunpack.c.l.b16 %v7740
    %v7892 = vunpack.c.h.b16 %v7740
    %v7893 = vunpack.c.l.b16 %v7741
    %v7894 = vunpack.c.h.b16 %v7741
    %v7895 = vunpack.c.l.b16 %v7742
    %v7896 = vunpack.c.h.b16 %v7742
    %v7897 = vunpack.c.l.b16 %v7743
    %v7898 = vunpack.c.h.b16 %v7743
    %v7899 = vunpack.c.l.b16 %v7744
    %v7900 = vunpack.c.h.b16 %v7744
    %v7901 = vunpack.c.l.b16 %v7745
    %v7902 = vunpack.c.h.b16 %v7745
    %v7903 = vunpack.c.l.b16 %v7746
    %v7904 = vunpack.c.h.b16 %v7746
    %v7905 = vunpack.c.l.b16 %v7747
    %v7906 = vunpack.c.h.b16 %v7747
    %v7907 = vunpack.c.l.b16 %v7748
    %v7908 = vunpack.c.h.b16 %v7748
    %v7909 = vunpack.c.l.b16 %v7749
    %v7910 = vunpack.c.h.b16 %v7749
    %v7911 = vunpack.c.l.b16 %v7750
    %v7912 = vunpack.c.h.b16 %v7750
    %v7913 = vunpack.c.l.b16 %v7751
    %v7914 = vunpack.c.h.b16 %v7751
    %v7915 = vunpack.c.l.b16 %v7752
    %v7916 = vunpack.c.h.b16 %v7752
    %v7917 = vunpack.c.l.b16 %v7753
    %v7918 = vunpack.c.h.b16 %v7753
    %v7919 = vunpack.c.l.b16 %v7754
    %v7920 = vunpack.c.h.b16 %v7754
    %v7921 = vunpack.c.l.b16 %v7755
    %v7922 = vunpack.c.h.b16 %v7755
    %v7923 = vunpack.c.l.b16 %v7756
    %v7924 = vunpack.c.h.b16 %v7756
    %v7925 = vunpack.c.l.b16 %v7757
    %v7926 = vunpack.c.h.b16 %v7757
    %v7927 = vunpack.c.l.b16 %v7758
    %v7928 = vunpack.c.h.b16 %v7758
    %v7929 = vunpack.c.l.b16 %v7759
    %v7930 = vunpack.c.h.b16 %v7759
    %v7931 = vunpack.c.l.b16 %v7760
    %v7932 = vunpack.c.h.b16 %v7760
    %v7933 = vunpack.c.l.b16 %v7761
    %v7934 = vunpack.c.h.b16 %v7761
    %v7935 = vunpack.c.l.b16 %v7762
    %v7936 = vunpack.c.h.b16 %v7762
    %v7937 = vunpack.c.l.b16 %v7763
    %v7938 = vunpack.c.h.b16 %v7763
    %v7939 = vunpack.c.l.b16 %v7764
    %v7940 = vunpack.c.h.b16 %v7764
    %v7941 = vunpack.c.l.b16 %v7765
    %v7942 = vunpack.c.h.b16 %v7765
    %v7943 = vunpack.c.l.b16 %v7766
    %v7944 = vunpack.c.h.b16 %v7766
    %v7945 = vunpack.c.l.b16 %v7767
    %v7946 = vunpack.c.h.b16 %v7767
    %v7947 = vunpack.c.l.b16 %v7768
    %v7948 = vunpack.c.h.b16 %v7768
    %v7949 = vunpack.c.l.b16 %v7769
    %v7950 = vunpack.c.h.b16 %v7769
    %v7951 = vunpack.c.l.b16 %v7770
    %v7952 = vunpack.c.h.b16 %v7770
    %v7953 = vunpack.c.l.b16 %v7771
    %v7954 = vunpack.c.h.b16 %v7771
    %v7955 = vunpack.c.l.b16 %v7772
    %v7956 = vunpack.c.h.b16 %v7772
    %v7957 = vunpack.c.l.b16 %v7773
    %v7958 = vunpack.c.h.b16 %v7773
    %v7959 = vunpack.c.l.b16 %v7774
    %v7960 = vunpack.c.h.b16 %v7774
    %v7961 = vunpack.c.l.b16 %v7775
    %v7962 = vunpack.c.h.b16 %v7775
    %v7963 = vunpack.c.l.b16 %v7776
    %v7964 = vunpack.c.h.b16 %v7776
    %v7965 = vunpack.c.l.b16 %v7777
    %v7966 = vunpack.c.h.b16 %v7777
    %v7967 = vunpack.c.l.b16 %v7778
    %v7968 = vunpack.c.h.b16 %v7778
    %v7969 = vunpack.c.l.b16 %v7779
    %v7970 = vunpack.c.h.b16 %v7779
    %v7971 = vunpack.c.l.b16 %v7780
    %v7972 = vunpack.c.h.b16 %v7780
    %v7973 = vunpack.c.l.b16 %v7781
    %v7974 = vunpack.c.h.b16 %v7781
    %v7975 = vunpack.c.l.b16 %v7782
    %v7976 = vunpack.c.h.b16 %v7782
    %v7977 = vunpack.c.l.b16 %v7783
    %v7978 = vunpack.c.h.b16 %v7783
    %v7979 = vunpack.c.l.b16 %v7784
    %v7980 = vunpack.c.h.b16 %v7784
    %v7981 = vunpack.c.l.b16 %v7785
    %v7982 = vunpack.c.h.b16 %v7785
    %v7983 = vunpack.c.l.b16 %v7786
    %v7984 = vunpack.c.h.b16 %v7786
    %v7985 = vunpack.c.l.b16 %v7787
    %v7986 = vunpack.c.h.b16 %v7787
    %v7987 = vunpack.c.l.b16 %v7788
    %v7988 = vunpack.c.h.b16 %v7788
    %v7989 = vunpack.c.l.b16 %v7789
    %v7990 = vunpack.c.h.b16 %v7789
    %v7991 = vunpack.c.l.b16 %v7790
    %v7992 = vunpack.c.h.b16 %v7790
    %v7993 = vunpack.c.l.b16 %v7791
    %v7994 = vunpack.c.h.b16 %v7791
    %v7995 = vunpack.c.l.b16 %v7792
    %v7996 = vunpack.c.h.b16 %v7792
    %v7997 = vpack.c.b16 %v7871, %v7869
    %v7998 = vpack.c.b16 %v7872, %v7870
    %v7999 = vpack.c.b16 %v7875, %v7873
    %v8000 = vpack.c.b16 %v7876, %v7874
    %v8001 = vpack.c.b16 %v7879, %v7877
    %v8002 = vpack.c.b16 %v7880, %v7878
    %v8003 = vpack.c.b16 %v7883, %v7881
    %v8004 = vpack.c.b16 %v7884, %v7882
    %v8005 = vpack.c.b16 %v7887, %v7885
    %v8006 = vpack.c.b16 %v7888, %v7886
    %v8007 = vpack.c.b16 %v7891, %v7889
    %v8008 = vpack.c.b16 %v7892, %v7890
    %v8009 = vpack.c.b16 %v7895, %v7893
    %v8010 = vpack.c.b16 %v7896, %v7894
    %v8011 = vpack.c.b16 %v7899, %v7897
    %v8012 = vpack.c.b16 %v7900, %v7898
    %v8013 = vpack.c.b16 %v7903, %v7901
    %v8014 = vpack.c.b16 %v7904, %v7902
    %v8015 = vpack.c.b16 %v7907, %v7905
    %v8016 = vpack.c.b16 %v7908, %v7906
    %v8017 = vpack.c.b16 %v7911, %v7909
    %v8018 = vpack.c.b16 %v7912, %v7910
    %v8019 = vpack.c.b16 %v7915, %v7913
    %v8020 = vpack.c.b16 %v7916, %v7914
    %v8021 = vpack.c.b16 %v7919, %v7917
    %v8022 = vpack.c.b16 %v7920, %v7918
    %v8023 = vpack.c.b16 %v7923, %v7921
    %v8024 = vpack.c.b16 %v7924, %v7922
    %v8025 = vpack.c.b16 %v7927, %v7925
    %v8026 = vpack.c.b16 %v7928, %v7926
    %v8027 = vpack.c.b16 %v7931, %v7929
    %v8028 = vpack.c.b16 %v7932, %v7930
    %v8029 = vpack.c.b16 %v7935, %v7933
    %v8030 = vpack.c.b16 %v7936, %v7934
    %v8031 = vpack.c.b16 %v7939, %v7937
    %v8032 = vpack.c.b16 %v7940, %v7938
    %v8033 = vpack.c.b16 %v7943, %v7941
    %v8034 = vpack.c.b16 %v7944, %v7942
    %v8035 = vpack.c.b16 %v7947, %v7945
    %v8036 = vpack.c.b16 %v7948, %v7946
    %v8037 = vpack.c.b16 %v7951, %v7949
    %v8038 = vpack.c.b16 %v7952, %v7950
    %v8039 = vpack.c.b16 %v7955, %v7953
    %v8040 = vpack.c.b16 %v7956, %v7954
    %v8041 = vpack.c.b16 %v7959, %v7957
    %v8042 = vpack.c.b16 %v7960, %v7958
    %v8043 = vpack.c.b16 %v7963, %v7961
    %v8044 = vpack.c.b16 %v7964, %v7962
    %v8045 = vpack.c.b16 %v7967, %v7965
    %v8046 = vpack.c.b16 %v7968, %v7966
    %v8047 = vpack.c.b16 %v7971, %v7969
    %v8048 = vpack.c.b16 %v7972, %v7970
    %v8049 = vpack.c.b16 %v7975, %v7973
    %v8050 = vpack.c.b16 %v7976, %v7974
    %v8051 = vpack.c.b16 %v7979, %v7977
    %v8052 = vpack.c.b16 %v7980, %v7978
    %v8053 = vpack.c.b16 %v7983, %v7981
    %v8054 = vpack.c.b16 %v7984, %v7982
    %v8055 = vpack.c.b16 %v7987, %v7985
    %v8056 = vpack.c.b16 %v7988, %v7986
    %v8057 = vpack.c.b16 %v7991, %v7989
    %v8058 = vpack.c.b16 %v7992, %v7990
    %v8059 = vpack.c.b16 %v7995, %v7993
    %v8060 = vpack.c.b16 %v7996, %v7994
    %8125 = vmatprep.subr.bf16.mxu0 %v8012
    %8126 = vmatpush1.bf16.msra.mxu0 %v8011
    %8127 = vmatprep.subr.bf16.mxu0 %v8010
    %8128 = vmatpush1.bf16.msra.mxu0 %v8009
    %8129 = vmatprep.subr.bf16.mxu0 %v8008
    %8130 = vmatpush1.bf16.msra.mxu0 %v8007
    %8131 = vmatprep.subr.bf16.mxu0 %v8006
    %8132 = vmatpush1.bf16.msra.mxu0 %v8005
    %8133 = vmatprep.subr.bf16.mxu0 %v8004
    %8134 = vmatpush1.bf16.msra.mxu0 %v8003
    %8135 = vmatprep.subr.bf16.mxu0 %v8002
    %8136 = vmatpush1.bf16.msra.mxu0 %v8001
    %8137 = vmatprep.subr.bf16.mxu0 %v8000
    %8138 = vmatpush1.bf16.msra.mxu0 %v7999
    %8139 = vmatprep.subr.bf16.mxu0 %v7998
    %8140 = vmatpush1.bf16.msra.mxu0 %v7997
    %8141 = vmatprep.subr.bf16.mxu0 %v8028
    %8142 = vmatpush2.bf16.msra.mxu0 %v8027
    %8143 = vmatprep.subr.bf16.mxu0 %v8026
    %8144 = vmatpush2.bf16.msra.mxu0 %v8025
    %8145 = vmatprep.subr.bf16.mxu0 %v8024
    %8146 = vmatpush2.bf16.msra.mxu0 %v8023
    %8147 = vmatprep.subr.bf16.mxu0 %v8022
    %8148 = vmatpush2.bf16.msra.mxu0 %v8021
    %8149 = vmatprep.subr.bf16.mxu0 %v8020
    %8150 = vmatpush2.bf16.msra.mxu0 %v8019
    %8151 = vmatprep.subr.bf16.mxu0 %v8018
    %8152 = vmatpush2.bf16.msra.mxu0 %v8017
    %8153 = vmatprep.subr.bf16.mxu0 %v8016
    %8154 = vmatpush2.bf16.msra.mxu0 %v8015
    %8155 = vmatprep.subr.bf16.mxu0 %v8014
    %8156 = vmatpush2.bf16.msra.mxu0 %v8013
    %8157 = vmatprep.mubr.bf16.mxu0 %v7228
    %8158 = vmatmul.mubr.bf16.gmra.mxu0 %v7227
    %v8159 = vpop.f32.mrf.mxu0
    %v8160 = vadd.f32 %v7798, %v8159
    %v8161 = vpop.f32.mrf.mxu0
    %v8162 = vadd.f32 %v7802, %v8161
    %v8163 = vpop.f32.mrf.mxu0
    %v8164 = vpop.f32.mrf.mxu0
    %8165 = vdwg.mxu0
    %8166 = vmatprep.subr.bf16.mxu0 %v8044
    %8167 = vmatpush1.bf16.msra.mxu0 %v8043
    %8168 = vmatprep.subr.bf16.mxu0 %v8042
    %8169 = vmatpush1.bf16.msra.mxu0 %v8041
    %8170 = vmatprep.subr.bf16.mxu0 %v8040
    %8171 = vmatpush1.bf16.msra.mxu0 %v8039
    %8172 = vmatprep.subr.bf16.mxu0 %v8038
    %8173 = vmatpush1.bf16.msra.mxu0 %v8037
    %8174 = vmatprep.subr.bf16.mxu0 %v8036
    %8175 = vmatpush1.bf16.msra.mxu0 %v8035
    %8176 = vmatprep.subr.bf16.mxu0 %v8034
    %8177 = vmatpush1.bf16.msra.mxu0 %v8033
    %8178 = vmatprep.subr.bf16.mxu0 %v8032
    %8179 = vmatpush1.bf16.msra.mxu0 %v8031
    %8180 = vmatprep.subr.bf16.mxu0 %v8030
    %8181 = vmatpush1.bf16.msra.mxu0 %v8029
    %8182 = vmatprep.subr.bf16.mxu0 %v8060
    %8183 = vmatpush2.bf16.msra.mxu0 %v8059
    %8184 = vmatprep.subr.bf16.mxu0 %v8058
    %8185 = vmatpush2.bf16.msra.mxu0 %v8057
    %8186 = vmatprep.subr.bf16.mxu0 %v8056
    %8187 = vmatpush2.bf16.msra.mxu0 %v8055
    %8188 = vmatprep.subr.bf16.mxu0 %v8054
    %8189 = vmatpush2.bf16.msra.mxu0 %v8053
    %8190 = vmatprep.subr.bf16.mxu0 %v8052
    %8191 = vmatpush2.bf16.msra.mxu0 %v8051
    %8192 = vmatprep.subr.bf16.mxu0 %v8050
    %8193 = vmatpush2.bf16.msra.mxu0 %v8049
    %8194 = vmatprep.subr.bf16.mxu0 %v8048
    %8195 = vmatpush2.bf16.msra.mxu0 %v8047
    %8196 = vmatprep.subr.bf16.mxu0 %v8046
    %8197 = vmatpush2.bf16.msra.mxu0 %v8045
    %8198 = vmatprep.mubr.bf16.mxu0 %v7230
    %8199 = vmatmul.mubr.bf16.gmra.mxu0 %v7229
    %v8200 = vpop.f32.mrf.mxu0
    %v8201 = vadd.f32 %v8160, %v8200
    %v8202 = vpop.f32.mrf.mxu0
    %v8203 = vadd.f32 %v8162, %v8202
    %v8204 = vpop.f32.mrf.mxu0
    %v8205 = vpop.f32.mrf.mxu0
    %8206 = vdwg.mxu0
    %v8207 = vadd.f32 %v7721, %v8201
    %v8208 = vadd.f32 %v7723, %v8203
    %v8209 = vmax.f32 %v8207, 0.0
    %v8210 = vmax.f32 %v8208, 0.0
    %v8211 = vmax.f32 %v8209, 0.0
    %v8212 = vmax.f32 %v8210, 0.0
    %s8213 = sshll.u32 %s3029, 4
    %8214 = dma.done %s4393, %s8213
    %v8215 = vpack.c.bf16 %v8211, %v8211
    %v8216 = vpack.c.bf16 %v8212, %v8212
    %v8217 = vld [vmem:[#allocation28] sm:$0xff]
    %v8218 = vld [vmem:[#allocation28 + $0x8] sm:$0xff]
    %v8219 = vld [vmem:[#allocation28 + $0x10] sm:$0xff]
    %v8220 = vld [vmem:[#allocation28 + $0x18] sm:$0xff]
    %v8221 = vld [vmem:[#allocation28 + $0x20] sm:$0xff]
    %v8222 = vld [vmem:[#allocation28 + $0x28] sm:$0xff]
    %v8223 = vld [vmem:[#allocation28 + $0x30] sm:$0xff]
    %v8224 = vld [vmem:[#allocation28 + $0x38] sm:$0xff]
    %v8225 = vld [vmem:[#allocation28 + $0x40] sm:$0xff]
    %v8226 = vld [vmem:[#allocation28 + $0x48] sm:$0xff]
    %v8227 = vld [vmem:[#allocation28 + $0x50] sm:$0xff]
    %v8228 = vld [vmem:[#allocation28 + $0x58] sm:$0xff]
    %v8229 = vld [vmem:[#allocation28 + $0x60] sm:$0xff]
    %v8230 = vld [vmem:[#allocation28 + $0x68] sm:$0xff]
    %v8231 = vld [vmem:[#allocation28 + $0x70] sm:$0xff]
    %v8232 = vld [vmem:[#allocation28 + $0x78] sm:$0xff]
    %v8233 = vld [vmem:[#allocation28 + $0x80] sm:$0xff]
    %v8234 = vld [vmem:[#allocation28 + $0x88] sm:$0xff]
    %v8235 = vld [vmem:[#allocation28 + $0x90] sm:$0xff]
    %v8236 = vld [vmem:[#allocation28 + $0x98] sm:$0xff]
    %v8237 = vld [vmem:[#allocation28 + $0xa0] sm:$0xff]
    %v8238 = vld [vmem:[#allocation28 + $0xa8] sm:$0xff]
    %v8239 = vld [vmem:[#allocation28 + $0xb0] sm:$0xff]
    %v8240 = vld [vmem:[#allocation28 + $0xb8] sm:$0xff]
    %v8241 = vld [vmem:[#allocation28 + $0xc0] sm:$0xff]
    %v8242 = vld [vmem:[#allocation28 + $0xc8] sm:$0xff]
    %v8243 = vld [vmem:[#allocation28 + $0xd0] sm:$0xff]
    %v8244 = vld [vmem:[#allocation28 + $0xd8] sm:$0xff]
    %v8245 = vld [vmem:[#allocation28 + $0xe0] sm:$0xff]
    %v8246 = vld [vmem:[#allocation28 + $0xe8] sm:$0xff]
    %v8247 = vld [vmem:[#allocation28 + $0xf0] sm:$0xff]
    %v8248 = vld [vmem:[#allocation28 + $0xf8] sm:$0xff]
    %v8249 = vld [vmem:[#allocation28 + $0x100] sm:$0xff]
    %v8250 = vld [vmem:[#allocation28 + $0x108] sm:$0xff]
    %v8251 = vld [vmem:[#allocation28 + $0x110] sm:$0xff]
    %v8252 = vld [vmem:[#allocation28 + $0x118] sm:$0xff]
    %v8253 = vld [vmem:[#allocation28 + $0x120] sm:$0xff]
    %v8254 = vld [vmem:[#allocation28 + $0x128] sm:$0xff]
    %v8255 = vld [vmem:[#allocation28 + $0x130] sm:$0xff]
    %v8256 = vld [vmem:[#allocation28 + $0x138] sm:$0xff]
    %v8257 = vld [vmem:[#allocation28 + $0x140] sm:$0xff]
    %v8258 = vld [vmem:[#allocation28 + $0x148] sm:$0xff]
    %v8259 = vld [vmem:[#allocation28 + $0x150] sm:$0xff]
    %v8260 = vld [vmem:[#allocation28 + $0x158] sm:$0xff]
    %v8261 = vld [vmem:[#allocation28 + $0x160] sm:$0xff]
    %v8262 = vld [vmem:[#allocation28 + $0x168] sm:$0xff]
    %v8263 = vld [vmem:[#allocation28 + $0x170] sm:$0xff]
    %v8264 = vld [vmem:[#allocation28 + $0x178] sm:$0xff]
    %v8265 = vld [vmem:[#allocation28 + $0x180] sm:$0xff]
    %v8266 = vld [vmem:[#allocation28 + $0x188] sm:$0xff]
    %v8267 = vld [vmem:[#allocation28 + $0x190] sm:$0xff]
    %v8268 = vld [vmem:[#allocation28 + $0x198] sm:$0xff]
    %v8269 = vld [vmem:[#allocation28 + $0x1a0] sm:$0xff]
    %v8270 = vld [vmem:[#allocation28 + $0x1a8] sm:$0xff]
    %v8271 = vld [vmem:[#allocation28 + $0x1b0] sm:$0xff]
    %v8272 = vld [vmem:[#allocation28 + $0x1b8] sm:$0xff]
    %v8273 = vld [vmem:[#allocation28 + $0x1c0] sm:$0xff]
    %v8274 = vld [vmem:[#allocation28 + $0x1c8] sm:$0xff]
    %v8275 = vld [vmem:[#allocation28 + $0x1d0] sm:$0xff]
    %v8276 = vld [vmem:[#allocation28 + $0x1d8] sm:$0xff]
    %v8277 = vld [vmem:[#allocation28 + $0x1e0] sm:$0xff]
    %v8278 = vld [vmem:[#allocation28 + $0x1e8] sm:$0xff]
    %v8279 = vld [vmem:[#allocation28 + $0x1f0] sm:$0xff]
    %v8280 = vld [vmem:[#allocation28 + $0x1f8] sm:$0xff]
    %v8281 = vld [vmem:[%s113] sm:$0xf]
    %v8283 = vlaneseq
    %v8284 = vshrl.u32 %v8283, 7
    %v8285 = vsub.s32 0, %v8284
    %v8286 = vrot.slane %v8281, %v8285
    %v8287 = vlaneseq
    %v8288 = vshrl.u32 %v8287, 7
    %v8289 = vsub.s32 1, %v8288
    %v8290 = vrot.slane %v8281, %v8289
    %v8291 = vlaneseq
    %v8292 = vshrl.u32 %v8291, 7
    %v8293 = vsub.s32 2, %v8292
    %v8294 = vrot.slane %v8281, %v8293
    %v8295 = vlaneseq
    %v8296 = vshrl.u32 %v8295, 7
    %v8297 = vsub.s32 3, %v8296
    %v8298 = vrot.slane %v8281, %v8297
    %v8367 = vunpack.c.l.b16 %v8217
    %v8368 = vunpack.c.h.b16 %v8217
    %v8369 = vunpack.c.l.b16 %v8218
    %v8370 = vunpack.c.h.b16 %v8218
    %v8371 = vunpack.c.l.b16 %v8219
    %v8372 = vunpack.c.h.b16 %v8219
    %v8373 = vunpack.c.l.b16 %v8220
    %v8374 = vunpack.c.h.b16 %v8220
    %v8375 = vunpack.c.l.b16 %v8221
    %v8376 = vunpack.c.h.b16 %v8221
    %v8377 = vunpack.c.l.b16 %v8222
    %v8378 = vunpack.c.h.b16 %v8222
    %v8379 = vunpack.c.l.b16 %v8223
    %v8380 = vunpack.c.h.b16 %v8223
    %v8381 = vunpack.c.l.b16 %v8224
    %v8382 = vunpack.c.h.b16 %v8224
    %v8383 = vunpack.c.l.b16 %v8225
    %v8384 = vunpack.c.h.b16 %v8225
    %v8385 = vunpack.c.l.b16 %v8226
    %v8386 = vunpack.c.h.b16 %v8226
    %v8387 = vunpack.c.l.b16 %v8227
    %v8388 = vunpack.c.h.b16 %v8227
    %v8389 = vunpack.c.l.b16 %v8228
    %v8390 = vunpack.c.h.b16 %v8228
    %v8391 = vunpack.c.l.b16 %v8229
    %v8392 = vunpack.c.h.b16 %v8229
    %v8393 = vunpack.c.l.b16 %v8230
    %v8394 = vunpack.c.h.b16 %v8230
    %v8395 = vunpack.c.l.b16 %v8231
    %v8396 = vunpack.c.h.b16 %v8231
    %v8397 = vunpack.c.l.b16 %v8232
    %v8398 = vunpack.c.h.b16 %v8232
    %v8399 = vunpack.c.l.b16 %v8233
    %v8400 = vunpack.c.h.b16 %v8233
    %v8401 = vunpack.c.l.b16 %v8234
    %v8402 = vunpack.c.h.b16 %v8234
    %v8403 = vunpack.c.l.b16 %v8235
    %v8404 = vunpack.c.h.b16 %v8235
    %v8405 = vunpack.c.l.b16 %v8236
    %v8406 = vunpack.c.h.b16 %v8236
    %v8407 = vunpack.c.l.b16 %v8237
    %v8408 = vunpack.c.h.b16 %v8237
    %v8409 = vunpack.c.l.b16 %v8238
    %v8410 = vunpack.c.h.b16 %v8238
    %v8411 = vunpack.c.l.b16 %v8239
    %v8412 = vunpack.c.h.b16 %v8239
    %v8413 = vunpack.c.l.b16 %v8240
    %v8414 = vunpack.c.h.b16 %v8240
    %v8415 = vunpack.c.l.b16 %v8241
    %v8416 = vunpack.c.h.b16 %v8241
    %v8417 = vunpack.c.l.b16 %v8242
    %v8418 = vunpack.c.h.b16 %v8242
    %v8419 = vunpack.c.l.b16 %v8243
    %v8420 = vunpack.c.h.b16 %v8243
    %v8421 = vunpack.c.l.b16 %v8244
    %v8422 = vunpack.c.h.b16 %v8244
    %v8423 = vunpack.c.l.b16 %v8245
    %v8424 = vunpack.c.h.b16 %v8245
    %v8425 = vunpack.c.l.b16 %v8246
    %v8426 = vunpack.c.h.b16 %v8246
    %v8427 = vunpack.c.l.b16 %v8247
    %v8428 = vunpack.c.h.b16 %v8247
    %v8429 = vunpack.c.l.b16 %v8248
    %v8430 = vunpack.c.h.b16 %v8248
    %v8431 = vunpack.c.l.b16 %v8249
    %v8432 = vunpack.c.h.b16 %v8249
    %v8433 = vunpack.c.l.b16 %v8250
    %v8434 = vunpack.c.h.b16 %v8250
    %v8435 = vunpack.c.l.b16 %v8251
    %v8436 = vunpack.c.h.b16 %v8251
    %v8437 = vunpack.c.l.b16 %v8252
    %v8438 = vunpack.c.h.b16 %v8252
    %v8439 = vunpack.c.l.b16 %v8253
    %v8440 = vunpack.c.h.b16 %v8253
    %v8441 = vunpack.c.l.b16 %v8254
    %v8442 = vunpack.c.h.b16 %v8254
    %v8443 = vunpack.c.l.b16 %v8255
    %v8444 = vunpack.c.h.b16 %v8255
    %v8445 = vunpack.c.l.b16 %v8256
    %v8446 = vunpack.c.h.b16 %v8256
    %v8447 = vunpack.c.l.b16 %v8257
    %v8448 = vunpack.c.h.b16 %v8257
    %v8449 = vunpack.c.l.b16 %v8258
    %v8450 = vunpack.c.h.b16 %v8258
    %v8451 = vunpack.c.l.b16 %v8259
    %v8452 = vunpack.c.h.b16 %v8259
    %v8453 = vunpack.c.l.b16 %v8260
    %v8454 = vunpack.c.h.b16 %v8260
    %v8455 = vunpack.c.l.b16 %v8261
    %v8456 = vunpack.c.h.b16 %v8261
    %v8457 = vunpack.c.l.b16 %v8262
    %v8458 = vunpack.c.h.b16 %v8262
    %v8459 = vunpack.c.l.b16 %v8263
    %v8460 = vunpack.c.h.b16 %v8263
    %v8461 = vunpack.c.l.b16 %v8264
    %v8462 = vunpack.c.h.b16 %v8264
    %v8463 = vunpack.c.l.b16 %v8265
    %v8464 = vunpack.c.h.b16 %v8265
    %v8465 = vunpack.c.l.b16 %v8266
    %v8466 = vunpack.c.h.b16 %v8266
    %v8467 = vunpack.c.l.b16 %v8267
    %v8468 = vunpack.c.h.b16 %v8267
    %v8469 = vunpack.c.l.b16 %v8268
    %v8470 = vunpack.c.h.b16 %v8268
    %v8471 = vunpack.c.l.b16 %v8269
    %v8472 = vunpack.c.h.b16 %v8269
    %v8473 = vunpack.c.l.b16 %v8270
    %v8474 = vunpack.c.h.b16 %v8270
    %v8475 = vunpack.c.l.b16 %v8271
    %v8476 = vunpack.c.h.b16 %v8271
    %v8477 = vunpack.c.l.b16 %v8272
    %v8478 = vunpack.c.h.b16 %v8272
    %v8479 = vunpack.c.l.b16 %v8273
    %v8480 = vunpack.c.h.b16 %v8273
    %v8481 = vunpack.c.l.b16 %v8274
    %v8482 = vunpack.c.h.b16 %v8274
    %v8483 = vunpack.c.l.b16 %v8275
    %v8484 = vunpack.c.h.b16 %v8275
    %v8485 = vunpack.c.l.b16 %v8276
    %v8486 = vunpack.c.h.b16 %v8276
    %v8487 = vunpack.c.l.b16 %v8277
    %v8488 = vunpack.c.h.b16 %v8277
    %v8489 = vunpack.c.l.b16 %v8278
    %v8490 = vunpack.c.h.b16 %v8278
    %v8491 = vunpack.c.l.b16 %v8279
    %v8492 = vunpack.c.h.b16 %v8279
    %v8493 = vunpack.c.l.b16 %v8280
    %v8494 = vunpack.c.h.b16 %v8280
    %v8495 = vpack.c.b16 %v8371, %v8367
    %v8496 = vpack.c.b16 %v8372, %v8368
    %v8497 = vpack.c.b16 %v8373, %v8369
    %v8498 = vpack.c.b16 %v8374, %v8370
    %v8499 = vpack.c.b16 %v8379, %v8375
    %v8500 = vpack.c.b16 %v8380, %v8376
    %v8501 = vpack.c.b16 %v8381, %v8377
    %v8502 = vpack.c.b16 %v8382, %v8378
    %v8503 = vpack.c.b16 %v8387, %v8383
    %v8504 = vpack.c.b16 %v8388, %v8384
    %v8505 = vpack.c.b16 %v8389, %v8385
    %v8506 = vpack.c.b16 %v8390, %v8386
    %v8507 = vpack.c.b16 %v8395, %v8391
    %v8508 = vpack.c.b16 %v8396, %v8392
    %v8509 = vpack.c.b16 %v8397, %v8393
    %v8510 = vpack.c.b16 %v8398, %v8394
    %v8511 = vpack.c.b16 %v8403, %v8399
    %v8512 = vpack.c.b16 %v8404, %v8400
    %v8513 = vpack.c.b16 %v8405, %v8401
    %v8514 = vpack.c.b16 %v8406, %v8402
    %v8515 = vpack.c.b16 %v8411, %v8407
    %v8516 = vpack.c.b16 %v8412, %v8408
    %v8517 = vpack.c.b16 %v8413, %v8409
    %v8518 = vpack.c.b16 %v8414, %v8410
    %v8519 = vpack.c.b16 %v8419, %v8415
    %v8520 = vpack.c.b16 %v8420, %v8416
    %v8521 = vpack.c.b16 %v8421, %v8417
    %v8522 = vpack.c.b16 %v8422, %v8418
    %v8523 = vpack.c.b16 %v8427, %v8423
    %v8524 = vpack.c.b16 %v8428, %v8424
    %v8525 = vpack.c.b16 %v8429, %v8425
    %v8526 = vpack.c.b16 %v8430, %v8426
    %v8527 = vpack.c.b16 %v8435, %v8431
    %v8528 = vpack.c.b16 %v8436, %v8432
    %v8529 = vpack.c.b16 %v8437, %v8433
    %v8530 = vpack.c.b16 %v8438, %v8434
    %v8531 = vpack.c.b16 %v8443, %v8439
    %v8532 = vpack.c.b16 %v8444, %v8440
    %v8533 = vpack.c.b16 %v8445, %v8441
    %v8534 = vpack.c.b16 %v8446, %v8442
    %v8535 = vpack.c.b16 %v8451, %v8447
    %v8536 = vpack.c.b16 %v8452, %v8448
    %v8537 = vpack.c.b16 %v8453, %v8449
    %v8538 = vpack.c.b16 %v8454, %v8450
    %v8539 = vpack.c.b16 %v8459, %v8455
    %v8540 = vpack.c.b16 %v8460, %v8456
    %v8541 = vpack.c.b16 %v8461, %v8457
    %v8542 = vpack.c.b16 %v8462, %v8458
    %v8543 = vpack.c.b16 %v8467, %v8463
    %v8544 = vpack.c.b16 %v8468, %v8464
    %v8545 = vpack.c.b16 %v8469, %v8465
    %v8546 = vpack.c.b16 %v8470, %v8466
    %v8547 = vpack.c.b16 %v8475, %v8471
    %v8548 = vpack.c.b16 %v8476, %v8472
    %v8549 = vpack.c.b16 %v8477, %v8473
    %v8550 = vpack.c.b16 %v8478, %v8474
    %v8551 = vpack.c.b16 %v8483, %v8479
    %v8552 = vpack.c.b16 %v8484, %v8480
    %v8553 = vpack.c.b16 %v8485, %v8481
    %v8554 = vpack.c.b16 %v8486, %v8482
    %v8555 = vpack.c.b16 %v8491, %v8487
    %v8556 = vpack.c.b16 %v8492, %v8488
    %v8557 = vpack.c.b16 %v8493, %v8489
    %v8558 = vpack.c.b16 %v8494, %v8490
    %8623 = vmatprep.subr.bf16.mxu0 %v8524
    %8624 = vmatpush1.bf16.msra.mxu0 %v8523
    %8625 = vmatprep.subr.bf16.mxu0 %v8520
    %8626 = vmatpush1.bf16.msra.mxu0 %v8519
    %8627 = vmatprep.subr.bf16.mxu0 %v8516
    %8628 = vmatpush1.bf16.msra.mxu0 %v8515
    %8629 = vmatprep.subr.bf16.mxu0 %v8512
    %8630 = vmatpush1.bf16.msra.mxu0 %v8511
    %8631 = vmatprep.subr.bf16.mxu0 %v8508
    %8632 = vmatpush1.bf16.msra.mxu0 %v8507
    %8633 = vmatprep.subr.bf16.mxu0 %v8504
    %8634 = vmatpush1.bf16.msra.mxu0 %v8503
    %8635 = vmatprep.subr.bf16.mxu0 %v8500
    %8636 = vmatpush1.bf16.msra.mxu0 %v8499
    %8637 = vmatprep.subr.bf16.mxu0 %v8496
    %8638 = vmatpush1.bf16.msra.mxu0 %v8495
    %8639 = vmatprep.subr.bf16.mxu0 %v8556
    %8640 = vmatpush2.bf16.msra.mxu0 %v8555
    %8641 = vmatprep.subr.bf16.mxu0 %v8552
    %8642 = vmatpush2.bf16.msra.mxu0 %v8551
    %8643 = vmatprep.subr.bf16.mxu0 %v8548
    %8644 = vmatpush2.bf16.msra.mxu0 %v8547
    %8645 = vmatprep.subr.bf16.mxu0 %v8544
    %8646 = vmatpush2.bf16.msra.mxu0 %v8543
    %8647 = vmatprep.subr.bf16.mxu0 %v8540
    %8648 = vmatpush2.bf16.msra.mxu0 %v8539
    %8649 = vmatprep.subr.bf16.mxu0 %v8536
    %8650 = vmatpush2.bf16.msra.mxu0 %v8535
    %8651 = vmatprep.subr.bf16.mxu0 %v8532
    %8652 = vmatpush2.bf16.msra.mxu0 %v8531
    %8653 = vmatprep.subr.bf16.mxu0 %v8528
    %8654 = vmatpush2.bf16.msra.mxu0 %v8527
    %8655 = vmatprep.mubr.bf16.mxu0 %v8216
    %8656 = vmatmul.mubr.bf16.gmra.mxu0 %v8215
    %v8657 = vpop.f32.mrf.mxu0
    %v8658 = vadd.f32 %v8286, %v8657
    %v8659 = vpop.f32.mrf.mxu0
    %v8660 = vadd.f32 %v8290, %v8659
    %v8661 = vpop.f32.mrf.mxu0
    %v8662 = vpop.f32.mrf.mxu0
    %8663 = vdwg.mxu0
    %8664 = vmatprep.subr.bf16.mxu0 %v8526
    %8665 = vmatpush1.bf16.msra.mxu0 %v8525
    %8666 = vmatprep.subr.bf16.mxu0 %v8522
    %8667 = vmatpush1.bf16.msra.mxu0 %v8521
    %8668 = vmatprep.subr.bf16.mxu0 %v8518
    %8669 = vmatpush1.bf16.msra.mxu0 %v8517
    %8670 = vmatprep.subr.bf16.mxu0 %v8514
    %8671 = vmatpush1.bf16.msra.mxu0 %v8513
    %8672 = vmatprep.subr.bf16.mxu0 %v8510
    %8673 = vmatpush1.bf16.msra.mxu0 %v8509
    %8674 = vmatprep.subr.bf16.mxu0 %v8506
    %8675 = vmatpush1.bf16.msra.mxu0 %v8505
    %8676 = vmatprep.subr.bf16.mxu0 %v8502
    %8677 = vmatpush1.bf16.msra.mxu0 %v8501
    %8678 = vmatprep.subr.bf16.mxu0 %v8498
    %8679 = vmatpush1.bf16.msra.mxu0 %v8497
    %8680 = vmatprep.subr.bf16.mxu0 %v8558
    %8681 = vmatpush2.bf16.msra.mxu0 %v8557
    %8682 = vmatprep.subr.bf16.mxu0 %v8554
    %8683 = vmatpush2.bf16.msra.mxu0 %v8553
    %8684 = vmatprep.subr.bf16.mxu0 %v8550
    %8685 = vmatpush2.bf16.msra.mxu0 %v8549
    %8686 = vmatprep.subr.bf16.mxu0 %v8546
    %8687 = vmatpush2.bf16.msra.mxu0 %v8545
    %8688 = vmatprep.subr.bf16.mxu0 %v8542
    %8689 = vmatpush2.bf16.msra.mxu0 %v8541
    %8690 = vmatprep.subr.bf16.mxu0 %v8538
    %8691 = vmatpush2.bf16.msra.mxu0 %v8537
    %8692 = vmatprep.subr.bf16.mxu0 %v8534
    %8693 = vmatpush2.bf16.msra.mxu0 %v8533
    %8694 = vmatprep.subr.bf16.mxu0 %v8530
    %8695 = vmatpush2.bf16.msra.mxu0 %v8529
    %8696 = vmatprep.mubr.bf16.mxu0 %v8216
    %8697 = vmatmul.mubr.bf16.gmra.mxu0 %v8215
    %v8698 = vpop.f32.mrf.mxu0
    %v8699 = vadd.f32 %v8294, %v8698
    %v8700 = vpop.f32.mrf.mxu0
    %v8701 = vadd.f32 %v8298, %v8700
    %v8702 = vpop.f32.mrf.mxu0
    %v8703 = vpop.f32.mrf.mxu0
    %8704 = vdwg.mxu0
    %v8705 = vmax.f32 %v8658, 0.0
    %v8706 = vmax.f32 %v8660, 0.0
    %v8707 = vmax.f32 %v8699, 0.0
    %v8708 = vmax.f32 %v8701, 0.0
    %s8709 = sshll.u32 %s7224, 4
    %8710 = dma.done %s4897, %s8709
    %v8711 = vpack.c.bf16 %v8705, %v8705
    %v8712 = vpack.c.bf16 %v8706, %v8706
    %v8713 = vpack.c.bf16 %v8707, %v8707
    %v8714 = vpack.c.bf16 %v8708, %v8708
    %v8715 = vld [vmem:[#allocation29] sm:$0xf]
    %v8716 = vld [vmem:[#allocation29 + $0x4] sm:$0xf]
    %v8717 = vld [vmem:[#allocation29 + $0x8] sm:$0xf]
    %v8718 = vld [vmem:[#allocation29 + $0xc] sm:$0xf]
    %v8719 = vld [vmem:[#allocation29 + $0x10] sm:$0xf]
    %v8720 = vld [vmem:[#allocation29 + $0x14] sm:$0xf]
    %v8721 = vld [vmem:[#allocation29 + $0x18] sm:$0xf]
    %v8722 = vld [vmem:[#allocation29 + $0x1c] sm:$0xf]
    %v8723 = vld [vmem:[#allocation29 + $0x20] sm:$0xf]
    %v8724 = vld [vmem:[#allocation29 + $0x24] sm:$0xf]
    %v8725 = vld [vmem:[#allocation29 + $0x28] sm:$0xf]
    %v8726 = vld [vmem:[#allocation29 + $0x2c] sm:$0xf]
    %v8727 = vld [vmem:[#allocation29 + $0x30] sm:$0xf]
    %v8728 = vld [vmem:[#allocation29 + $0x34] sm:$0xf]
    %v8729 = vld [vmem:[#allocation29 + $0x38] sm:$0xf]
    %v8730 = vld [vmem:[#allocation29 + $0x3c] sm:$0xf]
    %v8731 = vld [vmem:[#allocation29 + $0x40] sm:$0xf]
    %v8732 = vld [vmem:[#allocation29 + $0x44] sm:$0xf]
    %v8733 = vld [vmem:[#allocation29 + $0x48] sm:$0xf]
    %v8734 = vld [vmem:[#allocation29 + $0x4c] sm:$0xf]
    %v8735 = vld [vmem:[#allocation29 + $0x50] sm:$0xf]
    %v8736 = vld [vmem:[#allocation29 + $0x54] sm:$0xf]
    %v8737 = vld [vmem:[#allocation29 + $0x58] sm:$0xf]
    %v8738 = vld [vmem:[#allocation29 + $0x5c] sm:$0xf]
    %v8739 = vld [vmem:[#allocation29 + $0x60] sm:$0xf]
    %v8740 = vld [vmem:[#allocation29 + $0x64] sm:$0xf]
    %v8741 = vld [vmem:[#allocation29 + $0x68] sm:$0xf]
    %v8742 = vld [vmem:[#allocation29 + $0x6c] sm:$0xf]
    %v8743 = vld [vmem:[#allocation29 + $0x70] sm:$0xf]
    %v8744 = vld [vmem:[#allocation29 + $0x74] sm:$0xf]
    %v8745 = vld [vmem:[#allocation29 + $0x78] sm:$0xf]
    %v8746 = vld [vmem:[#allocation29 + $0x7c] sm:$0xf]
    %v8747 = vld [vmem:[#allocation29 + $0x80] sm:$0xf]
    %v8748 = vld [vmem:[#allocation29 + $0x84] sm:$0xf]
    %v8749 = vld [vmem:[#allocation29 + $0x88] sm:$0xf]
    %v8750 = vld [vmem:[#allocation29 + $0x8c] sm:$0xf]
    %v8751 = vld [vmem:[#allocation29 + $0x90] sm:$0xf]
    %v8752 = vld [vmem:[#allocation29 + $0x94] sm:$0xf]
    %v8753 = vld [vmem:[#allocation29 + $0x98] sm:$0xf]
    %v8754 = vld [vmem:[#allocation29 + $0x9c] sm:$0xf]
    %v8755 = vld [vmem:[#allocation29 + $0xa0] sm:$0xf]
    %v8756 = vld [vmem:[#allocation29 + $0xa4] sm:$0xf]
    %v8757 = vld [vmem:[#allocation29 + $0xa8] sm:$0xf]
    %v8758 = vld [vmem:[#allocation29 + $0xac] sm:$0xf]
    %v8759 = vld [vmem:[#allocation29 + $0xb0] sm:$0xf]
    %v8760 = vld [vmem:[#allocation29 + $0xb4] sm:$0xf]
    %v8761 = vld [vmem:[#allocation29 + $0xb8] sm:$0xf]
    %v8762 = vld [vmem:[#allocation29 + $0xbc] sm:$0xf]
    %v8763 = vld [vmem:[#allocation29 + $0xc0] sm:$0xf]
    %v8764 = vld [vmem:[#allocation29 + $0xc4] sm:$0xf]
    %v8765 = vld [vmem:[#allocation29 + $0xc8] sm:$0xf]
    %v8766 = vld [vmem:[#allocation29 + $0xcc] sm:$0xf]
    %v8767 = vld [vmem:[#allocation29 + $0xd0] sm:$0xf]
    %v8768 = vld [vmem:[#allocation29 + $0xd4] sm:$0xf]
    %v8769 = vld [vmem:[#allocation29 + $0xd8] sm:$0xf]
    %v8770 = vld [vmem:[#allocation29 + $0xdc] sm:$0xf]
    %v8771 = vld [vmem:[#allocation29 + $0xe0] sm:$0xf]
    %v8772 = vld [vmem:[#allocation29 + $0xe4] sm:$0xf]
    %v8773 = vld [vmem:[#allocation29 + $0xe8] sm:$0xf]
    %v8774 = vld [vmem:[#allocation29 + $0xec] sm:$0xf]
    %v8775 = vld [vmem:[#allocation29 + $0xf0] sm:$0xf]
    %v8776 = vld [vmem:[#allocation29 + $0xf4] sm:$0xf]
    %v8777 = vld [vmem:[#allocation29 + $0xf8] sm:$0xf]
    %v8778 = vld [vmem:[#allocation29 + $0xfc] sm:$0xf]
    %v8779 = vld [vmem:[#allocation52] sm:$0x1]
    %v8781 = vlaneseq
    %v8782 = vshrl.u32 %v8781, 7
    %v8783 = vsub.s32 0, %v8782
    %v8784 = vrot.slane %v8779, %v8783
    %v8850 = vunpack.c.l.b16 %v8715
    %v8851 = vunpack.c.l.b16 %v8716
    %v8852 = vunpack.c.l.b16 %v8717
    %v8853 = vunpack.c.l.b16 %v8718
    %v8854 = vunpack.c.l.b16 %v8719
    %v8855 = vunpack.c.l.b16 %v8720
    %v8856 = vunpack.c.l.b16 %v8721
    %v8857 = vunpack.c.l.b16 %v8722
    %v8858 = vunpack.c.l.b16 %v8723
    %v8859 = vunpack.c.l.b16 %v8724
    %v8860 = vunpack.c.l.b16 %v8725
    %v8861 = vunpack.c.l.b16 %v8726
    %v8862 = vunpack.c.l.b16 %v8727
    %v8863 = vunpack.c.l.b16 %v8728
    %v8864 = vunpack.c.l.b16 %v8729
    %v8865 = vunpack.c.l.b16 %v8730
    %v8866 = vunpack.c.l.b16 %v8731
    %v8867 = vunpack.c.l.b16 %v8732
    %v8868 = vunpack.c.l.b16 %v8733
    %v8869 = vunpack.c.l.b16 %v8734
    %v8870 = vunpack.c.l.b16 %v8735
    %v8871 = vunpack.c.l.b16 %v8736
    %v8872 = vunpack.c.l.b16 %v8737
    %v8873 = vunpack.c.l.b16 %v8738
    %v8874 = vunpack.c.l.b16 %v8739
    %v8875 = vunpack.c.l.b16 %v8740
    %v8876 = vunpack.c.l.b16 %v8741
    %v8877 = vunpack.c.l.b16 %v8742
    %v8878 = vunpack.c.l.b16 %v8743
    %v8879 = vunpack.c.l.b16 %v8744
    %v8880 = vunpack.c.l.b16 %v8745
    %v8881 = vunpack.c.l.b16 %v8746
    %v8882 = vunpack.c.l.b16 %v8747
    %v8883 = vunpack.c.l.b16 %v8748
    %v8884 = vunpack.c.l.b16 %v8749
    %v8885 = vunpack.c.l.b16 %v8750
    %v8886 = vunpack.c.l.b16 %v8751
    %v8887 = vunpack.c.l.b16 %v8752
    %v8888 = vunpack.c.l.b16 %v8753
    %v8889 = vunpack.c.l.b16 %v8754
    %v8890 = vunpack.c.l.b16 %v8755
    %v8891 = vunpack.c.l.b16 %v8756
    %v8892 = vunpack.c.l.b16 %v8757
    %v8893 = vunpack.c.l.b16 %v8758
    %v8894 = vunpack.c.l.b16 %v8759
    %v8895 = vunpack.c.l.b16 %v8760
    %v8896 = vunpack.c.l.b16 %v8761
    %v8897 = vunpack.c.l.b16 %v8762
    %v8898 = vunpack.c.l.b16 %v8763
    %v8899 = vunpack.c.l.b16 %v8764
    %v8900 = vunpack.c.l.b16 %v8765
    %v8901 = vunpack.c.l.b16 %v8766
    %v8902 = vunpack.c.l.b16 %v8767
    %v8903 = vunpack.c.l.b16 %v8768
    %v8904 = vunpack.c.l.b16 %v8769
    %v8905 = vunpack.c.l.b16 %v8770
    %v8906 = vunpack.c.l.b16 %v8771
    %v8907 = vunpack.c.l.b16 %v8772
    %v8908 = vunpack.c.l.b16 %v8773
    %v8909 = vunpack.c.l.b16 %v8774
    %v8910 = vunpack.c.l.b16 %v8775
    %v8911 = vunpack.c.l.b16 %v8776
    %v8912 = vunpack.c.l.b16 %v8777
    %v8913 = vunpack.c.l.b16 %v8778
    %v8914 = vpack.c.b16 %v8851, %v8850
    %v8915 = vpack.c.b16 %v8853, %v8852
    %v8916 = vpack.c.b16 %v8855, %v8854
    %v8917 = vpack.c.b16 %v8857, %v8856
    %v8918 = vpack.c.b16 %v8859, %v8858
    %v8919 = vpack.c.b16 %v8861, %v8860
    %v8920 = vpack.c.b16 %v8863, %v8862
    %v8921 = vpack.c.b16 %v8865, %v8864
    %v8922 = vpack.c.b16 %v8867, %v8866
    %v8923 = vpack.c.b16 %v8869, %v8868
    %v8924 = vpack.c.b16 %v8871, %v8870
    %v8925 = vpack.c.b16 %v8873, %v8872
    %v8926 = vpack.c.b16 %v8875, %v8874
    %v8927 = vpack.c.b16 %v8877, %v8876
    %v8928 = vpack.c.b16 %v8879, %v8878
    %v8929 = vpack.c.b16 %v8881, %v8880
    %v8930 = vpack.c.b16 %v8883, %v8882
    %v8931 = vpack.c.b16 %v8885, %v8884
    %v8932 = vpack.c.b16 %v8887, %v8886
    %v8933 = vpack.c.b16 %v8889, %v8888
    %v8934 = vpack.c.b16 %v8891, %v8890
    %v8935 = vpack.c.b16 %v8893, %v8892
    %v8936 = vpack.c.b16 %v8895, %v8894
    %v8937 = vpack.c.b16 %v8897, %v8896
    %v8938 = vpack.c.b16 %v8899, %v8898
    %v8939 = vpack.c.b16 %v8901, %v8900
    %v8940 = vpack.c.b16 %v8903, %v8902
    %v8941 = vpack.c.b16 %v8905, %v8904
    %v8942 = vpack.c.b16 %v8907, %v8906
    %v8943 = vpack.c.b16 %v8909, %v8908
    %v8944 = vpack.c.b16 %v8911, %v8910
    %v8945 = vpack.c.b16 %v8913, %v8912
    %8978 = vmatprep.subr.bf16.mxu0 0
    %8979 = vmatpush1.bf16.msra.mxu0 %v8921
    %8980 = vmatprep.subr.bf16.mxu0 0
    %8981 = vmatpush1.bf16.msra.mxu0 %v8920
    %8982 = vmatprep.subr.bf16.mxu0 0
    %8983 = vmatpush1.bf16.msra.mxu0 %v8919
    %8984 = vmatprep.subr.bf16.mxu0 0
    %8985 = vmatpush1.bf16.msra.mxu0 %v8918
    %8986 = vmatprep.subr.bf16.mxu0 0
    %8987 = vmatpush1.bf16.msra.mxu0 %v8917
    %8988 = vmatprep.subr.bf16.mxu0 0
    %8989 = vmatpush1.bf16.msra.mxu0 %v8916
    %8990 = vmatprep.subr.bf16.mxu0 0
    %8991 = vmatpush1.bf16.msra.mxu0 %v8915
    %8992 = vmatprep.subr.bf16.mxu0 0
    %8993 = vmatpush1.bf16.msra.mxu0 %v8914
    %8994 = vmatprep.subr.bf16.mxu0 0
    %8995 = vmatpush2.bf16.msra.mxu0 %v8929
    %8996 = vmatprep.subr.bf16.mxu0 0
    %8997 = vmatpush2.bf16.msra.mxu0 %v8928
    %8998 = vmatprep.subr.bf16.mxu0 0
    %8999 = vmatpush2.bf16.msra.mxu0 %v8927
    %9000 = vmatprep.subr.bf16.mxu0 0
    %9001 = vmatpush2.bf16.msra.mxu0 %v8926
    %9002 = vmatprep.subr.bf16.mxu0 0
    %9003 = vmatpush2.bf16.msra.mxu0 %v8925
    %9004 = vmatprep.subr.bf16.mxu0 0
    %9005 = vmatpush2.bf16.msra.mxu0 %v8924
    %9006 = vmatprep.subr.bf16.mxu0 0
    %9007 = vmatpush2.bf16.msra.mxu0 %v8923
    %9008 = vmatprep.subr.bf16.mxu0 0
    %9009 = vmatpush2.bf16.msra.mxu0 %v8922
    %9010 = vmatprep.mubr.bf16.mxu0 %v8712
    %9011 = vmatmul.mubr.bf16.gmra.mxu0 %v8711
    %v9012 = vpop.f32.mrf.mxu0
    %v9013 = vadd.f32 %v8784, %v9012
    %v9014 = vpop.f32.mrf.mxu0
    %v9015 = vpop.f32.mrf.mxu0
    %v9016 = vpop.f32.mrf.mxu0
    %9017 = vdwg.mxu0
    %9018 = vmatprep.subr.bf16.mxu0 0
    %9019 = vmatpush1.bf16.msra.mxu0 %v8937
    %9020 = vmatprep.subr.bf16.mxu0 0
    %9021 = vmatpush1.bf16.msra.mxu0 %v8936
    %9022 = vmatprep.subr.bf16.mxu0 0
    %9023 = vmatpush1.bf16.msra.mxu0 %v8935
    %9024 = vmatprep.subr.bf16.mxu0 0
    %9025 = vmatpush1.bf16.msra.mxu0 %v8934
    %9026 = vmatprep.subr.bf16.mxu0 0
    %9027 = vmatpush1.bf16.msra.mxu0 %v8933
    %9028 = vmatprep.subr.bf16.mxu0 0
    %9029 = vmatpush1.bf16.msra.mxu0 %v8932
    %9030 = vmatprep.subr.bf16.mxu0 0
    %9031 = vmatpush1.bf16.msra.mxu0 %v8931
    %9032 = vmatprep.subr.bf16.mxu0 0
    %9033 = vmatpush1.bf16.msra.mxu0 %v8930
    %9034 = vmatprep.subr.bf16.mxu0 0
    %9035 = vmatpush2.bf16.msra.mxu0 %v8945
    %9036 = vmatprep.subr.bf16.mxu0 0
    %9037 = vmatpush2.bf16.msra.mxu0 %v8944
    %9038 = vmatprep.subr.bf16.mxu0 0
    %9039 = vmatpush2.bf16.msra.mxu0 %v8943
    %9040 = vmatprep.subr.bf16.mxu0 0
    %9041 = vmatpush2.bf16.msra.mxu0 %v8942
    %9042 = vmatprep.subr.bf16.mxu0 0
    %9043 = vmatpush2.bf16.msra.mxu0 %v8941
    %9044 = vmatprep.subr.bf16.mxu0 0
    %9045 = vmatpush2.bf16.msra.mxu0 %v8940
    %9046 = vmatprep.subr.bf16.mxu0 0
    %9047 = vmatpush2.bf16.msra.mxu0 %v8939
    %9048 = vmatprep.subr.bf16.mxu0 0
    %9049 = vmatpush2.bf16.msra.mxu0 %v8938
    %9050 = vmatprep.mubr.bf16.mxu0 %v8714
    %9051 = vmatmul.mubr.bf16.gmra.mxu0 %v8713
    %v9052 = vpop.f32.mrf.mxu0
    %v9053 = vadd.f32 %v9013, %v9052
    %v9054 = vpop.f32.mrf.mxu0
    %v9055 = vpop.f32.mrf.mxu0
    %v9056 = vpop.f32.mrf.mxu0
    %9057 = vdwg.mxu0
    %v9058 = vmax.f32 %v9053, 0.0
    %s9059 = smul.u32 %s846, 1
    %s9060 = sshll.u32 %s9059, 4
    %9061 = dma.done %s5219, %s9060
    %v9062 = vpack.c.bf16 %v9058, %v9058
    %v9063 = vld [vmem:[#allocation30] sm:$0xf]
    %v9064 = vld [vmem:[#allocation30 + $0x4] sm:$0xf]
    %v9065 = vld [vmem:[#allocation30 + $0x8] sm:$0xf]
    %v9066 = vld [vmem:[#allocation30 + $0xc] sm:$0xf]
    %v9067 = vld [vmem:[#allocation30 + $0x10] sm:$0xf]
    %v9068 = vld [vmem:[#allocation30 + $0x14] sm:$0xf]
    %v9069 = vld [vmem:[#allocation30 + $0x18] sm:$0xf]
    %v9070 = vld [vmem:[#allocation30 + $0x1c] sm:$0xf]
    %v9071 = vld [vmem:[#allocation30 + $0x20] sm:$0xf]
    %v9072 = vld [vmem:[#allocation30 + $0x24] sm:$0xf]
    %v9073 = vld [vmem:[#allocation30 + $0x28] sm:$0xf]
    %v9074 = vld [vmem:[#allocation30 + $0x2c] sm:$0xf]
    %v9075 = vld [vmem:[#allocation30 + $0x30] sm:$0xf]
    %v9076 = vld [vmem:[#allocation30 + $0x34] sm:$0xf]
    %v9077 = vld [vmem:[#allocation30 + $0x38] sm:$0xf]
    %v9078 = vld [vmem:[#allocation30 + $0x3c] sm:$0xf]
    %v9079 = vld [vmem:[%s117] sm:$0x1]
    %v9081 = vlaneseq
    %v9082 = vshrl.u32 %v9081, 7
    %v9083 = vsub.s32 0, %v9082
    %v9084 = vrot.slane %v9079, %v9083
    %v9102 = vunpack.c.l.b16 %v9063
    %v9103 = vunpack.c.l.b16 %v9064
    %v9104 = vunpack.c.l.b16 %v9065
    %v9105 = vunpack.c.l.b16 %v9066
    %v9106 = vunpack.c.l.b16 %v9067
    %v9107 = vunpack.c.l.b16 %v9068
    %v9108 = vunpack.c.l.b16 %v9069
    %v9109 = vunpack.c.l.b16 %v9070
    %v9110 = vunpack.c.l.b16 %v9071
    %v9111 = vunpack.c.l.b16 %v9072
    %v9112 = vunpack.c.l.b16 %v9073
    %v9113 = vunpack.c.l.b16 %v9074
    %v9114 = vunpack.c.l.b16 %v9075
    %v9115 = vunpack.c.l.b16 %v9076
    %v9116 = vunpack.c.l.b16 %v9077
    %v9117 = vunpack.c.l.b16 %v9078
    %v9118 = vpack.c.b16 %v9103, %v9102
    %v9119 = vpack.c.b16 %v9105, %v9104
    %v9120 = vpack.c.b16 %v9107, %v9106
    %v9121 = vpack.c.b16 %v9109, %v9108
    %v9122 = vpack.c.b16 %v9111, %v9110
    %v9123 = vpack.c.b16 %v9113, %v9112
    %v9124 = vpack.c.b16 %v9115, %v9114
    %v9125 = vpack.c.b16 %v9117, %v9116
    %9134 = vmatprep.subr.bf16.mxu0 0
    %9135 = vmatpush1.bf16.msra.mxu0 %v9125
    %9136 = vmatprep.subr.bf16.mxu0 0
    %9137 = vmatpush1.bf16.msra.mxu0 %v9124
    %9138 = vmatprep.subr.bf16.mxu0 0
    %9139 = vmatpush1.bf16.msra.mxu0 %v9123
    %9140 = vmatprep.subr.bf16.mxu0 0
    %9141 = vmatpush1.bf16.msra.mxu0 %v9122
    %9142 = vmatprep.subr.bf16.mxu0 0
    %9143 = vmatpush1.bf16.msra.mxu0 %v9121
    %9144 = vmatprep.subr.bf16.mxu0 0
    %9145 = vmatpush1.bf16.msra.mxu0 %v9120
    %9146 = vmatprep.subr.bf16.mxu0 0
    %9147 = vmatpush1.bf16.msra.mxu0 %v9119
    %9148 = vmatprep.subr.bf16.mxu0 0
    %9149 = vmatpush1.bf16.msra.mxu0 %v9118
    %9150 = vmatprep.subr.bf16.mxu0 0
    %9151 = vmatpush2.bf16.msra.mxu0 0
    %9152 = vmatprep.subr.bf16.mxu0 0
    %9153 = vmatpush2.bf16.msra.mxu0 0
    %9154 = vmatprep.subr.bf16.mxu0 0
    %9155 = vmatpush2.bf16.msra.mxu0 0
    %9156 = vmatprep.subr.bf16.mxu0 0
    %9157 = vmatpush2.bf16.msra.mxu0 0
    %9158 = vmatprep.subr.bf16.mxu0 0
    %9159 = vmatpush2.bf16.msra.mxu0 0
    %9160 = vmatprep.subr.bf16.mxu0 0
    %9161 = vmatpush2.bf16.msra.mxu0 0
    %9162 = vmatprep.subr.bf16.mxu0 0
    %9163 = vmatpush2.bf16.msra.mxu0 0
    %9164 = vmatprep.subr.bf16.mxu0 0
    %9165 = vmatpush2.bf16.msra.mxu0 0
    %9166 = vmatprep.mubr.bf16.mxu0 0
    %9167 = vmatmul.mubr.bf16.gmra.mxu0 %v9062
    %v9168 = vpop.f32.mrf.mxu0
    %v9169 = vadd.f32 %v9084, %v9168
    %v9170 = vpop.f32.mrf.mxu0
    %v9171 = vpop.f32.mrf.mxu0
    %v9172 = vpop.f32.mrf.mxu0
    %9173 = vdwg.mxu0
    %9174 = vst [vmem:[%s121] sm:$0xff] %v9169
    // Predicated region
    $region354: #{_generator_forward_impl.1} parent=1 // pred_check
      _
    $region355: #{_generator_forward_impl.1} parent=1 // pred_check_branch
      %9176 = sbr.rel (0) target = $region357
    $region356: #{_generator_forward_impl.1} parent=1 // pred_region
      _
    $region357: #{_generator_forward_impl.1} parent=1 // pred_fallthru
      _
    // Predicated region
    $region358: #{_generator_forward_impl.1} parent=1 // pred_check
      _
    $region359: #{_generator_forward_impl.1} parent=1 // pred_check_branch
      %9178 = sbr.rel (0) target = $region361
    $region360: #{_generator_forward_impl.1} parent=1 // pred_region
      _
    $region361: #{_generator_forward_impl.1} parent=1 // pred_fallthru
      _
    // Predicated region
    $region362: #{_generator_forward_impl.1} parent=1 // pred_check
      _
    $region363: #{_generator_forward_impl.1} parent=1 // pred_check_branch
      %9180 = sbr.rel (0) target = $region365
    $region364: #{_generator_forward_impl.1} parent=1 // pred_region
      _
    $region365: #{_generator_forward_impl.1} parent=1 // pred_fallthru
      _
    // Predicated region
    $region366: #{_generator_forward_impl.1} parent=1 // pred_check
      _
    $region367: #{_generator_forward_impl.1} parent=1 // pred_check_branch
      %9182 = sbr.rel (0) target = $region369
    $region368: #{_generator_forward_impl.1} parent=1 // pred_region
      _
    $region369: #{_generator_forward_impl.1} parent=1 // pred_fallthru
      _
    %9183 = vsyncpa [#allocation33], 1
    %9184 = vsyncpa [#allocation35], 1
    %9185 = vsyncpa [#allocation38], 1
    %9186 = vsyncpa [#allocation41], 1
    %9187 = vsyncpa [#allocation44], 1
    %9188 = vsyncpa [#allocation47], 1
    %9189 = vsyncpa [#allocation50], 1
    %9190 = vsyncpa [#allocation53], 1
  %9191 = vsyncmov [#allocation31]
  %s9192 = vpop.sfrf %9191
  %p9193 = scmp.eq.s32.totalorder %s9192, 0
  %p9194 = pneg %p9193
  %9196 = shalt.err (%p9194)
  %s9197 = scalar_lea.sflag [#allocation31], 1
  %9198 = vsyncmov %s9197
  %s9199 = vpop.sfrf %9198
  %p9200 = scmp.eq.s32.totalorder %s9199, 0
  %p9201 = pneg %p9200
  %9203 = shalt.err (%p9201)
  %s9204 = scalar_lea.sflag [#allocation31], 2
  %9205 = vsyncmov %s9204
  %s9206 = vpop.sfrf %9205
  %p9207 = scmp.eq.s32.totalorder %s9206, 0
  %p9208 = pneg %p9207
  %9210 = shalt.err (%p9208)
  %s9211 = scalar_lea.sflag [#allocation31], 3
  %9212 = vsyncmov %s9211
  %s9213 = vpop.sfrf %9212
  %p9214 = scmp.eq.s32.totalorder %s9213, 0
  %p9215 = pneg %p9214
  %9217 = shalt.err (%p9215)
  %s9218 = scalar_lea.sflag [#allocation31], 4
  %9219 = vsyncmov %s9218
  %s9220 = vpop.sfrf %9219
  %p9221 = scmp.eq.s32.totalorder %s9220, 0
  %p9222 = pneg %p9221
  %9224 = shalt.err (%p9222)
  %s9225 = scalar_lea.sflag [#allocation31], 5
  %9226 = vsyncmov %s9225
  %s9227 = vpop.sfrf %9226
  %p9228 = scmp.eq.s32.totalorder %s9227, 0
  %p9229 = pneg %p9228
  %9231 = shalt.err (%p9229)
  %s9232 = scalar_lea.sflag [#allocation31], 6
  %9233 = vsyncmov %s9232
  %s9234 = vpop.sfrf %9233
  %p9235 = scmp.eq.s32.totalorder %s9234, 0
  %p9236 = pneg %p9235
  %9238 = shalt.err (%p9236)
  %s9239 = scalar_lea.sflag [#allocation31], 7
  %9240 = vsyncmov %s9239
  %s9241 = vpop.sfrf %9240
  %p9242 = scmp.eq.s32.totalorder %s9241, 0
  %p9243 = pneg %p9242
  %9245 = shalt.err (%p9243)
  %s9246 = scalar_lea.sflag [#allocation31], 8
  %9247 = vsyncmov %s9246
  %s9248 = vpop.sfrf %9247
  %p9249 = scmp.eq.s32.totalorder %s9248, 0
  %p9250 = pneg %p9249
  %9252 = shalt.err (%p9250)
  %s9253 = scalar_lea.sflag [#allocation31], 9
  %9254 = vsyncmov %s9253
  %s9255 = vpop.sfrf %9254
  %p9256 = scmp.eq.s32.totalorder %s9255, 0
  %p9257 = pneg %p9256
  %9259 = shalt.err (%p9257)
  %s9260 = scalar_lea.sflag [#allocation31], 10
  %9261 = vsyncmov %s9260
  %s9262 = vpop.sfrf %9261
  %p9263 = scmp.eq.s32.totalorder %s9262, 0
  %p9264 = pneg %p9263
  %9266 = shalt.err (%p9264)
  %s9267 = scalar_lea.sflag [#allocation31], 11
  %9268 = vsyncmov %s9267
  %s9269 = vpop.sfrf %9268
  %p9270 = scmp.eq.s32.totalorder %s9269, 0
  %p9271 = pneg %p9270
  %9273 = shalt.err (%p9271)
  %s9274 = scalar_lea.sflag [#allocation31], 12
  %9275 = vsyncmov %s9274
  %s9276 = vpop.sfrf %9275
  %p9277 = scmp.eq.s32.totalorder %s9276, 0
  %p9278 = pneg %p9277
  %9280 = shalt.err (%p9278)
  %s9281 = scalar_lea.sflag [#allocation31], 13
  %9282 = vsyncmov %s9281
  %s9283 = vpop.sfrf %9282
  %p9284 = scmp.eq.s32.totalorder %s9283, 0
  %p9285 = pneg %p9284
  %9287 = shalt.err (%p9285)
  %s9288 = scalar_lea.sflag [#allocation31], 14
  %9289 = vsyncmov %s9288
  %s9290 = vpop.sfrf %9289
  %p9291 = scmp.eq.s32.totalorder %s9290, 0
  %p9292 = pneg %p9291
  %9294 = shalt.err (%p9292)
  %s9295 = scalar_lea.sflag [#allocation31], 15
  %9296 = vsyncmov %s9295
  %s9297 = vpop.sfrf %9296
  %p9298 = scmp.eq.s32.totalorder %s9297, 0
  %p9299 = pneg %p9298
  %9301 = shalt.err (%p9299)
  %s9302 = scalar_lea.sflag [#allocation31], 16
  %9303 = vsyncmov %s9302
  %s9304 = vpop.sfrf %9303
  %p9305 = scmp.eq.s32.totalorder %s9304, 0
  %p9306 = pneg %p9305
  %9308 = shalt.err (%p9306)
  %s9309 = scalar_lea.sflag [#allocation31], 17
  %9310 = vsyncmov %s9309
  %s9311 = vpop.sfrf %9310
  %p9312 = scmp.eq.s32.totalorder %s9311, 0
  %p9313 = pneg %p9312
  %9315 = shalt.err (%p9313)
  %s9316 = scalar_lea.sflag [#allocation31], 18
  %9317 = vsyncmov %s9316
  %s9318 = vpop.sfrf %9317
  %p9319 = scmp.eq.s32.totalorder %s9318, 0
  %p9320 = pneg %p9319
  %9322 = shalt.err (%p9320)
  %s9323 = scalar_lea.sflag [#allocation31], 19
  %9324 = vsyncmov %s9323
  %s9325 = vpop.sfrf %9324
  %p9326 = scmp.eq.s32.totalorder %s9325, 0
  %p9327 = pneg %p9326
  %9329 = shalt.err (%p9327)
  %s9330 = scalar_lea.sflag [#allocation31], 20
  %9331 = vsyncmov %s9330
  %s9332 = vpop.sfrf %9331
  %p9333 = scmp.eq.s32.totalorder %s9332, 0
  %p9334 = pneg %p9333
  %9336 = shalt.err (%p9334)
  %s9337 = scalar_lea.sflag [#allocation31], 21
  %9338 = vsyncmov %s9337
  %s9339 = vpop.sfrf %9338
  %p9340 = scmp.eq.s32.totalorder %s9339, 0
  %p9341 = pneg %p9340
  %9343 = shalt.err (%p9341)
  %s9344 = scalar_lea.sflag [#allocation31], 22
  %9345 = vsyncmov %s9344
  %s9346 = vpop.sfrf %9345
  %p9347 = scmp.eq.s32.totalorder %s9346, 0
  %p9348 = pneg %p9347
  %9350 = shalt.err (%p9348)
  %s9351 = scalar_lea.sflag [#allocation31], 23
  %9352 = vsyncmov %s9351
  %s9353 = vpop.sfrf %9352
  %p9354 = scmp.eq.s32.totalorder %s9353, 0
  %p9355 = pneg %p9354
  %9357 = shalt.err (%p9355)
  %s9358 = scalar_lea.sflag [#allocation31], 24
  %9359 = vsyncmov %s9358
  %s9360 = vpop.sfrf %9359
  %p9361 = scmp.eq.s32.totalorder %s9360, 0
  %p9362 = pneg %p9361
  %9364 = shalt.err (%p9362)
  %s9365 = scalar_lea.sflag [#allocation31], 25
  %9366 = vsyncmov %s9365
  %s9367 = vpop.sfrf %9366
  %p9368 = scmp.eq.s32.totalorder %s9367, 0
  %p9369 = pneg %p9368
  %9371 = shalt.err (%p9369)
  %s9372 = scalar_lea.sflag [#allocation31], 26
  %9373 = vsyncmov %s9372
  %s9374 = vpop.sfrf %9373
  %p9375 = scmp.eq.s32.totalorder %s9374, 0
  %p9376 = pneg %p9375
  %9378 = shalt.err (%p9376)
  %s9379 = scalar_lea.sflag [#allocation31], 27
  %9380 = vsyncmov %s9379
  %s9381 = vpop.sfrf %9380
  %p9382 = scmp.eq.s32.totalorder %s9381, 0
  %p9383 = pneg %p9382
  %9385 = shalt.err (%p9383)
  %s9386 = scalar_lea.sflag [#allocation31], 28
  %9387 = vsyncmov %s9386
  %s9388 = vpop.sfrf %9387
  %p9389 = scmp.eq.s32.totalorder %s9388, 0
  %p9390 = pneg %p9389
  %9392 = shalt.err (%p9390)

</llo_original>
